<compile_context>
chip_gen: v7x
topology: tpu7x:2x2x1
jax: 0.10.0
libtpu: 0.0.40
codegen_flags: <defaults>
</compile_context>

<pallas_src>
import jax
import jax.numpy as jnp
from jax import lax
from jax.experimental import pallas as pl
from jax.experimental.pallas import tpu as pltpu

_EPS = 1e-5


def _round_up(x, m):
    return ((x + m - 1) // m) * m


# ----------------------------- Pallas kernel -------------------------------- #

def _make_conv_kernel(rp, wp, ci, k_pad, co_pad, use_mask, add_residual):
    """relu(conv3x3x3 + BN-bias [+ residual]) [* border-mask] for one D-plane.

    rp    : Hp*Wp output rows per plane (padded-plane flat layout)
    wp    : Wp, row stride between adjacent kh taps in the flat layout
    ci    : input channels
    k_pad : GEMM contraction dim (27*ci rounded up to a multiple of 128)
    """
    nk = 27 * ci

    def kernel(x0_ref, x1_ref, x2_ref, w_ref, b_ref, *rest):
        i = 0
        m_ref = None
        r_ref = None
        if use_mask:
            m_ref = rest[i]
            i += 1
        if add_residual:
            r_ref = rest[i]
            i += 1
        o_ref = rest[i]
        col_ref = rest[i + 1]

        # Zero the K-padding tail of the im2col scratch so the aligned GEMM
        # never reads uninitialized VMEM (tiny masked store, done every step
        # so it is megacore-safe).
        if k_pad > nk:
            col_ref[:, nk:] = jnp.zeros((rp, k_pad - nk), jnp.bfloat16)

        # Build the 27-tap im2col in VMEM.  Each plane is unpacked to f32 once
        # so the (possibly odd) sublane-offset row slices are plain relayouts;
        # taps are written back as bf16 into the GEMM operand.
        plane_refs = (x0_ref, x1_ref, x2_ref)
        for kd in range(3):
            plane = plane_refs[kd][0, 0].astype(jnp.float32)       # (rext, ci)
            for kh in range(3):
                for kw in range(3):
                    t = (kd * 3 + kh) * 3 + kw
                    off = kh * wp + kw
                    col_ref[:, t * ci:(t + 1) * ci] = (
                        plane[off:off + rp, :].astype(jnp.bfloat16))

        # One MXU GEMM: (rp, k_pad) x (k_pad, co_pad), f32 accumulation.
        y = jnp.dot(col_ref[...], w_ref[...],
                    preferred_element_type=jnp.float32)
        y = y + b_ref[...]                                   # folded BN bias
        if add_residual:
            y = y + r_ref[0, 0].astype(jnp.float32)
        y = jnp.maximum(y, 0.0)
        if use_mask:
            y = y * m_ref[...]       # zero H/W border rows for the next conv
        o_ref[0, 0] = y.astype(o_ref.dtype)

    return kernel


def _fused_conv3x3x3(xe, w_gemm, bias, H, W, mask=None, residual=None):
    """relu(BN(conv3x3x3(x)) [+ residual]) [* border-mask], BN folded into w/bias.

    xe      : (N, D+2, Hp*Wp + 2*Wp + 2, Ci)  bf16, padded + halo-extended planes
    w_gemm  : (k_pad, Co_pad)                 bf16, scale-folded im2col weights
    bias    : (1, Co_pad)                     f32
    mask    : (Hp*Wp, 1)                      f32 interior mask or None
    residual: (N, D, Hp*Wp, Co_pad)           bf16 or None
    returns : (N, D, Hp*Wp, Co_pad)           bf16 (padded-plane flat layout)
    """
    N, Dp, rext, ci = xe.shape
    D = Dp - 2
    Hp, Wp = H + 2, W + 2
    rp = Hp * Wp
    assert rext == rp + 2 * Wp + 2
    k_pad, co = w_gemm.shape
    assert k_pad == _round_up(27 * ci, 128)

    def plane_spec(kd):
        return pl.BlockSpec((1, 1, rext, ci),
                            lambda n, d, kd=kd: (n, d + kd, 0, 0))

    in_specs = [
        plane_spec(0), plane_spec(1), plane_spec(2),
        pl.BlockSpec((k_pad, co), lambda n, d: (0, 0)),   # weights: resident
        pl.BlockSpec((1, co), lambda n, d: (0, 0)),       # bias:    resident
    ]
    args = [xe, xe, xe, w_gemm, bias]
    if mask is not None:
        in_specs.append(pl.BlockSpec((rp, 1), lambda n, d: (0, 0)))
        args.append(mask)
    if residual is not None:
        in_specs.append(pl.BlockSpec((1, 1, rp, co), lambda n, d: (n, d, 0, 0)))
        args.append(residual)

    return pl.pallas_call(
        _make_conv_kernel(rp, Wp, ci, k_pad, co,
                          mask is not None, residual is not None),
        out_shape=jax.ShapeDtypeStruct((N, D, rp, co), jnp.bfloat16),
        grid_spec=pltpu.PrefetchScalarGridSpec(
            num_scalar_prefetch=0,
            grid=(N, D),
            in_specs=in_specs,
            out_specs=pl.BlockSpec((1, 1, rp, co), lambda n, d: (n, d, 0, 0)),
            scratch_shapes=[pltpu.VMEM((rp, k_pad), jnp.bfloat16)],
        ),
        compiler_params=pltpu.CompilerParams(
            dimension_semantics=("parallel", "parallel"),
        ),
    )(*args)


# ------------------------------ JAX glue ------------------------------------ #

def _prep_input(x_ndhwc):
    """(N,D,H,W,C) bf16 -> (N, D+2, Hp*Wp + 2*Wp + 2, C): zero-pad D/H/W by 1,
    flatten each padded D-plane, add a (Wp+1)-row flat halo top & bottom."""
    N, D, H, W, C = x_ndhwc.shape
    Hp, Wp = H + 2, W + 2
    xp = jnp.pad(x_ndhwc, ((0, 0), (1, 1), (1, 1), (1, 1), (0, 0)))
    xf = xp.reshape(N, D + 2, Hp * Wp, C)
    return jnp.pad(xf, ((0, 0), (0, 0), (Wp + 1, Wp + 1), (0, 0)))


def _chain_input(yk, planes, W):
    """Conv-1 output (N, D, Hp*Wp, co_pad) with border rows already zeroed
    in-kernel -> conv-2 input (N, D+2, rext, planes): channel slice + depth
    pad + flat-row halo pad (single XLA pass instead of extract + re-pad)."""
    Wp = W + 2
    y = yk[..., :planes]
    return jnp.pad(y, ((0, 0), (1, 1), (Wp + 1, Wp + 1), (0, 0)))


def _prep_residual(x_ndhwc, co_pad):
    """(N,D,H,W,C) bf16 -> (N, D, Hp*Wp, co_pad): H/W zero-pad + channel pad,
    matching the kernel's padded-plane flat output layout."""
    # TODO(synk): stream un-padded (C channels) and pad in-kernel to cut HBM
    # traffic when C << co_pad.
    N, D, H, W, C = x_ndhwc.shape
    r = jnp.pad(x_ndhwc, ((0, 0), (0, 0), (1, 1), (1, 1), (0, co_pad - C)))
    return r.reshape(N, D, (H + 2) * (W + 2), co_pad)


def _interior_mask(H, W):
    """(Hp*Wp, 1) f32 mask: 1 at interior padded positions, 0 on the border."""
    Hp, Wp = H + 2, W + 2
    idx = jnp.arange(Hp * Wp)
    h = idx // Wp
    w = idx % Wp
    m = ((h >= 1) & (h <= H) & (w >= 1) & (w <= W)).astype(jnp.float32)
    return m.reshape(Hp * Wp, 1)


def _extract_interior(yk, H, W, planes):
    """(N, D, Hp*Wp, co_pad) -> (N, D, H, W, planes)."""
    N, D, _, co = yk.shape
    y = yk.reshape(N, D, H + 2, W + 2, co)
    return y[:, :, 1:H + 1, 1:W + 1, :planes]


def _fold_bn(gamma, beta, mean, var, eps=_EPS):
    scale = gamma / jnp.sqrt(var + eps)
    bias = beta - mean * scale
    return scale, bias


def _prep_weight(w_oidhw, scale, k_pad, co_pad):
    """PyTorch (Co,Ci,3,3,3) -> (k_pad, co_pad) bf16 GEMM weight with BN scale
    folded; rows ordered (kd, kh, kw, ci) to match the in-kernel im2col."""
    co, ci = w_oidhw.shape[:2]
    w = w_oidhw.astype(jnp.float32) * scale[:, None, None, None, None]
    w = jnp.transpose(w, (2, 3, 4, 1, 0)).reshape(27 * ci, co)
    w = jnp.pad(w, ((0, k_pad - 27 * ci), (0, co_pad - co)))
    return w.astype(jnp.bfloat16)


def basic_block_forward(x_ncdhw, params):
    """BasicBlock.forward (stride=1, downsample=None), NCDHW in / NCDHW out."""
    N, C, D, H, W = x_ncdhw.shape
    planes = params["conv1_w"].shape[0]
    co_pad = _round_up(planes, 128)               # lane-dense GEMM-N / stores

    x = jnp.transpose(x_ncdhw, (0, 2, 3, 4, 1)).astype(jnp.bfloat16)   # NDHWC bf16
    mask = _interior_mask(H, W)

    # out = relu(norm1(conv1(x)))   (H/W border rows zeroed in-kernel)
    s1, b1 = _fold_bn(params["bn1_gamma"], params["bn1_beta"],
                      params["bn1_mean"], params["bn1_var"])
    k1 = _round_up(27 * C, 128)
    w1 = _prep_weight(params["conv1_w"], s1, k1, co_pad)
    bias1 = jnp.pad(b1, (0, co_pad - planes)).reshape(1, co_pad).astype(jnp.float32)
    y1k = _fused_conv3x3x3(_prep_input(x), w1, bias1, H, W, mask=mask)

    # out = relu(norm2(conv2(out)) + residual)
    s2, b2 = _fold_bn(params["bn2_gamma"], params["bn2_beta"],
                      params["bn2_mean"], params["bn2_var"])
    k2 = _round_up(27 * planes, 128)
    w2 = _prep_weight(params["conv2_w"], s2, k2, co_pad)
    bias2 = jnp.pad(b2, (0, co_pad - planes)).reshape(1, co_pad).astype(jnp.float32)
    res = _prep_residual(x, co_pad)
    y2k = _fused_conv3x3x3(_chain_input(y1k, planes, W), w2, bias2, H, W,
                           residual=res)
    y2 = _extract_interior(y2k, H, W, planes)

    return jnp.transpose(y2, (0, 4, 1, 2, 3)).astype(jnp.float32)      # NCDHW f32


# --------------------------- pure-JAX reference ------------------------------ #

def _ref_forward(x_ncdhw, params, eps=_EPS):
    def conv3(x, w):
        return lax.conv_general_dilated(
            x, w, window_strides=(1, 1, 1), padding=((1, 1),) * 3,
            dimension_numbers=("NCDHW", "OIDHW", "NCDHW"))

    def bn(x, g, b, m, v):
        sh = (1, -1, 1, 1, 1)
        return ((x - m.reshape(sh)) / jnp.sqrt(v.reshape(sh) + eps)
                * g.reshape(sh) + b.reshape(sh))

    out = jax.nn.relu(bn(conv3(x_ncdhw, params["conv1_w"]),
                         params["bn1_gamma"], params["bn1_beta"],
                         params["bn1_mean"], params["bn1_var"]))
    out = bn(conv3(out, params["conv2_w"]),
             params["bn2_gamma"], params["bn2_beta"],
             params["bn2_mean"], params["bn2_var"])
    out = out + x_ncdhw
    return jax.nn.relu(out)


# ----------------------------------- main ------------------------------------ #

if __name__ == "__main__":
    key = jax.random.PRNGKey(0)
    N, C, D, H, W = 2, 8, 8, 8, 8          # inplanes == planes -> identity residual
    planes = 8
    ks = jax.random.split(key, 11)

    x = jax.random.normal(ks[0], (N, C, D, H, W), jnp.float32)
    params = {
        "conv1_w": jax.random.normal(ks[1], (planes, C, 3, 3, 3), jnp.float32) * 0.1,
        "conv2_w": jax.random.normal(ks[2], (planes, planes, 3, 3, 3), jnp.float32) * 0.1,
        "bn1_gamma": jax.random.uniform(ks[3], (planes,), jnp.float32, 0.5, 1.5),
        "bn1_beta": jax.random.normal(ks[4], (planes,), jnp.float32) * 0.1,
        "bn1_mean": jax.random.normal(ks[5], (planes,), jnp.float32) * 0.1,
        "bn1_var": jax.random.uniform(ks[6], (planes,), jnp.float32, 0.5, 1.5),
        "bn2_gamma": jax.random.uniform(ks[7], (planes,), jnp.float32, 0.5, 1.5),
        "bn2_beta": jax.random.normal(ks[8], (planes,), jnp.float32) * 0.1,
        "bn2_mean": jax.random.normal(ks[9], (planes,), jnp.float32) * 0.1,
        "bn2_var": jax.random.uniform(ks[10], (planes,), jnp.float32, 0.5, 1.5),
    }

    fwd = jax.jit(basic_block_forward)
    out = jax.block_until_ready(fwd(x, params))
    ref = jax.block_until_ready(_ref_forward(x, params))

    assert out.shape == (N, planes, D, H, W), out.shape
    # bf16 activation/weight streams (f32 accumulation): loosened tolerance.
    err = float(jnp.max(jnp.abs(out - ref)))
    assert err < 0.15, f"max abs error vs reference: {err}"
    print("KERNEL_OK")
</pallas_src>

<mosaic_0001>
module attributes {stable_mosaic.version = 11 : i64} {
  func.func @kernel(%arg0: i32, %arg1: i32, %arg2: memref<1x1x122x8xbf16, #tpu.memory_space<vmem>>, %arg3: memref<1x1x122x8xbf16, #tpu.memory_space<vmem>>, %arg4: memref<1x1x122x8xbf16, #tpu.memory_space<vmem>>, %arg5: memref<256x128xbf16, #tpu.memory_space<vmem>>, %arg6: memref<1x128xf32, #tpu.memory_space<vmem>>, %arg7: memref<100x1xf32, #tpu.memory_space<vmem>>, %arg8: memref<1x1x100x128xbf16, #tpu.memory_space<vmem>>, %arg9: memref<100x256xbf16, #tpu.memory_space<vmem>>) attributes {dimension_semantics = [#tpu.dimension_semantics<parallel>, #tpu.dimension_semantics<parallel>], iteration_bounds = array<i64: 2, 8>, scalar_prefetch = 0 : i64, scratch_operands = 1 : i64, tpu.core_type = #tpu.core_type<tc>, window_params = [{transform_indices = @transform_0, window_bounds = array<i64: 1, 1, 122, 8>}, {transform_indices = @transform_1, window_bounds = array<i64: 1, 1, 122, 8>}, {transform_indices = @transform_2, window_bounds = array<i64: 1, 1, 122, 8>}, {pipeline_mode = #tpu.pipeline_mode<synchronous>, transform_indices = @transform_3, window_bounds = array<i64: 256, 128>}, {pipeline_mode = #tpu.pipeline_mode<synchronous>, transform_indices = @transform_4, window_bounds = array<i64: 1, 128>}, {pipeline_mode = #tpu.pipeline_mode<synchronous>, transform_indices = @transform_5, window_bounds = array<i64: 100, 1>}, {transform_indices = @transform_6, window_bounds = array<i64: 1, 1, 100, 128>}]} {
    %cst = arith.constant 0.000000e+00 : bf16
    %0 = vector.broadcast %cst : bf16 to vector<100x40xbf16>
    %c0 = arith.constant 0 : index
    %c216 = arith.constant 216 : index
    %1 = vector.load %arg9[%c0, %c216] : memref<100x256xbf16, #tpu.memory_space<vmem>>, vector<100x40xbf16>
    tpu.vector_store %arg9[%c0, %c216], %0 {strides = array<i32>} : memref<100x256xbf16, #tpu.memory_space<vmem>>, vector<100x40xbf16>,
    %c0_0 = arith.constant 0 : index
    %c0_1 = arith.constant 0 : index
    %c0_2 = arith.constant 0 : index
    %c0_3 = arith.constant 0 : index
    %2 = vector.load %arg2[%c0_0, %c0_1, %c0_2, %c0_3] : memref<1x1x122x8xbf16, #tpu.memory_space<vmem>>, vector<1x1x122x8xbf16>
    %3 = vector.shape_cast %2 : vector<1x1x122x8xbf16> to vector<122x8xbf16>
    %4 = arith.extf %3 : vector<122x8xbf16> to vector<122x8xf32>
    %5 = vector.extract_strided_slice %4 {offsets = [0, 0], sizes = [100, 8], strides = [1, 1]} : vector<122x8xf32> to vector<100x8xf32>
    %6 = arith.truncf %5 : vector<100x8xf32> to vector<100x8xbf16>
    %c0_4 = arith.constant 0 : index
    %c0_5 = arith.constant 0 : index
    %7 = vector.load %arg9[%c0_4, %c0_5] : memref<100x256xbf16, #tpu.memory_space<vmem>>, vector<100x8xbf16>
    tpu.vector_store %arg9[%c0_4, %c0_5], %6 {strides = array<i32>} : memref<100x256xbf16, #tpu.memory_space<vmem>>, vector<100x8xbf16>,
    %8 = vector.extract_strided_slice %4 {offsets = [1, 0], sizes = [100, 8], strides = [1, 1]} : vector<122x8xf32> to vector<100x8xf32>
    %9 = arith.truncf %8 : vector<100x8xf32> to vector<100x8xbf16>
    %c0_6 = arith.constant 0 : index
    %c8 = arith.constant 8 : index
    %10 = vector.load %arg9[%c0_6, %c8] : memref<100x256xbf16, #tpu.memory_space<vmem>>, vector<100x8xbf16>
    tpu.vector_store %arg9[%c0_6, %c8], %9 {strides = array<i32>} : memref<100x256xbf16, #tpu.memory_space<vmem>>, vector<100x8xbf16>,
    %11 = vector.extract_strided_slice %4 {offsets = [2, 0], sizes = [100, 8], strides = [1, 1]} : vector<122x8xf32> to vector<100x8xf32>
    %12 = arith.truncf %11 : vector<100x8xf32> to vector<100x8xbf16>
    %c0_7 = arith.constant 0 : index
    %c16 = arith.constant 16 : index
    %13 = vector.load %arg9[%c0_7, %c16] : memref<100x256xbf16, #tpu.memory_space<vmem>>, vector<100x8xbf16>
    tpu.vector_store %arg9[%c0_7, %c16], %12 {strides = array<i32>} : memref<100x256xbf16, #tpu.memory_space<vmem>>, vector<100x8xbf16>,
    %14 = vector.extract_strided_slice %4 {offsets = [10, 0], sizes = [100, 8], strides = [1, 1]} : vector<122x8xf32> to vector<100x8xf32>
    %15 = arith.truncf %14 : vector<100x8xf32> to vector<100x8xbf16>
    %c0_8 = arith.constant 0 : index
    %c24 = arith.constant 24 : index
    %16 = vector.load %arg9[%c0_8, %c24] : memref<100x256xbf16, #tpu.memory_space<vmem>>, vector<100x8xbf16>
    tpu.vector_store %arg9[%c0_8, %c24], %15 {strides = array<i32>} : memref<100x256xbf16, #tpu.memory_space<vmem>>, vector<100x8xbf16>,
    %17 = vector.extract_strided_slice %4 {offsets = [11, 0], sizes = [100, 8], strides = [1, 1]} : vector<122x8xf32> to vector<100x8xf32>
    %18 = arith.truncf %17 : vector<100x8xf32> to vector<100x8xbf16>
    %c0_9 = arith.constant 0 : index
    %c32 = arith.constant 32 : index
    %19 = vector.load %arg9[%c0_9, %c32] : memref<100x256xbf16, #tpu.memory_space<vmem>>, vector<100x8xbf16>
    tpu.vector_store %arg9[%c0_9, %c32], %18 {strides = array<i32>} : memref<100x256xbf16, #tpu.memory_space<vmem>>, vector<100x8xbf16>,
    %20 = vector.extract_strided_slice %4 {offsets = [12, 0], sizes = [100, 8], strides = [1, 1]} : vector<122x8xf32> to vector<100x8xf32>
    %21 = arith.truncf %20 : vector<100x8xf32> to vector<100x8xbf16>
    %c0_10 = arith.constant 0 : index
    %c40 = arith.constant 40 : index
    %22 = vector.load %arg9[%c0_10, %c40] : memref<100x256xbf16, #tpu.memory_space<vmem>>, vector<100x8xbf16>
    tpu.vector_store %arg9[%c0_10, %c40], %21 {strides = array<i32>} : memref<100x256xbf16, #tpu.memory_space<vmem>>, vector<100x8xbf16>,
    %23 = vector.extract_strided_slice %4 {offsets = [20, 0], sizes = [100, 8], strides = [1, 1]} : vector<122x8xf32> to vector<100x8xf32>
    %24 = arith.truncf %23 : vector<100x8xf32> to vector<100x8xbf16>
    %c0_11 = arith.constant 0 : index
    %c48 = arith.constant 48 : index
    %25 = vector.load %arg9[%c0_11, %c48] : memref<100x256xbf16, #tpu.memory_space<vmem>>, vector<100x8xbf16>
    tpu.vector_store %arg9[%c0_11, %c48], %24 {strides = array<i32>} : memref<100x256xbf16, #tpu.memory_space<vmem>>, vector<100x8xbf16>,
    %26 = vector.extract_strided_slice %4 {offsets = [21, 0], sizes = [100, 8], strides = [1, 1]} : vector<122x8xf32> to vector<100x8xf32>
    %27 = arith.truncf %26 : vector<100x8xf32> to vector<100x8xbf16>
    %c0_12 = arith.constant 0 : index
    %c56 = arith.constant 56 : index
    %28 = vector.load %arg9[%c0_12, %c56] : memref<100x256xbf16, #tpu.memory_space<vmem>>, vector<100x8xbf16>
    tpu.vector_store %arg9[%c0_12, %c56], %27 {strides = array<i32>} : memref<100x256xbf16, #tpu.memory_space<vmem>>, vector<100x8xbf16>,
    %29 = vector.extract_strided_slice %4 {offsets = [22, 0], sizes = [100, 8], strides = [1, 1]} : vector<122x8xf32> to vector<100x8xf32>
    %30 = arith.truncf %29 : vector<100x8xf32> to vector<100x8xbf16>
    %c0_13 = arith.constant 0 : index
    %c64 = arith.constant 64 : index
    %31 = vector.load %arg9[%c0_13, %c64] : memref<100x256xbf16, #tpu.memory_space<vmem>>, vector<100x8xbf16>
    tpu.vector_store %arg9[%c0_13, %c64], %30 {strides = array<i32>} : memref<100x256xbf16, #tpu.memory_space<vmem>>, vector<100x8xbf16>,
    %c0_14 = arith.constant 0 : index
    %c0_15 = arith.constant 0 : index
    %c0_16 = arith.constant 0 : index
    %c0_17 = arith.constant 0 : index
    %32 = vector.load %arg3[%c0_14, %c0_15, %c0_16, %c0_17] : memref<1x1x122x8xbf16, #tpu.memory_space<vmem>>, vector<1x1x122x8xbf16>
    %33 = vector.shape_cast %32 : vector<1x1x122x8xbf16> to vector<122x8xbf16>
    %34 = arith.extf %33 : vector<122x8xbf16> to vector<122x8xf32>
    %35 = vector.extract_strided_slice %34 {offsets = [0, 0], sizes = [100, 8], strides = [1, 1]} : vector<122x8xf32> to vector<100x8xf32>
    %36 = arith.truncf %35 : vector<100x8xf32> to vector<100x8xbf16>
    %c0_18 = arith.constant 0 : index
    %c72 = arith.constant 72 : index
    %37 = vector.load %arg9[%c0_18, %c72] : memref<100x256xbf16, #tpu.memory_space<vmem>>, vector<100x8xbf16>
    tpu.vector_store %arg9[%c0_18, %c72], %36 {strides = array<i32>} : memref<100x256xbf16, #tpu.memory_space<vmem>>, vector<100x8xbf16>,
    %38 = vector.extract_strided_slice %34 {offsets = [1, 0], sizes = [100, 8], strides = [1, 1]} : vector<122x8xf32> to vector<100x8xf32>
    %39 = arith.truncf %38 : vector<100x8xf32> to vector<100x8xbf16>
    %c0_19 = arith.constant 0 : index
    %c80 = arith.constant 80 : index
    %40 = vector.load %arg9[%c0_19, %c80] : memref<100x256xbf16, #tpu.memory_space<vmem>>, vector<100x8xbf16>
    tpu.vector_store %arg9[%c0_19, %c80], %39 {strides = array<i32>} : memref<100x256xbf16, #tpu.memory_space<vmem>>, vector<100x8xbf16>,
    %41 = vector.extract_strided_slice %34 {offsets = [2, 0], sizes = [100, 8], strides = [1, 1]} : vector<122x8xf32> to vector<100x8xf32>
    %42 = arith.truncf %41 : vector<100x8xf32> to vector<100x8xbf16>
    %c0_20 = arith.constant 0 : index
    %c88 = arith.constant 88 : index
    %43 = vector.load %arg9[%c0_20, %c88] : memref<100x256xbf16, #tpu.memory_space<vmem>>, vector<100x8xbf16>
    tpu.vector_store %arg9[%c0_20, %c88], %42 {strides = array<i32>} : memref<100x256xbf16, #tpu.memory_space<vmem>>, vector<100x8xbf16>,
    %44 = vector.extract_strided_slice %34 {offsets = [10, 0], sizes = [100, 8], strides = [1, 1]} : vector<122x8xf32> to vector<100x8xf32>
    %45 = arith.truncf %44 : vector<100x8xf32> to vector<100x8xbf16>
    %c0_21 = arith.constant 0 : index
    %c96 = arith.constant 96 : index
    %46 = vector.load %arg9[%c0_21, %c96] : memref<100x256xbf16, #tpu.memory_space<vmem>>, vector<100x8xbf16>
    tpu.vector_store %arg9[%c0_21, %c96], %45 {strides = array<i32>} : memref<100x256xbf16, #tpu.memory_space<vmem>>, vector<100x8xbf16>,
    %47 = vector.extract_strided_slice %34 {offsets = [11, 0], sizes = [100, 8], strides = [1, 1]} : vector<122x8xf32> to vector<100x8xf32>
    %48 = arith.truncf %47 : vector<100x8xf32> to vector<100x8xbf16>
    %c0_22 = arith.constant 0 : index
    %c104 = arith.constant 104 : index
    %49 = vector.load %arg9[%c0_22, %c104] : memref<100x256xbf16, #tpu.memory_space<vmem>>, vector<100x8xbf16>
    tpu.vector_store %arg9[%c0_22, %c104], %48 {strides = array<i32>} : memref<100x256xbf16, #tpu.memory_space<vmem>>, vector<100x8xbf16>,
    %50 = vector.extract_strided_slice %34 {offsets = [12, 0], sizes = [100, 8], strides = [1, 1]} : vector<122x8xf32> to vector<100x8xf32>
    %51 = arith.truncf %50 : vector<100x8xf32> to vector<100x8xbf16>
    %c0_23 = arith.constant 0 : index
    %c112 = arith.constant 112 : index
    %52 = vector.load %arg9[%c0_23, %c112] : memref<100x256xbf16, #tpu.memory_space<vmem>>, vector<100x8xbf16>
    tpu.vector_store %arg9[%c0_23, %c112], %51 {strides = array<i32>} : memref<100x256xbf16, #tpu.memory_space<vmem>>, vector<100x8xbf16>,
    %53 = vector.extract_strided_slice %34 {offsets = [20, 0], sizes = [100, 8], strides = [1, 1]} : vector<122x8xf32> to vector<100x8xf32>
    %54 = arith.truncf %53 : vector<100x8xf32> to vector<100x8xbf16>
    %c0_24 = arith.constant 0 : index
    %c120 = arith.constant 120 : index
    %55 = vector.load %arg9[%c0_24, %c120] : memref<100x256xbf16, #tpu.memory_space<vmem>>, vector<100x8xbf16>
    tpu.vector_store %arg9[%c0_24, %c120], %54 {strides = array<i32>} : memref<100x256xbf16, #tpu.memory_space<vmem>>, vector<100x8xbf16>,
    %56 = vector.extract_strided_slice %34 {offsets = [21, 0], sizes = [100, 8], strides = [1, 1]} : vector<122x8xf32> to vector<100x8xf32>
    %57 = arith.truncf %56 : vector<100x8xf32> to vector<100x8xbf16>
    %c0_25 = arith.constant 0 : index
    %c128 = arith.constant 128 : index
    %58 = vector.load %arg9[%c0_25, %c128] : memref<100x256xbf16, #tpu.memory_space<vmem>>, vector<100x8xbf16>
    tpu.vector_store %arg9[%c0_25, %c128], %57 {strides = array<i32>} : memref<100x256xbf16, #tpu.memory_space<vmem>>, vector<100x8xbf16>,
    %59 = vector.extract_strided_slice %34 {offsets = [22, 0], sizes = [100, 8], strides = [1, 1]} : vector<122x8xf32> to vector<100x8xf32>
    %60 = arith.truncf %59 : vector<100x8xf32> to vector<100x8xbf16>
    %c0_26 = arith.constant 0 : index
    %c136 = arith.constant 136 : index
    %61 = vector.load %arg9[%c0_26, %c136] : memref<100x256xbf16, #tpu.memory_space<vmem>>, vector<100x8xbf16>
    tpu.vector_store %arg9[%c0_26, %c136], %60 {strides = array<i32>} : memref<100x256xbf16, #tpu.memory_space<vmem>>, vector<100x8xbf16>,
    %c0_27 = arith.constant 0 : index
    %c0_28 = arith.constant 0 : index
    %c0_29 = arith.constant 0 : index
    %c0_30 = arith.constant 0 : index
    %62 = vector.load %arg4[%c0_27, %c0_28, %c0_29, %c0_30] : memref<1x1x122x8xbf16, #tpu.memory_space<vmem>>, vector<1x1x122x8xbf16>
    %63 = vector.shape_cast %62 : vector<1x1x122x8xbf16> to vector<122x8xbf16>
    %64 = arith.extf %63 : vector<122x8xbf16> to vector<122x8xf32>
    %65 = vector.extract_strided_slice %64 {offsets = [0, 0], sizes = [100, 8], strides = [1, 1]} : vector<122x8xf32> to vector<100x8xf32>
    %66 = arith.truncf %65 : vector<100x8xf32> to vector<100x8xbf16>
    %c0_31 = arith.constant 0 : index
    %c144 = arith.constant 144 : index
    %67 = vector.load %arg9[%c0_31, %c144] : memref<100x256xbf16, #tpu.memory_space<vmem>>, vector<100x8xbf16>
    tpu.vector_store %arg9[%c0_31, %c144], %66 {strides = array<i32>} : memref<100x256xbf16, #tpu.memory_space<vmem>>, vector<100x8xbf16>,
    %68 = vector.extract_strided_slice %64 {offsets = [1, 0], sizes = [100, 8], strides = [1, 1]} : vector<122x8xf32> to vector<100x8xf32>
    %69 = arith.truncf %68 : vector<100x8xf32> to vector<100x8xbf16>
    %c0_32 = arith.constant 0 : index
    %c152 = arith.constant 152 : index
    %70 = vector.load %arg9[%c0_32, %c152] : memref<100x256xbf16, #tpu.memory_space<vmem>>, vector<100x8xbf16>
    tpu.vector_store %arg9[%c0_32, %c152], %69 {strides = array<i32>} : memref<100x256xbf16, #tpu.memory_space<vmem>>, vector<100x8xbf16>,
    %71 = vector.extract_strided_slice %64 {offsets = [2, 0], sizes = [100, 8], strides = [1, 1]} : vector<122x8xf32> to vector<100x8xf32>
    %72 = arith.truncf %71 : vector<100x8xf32> to vector<100x8xbf16>
    %c0_33 = arith.constant 0 : index
    %c160 = arith.constant 160 : index
    %73 = vector.load %arg9[%c0_33, %c160] : memref<100x256xbf16, #tpu.memory_space<vmem>>, vector<100x8xbf16>
    tpu.vector_store %arg9[%c0_33, %c160], %72 {strides = array<i32>} : memref<100x256xbf16, #tpu.memory_space<vmem>>, vector<100x8xbf16>,
    %74 = vector.extract_strided_slice %64 {offsets = [10, 0], sizes = [100, 8], strides = [1, 1]} : vector<122x8xf32> to vector<100x8xf32>
    %75 = arith.truncf %74 : vector<100x8xf32> to vector<100x8xbf16>
    %c0_34 = arith.constant 0 : index
    %c168 = arith.constant 168 : index
    %76 = vector.load %arg9[%c0_34, %c168] : memref<100x256xbf16, #tpu.memory_space<vmem>>, vector<100x8xbf16>
    tpu.vector_store %arg9[%c0_34, %c168], %75 {strides = array<i32>} : memref<100x256xbf16, #tpu.memory_space<vmem>>, vector<100x8xbf16>,
    %77 = vector.extract_strided_slice %64 {offsets = [11, 0], sizes = [100, 8], strides = [1, 1]} : vector<122x8xf32> to vector<100x8xf32>
    %78 = arith.truncf %77 : vector<100x8xf32> to vector<100x8xbf16>
    %c0_35 = arith.constant 0 : index
    %c176 = arith.constant 176 : index
    %79 = vector.load %arg9[%c0_35, %c176] : memref<100x256xbf16, #tpu.memory_space<vmem>>, vector<100x8xbf16>
    tpu.vector_store %arg9[%c0_35, %c176], %78 {strides = array<i32>} : memref<100x256xbf16, #tpu.memory_space<vmem>>, vector<100x8xbf16>,
    %80 = vector.extract_strided_slice %64 {offsets = [12, 0], sizes = [100, 8], strides = [1, 1]} : vector<122x8xf32> to vector<100x8xf32>
    %81 = arith.truncf %80 : vector<100x8xf32> to vector<100x8xbf16>
    %c0_36 = arith.constant 0 : index
    %c184 = arith.constant 184 : index
    %82 = vector.load %arg9[%c0_36, %c184] : memref<100x256xbf16, #tpu.memory_space<vmem>>, vector<100x8xbf16>
    tpu.vector_store %arg9[%c0_36, %c184], %81 {strides = array<i32>} : memref<100x256xbf16, #tpu.memory_space<vmem>>, vector<100x8xbf16>,
    %83 = vector.extract_strided_slice %64 {offsets = [20, 0], sizes = [100, 8], strides = [1, 1]} : vector<122x8xf32> to vector<100x8xf32>
    %84 = arith.truncf %83 : vector<100x8xf32> to vector<100x8xbf16>
    %c0_37 = arith.constant 0 : index
    %c192 = arith.constant 192 : index
    %85 = vector.load %arg9[%c0_37, %c192] : memref<100x256xbf16, #tpu.memory_space<vmem>>, vector<100x8xbf16>
    tpu.vector_store %arg9[%c0_37, %c192], %84 {strides = array<i32>} : memref<100x256xbf16, #tpu.memory_space<vmem>>, vector<100x8xbf16>,
    %86 = vector.extract_strided_slice %64 {offsets = [21, 0], sizes = [100, 8], strides = [1, 1]} : vector<122x8xf32> to vector<100x8xf32>
    %87 = arith.truncf %86 : vector<100x8xf32> to vector<100x8xbf16>
    %c0_38 = arith.constant 0 : index
    %c200 = arith.constant 200 : index
    %88 = vector.load %arg9[%c0_38, %c200] : memref<100x256xbf16, #tpu.memory_space<vmem>>, vector<100x8xbf16>
    tpu.vector_store %arg9[%c0_38, %c200], %87 {strides = array<i32>} : memref<100x256xbf16, #tpu.memory_space<vmem>>, vector<100x8xbf16>,
    %89 = vector.extract_strided_slice %64 {offsets = [22, 0], sizes = [100, 8], strides = [1, 1]} : vector<122x8xf32> to vector<100x8xf32>
    %90 = arith.truncf %89 : vector<100x8xf32> to vector<100x8xbf16>
    %c0_39 = arith.constant 0 : index
    %c208 = arith.constant 208 : index
    %91 = vector.load %arg9[%c0_39, %c208] : memref<100x256xbf16, #tpu.memory_space<vmem>>, vector<100x8xbf16>
    tpu.vector_store %arg9[%c0_39, %c208], %90 {strides = array<i32>} : memref<100x256xbf16, #tpu.memory_space<vmem>>, vector<100x8xbf16>,
    %c0_40 = arith.constant 0 : index
    %c0_41 = arith.constant 0 : index
    %92 = vector.load %arg9[%c0_40, %c0_41] : memref<100x256xbf16, #tpu.memory_space<vmem>>, vector<100x256xbf16>
    %c0_42 = arith.constant 0 : index
    %c0_43 = arith.constant 0 : index
    %93 = vector.load %arg5[%c0_42, %c0_43] : memref<256x128xbf16, #tpu.memory_space<vmem>>, vector<256x128xbf16>
    %cst_44 = arith.constant dense<0.000000e+00> : vector<100x128xf32>
    %94 = tpu.matmul %92, %93, %cst_44 {dimension_numbers = #tpu.dot_dimension_numbers<[1], [0], [0], [1], [0, 0, 1, 1], [], []>} : vector<100x256xbf16>, vector<256x128xbf16>, vector<100x128xf32> -> vector<100x128xf32>
    %c0_45 = arith.constant 0 : index
    %c0_46 = arith.constant 0 : index
    %95 = vector.load %arg6[%c0_45, %c0_46] : memref<1x128xf32, #tpu.memory_space<vmem>>, vector<1x128xf32>
    %96 = vector.broadcast %95 : vector<1x128xf32> to vector<100x128xf32>
    %97 = arith.addf %94, %96 : vector<100x128xf32>
    %cst_47 = arith.constant 0.000000e+00 : f32
    %98 = vector.broadcast %cst_47 : f32 to vector<100x128xf32>
    %99 = arith.maximumf %97, %98 : vector<100x128xf32>
    %c0_48 = arith.constant 0 : index
    %c0_49 = arith.constant 0 : index
    %100 = vector.load %arg7[%c0_48, %c0_49] : memref<100x1xf32, #tpu.memory_space<vmem>>, vector<100x1xf32>
    %101 = vector.broadcast %100 : vector<100x1xf32> to vector<100x128xf32>
    %102 = arith.mulf %99, %101 : vector<100x128xf32>
    %103 = arith.truncf %102 : vector<100x128xf32> to vector<100x128xbf16>
    %c0_50 = arith.constant 0 : index
    %c0_51 = arith.constant 0 : index
    %c0_52 = arith.constant 0 : index
    %c0_53 = arith.constant 0 : index
    %104 = vector.load %arg8[%c0_50, %c0_51, %c0_52, %c0_53] : memref<1x1x100x128xbf16, #tpu.memory_space<vmem>>, vector<1x1x100x128xbf16>
    %105 = vector.shape_cast %104 : vector<1x1x100x128xbf16> to vector<100x128xbf16>
    %106 = vector.shape_cast %103 : vector<100x128xbf16> to vector<1x1x100x128xbf16>
    tpu.vector_store %arg8[%c0_50, %c0_51, %c0_52, %c0_53], %106 {strides = array<i32>} : memref<1x1x100x128xbf16, #tpu.memory_space<vmem>>, vector<1x1x100x128xbf16>,
    return
  }
  func.func @transform_0(%arg0: i32, %arg1: i32) -> (i32, i32, i32, i32) {
    %c0_i32 = arith.constant 0 : i32
    %0 = arith.addi %arg1, %c0_i32 : i32
    %c0_i32_0 = arith.constant 0 : i32
    %c0_i32_1 = arith.constant 0 : i32
    %c0_i32_2 = arith.constant 0 : i32
    return %arg0, %0, %c0_i32_0, %c0_i32_1 : i32, i32, i32, i32
  }
  func.func @transform_1(%arg0: i32, %arg1: i32) -> (i32, i32, i32, i32) {
    %c1_i32 = arith.constant 1 : i32
    %0 = arith.addi %arg1, %c1_i32 : i32
    %c0_i32 = arith.constant 0 : i32
    %c0_i32_0 = arith.constant 0 : i32
    %c0_i32_1 = arith.constant 0 : i32
    return %arg0, %0, %c0_i32, %c0_i32_0 : i32, i32, i32, i32
  }
  func.func @transform_2(%arg0: i32, %arg1: i32) -> (i32, i32, i32, i32) {
    %c2_i32 = arith.constant 2 : i32
    %0 = arith.addi %arg1, %c2_i32 : i32
    %c0_i32 = arith.constant 0 : i32
    %c0_i32_0 = arith.constant 0 : i32
    %c0_i32_1 = arith.constant 0 : i32
    return %arg0, %0, %c0_i32, %c0_i32_0 : i32, i32, i32, i32
  }
  func.func @transform_3(%arg0: i32, %arg1: i32) -> (i32, i32) {
    %c0_i32 = arith.constant 0 : i32
    %c0_i32_0 = arith.constant 0 : i32
    %c0_i32_1 = arith.constant 0 : i32
    return %c0_i32, %c0_i32_0 : i32, i32
  }
  func.func @transform_4(%arg0: i32, %arg1: i32) -> (i32, i32) {
    %c0_i32 = arith.constant 0 : i32
    %c0_i32_0 = arith.constant 0 : i32
    %c0_i32_1 = arith.constant 0 : i32
    return %c0_i32, %c0_i32_0 : i32, i32
  }
  func.func @transform_5(%arg0: i32, %arg1: i32) -> (i32, i32) {
    %c0_i32 = arith.constant 0 : i32
    %c0_i32_0 = arith.constant 0 : i32
    %c0_i32_1 = arith.constant 0 : i32
    return %c0_i32, %c0_i32_0 : i32, i32
  }
  func.func @transform_6(%arg0: i32, %arg1: i32) -> (i32, i32, i32, i32) {
    %c0_i32 = arith.constant 0 : i32
    %c0_i32_0 = arith.constant 0 : i32
    %c0_i32_1 = arith.constant 0 : i32
    return %arg0, %arg1, %c0_i32, %c0_i32_0 : i32, i32, i32, i32
  }
}

module attributes {stable_mosaic.version = 11 : i64} {
  func.func @kernel(%arg0: i32, %arg1: i32, %arg2: memref<1x1x122x8xbf16, #tpu.memory_space<vmem>>, %arg3: memref<1x1x122x8xbf16, #tpu.memory_space<vmem>>, %arg4: memref<1x1x122x8xbf16, #tpu.memory_space<vmem>>, %arg5: memref<256x128xbf16, #tpu.memory_space<vmem>>, %arg6: memref<1x128xf32, #tpu.memory_space<vmem>>, %arg7: memref<1x1x100x128xbf16, #tpu.memory_space<vmem>>, %arg8: memref<1x1x100x128xbf16, #tpu.memory_space<vmem>>, %arg9: memref<100x256xbf16, #tpu.memory_space<vmem>>) attributes {dimension_semantics = [#tpu.dimension_semantics<parallel>, #tpu.dimension_semantics<parallel>], iteration_bounds = array<i64: 2, 8>, scalar_prefetch = 0 : i64, scratch_operands = 1 : i64, tpu.core_type = #tpu.core_type<tc>, window_params = [{transform_indices = @transform_0, window_bounds = array<i64: 1, 1, 122, 8>}, {transform_indices = @transform_1, window_bounds = array<i64: 1, 1, 122, 8>}, {transform_indices = @transform_2, window_bounds = array<i64: 1, 1, 122, 8>}, {pipeline_mode = #tpu.pipeline_mode<synchronous>, transform_indices = @transform_3, window_bounds = array<i64: 256, 128>}, {pipeline_mode = #tpu.pipeline_mode<synchronous>, transform_indices = @transform_4, window_bounds = array<i64: 1, 128>}, {transform_indices = @transform_5, window_bounds = array<i64: 1, 1, 100, 128>}, {transform_indices = @transform_6, window_bounds = array<i64: 1, 1, 100, 128>}]} {
    %cst = arith.constant 0.000000e+00 : bf16
    %0 = vector.broadcast %cst : bf16 to vector<100x40xbf16>
    %c0 = arith.constant 0 : index
    %c216 = arith.constant 216 : index
    %1 = vector.load %arg9[%c0, %c216] : memref<100x256xbf16, #tpu.memory_space<vmem>>, vector<100x40xbf16>
    tpu.vector_store %arg9[%c0, %c216], %0 {strides = array<i32>} : memref<100x256xbf16, #tpu.memory_space<vmem>>, vector<100x40xbf16>,
    %c0_0 = arith.constant 0 : index
    %c0_1 = arith.constant 0 : index
    %c0_2 = arith.constant 0 : index
    %c0_3 = arith.constant 0 : index
    %2 = vector.load %arg2[%c0_0, %c0_1, %c0_2, %c0_3] : memref<1x1x122x8xbf16, #tpu.memory_space<vmem>>, vector<1x1x122x8xbf16>
    %3 = vector.shape_cast %2 : vector<1x1x122x8xbf16> to vector<122x8xbf16>
    %4 = arith.extf %3 : vector<122x8xbf16> to vector<122x8xf32>
    %5 = vector.extract_strided_slice %4 {offsets = [0, 0], sizes = [100, 8], strides = [1, 1]} : vector<122x8xf32> to vector<100x8xf32>
    %6 = arith.truncf %5 : vector<100x8xf32> to vector<100x8xbf16>
    %c0_4 = arith.constant 0 : index
    %c0_5 = arith.constant 0 : index
    %7 = vector.load %arg9[%c0_4, %c0_5] : memref<100x256xbf16, #tpu.memory_space<vmem>>, vector<100x8xbf16>
    tpu.vector_store %arg9[%c0_4, %c0_5], %6 {strides = array<i32>} : memref<100x256xbf16, #tpu.memory_space<vmem>>, vector<100x8xbf16>,
    %8 = vector.extract_strided_slice %4 {offsets = [1, 0], sizes = [100, 8], strides = [1, 1]} : vector<122x8xf32> to vector<100x8xf32>
    %9 = arith.truncf %8 : vector<100x8xf32> to vector<100x8xbf16>
    %c0_6 = arith.constant 0 : index
    %c8 = arith.constant 8 : index
    %10 = vector.load %arg9[%c0_6, %c8] : memref<100x256xbf16, #tpu.memory_space<vmem>>, vector<100x8xbf16>
    tpu.vector_store %arg9[%c0_6, %c8], %9 {strides = array<i32>} : memref<100x256xbf16, #tpu.memory_space<vmem>>, vector<100x8xbf16>,
    %11 = vector.extract_strided_slice %4 {offsets = [2, 0], sizes = [100, 8], strides = [1, 1]} : vector<122x8xf32> to vector<100x8xf32>
    %12 = arith.truncf %11 : vector<100x8xf32> to vector<100x8xbf16>
    %c0_7 = arith.constant 0 : index
    %c16 = arith.constant 16 : index
    %13 = vector.load %arg9[%c0_7, %c16] : memref<100x256xbf16, #tpu.memory_space<vmem>>, vector<100x8xbf16>
    tpu.vector_store %arg9[%c0_7, %c16], %12 {strides = array<i32>} : memref<100x256xbf16, #tpu.memory_space<vmem>>, vector<100x8xbf16>,
    %14 = vector.extract_strided_slice %4 {offsets = [10, 0], sizes = [100, 8], strides = [1, 1]} : vector<122x8xf32> to vector<100x8xf32>
    %15 = arith.truncf %14 : vector<100x8xf32> to vector<100x8xbf16>
    %c0_8 = arith.constant 0 : index
    %c24 = arith.constant 24 : index
    %16 = vector.load %arg9[%c0_8, %c24] : memref<100x256xbf16, #tpu.memory_space<vmem>>, vector<100x8xbf16>
    tpu.vector_store %arg9[%c0_8, %c24], %15 {strides = array<i32>} : memref<100x256xbf16, #tpu.memory_space<vmem>>, vector<100x8xbf16>,
    %17 = vector.extract_strided_slice %4 {offsets = [11, 0], sizes = [100, 8], strides = [1, 1]} : vector<122x8xf32> to vector<100x8xf32>
    %18 = arith.truncf %17 : vector<100x8xf32> to vector<100x8xbf16>
    %c0_9 = arith.constant 0 : index
    %c32 = arith.constant 32 : index
    %19 = vector.load %arg9[%c0_9, %c32] : memref<100x256xbf16, #tpu.memory_space<vmem>>, vector<100x8xbf16>
    tpu.vector_store %arg9[%c0_9, %c32], %18 {strides = array<i32>} : memref<100x256xbf16, #tpu.memory_space<vmem>>, vector<100x8xbf16>,
    %20 = vector.extract_strided_slice %4 {offsets = [12, 0], sizes = [100, 8], strides = [1, 1]} : vector<122x8xf32> to vector<100x8xf32>
    %21 = arith.truncf %20 : vector<100x8xf32> to vector<100x8xbf16>
    %c0_10 = arith.constant 0 : index
    %c40 = arith.constant 40 : index
    %22 = vector.load %arg9[%c0_10, %c40] : memref<100x256xbf16, #tpu.memory_space<vmem>>, vector<100x8xbf16>
    tpu.vector_store %arg9[%c0_10, %c40], %21 {strides = array<i32>} : memref<100x256xbf16, #tpu.memory_space<vmem>>, vector<100x8xbf16>,
    %23 = vector.extract_strided_slice %4 {offsets = [20, 0], sizes = [100, 8], strides = [1, 1]} : vector<122x8xf32> to vector<100x8xf32>
    %24 = arith.truncf %23 : vector<100x8xf32> to vector<100x8xbf16>
    %c0_11 = arith.constant 0 : index
    %c48 = arith.constant 48 : index
    %25 = vector.load %arg9[%c0_11, %c48] : memref<100x256xbf16, #tpu.memory_space<vmem>>, vector<100x8xbf16>
    tpu.vector_store %arg9[%c0_11, %c48], %24 {strides = array<i32>} : memref<100x256xbf16, #tpu.memory_space<vmem>>, vector<100x8xbf16>,
    %26 = vector.extract_strided_slice %4 {offsets = [21, 0], sizes = [100, 8], strides = [1, 1]} : vector<122x8xf32> to vector<100x8xf32>
    %27 = arith.truncf %26 : vector<100x8xf32> to vector<100x8xbf16>
    %c0_12 = arith.constant 0 : index
    %c56 = arith.constant 56 : index
    %28 = vector.load %arg9[%c0_12, %c56] : memref<100x256xbf16, #tpu.memory_space<vmem>>, vector<100x8xbf16>
    tpu.vector_store %arg9[%c0_12, %c56], %27 {strides = array<i32>} : memref<100x256xbf16, #tpu.memory_space<vmem>>, vector<100x8xbf16>,
    %29 = vector.extract_strided_slice %4 {offsets = [22, 0], sizes = [100, 8], strides = [1, 1]} : vector<122x8xf32> to vector<100x8xf32>
    %30 = arith.truncf %29 : vector<100x8xf32> to vector<100x8xbf16>
    %c0_13 = arith.constant 0 : index
    %c64 = arith.constant 64 : index
    %31 = vector.load %arg9[%c0_13, %c64] : memref<100x256xbf16, #tpu.memory_space<vmem>>, vector<100x8xbf16>
    tpu.vector_store %arg9[%c0_13, %c64], %30 {strides = array<i32>} : memref<100x256xbf16, #tpu.memory_space<vmem>>, vector<100x8xbf16>,
    %c0_14 = arith.constant 0 : index
    %c0_15 = arith.constant 0 : index
    %c0_16 = arith.constant 0 : index
    %c0_17 = arith.constant 0 : index
    %32 = vector.load %arg3[%c0_14, %c0_15, %c0_16, %c0_17] : memref<1x1x122x8xbf16, #tpu.memory_space<vmem>>, vector<1x1x122x8xbf16>
    %33 = vector.shape_cast %32 : vector<1x1x122x8xbf16> to vector<122x8xbf16>
    %34 = arith.extf %33 : vector<122x8xbf16> to vector<122x8xf32>
    %35 = vector.extract_strided_slice %34 {offsets = [0, 0], sizes = [100, 8], strides = [1, 1]} : vector<122x8xf32> to vector<100x8xf32>
    %36 = arith.truncf %35 : vector<100x8xf32> to vector<100x8xbf16>
    %c0_18 = arith.constant 0 : index
    %c72 = arith.constant 72 : index
    %37 = vector.load %arg9[%c0_18, %c72] : memref<100x256xbf16, #tpu.memory_space<vmem>>, vector<100x8xbf16>
    tpu.vector_store %arg9[%c0_18, %c72], %36 {strides = array<i32>} : memref<100x256xbf16, #tpu.memory_space<vmem>>, vector<100x8xbf16>,
    %38 = vector.extract_strided_slice %34 {offsets = [1, 0], sizes = [100, 8], strides = [1, 1]} : vector<122x8xf32> to vector<100x8xf32>
    %39 = arith.truncf %38 : vector<100x8xf32> to vector<100x8xbf16>
    %c0_19 = arith.constant 0 : index
    %c80 = arith.constant 80 : index
    %40 = vector.load %arg9[%c0_19, %c80] : memref<100x256xbf16, #tpu.memory_space<vmem>>, vector<100x8xbf16>
    tpu.vector_store %arg9[%c0_19, %c80], %39 {strides = array<i32>} : memref<100x256xbf16, #tpu.memory_space<vmem>>, vector<100x8xbf16>,
    %41 = vector.extract_strided_slice %34 {offsets = [2, 0], sizes = [100, 8], strides = [1, 1]} : vector<122x8xf32> to vector<100x8xf32>
    %42 = arith.truncf %41 : vector<100x8xf32> to vector<100x8xbf16>
    %c0_20 = arith.constant 0 : index
    %c88 = arith.constant 88 : index
    %43 = vector.load %arg9[%c0_20, %c88] : memref<100x256xbf16, #tpu.memory_space<vmem>>, vector<100x8xbf16>
    tpu.vector_store %arg9[%c0_20, %c88], %42 {strides = array<i32>} : memref<100x256xbf16, #tpu.memory_space<vmem>>, vector<100x8xbf16>,
    %44 = vector.extract_strided_slice %34 {offsets = [10, 0], sizes = [100, 8], strides = [1, 1]} : vector<122x8xf32> to vector<100x8xf32>
    %45 = arith.truncf %44 : vector<100x8xf32> to vector<100x8xbf16>
    %c0_21 = arith.constant 0 : index
    %c96 = arith.constant 96 : index
    %46 = vector.load %arg9[%c0_21, %c96] : memref<100x256xbf16, #tpu.memory_space<vmem>>, vector<100x8xbf16>
    tpu.vector_store %arg9[%c0_21, %c96], %45 {strides = array<i32>} : memref<100x256xbf16, #tpu.memory_space<vmem>>, vector<100x8xbf16>,
    %47 = vector.extract_strided_slice %34 {offsets = [11, 0], sizes = [100, 8], strides = [1, 1]} : vector<122x8xf32> to vector<100x8xf32>
    %48 = arith.truncf %47 : vector<100x8xf32> to vector<100x8xbf16>
    %c0_22 = arith.constant 0 : index
    %c104 = arith.constant 104 : index
    %49 = vector.load %arg9[%c0_22, %c104] : memref<100x256xbf16, #tpu.memory_space<vmem>>, vector<100x8xbf16>
    tpu.vector_store %arg9[%c0_22, %c104], %48 {strides = array<i32>} : memref<100x256xbf16, #tpu.memory_space<vmem>>, vector<100x8xbf16>,
    %50 = vector.extract_strided_slice %34 {offsets = [12, 0], sizes = [100, 8], strides = [1, 1]} : vector<122x8xf32> to vector<100x8xf32>
    %51 = arith.truncf %50 : vector<100x8xf32> to vector<100x8xbf16>
    %c0_23 = arith.constant 0 : index
    %c112 = arith.constant 112 : index
    %52 = vector.load %arg9[%c0_23, %c112] : memref<100x256xbf16, #tpu.memory_space<vmem>>, vector<100x8xbf16>
    tpu.vector_store %arg9[%c0_23, %c112], %51 {strides = array<i32>} : memref<100x256xbf16, #tpu.memory_space<vmem>>, vector<100x8xbf16>,
    %53 = vector.extract_strided_slice %34 {offsets = [20, 0], sizes = [100, 8], strides = [1, 1]} : vector<122x8xf32> to vector<100x8xf32>
    %54 = arith.truncf %53 : vector<100x8xf32> to vector<100x8xbf16>
    %c0_24 = arith.constant 0 : index
    %c120 = arith.constant 120 : index
    %55 = vector.load %arg9[%c0_24, %c120] : memref<100x256xbf16, #tpu.memory_space<vmem>>, vector<100x8xbf16>
    tpu.vector_store %arg9[%c0_24, %c120], %54 {strides = array<i32>} : memref<100x256xbf16, #tpu.memory_space<vmem>>, vector<100x8xbf16>,
    %56 = vector.extract_strided_slice %34 {offsets = [21, 0], sizes = [100, 8], strides = [1, 1]} : vector<122x8xf32> to vector<100x8xf32>
    %57 = arith.truncf %56 : vector<100x8xf32> to vector<100x8xbf16>
    %c0_25 = arith.constant 0 : index
    %c128 = arith.constant 128 : index
    %58 = vector.load %arg9[%c0_25, %c128] : memref<100x256xbf16, #tpu.memory_space<vmem>>, vector<100x8xbf16>
    tpu.vector_store %arg9[%c0_25, %c128], %57 {strides = array<i32>} : memref<100x256xbf16, #tpu.memory_space<vmem>>, vector<100x8xbf16>,
    %59 = vector.extract_strided_slice %34 {offsets = [22, 0], sizes = [100, 8], strides = [1, 1]} : vector<122x8xf32> to vector<100x8xf32>
    %60 = arith.truncf %59 : vector<100x8xf32> to vector<100x8xbf16>
    %c0_26 = arith.constant 0 : index
    %c136 = arith.constant 136 : index
    %61 = vector.load %arg9[%c0_26, %c136] : memref<100x256xbf16, #tpu.memory_space<vmem>>, vector<100x8xbf16>
    tpu.vector_store %arg9[%c0_26, %c136], %60 {strides = array<i32>} : memref<100x256xbf16, #tpu.memory_space<vmem>>, vector<100x8xbf16>,
    %c0_27 = arith.constant 0 : index
    %c0_28 = arith.constant 0 : index
    %c0_29 = arith.constant 0 : index
    %c0_30 = arith.constant 0 : index
    %62 = vector.load %arg4[%c0_27, %c0_28, %c0_29, %c0_30] : memref<1x1x122x8xbf16, #tpu.memory_space<vmem>>, vector<1x1x122x8xbf16>
    %63 = vector.shape_cast %62 : vector<1x1x122x8xbf16> to vector<122x8xbf16>
    %64 = arith.extf %63 : vector<122x8xbf16> to vector<122x8xf32>
    %65 = vector.extract_strided_slice %64 {offsets = [0, 0], sizes = [100, 8], strides = [1, 1]} : vector<122x8xf32> to vector<100x8xf32>
    %66 = arith.truncf %65 : vector<100x8xf32> to vector<100x8xbf16>
    %c0_31 = arith.constant 0 : index
    %c144 = arith.constant 144 : index
    %67 = vector.load %arg9[%c0_31, %c144] : memref<100x256xbf16, #tpu.memory_space<vmem>>, vector<100x8xbf16>
    tpu.vector_store %arg9[%c0_31, %c144], %66 {strides = array<i32>} : memref<100x256xbf16, #tpu.memory_space<vmem>>, vector<100x8xbf16>,
    %68 = vector.extract_strided_slice %64 {offsets = [1, 0], sizes = [100, 8], strides = [1, 1]} : vector<122x8xf32> to vector<100x8xf32>
    %69 = arith.truncf %68 : vector<100x8xf32> to vector<100x8xbf16>
    %c0_32 = arith.constant 0 : index
    %c152 = arith.constant 152 : index
    %70 = vector.load %arg9[%c0_32, %c152] : memref<100x256xbf16, #tpu.memory_space<vmem>>, vector<100x8xbf16>
    tpu.vector_store %arg9[%c0_32, %c152], %69 {strides = array<i32>} : memref<100x256xbf16, #tpu.memory_space<vmem>>, vector<100x8xbf16>,
    %71 = vector.extract_strided_slice %64 {offsets = [2, 0], sizes = [100, 8], strides = [1, 1]} : vector<122x8xf32> to vector<100x8xf32>
    %72 = arith.truncf %71 : vector<100x8xf32> to vector<100x8xbf16>
    %c0_33 = arith.constant 0 : index
    %c160 = arith.constant 160 : index
    %73 = vector.load %arg9[%c0_33, %c160] : memref<100x256xbf16, #tpu.memory_space<vmem>>, vector<100x8xbf16>
    tpu.vector_store %arg9[%c0_33, %c160], %72 {strides = array<i32>} : memref<100x256xbf16, #tpu.memory_space<vmem>>, vector<100x8xbf16>,
    %74 = vector.extract_strided_slice %64 {offsets = [10, 0], sizes = [100, 8], strides = [1, 1]} : vector<122x8xf32> to vector<100x8xf32>
    %75 = arith.truncf %74 : vector<100x8xf32> to vector<100x8xbf16>
    %c0_34 = arith.constant 0 : index
    %c168 = arith.constant 168 : index
    %76 = vector.load %arg9[%c0_34, %c168] : memref<100x256xbf16, #tpu.memory_space<vmem>>, vector<100x8xbf16>
    tpu.vector_store %arg9[%c0_34, %c168], %75 {strides = array<i32>} : memref<100x256xbf16, #tpu.memory_space<vmem>>, vector<100x8xbf16>,
    %77 = vector.extract_strided_slice %64 {offsets = [11, 0], sizes = [100, 8], strides = [1, 1]} : vector<122x8xf32> to vector<100x8xf32>
    %78 = arith.truncf %77 : vector<100x8xf32> to vector<100x8xbf16>
    %c0_35 = arith.constant 0 : index
    %c176 = arith.constant 176 : index
    %79 = vector.load %arg9[%c0_35, %c176] : memref<100x256xbf16, #tpu.memory_space<vmem>>, vector<100x8xbf16>
    tpu.vector_store %arg9[%c0_35, %c176], %78 {strides = array<i32>} : memref<100x256xbf16, #tpu.memory_space<vmem>>, vector<100x8xbf16>,
    %80 = vector.extract_strided_slice %64 {offsets = [12, 0], sizes = [100, 8], strides = [1, 1]} : vector<122x8xf32> to vector<100x8xf32>
    %81 = arith.truncf %80 : vector<100x8xf32> to vector<100x8xbf16>
    %c0_36 = arith.constant 0 : index
    %c184 = arith.constant 184 : index
    %82 = vector.load %arg9[%c0_36, %c184] : memref<100x256xbf16, #tpu.memory_space<vmem>>, vector<100x8xbf16>
    tpu.vector_store %arg9[%c0_36, %c184], %81 {strides = array<i32>} : memref<100x256xbf16, #tpu.memory_space<vmem>>, vector<100x8xbf16>,
    %83 = vector.extract_strided_slice %64 {offsets = [20, 0], sizes = [100, 8], strides = [1, 1]} : vector<122x8xf32> to vector<100x8xf32>
    %84 = arith.truncf %83 : vector<100x8xf32> to vector<100x8xbf16>
    %c0_37 = arith.constant 0 : index
    %c192 = arith.constant 192 : index
    %85 = vector.load %arg9[%c0_37, %c192] : memref<100x256xbf16, #tpu.memory_space<vmem>>, vector<100x8xbf16>
    tpu.vector_store %arg9[%c0_37, %c192], %84 {strides = array<i32>} : memref<100x256xbf16, #tpu.memory_space<vmem>>, vector<100x8xbf16>,
    %86 = vector.extract_strided_slice %64 {offsets = [21, 0], sizes = [100, 8], strides = [1, 1]} : vector<122x8xf32> to vector<100x8xf32>
    %87 = arith.truncf %86 : vector<100x8xf32> to vector<100x8xbf16>
    %c0_38 = arith.constant 0 : index
    %c200 = arith.constant 200 : index
    %88 = vector.load %arg9[%c0_38, %c200] : memref<100x256xbf16, #tpu.memory_space<vmem>>, vector<100x8xbf16>
    tpu.vector_store %arg9[%c0_38, %c200], %87 {strides = array<i32>} : memref<100x256xbf16, #tpu.memory_space<vmem>>, vector<100x8xbf16>,
    %89 = vector.extract_strided_slice %64 {offsets = [22, 0], sizes = [100, 8], strides = [1, 1]} : vector<122x8xf32> to vector<100x8xf32>
    %90 = arith.truncf %89 : vector<100x8xf32> to vector<100x8xbf16>
    %c0_39 = arith.constant 0 : index
    %c208 = arith.constant 208 : index
    %91 = vector.load %arg9[%c0_39, %c208] : memref<100x256xbf16, #tpu.memory_space<vmem>>, vector<100x8xbf16>
    tpu.vector_store %arg9[%c0_39, %c208], %90 {strides = array<i32>} : memref<100x256xbf16, #tpu.memory_space<vmem>>, vector<100x8xbf16>,
    %c0_40 = arith.constant 0 : index
    %c0_41 = arith.constant 0 : index
    %92 = vector.load %arg9[%c0_40, %c0_41] : memref<100x256xbf16, #tpu.memory_space<vmem>>, vector<100x256xbf16>
    %c0_42 = arith.constant 0 : index
    %c0_43 = arith.constant 0 : index
    %93 = vector.load %arg5[%c0_42, %c0_43] : memref<256x128xbf16, #tpu.memory_space<vmem>>, vector<256x128xbf16>
    %cst_44 = arith.constant dense<0.000000e+00> : vector<100x128xf32>
    %94 = tpu.matmul %92, %93, %cst_44 {dimension_numbers = #tpu.dot_dimension_numbers<[1], [0], [0], [1], [0, 0, 1, 1], [], []>} : vector<100x256xbf16>, vector<256x128xbf16>, vector<100x128xf32> -> vector<100x128xf32>
    %c0_45 = arith.constant 0 : index
    %c0_46 = arith.constant 0 : index
    %95 = vector.load %arg6[%c0_45, %c0_46] : memref<1x128xf32, #tpu.memory_space<vmem>>, vector<1x128xf32>
    %96 = vector.broadcast %95 : vector<1x128xf32> to vector<100x128xf32>
    %97 = arith.addf %94, %96 : vector<100x128xf32>
    %c0_47 = arith.constant 0 : index
    %c0_48 = arith.constant 0 : index
    %c0_49 = arith.constant 0 : index
    %c0_50 = arith.constant 0 : index
    %98 = vector.load %arg7[%c0_47, %c0_48, %c0_49, %c0_50] : memref<1x1x100x128xbf16, #tpu.memory_space<vmem>>, vector<1x1x100x128xbf16>
    %99 = vector.shape_cast %98 : vector<1x1x100x128xbf16> to vector<100x128xbf16>
    %100 = arith.extf %99 : vector<100x128xbf16> to vector<100x128xf32>
    %101 = arith.addf %97, %100 : vector<100x128xf32>
    %cst_51 = arith.constant 0.000000e+00 : f32
    %102 = vector.broadcast %cst_51 : f32 to vector<100x128xf32>
    %103 = arith.maximumf %101, %102 : vector<100x128xf32>
    %104 = arith.truncf %103 : vector<100x128xf32> to vector<100x128xbf16>
    %c0_52 = arith.constant 0 : index
    %c0_53 = arith.constant 0 : index
    %c0_54 = arith.constant 0 : index
    %c0_55 = arith.constant 0 : index
    %105 = vector.load %arg8[%c0_52, %c0_53, %c0_54, %c0_55] : memref<1x1x100x128xbf16, #tpu.memory_space<vmem>>, vector<1x1x100x128xbf16>
    %106 = vector.shape_cast %105 : vector<1x1x100x128xbf16> to vector<100x128xbf16>
    %107 = vector.shape_cast %104 : vector<100x128xbf16> to vector<1x1x100x128xbf16>
    tpu.vector_store %arg8[%c0_52, %c0_53, %c0_54, %c0_55], %107 {strides = array<i32>} : memref<1x1x100x128xbf16, #tpu.memory_space<vmem>>, vector<1x1x100x128xbf16>,
    return
  }
  func.func @transform_0(%arg0: i32, %arg1: i32) -> (i32, i32, i32, i32) {
    %c0_i32 = arith.constant 0 : i32
    %0 = arith.addi %arg1, %c0_i32 : i32
    %c0_i32_0 = arith.constant 0 : i32
    %c0_i32_1 = arith.constant 0 : i32
    %c0_i32_2 = arith.constant 0 : i32
    return %arg0, %0, %c0_i32_0, %c0_i32_1 : i32, i32, i32, i32
  }
  func.func @transform_1(%arg0: i32, %arg1: i32) -> (i32, i32, i32, i32) {
    %c1_i32 = arith.constant 1 : i32
    %0 = arith.addi %arg1, %c1_i32 : i32
    %c0_i32 = arith.constant 0 : i32
    %c0_i32_0 = arith.constant 0 : i32
    %c0_i32_1 = arith.constant 0 : i32
    return %arg0, %0, %c0_i32, %c0_i32_0 : i32, i32, i32, i32
  }
  func.func @transform_2(%arg0: i32, %arg1: i32) -> (i32, i32, i32, i32) {
    %c2_i32 = arith.constant 2 : i32
    %0 = arith.addi %arg1, %c2_i32 : i32
    %c0_i32 = arith.constant 0 : i32
    %c0_i32_0 = arith.constant 0 : i32
    %c0_i32_1 = arith.constant 0 : i32
    return %arg0, %0, %c0_i32, %c0_i32_0 : i32, i32, i32, i32
  }
  func.func @transform_3(%arg0: i32, %arg1: i32) -> (i32, i32) {
    %c0_i32 = arith.constant 0 : i32
    %c0_i32_0 = arith.constant 0 : i32
    %c0_i32_1 = arith.constant 0 : i32
    return %c0_i32, %c0_i32_0 : i32, i32
  }
  func.func @transform_4(%arg0: i32, %arg1: i32) -> (i32, i32) {
    %c0_i32 = arith.constant 0 : i32
    %c0_i32_0 = arith.constant 0 : i32
    %c0_i32_1 = arith.constant 0 : i32
    return %c0_i32, %c0_i32_0 : i32, i32
  }
  func.func @transform_5(%arg0: i32, %arg1: i32) -> (i32, i32, i32, i32) {
    %c0_i32 = arith.constant 0 : i32
    %c0_i32_0 = arith.constant 0 : i32
    %c0_i32_1 = arith.constant 0 : i32
    return %arg0, %arg1, %c0_i32, %c0_i32_0 : i32, i32, i32, i32
  }
  func.func @transform_6(%arg0: i32, %arg1: i32) -> (i32, i32, i32, i32) {
    %c0_i32 = arith.constant 0 : i32
    %c0_i32_0 = arith.constant 0 : i32
    %c0_i32_1 = arith.constant 0 : i32
    return %arg0, %arg1, %c0_i32, %c0_i32_0 : i32, i32, i32, i32
  }
}

</mosaic_0001>

<llo_original>
// kernel: basic_block_forward.2
$region0: #{basic_block_forward.2}
  #allocation0 [shape = 'u32[]', space=smem, size = 0x4, offset = 0x4, fixed_abs, tag = 'smem constant byte address 0x4 - core index']
  #allocation1 [shape = 'u32[144,128]{1,0:T(1,128)}', space=vmem, size = 0x12000, scoped, tag = 'internal scratch']
  #allocation2 [shape = 'bf16[100,256]{1,0:T(8,128)(2,1)}', space=vmem, size = 0xd000, scoped, tag = 'scratch operand']
  %s0 = inlined_call_operand.vmem [shape: bf16[2,10,122,8], index: 0, kind: input, shape index: {}, may-alias: {0,1,2}]
  %s1 = inlined_call_operand.vmem [shape: bf16[2,10,122,8], index: 1, kind: input, shape index: {}, may-alias: {0,1,2}]
  %s2 = inlined_call_operand.vmem [shape: bf16[2,10,122,8], index: 2, kind: input, shape index: {}, may-alias: {0,1,2}]
  %s3 = inlined_call_operand.vmem [shape: bf16[256,128], index: 3, kind: input, shape index: {}]
  %s4 = inlined_call_operand.vmem [shape: f32[1,128], index: 4, kind: input, shape index: {}]
  %s5 = inlined_call_operand.vmem [shape: f32[100,1], index: 5, kind: input, shape index: {}]
  %s6 = inlined_call_operand.vmem [shape: bf16[2,8,100,128], index: 6, kind: output, shape index: {}]
  %s7 = sld [smem:[#allocation0]]
  $region57: #{basic_block_forward.2} parent=0
    _
  %s9 = ssub.s32 1, %s7
  %s10 = scalar_select 0, %s9, %s7
  loop: start=0, step=1, limit=18
  $region2: #{basic_block_forward.2} parent=0 // loop_pre_header
    _
  $region3: #{basic_block_forward.2} parent=0 // loop_header
    %s12 = sphi 0, %s16
    %p13 = scmp.ge.s32.totalorder %s12, 18
    %s19 = sphi 0, %s31
    %s20 = sphi 0, %s27
    %s21 = sphi 0, %s19
    %s22 = sphi 0, %s20
    %s23 = sphi 0, %s21
    %s24 = sphi 0, %s22
    %s36 = sphi 0, %s38
    %s39 = sphi 0, %s36
    %s40 = sphi 0, %s39
    %s56 = sphi 0, %s40
    %s66 = sphi 0, %s68
    %s69 = sphi 0, %s66
    %s70 = sphi 0, %s69
    %s86 = sphi 0, %s70
    %s96 = sphi 0, %s98
    %s99 = sphi 0, %s96
    %s100 = sphi 0, %s99
    %s116 = sphi 0, %s100
    %s120 = sphi 0, %s120
    %s122 = sphi 0, %s120
    %s123 = sphi 0, %s122
    %s137 = sphi 0, %s123
    %s141 = sphi 0, %s141
    %s143 = sphi 0, %s141
    %s144 = sphi 0, %s143
    %s158 = sphi 0, %s144
    %s162 = sphi 0, %s162
    %s164 = sphi 0, %s162
    %s165 = sphi 0, %s164
    %s179 = sphi 0, %s165
    %s187 = sphi 0, %s189
    %s190 = sphi 0, %s187
    %s191 = sphi 0, %s190
    %s207 = sphi 0, %s191
  $region4: #{basic_block_forward.2} parent=0 // loop_header_branch
    %15 = sbr.rel (%p13) target = $region8
  $region5: #{basic_block_forward.2} parent=0 // loop_body
    %s17 = ssub.s32 %s12, 1
    %s18 = ssub.s32 %s12, 2
    %s25 = sadd.s32 1, %s20
    %p26 = scmp.ge.s32.totalorder %s25, 8
    %s27 = scalar_select %p26, 0, %s25
    %s28 = sadd.s32 1, %s19
    %s29 = scalar_select %p26, %s28, %s19
    %p30 = scmp.ge.s32.totalorder %s29, 2
    %s31 = scalar_select %p30, 0, %s29
    %s32 = ssub.s32 %s19, %s31
    %s33 = ssub.s32 %s20, %s27
    %s34 = sor.u32 %s32, %s33
    %p35 = scmp.eq.s32.totalorder %s34, 0
    %s37 = sadd.s32 %s36, 1
    %s38 = scalar_select %p35, %s36, %s37
    %p41 = pneg %p35
    %p42 = scmp.eq.s32.totalorder %s12, 15
    %p43 = por %p41, %p42
    %p44 = scmp.ne.s32.totalorder %s36, %s39
    %p45 = scmp.eq.s32.totalorder %s12, 0
    %p46 = por %p44, %p45
    %p47 = scmp.ne.s32.totalorder %s36, %s39
    %p48 = scmp.eq.s32.totalorder %s17, 15
    %p49 = por %p47, %p48
    %p50 = scmp.ne.s32.totalorder %s39, %s40
    %p51 = scmp.eq.s32.totalorder %s17, 0
    %p52 = por %p50, %p51
    %p53 = scmp.ne.s32.totalorder %s39, %s40
    %p54 = scmp.eq.s32.totalorder %s18, 15
    %p55 = por %p53, %p54
    %p57 = scmp.ne.s32.totalorder %s40, %s56
    %p58 = scmp.eq.s32.totalorder %s18, 0
    %p59 = por %p57, %p58
    %s60 = sadd.s32 %s20, 1
    %s61 = sadd.s32 %s27, 1
    %s62 = ssub.s32 %s19, %s31
    %s63 = ssub.s32 %s60, %s61
    %s64 = sor.u32 %s62, %s63
    %p65 = scmp.eq.s32.totalorder %s64, 0
    %s67 = sadd.s32 %s66, 1
    %s68 = scalar_select %p65, %s66, %s67
    %p71 = pneg %p65
    %p72 = scmp.eq.s32.totalorder %s12, 15
    %p73 = por %p71, %p72
    %p74 = scmp.ne.s32.totalorder %s66, %s69
    %p75 = scmp.eq.s32.totalorder %s12, 0
    %p76 = por %p74, %p75
    %p77 = scmp.ne.s32.totalorder %s66, %s69
    %p78 = scmp.eq.s32.totalorder %s17, 15
    %p79 = por %p77, %p78
    %p80 = scmp.ne.s32.totalorder %s69, %s70
    %p81 = scmp.eq.s32.totalorder %s17, 0
    %p82 = por %p80, %p81
    %p83 = scmp.ne.s32.totalorder %s69, %s70
    %p84 = scmp.eq.s32.totalorder %s18, 15
    %p85 = por %p83, %p84
    %p87 = scmp.ne.s32.totalorder %s70, %s86
    %p88 = scmp.eq.s32.totalorder %s18, 0
    %p89 = por %p87, %p88
    %s90 = sadd.s32 %s20, 2
    %s91 = sadd.s32 %s27, 2
    %s92 = ssub.s32 %s19, %s31
    %s93 = ssub.s32 %s90, %s91
    %s94 = sor.u32 %s92, %s93
    %p95 = scmp.eq.s32.totalorder %s94, 0
    %s97 = sadd.s32 %s96, 1
    %s98 = scalar_select %p95, %s96, %s97
    %p101 = pneg %p95
    %p102 = scmp.eq.s32.totalorder %s12, 15
    %p103 = por %p101, %p102
    %p104 = scmp.ne.s32.totalorder %s96, %s99
    %p105 = scmp.eq.s32.totalorder %s12, 0
    %p106 = por %p104, %p105
    %p107 = scmp.ne.s32.totalorder %s96, %s99
    %p108 = scmp.eq.s32.totalorder %s17, 15
    %p109 = por %p107, %p108
    %p110 = scmp.ne.s32.totalorder %s99, %s100
    %p111 = scmp.eq.s32.totalorder %s17, 0
    %p112 = por %p110, %p111
    %p113 = scmp.ne.s32.totalorder %s99, %s100
    %p114 = scmp.eq.s32.totalorder %s18, 15
    %p115 = por %p113, %p114
    %p117 = scmp.ne.s32.totalorder %s100, %s116
    %p118 = scmp.eq.s32.totalorder %s18, 0
    %p119 = por %p117, %p118
    %s121 = sadd.s32 %s120, 1
    %p124 = scmp.eq.s32.totalorder %s12, 15
    %p125 = scmp.ne.s32.totalorder %s120, %s122
    %p126 = scmp.eq.s32.totalorder %s12, 0
    %p127 = por %p125, %p126
    %p128 = scmp.ne.s32.totalorder %s120, %s122
    %p129 = scmp.eq.s32.totalorder %s17, 15
    %p130 = por %p128, %p129
    %p131 = scmp.ne.s32.totalorder %s122, %s123
    %p132 = scmp.eq.s32.totalorder %s17, 0
    %p133 = por %p131, %p132
    %p134 = scmp.ne.s32.totalorder %s122, %s123
    %p135 = scmp.eq.s32.totalorder %s18, 15
    %p136 = por %p134, %p135
    %p138 = scmp.ne.s32.totalorder %s123, %s137
    %p139 = scmp.eq.s32.totalorder %s18, 0
    %p140 = por %p138, %p139
    %s142 = sadd.s32 %s141, 1
    %p145 = scmp.eq.s32.totalorder %s12, 15
    %p146 = scmp.ne.s32.totalorder %s141, %s143
    %p147 = scmp.eq.s32.totalorder %s12, 0
    %p148 = por %p146, %p147
    %p149 = scmp.ne.s32.totalorder %s141, %s143
    %p150 = scmp.eq.s32.totalorder %s17, 15
    %p151 = por %p149, %p150
    %p152 = scmp.ne.s32.totalorder %s143, %s144
    %p153 = scmp.eq.s32.totalorder %s17, 0
    %p154 = por %p152, %p153
    %p155 = scmp.ne.s32.totalorder %s143, %s144
    %p156 = scmp.eq.s32.totalorder %s18, 15
    %p157 = por %p155, %p156
    %p159 = scmp.ne.s32.totalorder %s144, %s158
    %p160 = scmp.eq.s32.totalorder %s18, 0
    %p161 = por %p159, %p160
    %s163 = sadd.s32 %s162, 1
    %p166 = scmp.eq.s32.totalorder %s12, 15
    %p167 = scmp.ne.s32.totalorder %s162, %s164
    %p168 = scmp.eq.s32.totalorder %s12, 0
    %p169 = por %p167, %p168
    %p170 = scmp.ne.s32.totalorder %s162, %s164
    %p171 = scmp.eq.s32.totalorder %s17, 15
    %p172 = por %p170, %p171
    %p173 = scmp.ne.s32.totalorder %s164, %s165
    %p174 = scmp.eq.s32.totalorder %s17, 0
    %p175 = por %p173, %p174
    %p176 = scmp.ne.s32.totalorder %s164, %s165
    %p177 = scmp.eq.s32.totalorder %s18, 15
    %p178 = por %p176, %p177
    %p180 = scmp.ne.s32.totalorder %s165, %s179
    %p181 = scmp.eq.s32.totalorder %s18, 0
    %p182 = por %p180, %p181
    %s183 = ssub.s32 %s19, %s31
    %s184 = ssub.s32 %s20, %s27
    %s185 = sor.u32 %s183, %s184
    %p186 = scmp.eq.s32.totalorder %s185, 0
    %s188 = sadd.s32 %s187, 1
    %s189 = scalar_select %p186, %s187, %s188
    %p192 = pneg %p186
    %p193 = scmp.eq.s32.totalorder %s12, 15
    %p194 = por %p192, %p193
    %p195 = scmp.ne.s32.totalorder %s187, %s190
    %p196 = scmp.eq.s32.totalorder %s12, 0
    %p197 = por %p195, %p196
    %p198 = scmp.ne.s32.totalorder %s187, %s190
    %p199 = scmp.eq.s32.totalorder %s17, 15
    %p200 = por %p198, %p199
    %p201 = scmp.ne.s32.totalorder %s190, %s191
    %p202 = scmp.eq.s32.totalorder %s17, 0
    %p203 = por %p201, %p202
    %p204 = scmp.ne.s32.totalorder %s190, %s191
    %p205 = scmp.eq.s32.totalorder %s18, 15
    %p206 = por %p204, %p205
    %p208 = scmp.ne.s32.totalorder %s191, %s207
    %p209 = scmp.eq.s32.totalorder %s18, 0
    %p210 = por %p208, %p209
    %p211 = scmp.le.s32.totalorder 1, %s12
    %p212 = scmp.lt.s32.totalorder %s12, 17
    %p213 = pnand %p211, %p212
    %p214 = pneg %p213
    // Predicated region
    $region9: #{basic_block_forward.2} parent=5 // pred_check
      _
    $region10: #{basic_block_forward.2} parent=5 // pred_check_branch
      %216 = sbr.rel (%p213) target = $region12
    $region11: #{basic_block_forward.2} parent=5 // pred_region
      %s217 = ssub.s32 %s12, 1
      // Predicated region
      $region13: #{basic_block_forward.2} parent=11 // pred_check
        %p218 = pneg %p133
      $region14: #{basic_block_forward.2} parent=11 // pred_check_branch
        %220 = sbr.rel (%p218) target = $region16
      $region15: #{basic_block_forward.2} parent=11 // pred_region
        _
      $region16: #{basic_block_forward.2} parent=11 // pred_fallthru
        _
      // Predicated region
      $region17: #{basic_block_forward.2} parent=11 // pred_check
        %p221 = pneg %p154
      $region18: #{basic_block_forward.2} parent=11 // pred_check_branch
        %223 = sbr.rel (%p221) target = $region20
      $region19: #{basic_block_forward.2} parent=11 // pred_region
        _
      $region20: #{basic_block_forward.2} parent=11 // pred_fallthru
        _
      // Predicated region
      $region21: #{basic_block_forward.2} parent=11 // pred_check
        %p224 = pneg %p175
      $region22: #{basic_block_forward.2} parent=11 // pred_check_branch
        %226 = sbr.rel (%p224) target = $region24
      $region23: #{basic_block_forward.2} parent=11 // pred_region
        _
      $region24: #{basic_block_forward.2} parent=11 // pred_fallthru
        _
    $region12: #{basic_block_forward.2} parent=5 // pred_fallthru
      _
    %p227 = scmp.lt.s32.totalorder %s12, 16
    // Predicated region
    $region25: #{basic_block_forward.2} parent=5 // pred_check
      %p228 = pneg %p227
    $region26: #{basic_block_forward.2} parent=5 // pred_check_branch
      %230 = sbr.rel (%p228) target = $region28
    $region27: #{basic_block_forward.2} parent=5 // pred_region
      // Predicated region
      $region29: #{basic_block_forward.2} parent=27 // pred_check
        %p231 = pneg %p46
      $region30: #{basic_block_forward.2} parent=27 // pred_check_branch
        %233 = sbr.rel (%p231) target = $region32
      $region31: #{basic_block_forward.2} parent=27 // pred_region
        %p234 = scmp.lt.s32.totalorder %s19, 1
        %s235 = scalar_select %p234, %s19, 1
        %p236 = scmp.lt.s32.totalorder %s20, 9
        %s237 = scalar_select %p236, %s20, 9
        %s238 = smul.addr %s237, 16
        %s239 = smul.addr %s235, 160
        %s240 = sadd.s32 %s238, %s239
        %s241 = smul.addr %s240, 4
        %s242 = scalar_lea.vmem %s0, %s241
      $region32: #{basic_block_forward.2} parent=27 // pred_fallthru
        _
      // Predicated region
      $region33: #{basic_block_forward.2} parent=27 // pred_check
        %p243 = pneg %p76
      $region34: #{basic_block_forward.2} parent=27 // pred_check_branch
        %245 = sbr.rel (%p243) target = $region36
      $region35: #{basic_block_forward.2} parent=27 // pred_region
        %s246 = sadd.s32 %s20, 1
        %p247 = scmp.lt.s32.totalorder %s19, 1
        %s248 = scalar_select %p247, %s19, 1
        %p249 = scmp.lt.s32.totalorder %s246, 9
        %s250 = scalar_select %p249, %s246, 9
        %s251 = smul.addr %s250, 16
        %s252 = smul.addr %s248, 160
        %s253 = sadd.s32 %s251, %s252
        %s254 = smul.addr %s253, 4
        %s255 = scalar_lea.vmem %s1, %s254
        %s256 = sadd.s32 %s20, 1
      $region36: #{basic_block_forward.2} parent=27 // pred_fallthru
        _
      // Predicated region
      $region37: #{basic_block_forward.2} parent=27 // pred_check
        %p257 = pneg %p106
      $region38: #{basic_block_forward.2} parent=27 // pred_check_branch
        %259 = sbr.rel (%p257) target = $region40
      $region39: #{basic_block_forward.2} parent=27 // pred_region
        %s260 = sadd.s32 %s20, 2
        %p261 = scmp.lt.s32.totalorder %s19, 1
        %s262 = scalar_select %p261, %s19, 1
        %p263 = scmp.lt.s32.totalorder %s260, 9
        %s264 = scalar_select %p263, %s260, 9
        %s265 = smul.addr %s264, 16
        %s266 = smul.addr %s262, 160
        %s267 = sadd.s32 %s265, %s266
        %s268 = smul.addr %s267, 4
        %s269 = scalar_lea.vmem %s2, %s268
        %s270 = sadd.s32 %s20, 2
      $region40: #{basic_block_forward.2} parent=27 // pred_fallthru
        _
    $region28: #{basic_block_forward.2} parent=5 // pred_fallthru
      _
    %p271 = scmp.le.s32.totalorder 1, %s12
    %p272 = scmp.lt.s32.totalorder %s12, 17
    %p273 = pnand %p271, %p272
    %p274 = pneg %p273
    // Predicated region
    $region41: #{basic_block_forward.2} parent=5 // pred_check
      _
    $region42: #{basic_block_forward.2} parent=5 // pred_check_branch
      %276 = sbr.rel (%p273) target = $region44
    $region43: #{basic_block_forward.2} parent=5 // pred_region
      %s277 = ssub.s32 %s12, 1
      %p278 = scmp.lt.s32.totalorder %s21, 1
      %s279 = scalar_select %p278, %s21, 1
      %p280 = scmp.lt.s32.totalorder %s22, 9
      %s281 = scalar_select %p280, %s22, 9
      %s282 = smul.addr %s281, 16
      %s283 = smul.addr %s279, 160
      %s284 = sadd.s32 %s282, %s283
      %s285 = smul.addr %s284, 4
      %s286 = scalar_lea.vmem %s0, %s285
      %p287 = pneg %p52
      %p288 = pneg %p49
      %s289 = sadd.s32 %s22, 1
      %p290 = scmp.lt.s32.totalorder %s21, 1
      %s291 = scalar_select %p290, %s21, 1
      %p292 = scmp.lt.s32.totalorder %s289, 9
      %s293 = scalar_select %p292, %s289, 9
      %s294 = smul.addr %s293, 16
      %s295 = smul.addr %s291, 160
      %s296 = sadd.s32 %s294, %s295
      %s297 = smul.addr %s296, 4
      %s298 = scalar_lea.vmem %s1, %s297
      %p299 = pneg %p82
      %p300 = pneg %p79
      %s301 = sadd.s32 %s22, 2
      %p302 = scmp.lt.s32.totalorder %s21, 1
      %s303 = scalar_select %p302, %s21, 1
      %p304 = scmp.lt.s32.totalorder %s301, 9
      %s305 = scalar_select %p304, %s301, 9
      %s306 = smul.addr %s305, 16
      %s307 = smul.addr %s303, 160
      %s308 = sadd.s32 %s306, %s307
      %s309 = smul.addr %s308, 4
      %s310 = scalar_lea.vmem %s2, %s309
      %p311 = pneg %p112
      %p312 = pneg %p109
      %p313 = pneg %p133
      %p314 = pneg %p130
      %p315 = pneg %p154
      %p316 = pneg %p151
      %p317 = pneg %p175
      %p318 = pneg %p172
      %p319 = pneg %p203
      %p320 = pneg %p200
      %p321 = scmp.lt.s32.totalorder %s21, 1
      %s322 = scalar_select %p321, %s21, 1
      %p323 = scmp.lt.s32.totalorder %s22, 7
      %s324 = scalar_select %p323, %s22, 7
      %s325 = smul.addr %s324, 13
      %s326 = smul.addr %s322, 104
      %s327 = sadd.s32 %s325, %s326
      %s328 = smul.addr %s327, 4
      %s329 = scalar_lea.vmem %s6, %s328
      %p330 = scmp.lt.s32.totalorder %s21, 1
      %s331 = scalar_select %p330, %s21, 1
      %p332 = scmp.lt.s32.totalorder %s22, 9
      %s333 = scalar_select %p332, %s22, 9
      %s334 = smul.addr %s333, 16
      %s335 = smul.addr %s331, 160
      %s336 = sadd.s32 %s334, %s335
      %s337 = smul.addr %s336, 4
      %s338 = scalar_lea.vmem %s0, %s337
      %s339 = sadd.s32 %s22, 1
      %p340 = scmp.lt.s32.totalorder %s21, 1
      %s341 = scalar_select %p340, %s21, 1
      %p342 = scmp.lt.s32.totalorder %s339, 9
      %s343 = scalar_select %p342, %s339, 9
      %s344 = smul.addr %s343, 16
      %s345 = smul.addr %s341, 160
      %s346 = sadd.s32 %s344, %s345
      %s347 = smul.addr %s346, 4
      %s348 = scalar_lea.vmem %s1, %s347
      %s349 = sadd.s32 %s22, 1
      %s350 = sadd.s32 %s22, 2
      %p351 = scmp.lt.s32.totalorder %s21, 1
      %s352 = scalar_select %p351, %s21, 1
      %p353 = scmp.lt.s32.totalorder %s350, 9
      %s354 = scalar_select %p353, %s350, 9
      %s355 = smul.addr %s354, 16
      %s356 = smul.addr %s352, 160
      %s357 = sadd.s32 %s355, %s356
      %s358 = smul.addr %s357, 4
      %s359 = scalar_lea.vmem %s2, %s358
      %s360 = sadd.s32 %s22, 2
      %p361 = scmp.lt.s32.totalorder %s21, 1
      %s362 = scalar_select %p361, %s21, 1
      %p363 = scmp.lt.s32.totalorder %s22, 7
      %s364 = scalar_select %p363, %s22, 7
      %s365 = smul.addr %s364, 13
      %s366 = smul.addr %s362, 104
      %s367 = sadd.s32 %s365, %s366
      %s368 = smul.addr %s367, 4
      %s369 = scalar_lea.vmem %s6, %s368
      %vm371 = vcmask 1044160
      %372 = vst.msk [vmem:[#allocation2 + $0x4] sm:$0xf] %vm371, 0
      %373 = vst.msk [vmem:[#allocation2 + $0xc] sm:$0xf] %vm371, 0
      %374 = vst.msk [vmem:[#allocation2 + $0x14] sm:$0xf] %vm371, 0
      %375 = vst.msk [vmem:[#allocation2 + $0x1c] sm:$0xf] %vm371, 0
      %376 = vst.msk [vmem:[#allocation2 + $0x24] sm:$0xf] %vm371, 0
      %377 = vst.msk [vmem:[#allocation2 + $0x2c] sm:$0xf] %vm371, 0
      %378 = vst.msk [vmem:[#allocation2 + $0x34] sm:$0xf] %vm371, 0
      %379 = vst.msk [vmem:[#allocation2 + $0x3c] sm:$0xf] %vm371, 0
      %380 = vst.msk [vmem:[#allocation2 + $0x44] sm:$0xf] %vm371, 0
      %381 = vst.msk [vmem:[#allocation2 + $0x4c] sm:$0xf] %vm371, 0
      %382 = vst.msk [vmem:[#allocation2 + $0x54] sm:$0xf] %vm371, 0
      %383 = vst.msk [vmem:[#allocation2 + $0x5c] sm:$0xf] %vm371, 0
      %vm384 = vcmask 1042112
      %385 = vst.msk [vmem:[#allocation2 + $0x64] sm:$0x3] %vm384, 0
      %v386 = vld [vmem:[%s338] sm:$0xf]
      %v387 = vld [vmem:[%s338 + $0x4] sm:$0xf]
      %v388 = vld [vmem:[%s338 + $0x8] sm:$0xf]
      %v389 = vld [vmem:[%s338 + $0xc] sm:$0xf]
      %v390 = vld [vmem:[%s338 + $0x10] sm:$0xf]
      %v391 = vld [vmem:[%s338 + $0x14] sm:$0xf]
      %v392 = vld [vmem:[%s338 + $0x18] sm:$0xf]
      %v393 = vld [vmem:[%s338 + $0x1c] sm:$0xf]
      %v394 = vld [vmem:[%s338 + $0x20] sm:$0xf]
      %v395 = vld [vmem:[%s338 + $0x24] sm:$0xf]
      %v396 = vld [vmem:[%s338 + $0x28] sm:$0xf]
      %v397 = vld [vmem:[%s338 + $0x2c] sm:$0xf]
      %v398 = vld [vmem:[%s338 + $0x30] sm:$0xf]
      %v399 = vld [vmem:[%s338 + $0x34] sm:$0xf]
      %v400 = vld [vmem:[%s338 + $0x38] sm:$0xf]
      %v401 = vld [vmem:[%s338 + $0x3c] sm:$0x1]
      %v402 = vunpack.c.l.bf16 %v386
      %v403 = vunpack.c.l.bf16 %v387
      %v404 = vunpack.c.l.bf16 %v388
      %v405 = vunpack.c.l.bf16 %v389
      %v406 = vunpack.c.l.bf16 %v390
      %v407 = vunpack.c.l.bf16 %v391
      %v408 = vunpack.c.l.bf16 %v392
      %v409 = vunpack.c.l.bf16 %v393
      %v410 = vunpack.c.l.bf16 %v394
      %v411 = vunpack.c.l.bf16 %v395
      %v412 = vunpack.c.l.bf16 %v396
      %v413 = vunpack.c.l.bf16 %v397
      %v414 = vunpack.c.l.bf16 %v398
      %v415 = vunpack.c.l.bf16 %v399
      %v416 = vunpack.c.l.bf16 %v400
      %v417 = vunpack.c.l.bf16 %v401
      %v418 = vpack.c.bf16 %v403, %v402
      %v419 = vpack.c.bf16 %v405, %v404
      %v420 = vpack.c.bf16 %v407, %v406
      %v421 = vpack.c.bf16 %v409, %v408
      %v422 = vpack.c.bf16 %v411, %v410
      %v423 = vpack.c.bf16 %v413, %v412
      %v424 = vpack.c.bf16 %v414, %v414
      %v432 = vunpack.c.l.b16 %v418
      %v433 = vunpack.c.h.b16 %v418
      %v434 = vunpack.c.l.b16 %v419
      %v435 = vunpack.c.h.b16 %v419
      %v436 = vunpack.c.l.b16 %v420
      %v437 = vunpack.c.h.b16 %v420
      %v438 = vunpack.c.l.b16 %v421
      %v439 = vunpack.c.h.b16 %v421
      %v440 = vunpack.c.l.b16 %v422
      %v441 = vunpack.c.h.b16 %v422
      %v442 = vunpack.c.l.b16 %v423
      %v443 = vunpack.c.h.b16 %v423
      %v444 = vunpack.c.l.b16 %v424
      %v445 = vpack.c.b16 %v432, %v432
      %v446 = vpack.c.b16 %v433, %v433
      %v447 = vpack.c.b16 %v434, %v434
      %v448 = vpack.c.b16 %v435, %v435
      %v449 = vpack.c.b16 %v436, %v436
      %v450 = vpack.c.b16 %v437, %v437
      %v451 = vpack.c.b16 %v438, %v438
      %v452 = vpack.c.b16 %v439, %v439
      %v453 = vpack.c.b16 %v440, %v440
      %v454 = vpack.c.b16 %v441, %v441
      %v455 = vpack.c.b16 %v442, %v442
      %v456 = vpack.c.b16 %v443, %v443
      %v457 = vpack.c.b16 %v444, %v444
      %vm471 = vcmask 60416
      %472 = vst.msk [vmem:[#allocation2] sm:$0xf] %vm471, %v445
      %473 = vst.msk [vmem:[#allocation2 + $0x8] sm:$0xf] %vm471, %v446
      %474 = vst.msk [vmem:[#allocation2 + $0x10] sm:$0xf] %vm471, %v447
      %475 = vst.msk [vmem:[#allocation2 + $0x18] sm:$0xf] %vm471, %v448
      %476 = vst.msk [vmem:[#allocation2 + $0x20] sm:$0xf] %vm471, %v449
      %477 = vst.msk [vmem:[#allocation2 + $0x28] sm:$0xf] %vm471, %v450
      %478 = vst.msk [vmem:[#allocation2 + $0x30] sm:$0xf] %vm471, %v451
      %479 = vst.msk [vmem:[#allocation2 + $0x38] sm:$0xf] %vm471, %v452
      %480 = vst.msk [vmem:[#allocation2 + $0x40] sm:$0xf] %vm471, %v453
      %481 = vst.msk [vmem:[#allocation2 + $0x48] sm:$0xf] %vm471, %v454
      %482 = vst.msk [vmem:[#allocation2 + $0x50] sm:$0xf] %vm471, %v455
      %483 = vst.msk [vmem:[#allocation2 + $0x58] sm:$0xf] %vm471, %v456
      %vm484 = vcmask 58368
      %485 = vst.msk [vmem:[#allocation2 + $0x60] sm:$0x3] %vm484, %v457
      %vm486 = vsmask.f32 3328
      %vm487 = vsmask.f32 7440
      %vm488 = vmor %vm486, %vm487
      %v490 = vshrl.u32 %v445, 16
      %v492 = vrot.slane %v490, 4
      %v493 = vshll.u32 %v445, 16
      %v495 = vrot.slane %v493, 5
      %v496 = vor.u32 %v492, %v495
      %v497 = vrot.slane %v496, 4
      %v499 = vshll.u32 %v446, 16
      %v501 = vrot.slane %v499, 5
      %v502 = vsel %vm488, %v497, %v501
      %v503 = vshrl.u32 %v446, 16
      %v505 = vrot.slane %v503, 4
      %v506 = vor.u32 %v505, %v501
      %v507 = vrot.slane %v506, 4
      %v509 = vshll.u32 %v447, 16
      %v511 = vrot.slane %v509, 5
      %v512 = vsel %vm488, %v507, %v511
      %v513 = vshrl.u32 %v447, 16
      %v515 = vrot.slane %v513, 4
      %v516 = vor.u32 %v515, %v511
      %v517 = vrot.slane %v516, 4
      %v519 = vshll.u32 %v448, 16
      %v521 = vrot.slane %v519, 5
      %v522 = vsel %vm488, %v517, %v521
      %v523 = vshrl.u32 %v448, 16
      %v525 = vrot.slane %v523, 4
      %v526 = vor.u32 %v525, %v521
      %v527 = vrot.slane %v526, 4
      %v529 = vshll.u32 %v449, 16
      %v531 = vrot.slane %v529, 5
      %v532 = vsel %vm488, %v527, %v531
      %v533 = vshrl.u32 %v449, 16
      %v535 = vrot.slane %v533, 4
      %v536 = vor.u32 %v535, %v531
      %v537 = vrot.slane %v536, 4
      %v539 = vshll.u32 %v450, 16
      %v541 = vrot.slane %v539, 5
      %v542 = vsel %vm488, %v537, %v541
      %v543 = vshrl.u32 %v450, 16
      %v545 = vrot.slane %v543, 4
      %v546 = vor.u32 %v545, %v541
      %v547 = vrot.slane %v546, 4
      %v549 = vshll.u32 %v451, 16
      %v551 = vrot.slane %v549, 5
      %v552 = vsel %vm488, %v547, %v551
      %v553 = vshrl.u32 %v451, 16
      %v555 = vrot.slane %v553, 4
      %v556 = vor.u32 %v555, %v551
      %v557 = vrot.slane %v556, 4
      %v559 = vshll.u32 %v452, 16
      %v561 = vrot.slane %v559, 5
      %v562 = vsel %vm488, %v557, %v561
      %v563 = vshrl.u32 %v452, 16
      %v565 = vrot.slane %v563, 4
      %v566 = vor.u32 %v565, %v561
      %v567 = vrot.slane %v566, 4
      %v569 = vshll.u32 %v453, 16
      %v571 = vrot.slane %v569, 5
      %v572 = vsel %vm488, %v567, %v571
      %v573 = vshrl.u32 %v453, 16
      %v575 = vrot.slane %v573, 4
      %v576 = vor.u32 %v575, %v571
      %v577 = vrot.slane %v576, 4
      %v579 = vshll.u32 %v454, 16
      %v581 = vrot.slane %v579, 5
      %v582 = vsel %vm488, %v577, %v581
      %v583 = vshrl.u32 %v454, 16
      %v585 = vrot.slane %v583, 4
      %v586 = vor.u32 %v585, %v581
      %v587 = vrot.slane %v586, 4
      %v589 = vshll.u32 %v455, 16
      %v591 = vrot.slane %v589, 5
      %v592 = vsel %vm488, %v587, %v591
      %v593 = vshrl.u32 %v455, 16
      %v595 = vrot.slane %v593, 4
      %v596 = vor.u32 %v595, %v591
      %v597 = vrot.slane %v596, 4
      %v599 = vshll.u32 %v456, 16
      %v601 = vrot.slane %v599, 5
      %v602 = vsel %vm488, %v597, %v601
      %v603 = vshrl.u32 %v456, 16
      %v605 = vrot.slane %v603, 4
      %v606 = vor.u32 %v605, %v601
      %v607 = vrot.slane %v606, 4
      %v609 = vshll.u32 %v457, 16
      %v611 = vrot.slane %v609, 5
      %v612 = vsel %vm488, %v607, %v611
      %v613 = vshrl.u32 %v457, 16
      %v615 = vrot.slane %v613, 4
      %v616 = vor.u32 %v615, %v611
      %v617 = vrot.slane %v616, 4
      %618 = vrot.lane.b32.xlu0 %v502, 8
      %v619 = vpop.permute.xlu0 %618
      %620 = vrot.lane.b32.xlu0 %v512, 8
      %v621 = vpop.permute.xlu0 %620
      %622 = vrot.lane.b32.xlu0 %v522, 8
      %v623 = vpop.permute.xlu0 %622
      %624 = vrot.lane.b32.xlu0 %v532, 8
      %v625 = vpop.permute.xlu0 %624
      %626 = vrot.lane.b32.xlu0 %v542, 8
      %v627 = vpop.permute.xlu0 %626
      %628 = vrot.lane.b32.xlu0 %v552, 8
      %v629 = vpop.permute.xlu0 %628
      %630 = vrot.lane.b32.xlu0 %v562, 8
      %v631 = vpop.permute.xlu0 %630
      %632 = vrot.lane.b32.xlu0 %v572, 8
      %v633 = vpop.permute.xlu0 %632
      %634 = vrot.lane.b32.xlu0 %v582, 8
      %v635 = vpop.permute.xlu0 %634
      %636 = vrot.lane.b32.xlu0 %v592, 8
      %v637 = vpop.permute.xlu0 %636
      %638 = vrot.lane.b32.xlu0 %v602, 8
      %v639 = vpop.permute.xlu0 %638
      %640 = vrot.lane.b32.xlu0 %v612, 8
      %v641 = vpop.permute.xlu0 %640
      %642 = vrot.lane.b32.xlu0 %v617, 8
      %v643 = vpop.permute.xlu0 %642
      %vm657 = vcmask 126016
      %658 = vst.msk [vmem:[#allocation2] sm:$0xf] %vm657, %v619
      %659 = vst.msk [vmem:[#allocation2 + $0x8] sm:$0xf] %vm657, %v621
      %660 = vst.msk [vmem:[#allocation2 + $0x10] sm:$0xf] %vm657, %v623
      %661 = vst.msk [vmem:[#allocation2 + $0x18] sm:$0xf] %vm657, %v625
      %662 = vst.msk [vmem:[#allocation2 + $0x20] sm:$0xf] %vm657, %v627
      %663 = vst.msk [vmem:[#allocation2 + $0x28] sm:$0xf] %vm657, %v629
      %664 = vst.msk [vmem:[#allocation2 + $0x30] sm:$0xf] %vm657, %v631
      %665 = vst.msk [vmem:[#allocation2 + $0x38] sm:$0xf] %vm657, %v633
      %666 = vst.msk [vmem:[#allocation2 + $0x40] sm:$0xf] %vm657, %v635
      %667 = vst.msk [vmem:[#allocation2 + $0x48] sm:$0xf] %vm657, %v637
      %668 = vst.msk [vmem:[#allocation2 + $0x50] sm:$0xf] %vm657, %v639
      %669 = vst.msk [vmem:[#allocation2 + $0x58] sm:$0xf] %vm657, %v641
      %vm670 = vcmask 123968
      %671 = vst.msk [vmem:[#allocation2 + $0x60] sm:$0x3] %vm670, %v643
      %vm672 = vcmask 1042432
      %vm673 = vcmask 1046532
      %vm674 = vmor %vm672, %vm673
      %v675 = vrot.slane %v445, 5
      %v676 = vrot.slane %v675, 4
      %v677 = vrot.slane %v446, 5
      %v678 = vsel %vm674, %v676, %v677
      %v679 = vrot.slane %v677, 4
      %v680 = vrot.slane %v447, 5
      %v681 = vsel %vm674, %v679, %v680
      %v682 = vrot.slane %v680, 4
      %v683 = vrot.slane %v448, 5
      %v684 = vsel %vm674, %v682, %v683
      %v685 = vrot.slane %v683, 4
      %v686 = vrot.slane %v449, 5
      %v687 = vsel %vm674, %v685, %v686
      %v688 = vrot.slane %v686, 4
      %v689 = vrot.slane %v450, 5
      %v690 = vsel %vm674, %v688, %v689
      %v691 = vrot.slane %v689, 4
      %v692 = vrot.slane %v451, 5
      %v693 = vsel %vm674, %v691, %v692
      %v694 = vrot.slane %v692, 4
      %v695 = vrot.slane %v452, 5
      %v696 = vsel %vm674, %v694, %v695
      %v697 = vrot.slane %v695, 4
      %v698 = vrot.slane %v453, 5
      %v699 = vsel %vm674, %v697, %v698
      %v700 = vrot.slane %v698, 4
      %v701 = vrot.slane %v454, 5
      %v702 = vsel %vm674, %v700, %v701
      %v703 = vrot.slane %v701, 4
      %v704 = vrot.slane %v455, 5
      %v705 = vsel %vm674, %v703, %v704
      %v706 = vrot.slane %v704, 4
      %v707 = vrot.slane %v456, 5
      %v708 = vsel %vm674, %v706, %v707
      %v709 = vrot.slane %v707, 4
      %v710 = vrot.slane %v457, 5
      %v711 = vsel %vm674, %v709, %v710
      %v712 = vrot.slane %v710, 4
      %713 = vrot.lane.b32.xlu0 %v678, 16
      %v714 = vpop.permute.xlu0 %713
      %715 = vrot.lane.b32.xlu0 %v681, 16
      %v716 = vpop.permute.xlu0 %715
      %717 = vrot.lane.b32.xlu0 %v684, 16
      %v718 = vpop.permute.xlu0 %717
      %719 = vrot.lane.b32.xlu0 %v687, 16
      %v720 = vpop.permute.xlu0 %719
      %721 = vrot.lane.b32.xlu0 %v690, 16
      %v722 = vpop.permute.xlu0 %721
      %723 = vrot.lane.b32.xlu0 %v693, 16
      %v724 = vpop.permute.xlu0 %723
      %725 = vrot.lane.b32.xlu0 %v696, 16
      %v726 = vpop.permute.xlu0 %725
      %727 = vrot.lane.b32.xlu0 %v699, 16
      %v728 = vpop.permute.xlu0 %727
      %729 = vrot.lane.b32.xlu0 %v702, 16
      %v730 = vpop.permute.xlu0 %729
      %731 = vrot.lane.b32.xlu0 %v705, 16
      %v732 = vpop.permute.xlu0 %731
      %733 = vrot.lane.b32.xlu0 %v708, 16
      %v734 = vpop.permute.xlu0 %733
      %735 = vrot.lane.b32.xlu0 %v711, 16
      %v736 = vpop.permute.xlu0 %735
      %737 = vrot.lane.b32.xlu0 %v712, 16
      %v738 = vpop.permute.xlu0 %737
      %vm752 = vcmask 191616
      %753 = vst.msk [vmem:[#allocation2] sm:$0xf] %vm752, %v714
      %754 = vst.msk [vmem:[#allocation2 + $0x8] sm:$0xf] %vm752, %v716
      %755 = vst.msk [vmem:[#allocation2 + $0x10] sm:$0xf] %vm752, %v718
      %756 = vst.msk [vmem:[#allocation2 + $0x18] sm:$0xf] %vm752, %v720
      %757 = vst.msk [vmem:[#allocation2 + $0x20] sm:$0xf] %vm752, %v722
      %758 = vst.msk [vmem:[#allocation2 + $0x28] sm:$0xf] %vm752, %v724
      %759 = vst.msk [vmem:[#allocation2 + $0x30] sm:$0xf] %vm752, %v726
      %760 = vst.msk [vmem:[#allocation2 + $0x38] sm:$0xf] %vm752, %v728
      %761 = vst.msk [vmem:[#allocation2 + $0x40] sm:$0xf] %vm752, %v730
      %762 = vst.msk [vmem:[#allocation2 + $0x48] sm:$0xf] %vm752, %v732
      %763 = vst.msk [vmem:[#allocation2 + $0x50] sm:$0xf] %vm752, %v734
      %764 = vst.msk [vmem:[#allocation2 + $0x58] sm:$0xf] %vm752, %v736
      %vm765 = vcmask 189568
      %766 = vst.msk [vmem:[#allocation2 + $0x60] sm:$0x3] %vm765, %v738
      %v767 = vpack.c.bf16 %v404, %v403
      %v768 = vpack.c.bf16 %v406, %v405
      %v769 = vpack.c.bf16 %v408, %v407
      %v770 = vpack.c.bf16 %v410, %v409
      %v771 = vpack.c.bf16 %v412, %v411
      %v772 = vpack.c.bf16 %v414, %v413
      %v773 = vpack.c.bf16 %v415, %v415
      %v781 = vunpack.c.l.b16 %v767
      %v782 = vunpack.c.h.b16 %v767
      %v783 = vunpack.c.l.b16 %v768
      %v784 = vunpack.c.h.b16 %v768
      %v785 = vunpack.c.l.b16 %v769
      %v786 = vunpack.c.h.b16 %v769
      %v787 = vunpack.c.l.b16 %v770
      %v788 = vunpack.c.h.b16 %v770
      %v789 = vunpack.c.l.b16 %v771
      %v790 = vunpack.c.h.b16 %v771
      %v791 = vunpack.c.l.b16 %v772
      %v792 = vunpack.c.h.b16 %v772
      %v793 = vunpack.c.l.b16 %v773
      %v794 = vpack.c.b16 %v781, %v781
      %v795 = vpack.c.b16 %v782, %v782
      %v796 = vpack.c.b16 %v783, %v783
      %v797 = vpack.c.b16 %v784, %v784
      %v798 = vpack.c.b16 %v785, %v785
      %v799 = vpack.c.b16 %v786, %v786
      %v800 = vpack.c.b16 %v787, %v787
      %v801 = vpack.c.b16 %v788, %v788
      %v802 = vpack.c.b16 %v789, %v789
      %v803 = vpack.c.b16 %v790, %v790
      %v804 = vpack.c.b16 %v791, %v791
      %v805 = vpack.c.b16 %v792, %v792
      %v806 = vpack.c.b16 %v793, %v793
      %v807 = vrot.slane %v794, 5
      %v808 = vrot.slane %v807, 4
      %v809 = vrot.slane %v795, 5
      %v810 = vsel %vm674, %v808, %v809
      %v811 = vrot.slane %v809, 4
      %v812 = vrot.slane %v796, 5
      %v813 = vsel %vm674, %v811, %v812
      %v814 = vrot.slane %v812, 4
      %v815 = vrot.slane %v797, 5
      %v816 = vsel %vm674, %v814, %v815
      %v817 = vrot.slane %v815, 4
      %v818 = vrot.slane %v798, 5
      %v819 = vsel %vm674, %v817, %v818
      %v820 = vrot.slane %v818, 4
      %v821 = vrot.slane %v799, 5
      %v822 = vsel %vm674, %v820, %v821
      %v823 = vrot.slane %v821, 4
      %v824 = vrot.slane %v800, 5
      %v825 = vsel %vm674, %v823, %v824
      %v826 = vrot.slane %v824, 4
      %v827 = vrot.slane %v801, 5
      %v828 = vsel %vm674, %v826, %v827
      %v829 = vrot.slane %v827, 4
      %v830 = vrot.slane %v802, 5
      %v831 = vsel %vm674, %v829, %v830
      %v832 = vrot.slane %v830, 4
      %v833 = vrot.slane %v803, 5
      %v834 = vsel %vm674, %v832, %v833
      %v835 = vrot.slane %v833, 4
      %v836 = vrot.slane %v804, 5
      %v837 = vsel %vm674, %v835, %v836
      %v838 = vrot.slane %v836, 4
      %v839 = vrot.slane %v805, 5
      %v840 = vsel %vm674, %v838, %v839
      %v841 = vrot.slane %v839, 4
      %v842 = vrot.slane %v806, 5
      %v843 = vsel %vm674, %v841, %v842
      %v844 = vrot.slane %v842, 4
      %845 = vrot.lane.b32.xlu0 %v810, 24
      %v846 = vpop.permute.xlu0 %845
      %847 = vrot.lane.b32.xlu0 %v813, 24
      %v848 = vpop.permute.xlu0 %847
      %849 = vrot.lane.b32.xlu0 %v816, 24
      %v850 = vpop.permute.xlu0 %849
      %851 = vrot.lane.b32.xlu0 %v819, 24
      %v852 = vpop.permute.xlu0 %851
      %853 = vrot.lane.b32.xlu0 %v822, 24
      %v854 = vpop.permute.xlu0 %853
      %855 = vrot.lane.b32.xlu0 %v825, 24
      %v856 = vpop.permute.xlu0 %855
      %857 = vrot.lane.b32.xlu0 %v828, 24
      %v858 = vpop.permute.xlu0 %857
      %859 = vrot.lane.b32.xlu0 %v831, 24
      %v860 = vpop.permute.xlu0 %859
      %861 = vrot.lane.b32.xlu0 %v834, 24
      %v862 = vpop.permute.xlu0 %861
      %863 = vrot.lane.b32.xlu0 %v837, 24
      %v864 = vpop.permute.xlu0 %863
      %865 = vrot.lane.b32.xlu0 %v840, 24
      %v866 = vpop.permute.xlu0 %865
      %867 = vrot.lane.b32.xlu0 %v843, 24
      %v868 = vpop.permute.xlu0 %867
      %869 = vrot.lane.b32.xlu0 %v844, 24
      %v870 = vpop.permute.xlu0 %869
      %vm884 = vcmask 257216
      %885 = vst.msk [vmem:[#allocation2] sm:$0xf] %vm884, %v846
      %886 = vst.msk [vmem:[#allocation2 + $0x8] sm:$0xf] %vm884, %v848
      %887 = vst.msk [vmem:[#allocation2 + $0x10] sm:$0xf] %vm884, %v850
      %888 = vst.msk [vmem:[#allocation2 + $0x18] sm:$0xf] %vm884, %v852
      %889 = vst.msk [vmem:[#allocation2 + $0x20] sm:$0xf] %vm884, %v854
      %890 = vst.msk [vmem:[#allocation2 + $0x28] sm:$0xf] %vm884, %v856
      %891 = vst.msk [vmem:[#allocation2 + $0x30] sm:$0xf] %vm884, %v858
      %892 = vst.msk [vmem:[#allocation2 + $0x38] sm:$0xf] %vm884, %v860
      %893 = vst.msk [vmem:[#allocation2 + $0x40] sm:$0xf] %vm884, %v862
      %894 = vst.msk [vmem:[#allocation2 + $0x48] sm:$0xf] %vm884, %v864
      %895 = vst.msk [vmem:[#allocation2 + $0x50] sm:$0xf] %vm884, %v866
      %896 = vst.msk [vmem:[#allocation2 + $0x58] sm:$0xf] %vm884, %v868
      %vm897 = vcmask 255168
      %898 = vst.msk [vmem:[#allocation2 + $0x60] sm:$0x3] %vm897, %v870
      %vm899 = vsmask.f32 2304
      %vm900 = vsmask.f32 6416
      %vm901 = vmor %vm899, %vm900
      %v903 = vshrl.u32 %v794, 16
      %v905 = vrot.slane %v903, 5
      %v906 = vshll.u32 %v794, 16
      %v908 = vrot.slane %v906, 6
      %v909 = vor.u32 %v905, %v908
      %v910 = vrot.slane %v909, 4
      %v912 = vshrl.u32 %v795, 16
      %v914 = vrot.slane %v912, 5
      %v915 = vshll.u32 %v795, 16
      %v917 = vrot.slane %v915, 6
      %v918 = vor.u32 %v914, %v917
      %v919 = vsel %vm901, %v910, %v918
      %v920 = vrot.slane %v918, 4
      %v922 = vshrl.u32 %v796, 16
      %v924 = vrot.slane %v922, 5
      %v925 = vshll.u32 %v796, 16
      %v927 = vrot.slane %v925, 6
      %v928 = vor.u32 %v924, %v927
      %v929 = vsel %vm901, %v920, %v928
      %v930 = vrot.slane %v928, 4
      %v932 = vshrl.u32 %v797, 16
      %v934 = vrot.slane %v932, 5
      %v935 = vshll.u32 %v797, 16
      %v937 = vrot.slane %v935, 6
      %v938 = vor.u32 %v934, %v937
      %v939 = vsel %vm901, %v930, %v938
      %v940 = vrot.slane %v938, 4
      %v942 = vshrl.u32 %v798, 16
      %v944 = vrot.slane %v942, 5
      %v945 = vshll.u32 %v798, 16
      %v947 = vrot.slane %v945, 6
      %v948 = vor.u32 %v944, %v947
      %v949 = vsel %vm901, %v940, %v948
      %v950 = vrot.slane %v948, 4
      %v952 = vshrl.u32 %v799, 16
      %v954 = vrot.slane %v952, 5
      %v955 = vshll.u32 %v799, 16
      %v957 = vrot.slane %v955, 6
      %v958 = vor.u32 %v954, %v957
      %v959 = vsel %vm901, %v950, %v958
      %v960 = vrot.slane %v958, 4
      %v962 = vshrl.u32 %v800, 16
      %v964 = vrot.slane %v962, 5
      %v965 = vshll.u32 %v800, 16
      %v967 = vrot.slane %v965, 6
      %v968 = vor.u32 %v964, %v967
      %v969 = vsel %vm901, %v960, %v968
      %v970 = vrot.slane %v968, 4
      %v972 = vshrl.u32 %v801, 16
      %v974 = vrot.slane %v972, 5
      %v975 = vshll.u32 %v801, 16
      %v977 = vrot.slane %v975, 6
      %v978 = vor.u32 %v974, %v977
      %v979 = vsel %vm901, %v970, %v978
      %v980 = vrot.slane %v978, 4
      %v982 = vshrl.u32 %v802, 16
      %v984 = vrot.slane %v982, 5
      %v985 = vshll.u32 %v802, 16
      %v987 = vrot.slane %v985, 6
      %v988 = vor.u32 %v984, %v987
      %v989 = vsel %vm901, %v980, %v988
      %v990 = vrot.slane %v988, 4
      %v992 = vshrl.u32 %v803, 16
      %v994 = vrot.slane %v992, 5
      %v995 = vshll.u32 %v803, 16
      %v997 = vrot.slane %v995, 6
      %v998 = vor.u32 %v994, %v997
      %v999 = vsel %vm901, %v990, %v998
      %v1000 = vrot.slane %v998, 4
      %v1002 = vshrl.u32 %v804, 16
      %v1004 = vrot.slane %v1002, 5
      %v1005 = vshll.u32 %v804, 16
      %v1007 = vrot.slane %v1005, 6
      %v1008 = vor.u32 %v1004, %v1007
      %v1009 = vsel %vm901, %v1000, %v1008
      %v1010 = vrot.slane %v1008, 4
      %v1012 = vshrl.u32 %v805, 16
      %v1014 = vrot.slane %v1012, 5
      %v1015 = vshll.u32 %v805, 16
      %v1017 = vrot.slane %v1015, 6
      %v1018 = vor.u32 %v1014, %v1017
      %v1019 = vsel %vm901, %v1010, %v1018
      %v1020 = vrot.slane %v1018, 4
      %v1022 = vshrl.u32 %v806, 16
      %v1024 = vrot.slane %v1022, 5
      %v1025 = vshll.u32 %v806, 16
      %v1027 = vrot.slane %v1025, 6
      %v1028 = vor.u32 %v1024, %v1027
      %v1029 = vsel %vm901, %v1020, %v1028
      %v1030 = vrot.slane %v1028, 4
      %1031 = vrot.lane.b32.xlu0 %v919, 32
      %v1032 = vpop.permute.xlu0 %1031
      %1033 = vrot.lane.b32.xlu0 %v929, 32
      %v1034 = vpop.permute.xlu0 %1033
      %1035 = vrot.lane.b32.xlu0 %v939, 32
      %v1036 = vpop.permute.xlu0 %1035
      %1037 = vrot.lane.b32.xlu0 %v949, 32
      %v1038 = vpop.permute.xlu0 %1037
      %1039 = vrot.lane.b32.xlu0 %v959, 32
      %v1040 = vpop.permute.xlu0 %1039
      %1041 = vrot.lane.b32.xlu0 %v969, 32
      %v1042 = vpop.permute.xlu0 %1041
      %1043 = vrot.lane.b32.xlu0 %v979, 32
      %v1044 = vpop.permute.xlu0 %1043
      %1045 = vrot.lane.b32.xlu0 %v989, 32
      %v1046 = vpop.permute.xlu0 %1045
      %1047 = vrot.lane.b32.xlu0 %v999, 32
      %v1048 = vpop.permute.xlu0 %1047
      %1049 = vrot.lane.b32.xlu0 %v1009, 32
      %v1050 = vpop.permute.xlu0 %1049
      %1051 = vrot.lane.b32.xlu0 %v1019, 32
      %v1052 = vpop.permute.xlu0 %1051
      %1053 = vrot.lane.b32.xlu0 %v1029, 32
      %v1054 = vpop.permute.xlu0 %1053
      %1055 = vrot.lane.b32.xlu0 %v1030, 32
      %v1056 = vpop.permute.xlu0 %1055
      %vm1070 = vcmask 322816
      %1071 = vst.msk [vmem:[#allocation2] sm:$0xf] %vm1070, %v1032
      %1072 = vst.msk [vmem:[#allocation2 + $0x8] sm:$0xf] %vm1070, %v1034
      %1073 = vst.msk [vmem:[#allocation2 + $0x10] sm:$0xf] %vm1070, %v1036
      %1074 = vst.msk [vmem:[#allocation2 + $0x18] sm:$0xf] %vm1070, %v1038
      %1075 = vst.msk [vmem:[#allocation2 + $0x20] sm:$0xf] %vm1070, %v1040
      %1076 = vst.msk [vmem:[#allocation2 + $0x28] sm:$0xf] %vm1070, %v1042
      %1077 = vst.msk [vmem:[#allocation2 + $0x30] sm:$0xf] %vm1070, %v1044
      %1078 = vst.msk [vmem:[#allocation2 + $0x38] sm:$0xf] %vm1070, %v1046
      %1079 = vst.msk [vmem:[#allocation2 + $0x40] sm:$0xf] %vm1070, %v1048
      %1080 = vst.msk [vmem:[#allocation2 + $0x48] sm:$0xf] %vm1070, %v1050
      %1081 = vst.msk [vmem:[#allocation2 + $0x50] sm:$0xf] %vm1070, %v1052
      %1082 = vst.msk [vmem:[#allocation2 + $0x58] sm:$0xf] %vm1070, %v1054
      %vm1083 = vcmask 320768
      %1084 = vst.msk [vmem:[#allocation2 + $0x60] sm:$0x3] %vm1083, %v1056
      %vm1085 = vcmask 1041408
      %vm1086 = vcmask 1045508
      %vm1087 = vmor %vm1085, %vm1086
      %v1088 = vrot.slane %v794, 6
      %v1089 = vrot.slane %v1088, 4
      %v1090 = vrot.slane %v795, 6
      %v1091 = vsel %vm1087, %v1089, %v1090
      %v1092 = vrot.slane %v1090, 4
      %v1093 = vrot.slane %v796, 6
      %v1094 = vsel %vm1087, %v1092, %v1093
      %v1095 = vrot.slane %v1093, 4
      %v1096 = vrot.slane %v797, 6
      %v1097 = vsel %vm1087, %v1095, %v1096
      %v1098 = vrot.slane %v1096, 4
      %v1099 = vrot.slane %v798, 6
      %v1100 = vsel %vm1087, %v1098, %v1099
      %v1101 = vrot.slane %v1099, 4
      %v1102 = vrot.slane %v799, 6
      %v1103 = vsel %vm1087, %v1101, %v1102
      %v1104 = vrot.slane %v1102, 4
      %v1105 = vrot.slane %v800, 6
      %v1106 = vsel %vm1087, %v1104, %v1105
      %v1107 = vrot.slane %v1105, 4
      %v1108 = vrot.slane %v801, 6
      %v1109 = vsel %vm1087, %v1107, %v1108
      %v1110 = vrot.slane %v1108, 4
      %v1111 = vrot.slane %v802, 6
      %v1112 = vsel %vm1087, %v1110, %v1111
      %v1113 = vrot.slane %v1111, 4
      %v1114 = vrot.slane %v803, 6
      %v1115 = vsel %vm1087, %v1113, %v1114
      %v1116 = vrot.slane %v1114, 4
      %v1117 = vrot.slane %v804, 6
      %v1118 = vsel %vm1087, %v1116, %v1117
      %v1119 = vrot.slane %v1117, 4
      %v1120 = vrot.slane %v805, 6
      %v1121 = vsel %vm1087, %v1119, %v1120
      %v1122 = vrot.slane %v1120, 4
      %v1123 = vrot.slane %v806, 6
      %v1124 = vsel %vm1087, %v1122, %v1123
      %v1125 = vrot.slane %v1123, 4
      %1126 = vrot.lane.b32.xlu0 %v1091, 40
      %v1127 = vpop.permute.xlu0 %1126
      %1128 = vrot.lane.b32.xlu0 %v1094, 40
      %v1129 = vpop.permute.xlu0 %1128
      %1130 = vrot.lane.b32.xlu0 %v1097, 40
      %v1131 = vpop.permute.xlu0 %1130
      %1132 = vrot.lane.b32.xlu0 %v1100, 40
      %v1133 = vpop.permute.xlu0 %1132
      %1134 = vrot.lane.b32.xlu0 %v1103, 40
      %v1135 = vpop.permute.xlu0 %1134
      %1136 = vrot.lane.b32.xlu0 %v1106, 40
      %v1137 = vpop.permute.xlu0 %1136
      %1138 = vrot.lane.b32.xlu0 %v1109, 40
      %v1139 = vpop.permute.xlu0 %1138
      %1140 = vrot.lane.b32.xlu0 %v1112, 40
      %v1141 = vpop.permute.xlu0 %1140
      %1142 = vrot.lane.b32.xlu0 %v1115, 40
      %v1143 = vpop.permute.xlu0 %1142
      %1144 = vrot.lane.b32.xlu0 %v1118, 40
      %v1145 = vpop.permute.xlu0 %1144
      %1146 = vrot.lane.b32.xlu0 %v1121, 40
      %v1147 = vpop.permute.xlu0 %1146
      %1148 = vrot.lane.b32.xlu0 %v1124, 40
      %v1149 = vpop.permute.xlu0 %1148
      %1150 = vrot.lane.b32.xlu0 %v1125, 40
      %v1151 = vpop.permute.xlu0 %1150
      %vm1165 = vcmask 388416
      %1166 = vst.msk [vmem:[#allocation2] sm:$0xf] %vm1165, %v1127
      %1167 = vst.msk [vmem:[#allocation2 + $0x8] sm:$0xf] %vm1165, %v1129
      %1168 = vst.msk [vmem:[#allocation2 + $0x10] sm:$0xf] %vm1165, %v1131
      %1169 = vst.msk [vmem:[#allocation2 + $0x18] sm:$0xf] %vm1165, %v1133
      %1170 = vst.msk [vmem:[#allocation2 + $0x20] sm:$0xf] %vm1165, %v1135
      %1171 = vst.msk [vmem:[#allocation2 + $0x28] sm:$0xf] %vm1165, %v1137
      %1172 = vst.msk [vmem:[#allocation2 + $0x30] sm:$0xf] %vm1165, %v1139
      %1173 = vst.msk [vmem:[#allocation2 + $0x38] sm:$0xf] %vm1165, %v1141
      %1174 = vst.msk [vmem:[#allocation2 + $0x40] sm:$0xf] %vm1165, %v1143
      %1175 = vst.msk [vmem:[#allocation2 + $0x48] sm:$0xf] %vm1165, %v1145
      %1176 = vst.msk [vmem:[#allocation2 + $0x50] sm:$0xf] %vm1165, %v1147
      %1177 = vst.msk [vmem:[#allocation2 + $0x58] sm:$0xf] %vm1165, %v1149
      %vm1178 = vcmask 386368
      %1179 = vst.msk [vmem:[#allocation2 + $0x60] sm:$0x3] %vm1178, %v1151
      %v1180 = vpack.c.bf16 %v415, %v414
      %v1181 = vpack.c.bf16 %v416, %v416
      %v1184 = vunpack.c.l.b16 %v1180
      %v1185 = vunpack.c.h.b16 %v1180
      %v1186 = vunpack.c.l.b16 %v1181
      %v1187 = vpack.c.b16 %v1184, %v1184
      %v1188 = vpack.c.b16 %v1185, %v1185
      %v1189 = vpack.c.b16 %v1186, %v1186
      %v1190 = vrot.slane %v447, 6
      %v1191 = vrot.slane %v1190, 4
      %v1192 = vrot.slane %v448, 6
      %v1193 = vsel %vm1087, %v1191, %v1192
      %v1194 = vrot.slane %v1192, 4
      %v1195 = vrot.slane %v449, 6
      %v1196 = vsel %vm1087, %v1194, %v1195
      %v1197 = vrot.slane %v1195, 4
      %v1198 = vrot.slane %v450, 6
      %v1199 = vsel %vm1087, %v1197, %v1198
      %v1200 = vrot.slane %v1198, 4
      %v1201 = vrot.slane %v451, 6
      %v1202 = vsel %vm1087, %v1200, %v1201
      %v1203 = vrot.slane %v1201, 4
      %v1204 = vrot.slane %v452, 6
      %v1205 = vsel %vm1087, %v1203, %v1204
      %v1206 = vrot.slane %v1204, 4
      %v1207 = vrot.slane %v453, 6
      %v1208 = vsel %vm1087, %v1206, %v1207
      %v1209 = vrot.slane %v1207, 4
      %v1210 = vrot.slane %v454, 6
      %v1211 = vsel %vm1087, %v1209, %v1210
      %v1212 = vrot.slane %v1210, 4
      %v1213 = vrot.slane %v455, 6
      %v1214 = vsel %vm1087, %v1212, %v1213
      %v1215 = vrot.slane %v1213, 4
      %v1216 = vrot.slane %v456, 6
      %v1217 = vsel %vm1087, %v1215, %v1216
      %v1218 = vrot.slane %v1216, 4
      %v1219 = vrot.slane %v1187, 6
      %v1220 = vsel %vm1087, %v1218, %v1219
      %v1221 = vrot.slane %v1219, 4
      %v1222 = vrot.slane %v1188, 6
      %v1223 = vsel %vm1087, %v1221, %v1222
      %v1224 = vrot.slane %v1222, 4
      %v1225 = vrot.slane %v1189, 6
      %v1226 = vsel %vm1087, %v1224, %v1225
      %v1227 = vrot.slane %v1225, 4
      %1228 = vrot.lane.b32.xlu0 %v1193, 48
      %v1229 = vpop.permute.xlu0 %1228
      %1230 = vrot.lane.b32.xlu0 %v1196, 48
      %v1231 = vpop.permute.xlu0 %1230
      %1232 = vrot.lane.b32.xlu0 %v1199, 48
      %v1233 = vpop.permute.xlu0 %1232
      %1234 = vrot.lane.b32.xlu0 %v1202, 48
      %v1235 = vpop.permute.xlu0 %1234
      %1236 = vrot.lane.b32.xlu0 %v1205, 48
      %v1237 = vpop.permute.xlu0 %1236
      %1238 = vrot.lane.b32.xlu0 %v1208, 48
      %v1239 = vpop.permute.xlu0 %1238
      %1240 = vrot.lane.b32.xlu0 %v1211, 48
      %v1241 = vpop.permute.xlu0 %1240
      %1242 = vrot.lane.b32.xlu0 %v1214, 48
      %v1243 = vpop.permute.xlu0 %1242
      %1244 = vrot.lane.b32.xlu0 %v1217, 48
      %v1245 = vpop.permute.xlu0 %1244
      %1246 = vrot.lane.b32.xlu0 %v1220, 48
      %v1247 = vpop.permute.xlu0 %1246
      %1248 = vrot.lane.b32.xlu0 %v1223, 48
      %v1249 = vpop.permute.xlu0 %1248
      %1250 = vrot.lane.b32.xlu0 %v1226, 48
      %v1251 = vpop.permute.xlu0 %1250
      %1252 = vrot.lane.b32.xlu0 %v1227, 48
      %v1253 = vpop.permute.xlu0 %1252
      %vm1267 = vcmask 454016
      %1268 = vst.msk [vmem:[#allocation2] sm:$0xf] %vm1267, %v1229
      %1269 = vst.msk [vmem:[#allocation2 + $0x8] sm:$0xf] %vm1267, %v1231
      %1270 = vst.msk [vmem:[#allocation2 + $0x10] sm:$0xf] %vm1267, %v1233
      %1271 = vst.msk [vmem:[#allocation2 + $0x18] sm:$0xf] %vm1267, %v1235
      %1272 = vst.msk [vmem:[#allocation2 + $0x20] sm:$0xf] %vm1267, %v1237
      %1273 = vst.msk [vmem:[#allocation2 + $0x28] sm:$0xf] %vm1267, %v1239
      %1274 = vst.msk [vmem:[#allocation2 + $0x30] sm:$0xf] %vm1267, %v1241
      %1275 = vst.msk [vmem:[#allocation2 + $0x38] sm:$0xf] %vm1267, %v1243
      %1276 = vst.msk [vmem:[#allocation2 + $0x40] sm:$0xf] %vm1267, %v1245
      %1277 = vst.msk [vmem:[#allocation2 + $0x48] sm:$0xf] %vm1267, %v1247
      %1278 = vst.msk [vmem:[#allocation2 + $0x50] sm:$0xf] %vm1267, %v1249
      %1279 = vst.msk [vmem:[#allocation2 + $0x58] sm:$0xf] %vm1267, %v1251
      %vm1280 = vcmask 451968
      %1281 = vst.msk [vmem:[#allocation2 + $0x60] sm:$0x3] %vm1280, %v1253
      %v1282 = vpack.c.bf16 %v417, %v416
      %v1284 = vunpack.c.l.b16 %v1282
      %v1285 = vunpack.c.h.b16 %v1282
      %v1286 = vpack.c.b16 %v1284, %v1284
      %v1287 = vpack.c.b16 %v1285, %v1285
      %vm1288 = vsmask.f32 1280
      %vm1289 = vsmask.f32 5392
      %vm1290 = vmor %vm1288, %vm1289
      %v1291 = vrot.slane %v513, 6
      %v1292 = vrot.slane %v509, 7
      %v1293 = vor.u32 %v1291, %v1292
      %v1294 = vrot.slane %v1293, 4
      %v1295 = vrot.slane %v523, 6
      %v1296 = vrot.slane %v519, 7
      %v1297 = vor.u32 %v1295, %v1296
      %v1298 = vsel %vm1290, %v1294, %v1297
      %v1299 = vrot.slane %v1297, 4
      %v1300 = vrot.slane %v533, 6
      %v1301 = vrot.slane %v529, 7
      %v1302 = vor.u32 %v1300, %v1301
      %v1303 = vsel %vm1290, %v1299, %v1302
      %v1304 = vrot.slane %v1302, 4
      %v1305 = vrot.slane %v543, 6
      %v1306 = vrot.slane %v539, 7
      %v1307 = vor.u32 %v1305, %v1306
      %v1308 = vsel %vm1290, %v1304, %v1307
      %v1309 = vrot.slane %v1307, 4
      %v1310 = vrot.slane %v553, 6
      %v1311 = vrot.slane %v549, 7
      %v1312 = vor.u32 %v1310, %v1311
      %v1313 = vsel %vm1290, %v1309, %v1312
      %v1314 = vrot.slane %v1312, 4
      %v1315 = vrot.slane %v563, 6
      %v1316 = vrot.slane %v559, 7
      %v1317 = vor.u32 %v1315, %v1316
      %v1318 = vsel %vm1290, %v1314, %v1317
      %v1319 = vrot.slane %v1317, 4
      %v1320 = vrot.slane %v573, 6
      %v1321 = vrot.slane %v569, 7
      %v1322 = vor.u32 %v1320, %v1321
      %v1323 = vsel %vm1290, %v1319, %v1322
      %v1324 = vrot.slane %v1322, 4
      %v1325 = vrot.slane %v583, 6
      %v1326 = vrot.slane %v579, 7
      %v1327 = vor.u32 %v1325, %v1326
      %v1328 = vsel %vm1290, %v1324, %v1327
      %v1329 = vrot.slane %v1327, 4
      %v1330 = vrot.slane %v593, 6
      %v1331 = vrot.slane %v589, 7
      %v1332 = vor.u32 %v1330, %v1331
      %v1333 = vsel %vm1290, %v1329, %v1332
      %v1334 = vrot.slane %v1332, 4
      %v1335 = vrot.slane %v603, 6
      %v1336 = vrot.slane %v599, 7
      %v1337 = vor.u32 %v1335, %v1336
      %v1338 = vsel %vm1290, %v1334, %v1337
      %v1339 = vrot.slane %v1337, 4
      %v1341 = vshrl.u32 %v1187, 16
      %v1343 = vrot.slane %v1341, 6
      %v1344 = vshll.u32 %v1187, 16
      %v1346 = vrot.slane %v1344, 7
      %v1347 = vor.u32 %v1343, %v1346
      %v1348 = vsel %vm1290, %v1339, %v1347
      %v1349 = vrot.slane %v1347, 4
      %v1351 = vshrl.u32 %v1188, 16
      %v1353 = vrot.slane %v1351, 6
      %v1354 = vshll.u32 %v1188, 16
      %v1356 = vrot.slane %v1354, 7
      %v1357 = vor.u32 %v1353, %v1356
      %v1358 = vsel %vm1290, %v1349, %v1357
      %v1359 = vrot.slane %v1357, 4
      %v1361 = vshrl.u32 %v1286, 16
      %v1363 = vrot.slane %v1361, 6
      %v1364 = vshll.u32 %v1286, 16
      %v1366 = vrot.slane %v1364, 7
      %v1367 = vor.u32 %v1363, %v1366
      %v1368 = vsel %vm1290, %v1359, %v1367
      %v1369 = vrot.slane %v1367, 4
      %v1371 = vshll.u32 %v1287, 16
      %v1373 = vrot.slane %v1371, 7
      %v1374 = vsel %vm1290, %v1369, %v1373
      %1375 = vrot.lane.b32.xlu0 %v1298, 56
      %v1376 = vpop.permute.xlu0 %1375
      %1377 = vrot.lane.b32.xlu0 %v1303, 56
      %v1378 = vpop.permute.xlu0 %1377
      %1379 = vrot.lane.b32.xlu0 %v1308, 56
      %v1380 = vpop.permute.xlu0 %1379
      %1381 = vrot.lane.b32.xlu0 %v1313, 56
      %v1382 = vpop.permute.xlu0 %1381
      %1383 = vrot.lane.b32.xlu0 %v1318, 56
      %v1384 = vpop.permute.xlu0 %1383
      %1385 = vrot.lane.b32.xlu0 %v1323, 56
      %v1386 = vpop.permute.xlu0 %1385
      %1387 = vrot.lane.b32.xlu0 %v1328, 56
      %v1388 = vpop.permute.xlu0 %1387
      %1389 = vrot.lane.b32.xlu0 %v1333, 56
      %v1390 = vpop.permute.xlu0 %1389
      %1391 = vrot.lane.b32.xlu0 %v1338, 56
      %v1392 = vpop.permute.xlu0 %1391
      %1393 = vrot.lane.b32.xlu0 %v1348, 56
      %v1394 = vpop.permute.xlu0 %1393
      %1395 = vrot.lane.b32.xlu0 %v1358, 56
      %v1396 = vpop.permute.xlu0 %1395
      %1397 = vrot.lane.b32.xlu0 %v1368, 56
      %v1398 = vpop.permute.xlu0 %1397
      %1399 = vrot.lane.b32.xlu0 %v1374, 56
      %v1400 = vpop.permute.xlu0 %1399
      %vm1414 = vcmask 519616
      %1415 = vst.msk [vmem:[#allocation2] sm:$0xf] %vm1414, %v1376
      %1416 = vst.msk [vmem:[#allocation2 + $0x8] sm:$0xf] %vm1414, %v1378
      %1417 = vst.msk [vmem:[#allocation2 + $0x10] sm:$0xf] %vm1414, %v1380
      %1418 = vst.msk [vmem:[#allocation2 + $0x18] sm:$0xf] %vm1414, %v1382
      %1419 = vst.msk [vmem:[#allocation2 + $0x20] sm:$0xf] %vm1414, %v1384
      %1420 = vst.msk [vmem:[#allocation2 + $0x28] sm:$0xf] %vm1414, %v1386
      %1421 = vst.msk [vmem:[#allocation2 + $0x30] sm:$0xf] %vm1414, %v1388
      %1422 = vst.msk [vmem:[#allocation2 + $0x38] sm:$0xf] %vm1414, %v1390
      %1423 = vst.msk [vmem:[#allocation2 + $0x40] sm:$0xf] %vm1414, %v1392
      %1424 = vst.msk [vmem:[#allocation2 + $0x48] sm:$0xf] %vm1414, %v1394
      %1425 = vst.msk [vmem:[#allocation2 + $0x50] sm:$0xf] %vm1414, %v1396
      %1426 = vst.msk [vmem:[#allocation2 + $0x58] sm:$0xf] %vm1414, %v1398
      %vm1427 = vcmask 517568
      %1428 = vst.msk [vmem:[#allocation2 + $0x60] sm:$0x3] %vm1427, %v1400
      %vm1429 = vcmask 1040384
      %vm1430 = vcmask 1044484
      %vm1431 = vmor %vm1429, %vm1430
      %v1432 = vrot.slane %v447, 7
      %v1433 = vrot.slane %v1432, 4
      %v1434 = vrot.slane %v448, 7
      %v1435 = vsel %vm1431, %v1433, %v1434
      %v1436 = vrot.slane %v1434, 4
      %v1437 = vrot.slane %v449, 7
      %v1438 = vsel %vm1431, %v1436, %v1437
      %v1439 = vrot.slane %v1437, 4
      %v1440 = vrot.slane %v450, 7
      %v1441 = vsel %vm1431, %v1439, %v1440
      %v1442 = vrot.slane %v1440, 4
      %v1443 = vrot.slane %v451, 7
      %v1444 = vsel %vm1431, %v1442, %v1443
      %v1445 = vrot.slane %v1443, 4
      %v1446 = vrot.slane %v452, 7
      %v1447 = vsel %vm1431, %v1445, %v1446
      %v1448 = vrot.slane %v1446, 4
      %v1449 = vrot.slane %v453, 7
      %v1450 = vsel %vm1431, %v1448, %v1449
      %v1451 = vrot.slane %v1449, 4
      %v1452 = vrot.slane %v454, 7
      %v1453 = vsel %vm1431, %v1451, %v1452
      %v1454 = vrot.slane %v1452, 4
      %v1455 = vrot.slane %v455, 7
      %v1456 = vsel %vm1431, %v1454, %v1455
      %v1457 = vrot.slane %v1455, 4
      %v1458 = vrot.slane %v456, 7
      %v1459 = vsel %vm1431, %v1457, %v1458
      %v1460 = vrot.slane %v1458, 4
      %v1461 = vrot.slane %v1187, 7
      %v1462 = vsel %vm1431, %v1460, %v1461
      %v1463 = vrot.slane %v1461, 4
      %v1464 = vrot.slane %v1188, 7
      %v1465 = vsel %vm1431, %v1463, %v1464
      %v1466 = vrot.slane %v1464, 4
      %v1467 = vrot.slane %v1286, 7
      %v1468 = vsel %vm1431, %v1466, %v1467
      %v1469 = vrot.slane %v1467, 4
      %v1470 = vrot.slane %v1287, 7
      %v1471 = vsel %vm1431, %v1469, %v1470
      %1472 = vrot.lane.b32.xlu0 %v1435, 64
      %v1473 = vpop.permute.xlu0 %1472
      %1474 = vrot.lane.b32.xlu0 %v1438, 64
      %v1475 = vpop.permute.xlu0 %1474
      %1476 = vrot.lane.b32.xlu0 %v1441, 64
      %v1477 = vpop.permute.xlu0 %1476
      %1478 = vrot.lane.b32.xlu0 %v1444, 64
      %v1479 = vpop.permute.xlu0 %1478
      %1480 = vrot.lane.b32.xlu0 %v1447, 64
      %v1481 = vpop.permute.xlu0 %1480
      %1482 = vrot.lane.b32.xlu0 %v1450, 64
      %v1483 = vpop.permute.xlu0 %1482
      %1484 = vrot.lane.b32.xlu0 %v1453, 64
      %v1485 = vpop.permute.xlu0 %1484
      %1486 = vrot.lane.b32.xlu0 %v1456, 64
      %v1487 = vpop.permute.xlu0 %1486
      %1488 = vrot.lane.b32.xlu0 %v1459, 64
      %v1489 = vpop.permute.xlu0 %1488
      %1490 = vrot.lane.b32.xlu0 %v1462, 64
      %v1491 = vpop.permute.xlu0 %1490
      %1492 = vrot.lane.b32.xlu0 %v1465, 64
      %v1493 = vpop.permute.xlu0 %1492
      %1494 = vrot.lane.b32.xlu0 %v1468, 64
      %v1495 = vpop.permute.xlu0 %1494
      %1496 = vrot.lane.b32.xlu0 %v1471, 64
      %v1497 = vpop.permute.xlu0 %1496
      %vm1511 = vcmask 585216
      %1512 = vst.msk [vmem:[#allocation2] sm:$0xf] %vm1511, %v1473
      %1513 = vst.msk [vmem:[#allocation2 + $0x8] sm:$0xf] %vm1511, %v1475
      %1514 = vst.msk [vmem:[#allocation2 + $0x10] sm:$0xf] %vm1511, %v1477
      %1515 = vst.msk [vmem:[#allocation2 + $0x18] sm:$0xf] %vm1511, %v1479
      %1516 = vst.msk [vmem:[#allocation2 + $0x20] sm:$0xf] %vm1511, %v1481
      %1517 = vst.msk [vmem:[#allocation2 + $0x28] sm:$0xf] %vm1511, %v1483
      %1518 = vst.msk [vmem:[#allocation2 + $0x30] sm:$0xf] %vm1511, %v1485
      %1519 = vst.msk [vmem:[#allocation2 + $0x38] sm:$0xf] %vm1511, %v1487
      %1520 = vst.msk [vmem:[#allocation2 + $0x40] sm:$0xf] %vm1511, %v1489
      %1521 = vst.msk [vmem:[#allocation2 + $0x48] sm:$0xf] %vm1511, %v1491
      %1522 = vst.msk [vmem:[#allocation2 + $0x50] sm:$0xf] %vm1511, %v1493
      %1523 = vst.msk [vmem:[#allocation2 + $0x58] sm:$0xf] %vm1511, %v1495
      %vm1524 = vcmask 583168
      %1525 = vst.msk [vmem:[#allocation2 + $0x60] sm:$0x3] %vm1524, %v1497
      %v1526 = vld [vmem:[%s348] sm:$0xf]
      %v1527 = vld [vmem:[%s348 + $0x4] sm:$0xf]
      %v1528 = vld [vmem:[%s348 + $0x8] sm:$0xf]
      %v1529 = vld [vmem:[%s348 + $0xc] sm:$0xf]
      %v1530 = vld [vmem:[%s348 + $0x10] sm:$0xf]
      %v1531 = vld [vmem:[%s348 + $0x14] sm:$0xf]
      %v1532 = vld [vmem:[%s348 + $0x18] sm:$0xf]
      %v1533 = vld [vmem:[%s348 + $0x1c] sm:$0xf]
      %v1534 = vld [vmem:[%s348 + $0x20] sm:$0xf]
      %v1535 = vld [vmem:[%s348 + $0x24] sm:$0xf]
      %v1536 = vld [vmem:[%s348 + $0x28] sm:$0xf]
      %v1537 = vld [vmem:[%s348 + $0x2c] sm:$0xf]
      %v1538 = vld [vmem:[%s348 + $0x30] sm:$0xf]
      %v1539 = vld [vmem:[%s348 + $0x34] sm:$0xf]
      %v1540 = vld [vmem:[%s348 + $0x38] sm:$0xf]
      %v1541 = vld [vmem:[%s348 + $0x3c] sm:$0x1]
      %v1542 = vunpack.c.l.bf16 %v1526
      %v1543 = vunpack.c.l.bf16 %v1527
      %v1544 = vunpack.c.l.bf16 %v1528
      %v1545 = vunpack.c.l.bf16 %v1529
      %v1546 = vunpack.c.l.bf16 %v1530
      %v1547 = vunpack.c.l.bf16 %v1531
      %v1548 = vunpack.c.l.bf16 %v1532
      %v1549 = vunpack.c.l.bf16 %v1533
      %v1550 = vunpack.c.l.bf16 %v1534
      %v1551 = vunpack.c.l.bf16 %v1535
      %v1552 = vunpack.c.l.bf16 %v1536
      %v1553 = vunpack.c.l.bf16 %v1537
      %v1554 = vunpack.c.l.bf16 %v1538
      %v1555 = vunpack.c.l.bf16 %v1539
      %v1556 = vunpack.c.l.bf16 %v1540
      %v1557 = vunpack.c.l.bf16 %v1541
      %v1558 = vpack.c.bf16 %v1543, %v1542
      %v1559 = vpack.c.bf16 %v1545, %v1544
      %v1560 = vpack.c.bf16 %v1547, %v1546
      %v1561 = vpack.c.bf16 %v1549, %v1548
      %v1562 = vpack.c.bf16 %v1551, %v1550
      %v1563 = vpack.c.bf16 %v1553, %v1552
      %v1564 = vpack.c.bf16 %v1554, %v1554
      %v1572 = vunpack.c.l.b16 %v1558
      %v1573 = vunpack.c.h.b16 %v1558
      %v1574 = vunpack.c.l.b16 %v1559
      %v1575 = vunpack.c.h.b16 %v1559
      %v1576 = vunpack.c.l.b16 %v1560
      %v1577 = vunpack.c.h.b16 %v1560
      %v1578 = vunpack.c.l.b16 %v1561
      %v1579 = vunpack.c.h.b16 %v1561
      %v1580 = vunpack.c.l.b16 %v1562
      %v1581 = vunpack.c.h.b16 %v1562
      %v1582 = vunpack.c.l.b16 %v1563
      %v1583 = vunpack.c.h.b16 %v1563
      %v1584 = vunpack.c.l.b16 %v1564
      %v1585 = vpack.c.b16 %v1572, %v1572
      %v1586 = vpack.c.b16 %v1573, %v1573
      %v1587 = vpack.c.b16 %v1574, %v1574
      %v1588 = vpack.c.b16 %v1575, %v1575
      %v1589 = vpack.c.b16 %v1576, %v1576
      %v1590 = vpack.c.b16 %v1577, %v1577
      %v1591 = vpack.c.b16 %v1578, %v1578
      %v1592 = vpack.c.b16 %v1579, %v1579
      %v1593 = vpack.c.b16 %v1580, %v1580
      %v1594 = vpack.c.b16 %v1581, %v1581
      %v1595 = vpack.c.b16 %v1582, %v1582
      %v1596 = vpack.c.b16 %v1583, %v1583
      %v1597 = vpack.c.b16 %v1584, %v1584
      %1598 = vrot.lane.b32.xlu0 %v1585, 72
      %v1599 = vpop.permute.xlu0 %1598
      %1600 = vrot.lane.b32.xlu0 %v1586, 72
      %v1601 = vpop.permute.xlu0 %1600
      %1602 = vrot.lane.b32.xlu0 %v1587, 72
      %v1603 = vpop.permute.xlu0 %1602
      %1604 = vrot.lane.b32.xlu0 %v1588, 72
      %v1605 = vpop.permute.xlu0 %1604
      %1606 = vrot.lane.b32.xlu0 %v1589, 72
      %v1607 = vpop.permute.xlu0 %1606
      %1608 = vrot.lane.b32.xlu0 %v1590, 72
      %v1609 = vpop.permute.xlu0 %1608
      %1610 = vrot.lane.b32.xlu0 %v1591, 72
      %v1611 = vpop.permute.xlu0 %1610
      %1612 = vrot.lane.b32.xlu0 %v1592, 72
      %v1613 = vpop.permute.xlu0 %1612
      %1614 = vrot.lane.b32.xlu0 %v1593, 72
      %v1615 = vpop.permute.xlu0 %1614
      %1616 = vrot.lane.b32.xlu0 %v1594, 72
      %v1617 = vpop.permute.xlu0 %1616
      %1618 = vrot.lane.b32.xlu0 %v1595, 72
      %v1619 = vpop.permute.xlu0 %1618
      %1620 = vrot.lane.b32.xlu0 %v1596, 72
      %v1621 = vpop.permute.xlu0 %1620
      %1622 = vrot.lane.b32.xlu0 %v1597, 72
      %v1623 = vpop.permute.xlu0 %1622
      %vm1637 = vcmask 650816
      %1638 = vst.msk [vmem:[#allocation2] sm:$0xf] %vm1637, %v1599
      %1639 = vst.msk [vmem:[#allocation2 + $0x8] sm:$0xf] %vm1637, %v1601
      %1640 = vst.msk [vmem:[#allocation2 + $0x10] sm:$0xf] %vm1637, %v1603
      %1641 = vst.msk [vmem:[#allocation2 + $0x18] sm:$0xf] %vm1637, %v1605
      %1642 = vst.msk [vmem:[#allocation2 + $0x20] sm:$0xf] %vm1637, %v1607
      %1643 = vst.msk [vmem:[#allocation2 + $0x28] sm:$0xf] %vm1637, %v1609
      %1644 = vst.msk [vmem:[#allocation2 + $0x30] sm:$0xf] %vm1637, %v1611
      %1645 = vst.msk [vmem:[#allocation2 + $0x38] sm:$0xf] %vm1637, %v1613
      %1646 = vst.msk [vmem:[#allocation2 + $0x40] sm:$0xf] %vm1637, %v1615
      %1647 = vst.msk [vmem:[#allocation2 + $0x48] sm:$0xf] %vm1637, %v1617
      %1648 = vst.msk [vmem:[#allocation2 + $0x50] sm:$0xf] %vm1637, %v1619
      %1649 = vst.msk [vmem:[#allocation2 + $0x58] sm:$0xf] %vm1637, %v1621
      %vm1650 = vcmask 648768
      %1651 = vst.msk [vmem:[#allocation2 + $0x60] sm:$0x3] %vm1650, %v1623
      %v1653 = vshrl.u32 %v1585, 16
      %v1655 = vrot.slane %v1653, 4
      %v1656 = vshll.u32 %v1585, 16
      %v1658 = vrot.slane %v1656, 5
      %v1659 = vor.u32 %v1655, %v1658
      %v1660 = vrot.slane %v1659, 4
      %v1662 = vshll.u32 %v1586, 16
      %v1664 = vrot.slane %v1662, 5
      %v1665 = vsel %vm488, %v1660, %v1664
      %v1666 = vshrl.u32 %v1586, 16
      %v1668 = vrot.slane %v1666, 4
      %v1669 = vor.u32 %v1668, %v1664
      %v1670 = vrot.slane %v1669, 4
      %v1672 = vshll.u32 %v1587, 16
      %v1674 = vrot.slane %v1672, 5
      %v1675 = vsel %vm488, %v1670, %v1674
      %v1676 = vshrl.u32 %v1587, 16
      %v1678 = vrot.slane %v1676, 4
      %v1679 = vor.u32 %v1678, %v1674
      %v1680 = vrot.slane %v1679, 4
      %v1682 = vshll.u32 %v1588, 16
      %v1684 = vrot.slane %v1682, 5
      %v1685 = vsel %vm488, %v1680, %v1684
      %v1686 = vshrl.u32 %v1588, 16
      %v1688 = vrot.slane %v1686, 4
      %v1689 = vor.u32 %v1688, %v1684
      %v1690 = vrot.slane %v1689, 4
      %v1692 = vshll.u32 %v1589, 16
      %v1694 = vrot.slane %v1692, 5
      %v1695 = vsel %vm488, %v1690, %v1694
      %v1696 = vshrl.u32 %v1589, 16
      %v1698 = vrot.slane %v1696, 4
      %v1699 = vor.u32 %v1698, %v1694
      %v1700 = vrot.slane %v1699, 4
      %v1702 = vshll.u32 %v1590, 16
      %v1704 = vrot.slane %v1702, 5
      %v1705 = vsel %vm488, %v1700, %v1704
      %v1706 = vshrl.u32 %v1590, 16
      %v1708 = vrot.slane %v1706, 4
      %v1709 = vor.u32 %v1708, %v1704
      %v1710 = vrot.slane %v1709, 4
      %v1712 = vshll.u32 %v1591, 16
      %v1714 = vrot.slane %v1712, 5
      %v1715 = vsel %vm488, %v1710, %v1714
      %v1716 = vshrl.u32 %v1591, 16
      %v1718 = vrot.slane %v1716, 4
      %v1719 = vor.u32 %v1718, %v1714
      %v1720 = vrot.slane %v1719, 4
      %v1722 = vshll.u32 %v1592, 16
      %v1724 = vrot.slane %v1722, 5
      %v1725 = vsel %vm488, %v1720, %v1724
      %v1726 = vshrl.u32 %v1592, 16
      %v1728 = vrot.slane %v1726, 4
      %v1729 = vor.u32 %v1728, %v1724
      %v1730 = vrot.slane %v1729, 4
      %v1732 = vshll.u32 %v1593, 16
      %v1734 = vrot.slane %v1732, 5
      %v1735 = vsel %vm488, %v1730, %v1734
      %v1736 = vshrl.u32 %v1593, 16
      %v1738 = vrot.slane %v1736, 4
      %v1739 = vor.u32 %v1738, %v1734
      %v1740 = vrot.slane %v1739, 4
      %v1742 = vshll.u32 %v1594, 16
      %v1744 = vrot.slane %v1742, 5
      %v1745 = vsel %vm488, %v1740, %v1744
      %v1746 = vshrl.u32 %v1594, 16
      %v1748 = vrot.slane %v1746, 4
      %v1749 = vor.u32 %v1748, %v1744
      %v1750 = vrot.slane %v1749, 4
      %v1752 = vshll.u32 %v1595, 16
      %v1754 = vrot.slane %v1752, 5
      %v1755 = vsel %vm488, %v1750, %v1754
      %v1756 = vshrl.u32 %v1595, 16
      %v1758 = vrot.slane %v1756, 4
      %v1759 = vor.u32 %v1758, %v1754
      %v1760 = vrot.slane %v1759, 4
      %v1762 = vshll.u32 %v1596, 16
      %v1764 = vrot.slane %v1762, 5
      %v1765 = vsel %vm488, %v1760, %v1764
      %v1766 = vshrl.u32 %v1596, 16
      %v1768 = vrot.slane %v1766, 4
      %v1769 = vor.u32 %v1768, %v1764
      %v1770 = vrot.slane %v1769, 4
      %v1772 = vshll.u32 %v1597, 16
      %v1774 = vrot.slane %v1772, 5
      %v1775 = vsel %vm488, %v1770, %v1774
      %v1776 = vshrl.u32 %v1597, 16
      %v1778 = vrot.slane %v1776, 4
      %v1779 = vor.u32 %v1778, %v1774
      %v1780 = vrot.slane %v1779, 4
      %1781 = vrot.lane.b32.xlu0 %v1665, 80
      %v1782 = vpop.permute.xlu0 %1781
      %1783 = vrot.lane.b32.xlu0 %v1675, 80
      %v1784 = vpop.permute.xlu0 %1783
      %1785 = vrot.lane.b32.xlu0 %v1685, 80
      %v1786 = vpop.permute.xlu0 %1785
      %1787 = vrot.lane.b32.xlu0 %v1695, 80
      %v1788 = vpop.permute.xlu0 %1787
      %1789 = vrot.lane.b32.xlu0 %v1705, 80
      %v1790 = vpop.permute.xlu0 %1789
      %1791 = vrot.lane.b32.xlu0 %v1715, 80
      %v1792 = vpop.permute.xlu0 %1791
      %1793 = vrot.lane.b32.xlu0 %v1725, 80
      %v1794 = vpop.permute.xlu0 %1793
      %1795 = vrot.lane.b32.xlu0 %v1735, 80
      %v1796 = vpop.permute.xlu0 %1795
      %1797 = vrot.lane.b32.xlu0 %v1745, 80
      %v1798 = vpop.permute.xlu0 %1797
      %1799 = vrot.lane.b32.xlu0 %v1755, 80
      %v1800 = vpop.permute.xlu0 %1799
      %1801 = vrot.lane.b32.xlu0 %v1765, 80
      %v1802 = vpop.permute.xlu0 %1801
      %1803 = vrot.lane.b32.xlu0 %v1775, 80
      %v1804 = vpop.permute.xlu0 %1803
      %1805 = vrot.lane.b32.xlu0 %v1780, 80
      %v1806 = vpop.permute.xlu0 %1805
      %vm1820 = vcmask 716416
      %1821 = vst.msk [vmem:[#allocation2] sm:$0xf] %vm1820, %v1782
      %1822 = vst.msk [vmem:[#allocation2 + $0x8] sm:$0xf] %vm1820, %v1784
      %1823 = vst.msk [vmem:[#allocation2 + $0x10] sm:$0xf] %vm1820, %v1786
      %1824 = vst.msk [vmem:[#allocation2 + $0x18] sm:$0xf] %vm1820, %v1788
      %1825 = vst.msk [vmem:[#allocation2 + $0x20] sm:$0xf] %vm1820, %v1790
      %1826 = vst.msk [vmem:[#allocation2 + $0x28] sm:$0xf] %vm1820, %v1792
      %1827 = vst.msk [vmem:[#allocation2 + $0x30] sm:$0xf] %vm1820, %v1794
      %1828 = vst.msk [vmem:[#allocation2 + $0x38] sm:$0xf] %vm1820, %v1796
      %1829 = vst.msk [vmem:[#allocation2 + $0x40] sm:$0xf] %vm1820, %v1798
      %1830 = vst.msk [vmem:[#allocation2 + $0x48] sm:$0xf] %vm1820, %v1800
      %1831 = vst.msk [vmem:[#allocation2 + $0x50] sm:$0xf] %vm1820, %v1802
      %1832 = vst.msk [vmem:[#allocation2 + $0x58] sm:$0xf] %vm1820, %v1804
      %vm1833 = vcmask 714368
      %1834 = vst.msk [vmem:[#allocation2 + $0x60] sm:$0x3] %vm1833, %v1806
      %v1835 = vrot.slane %v1585, 5
      %v1836 = vrot.slane %v1835, 4
      %v1837 = vrot.slane %v1586, 5
      %v1838 = vsel %vm674, %v1836, %v1837
      %v1839 = vrot.slane %v1837, 4
      %v1840 = vrot.slane %v1587, 5
      %v1841 = vsel %vm674, %v1839, %v1840
      %v1842 = vrot.slane %v1840, 4
      %v1843 = vrot.slane %v1588, 5
      %v1844 = vsel %vm674, %v1842, %v1843
      %v1845 = vrot.slane %v1843, 4
      %v1846 = vrot.slane %v1589, 5
      %v1847 = vsel %vm674, %v1845, %v1846
      %v1848 = vrot.slane %v1846, 4
      %v1849 = vrot.slane %v1590, 5
      %v1850 = vsel %vm674, %v1848, %v1849
      %v1851 = vrot.slane %v1849, 4
      %v1852 = vrot.slane %v1591, 5
      %v1853 = vsel %vm674, %v1851, %v1852
      %v1854 = vrot.slane %v1852, 4
      %v1855 = vrot.slane %v1592, 5
      %v1856 = vsel %vm674, %v1854, %v1855
      %v1857 = vrot.slane %v1855, 4
      %v1858 = vrot.slane %v1593, 5
      %v1859 = vsel %vm674, %v1857, %v1858
      %v1860 = vrot.slane %v1858, 4
      %v1861 = vrot.slane %v1594, 5
      %v1862 = vsel %vm674, %v1860, %v1861
      %v1863 = vrot.slane %v1861, 4
      %v1864 = vrot.slane %v1595, 5
      %v1865 = vsel %vm674, %v1863, %v1864
      %v1866 = vrot.slane %v1864, 4
      %v1867 = vrot.slane %v1596, 5
      %v1868 = vsel %vm674, %v1866, %v1867
      %v1869 = vrot.slane %v1867, 4
      %v1870 = vrot.slane %v1597, 5
      %v1871 = vsel %vm674, %v1869, %v1870
      %v1872 = vrot.slane %v1870, 4
      %1873 = vrot.lane.b32.xlu0 %v1838, 88
      %v1874 = vpop.permute.xlu0 %1873
      %1875 = vrot.lane.b32.xlu0 %v1841, 88
      %v1876 = vpop.permute.xlu0 %1875
      %1877 = vrot.lane.b32.xlu0 %v1844, 88
      %v1878 = vpop.permute.xlu0 %1877
      %1879 = vrot.lane.b32.xlu0 %v1847, 88
      %v1880 = vpop.permute.xlu0 %1879
      %1881 = vrot.lane.b32.xlu0 %v1850, 88
      %v1882 = vpop.permute.xlu0 %1881
      %1883 = vrot.lane.b32.xlu0 %v1853, 88
      %v1884 = vpop.permute.xlu0 %1883
      %1885 = vrot.lane.b32.xlu0 %v1856, 88
      %v1886 = vpop.permute.xlu0 %1885
      %1887 = vrot.lane.b32.xlu0 %v1859, 88
      %v1888 = vpop.permute.xlu0 %1887
      %1889 = vrot.lane.b32.xlu0 %v1862, 88
      %v1890 = vpop.permute.xlu0 %1889
      %1891 = vrot.lane.b32.xlu0 %v1865, 88
      %v1892 = vpop.permute.xlu0 %1891
      %1893 = vrot.lane.b32.xlu0 %v1868, 88
      %v1894 = vpop.permute.xlu0 %1893
      %1895 = vrot.lane.b32.xlu0 %v1871, 88
      %v1896 = vpop.permute.xlu0 %1895
      %1897 = vrot.lane.b32.xlu0 %v1872, 88
      %v1898 = vpop.permute.xlu0 %1897
      %vm1912 = vcmask 782016
      %1913 = vst.msk [vmem:[#allocation2] sm:$0xf] %vm1912, %v1874
      %1914 = vst.msk [vmem:[#allocation2 + $0x8] sm:$0xf] %vm1912, %v1876
      %1915 = vst.msk [vmem:[#allocation2 + $0x10] sm:$0xf] %vm1912, %v1878
      %1916 = vst.msk [vmem:[#allocation2 + $0x18] sm:$0xf] %vm1912, %v1880
      %1917 = vst.msk [vmem:[#allocation2 + $0x20] sm:$0xf] %vm1912, %v1882
      %1918 = vst.msk [vmem:[#allocation2 + $0x28] sm:$0xf] %vm1912, %v1884
      %1919 = vst.msk [vmem:[#allocation2 + $0x30] sm:$0xf] %vm1912, %v1886
      %1920 = vst.msk [vmem:[#allocation2 + $0x38] sm:$0xf] %vm1912, %v1888
      %1921 = vst.msk [vmem:[#allocation2 + $0x40] sm:$0xf] %vm1912, %v1890
      %1922 = vst.msk [vmem:[#allocation2 + $0x48] sm:$0xf] %vm1912, %v1892
      %1923 = vst.msk [vmem:[#allocation2 + $0x50] sm:$0xf] %vm1912, %v1894
      %1924 = vst.msk [vmem:[#allocation2 + $0x58] sm:$0xf] %vm1912, %v1896
      %vm1925 = vcmask 779968
      %1926 = vst.msk [vmem:[#allocation2 + $0x60] sm:$0x3] %vm1925, %v1898
      %v1927 = vpack.c.bf16 %v1544, %v1543
      %v1928 = vpack.c.bf16 %v1546, %v1545
      %v1929 = vpack.c.bf16 %v1548, %v1547
      %v1930 = vpack.c.bf16 %v1550, %v1549
      %v1931 = vpack.c.bf16 %v1552, %v1551
      %v1932 = vpack.c.bf16 %v1554, %v1553
      %v1933 = vpack.c.bf16 %v1555, %v1555
      %v1941 = vunpack.c.l.b16 %v1927
      %v1942 = vunpack.c.h.b16 %v1927
      %v1943 = vunpack.c.l.b16 %v1928
      %v1944 = vunpack.c.h.b16 %v1928
      %v1945 = vunpack.c.l.b16 %v1929
      %v1946 = vunpack.c.h.b16 %v1929
      %v1947 = vunpack.c.l.b16 %v1930
      %v1948 = vunpack.c.h.b16 %v1930
      %v1949 = vunpack.c.l.b16 %v1931
      %v1950 = vunpack.c.h.b16 %v1931
      %v1951 = vunpack.c.l.b16 %v1932
      %v1952 = vunpack.c.h.b16 %v1932
      %v1953 = vunpack.c.l.b16 %v1933
      %v1954 = vpack.c.b16 %v1941, %v1941
      %v1955 = vpack.c.b16 %v1942, %v1942
      %v1956 = vpack.c.b16 %v1943, %v1943
      %v1957 = vpack.c.b16 %v1944, %v1944
      %v1958 = vpack.c.b16 %v1945, %v1945
      %v1959 = vpack.c.b16 %v1946, %v1946
      %v1960 = vpack.c.b16 %v1947, %v1947
      %v1961 = vpack.c.b16 %v1948, %v1948
      %v1962 = vpack.c.b16 %v1949, %v1949
      %v1963 = vpack.c.b16 %v1950, %v1950
      %v1964 = vpack.c.b16 %v1951, %v1951
      %v1965 = vpack.c.b16 %v1952, %v1952
      %v1966 = vpack.c.b16 %v1953, %v1953
      %v1967 = vrot.slane %v1954, 5
      %v1968 = vrot.slane %v1967, 4
      %v1969 = vrot.slane %v1955, 5
      %v1970 = vsel %vm674, %v1968, %v1969
      %v1971 = vrot.slane %v1969, 4
      %v1972 = vrot.slane %v1956, 5
      %v1973 = vsel %vm674, %v1971, %v1972
      %v1974 = vrot.slane %v1972, 4
      %v1975 = vrot.slane %v1957, 5
      %v1976 = vsel %vm674, %v1974, %v1975
      %v1977 = vrot.slane %v1975, 4
      %v1978 = vrot.slane %v1958, 5
      %v1979 = vsel %vm674, %v1977, %v1978
      %v1980 = vrot.slane %v1978, 4
      %v1981 = vrot.slane %v1959, 5
      %v1982 = vsel %vm674, %v1980, %v1981
      %v1983 = vrot.slane %v1981, 4
      %v1984 = vrot.slane %v1960, 5
      %v1985 = vsel %vm674, %v1983, %v1984
      %v1986 = vrot.slane %v1984, 4
      %v1987 = vrot.slane %v1961, 5
      %v1988 = vsel %vm674, %v1986, %v1987
      %v1989 = vrot.slane %v1987, 4
      %v1990 = vrot.slane %v1962, 5
      %v1991 = vsel %vm674, %v1989, %v1990
      %v1992 = vrot.slane %v1990, 4
      %v1993 = vrot.slane %v1963, 5
      %v1994 = vsel %vm674, %v1992, %v1993
      %v1995 = vrot.slane %v1993, 4
      %v1996 = vrot.slane %v1964, 5
      %v1997 = vsel %vm674, %v1995, %v1996
      %v1998 = vrot.slane %v1996, 4
      %v1999 = vrot.slane %v1965, 5
      %v2000 = vsel %vm674, %v1998, %v1999
      %v2001 = vrot.slane %v1999, 4
      %v2002 = vrot.slane %v1966, 5
      %v2003 = vsel %vm674, %v2001, %v2002
      %v2004 = vrot.slane %v2002, 4
      %2005 = vrot.lane.b32.xlu0 %v1970, 96
      %v2006 = vpop.permute.xlu0 %2005
      %2007 = vrot.lane.b32.xlu0 %v1973, 96
      %v2008 = vpop.permute.xlu0 %2007
      %2009 = vrot.lane.b32.xlu0 %v1976, 96
      %v2010 = vpop.permute.xlu0 %2009
      %2011 = vrot.lane.b32.xlu0 %v1979, 96
      %v2012 = vpop.permute.xlu0 %2011
      %2013 = vrot.lane.b32.xlu0 %v1982, 96
      %v2014 = vpop.permute.xlu0 %2013
      %2015 = vrot.lane.b32.xlu0 %v1985, 96
      %v2016 = vpop.permute.xlu0 %2015
      %2017 = vrot.lane.b32.xlu0 %v1988, 96
      %v2018 = vpop.permute.xlu0 %2017
      %2019 = vrot.lane.b32.xlu0 %v1991, 96
      %v2020 = vpop.permute.xlu0 %2019
      %2021 = vrot.lane.b32.xlu0 %v1994, 96
      %v2022 = vpop.permute.xlu0 %2021
      %2023 = vrot.lane.b32.xlu0 %v1997, 96
      %v2024 = vpop.permute.xlu0 %2023
      %2025 = vrot.lane.b32.xlu0 %v2000, 96
      %v2026 = vpop.permute.xlu0 %2025
      %2027 = vrot.lane.b32.xlu0 %v2003, 96
      %v2028 = vpop.permute.xlu0 %2027
      %2029 = vrot.lane.b32.xlu0 %v2004, 96
      %v2030 = vpop.permute.xlu0 %2029
      %vm2044 = vcmask 847616
      %2045 = vst.msk [vmem:[#allocation2] sm:$0xf] %vm2044, %v2006
      %2046 = vst.msk [vmem:[#allocation2 + $0x8] sm:$0xf] %vm2044, %v2008
      %2047 = vst.msk [vmem:[#allocation2 + $0x10] sm:$0xf] %vm2044, %v2010
      %2048 = vst.msk [vmem:[#allocation2 + $0x18] sm:$0xf] %vm2044, %v2012
      %2049 = vst.msk [vmem:[#allocation2 + $0x20] sm:$0xf] %vm2044, %v2014
      %2050 = vst.msk [vmem:[#allocation2 + $0x28] sm:$0xf] %vm2044, %v2016
      %2051 = vst.msk [vmem:[#allocation2 + $0x30] sm:$0xf] %vm2044, %v2018
      %2052 = vst.msk [vmem:[#allocation2 + $0x38] sm:$0xf] %vm2044, %v2020
      %2053 = vst.msk [vmem:[#allocation2 + $0x40] sm:$0xf] %vm2044, %v2022
      %2054 = vst.msk [vmem:[#allocation2 + $0x48] sm:$0xf] %vm2044, %v2024
      %2055 = vst.msk [vmem:[#allocation2 + $0x50] sm:$0xf] %vm2044, %v2026
      %2056 = vst.msk [vmem:[#allocation2 + $0x58] sm:$0xf] %vm2044, %v2028
      %vm2057 = vcmask 845568
      %2058 = vst.msk [vmem:[#allocation2 + $0x60] sm:$0x3] %vm2057, %v2030
      %v2060 = vshrl.u32 %v1954, 16
      %v2062 = vrot.slane %v2060, 5
      %v2063 = vshll.u32 %v1954, 16
      %v2065 = vrot.slane %v2063, 6
      %v2066 = vor.u32 %v2062, %v2065
      %v2067 = vrot.slane %v2066, 4
      %v2069 = vshrl.u32 %v1955, 16
      %v2071 = vrot.slane %v2069, 5
      %v2072 = vshll.u32 %v1955, 16
      %v2074 = vrot.slane %v2072, 6
      %v2075 = vor.u32 %v2071, %v2074
      %v2076 = vsel %vm901, %v2067, %v2075
      %v2077 = vrot.slane %v2075, 4
      %v2079 = vshrl.u32 %v1956, 16
      %v2081 = vrot.slane %v2079, 5
      %v2082 = vshll.u32 %v1956, 16
      %v2084 = vrot.slane %v2082, 6
      %v2085 = vor.u32 %v2081, %v2084
      %v2086 = vsel %vm901, %v2077, %v2085
      %v2087 = vrot.slane %v2085, 4
      %v2089 = vshrl.u32 %v1957, 16
      %v2091 = vrot.slane %v2089, 5
      %v2092 = vshll.u32 %v1957, 16
      %v2094 = vrot.slane %v2092, 6
      %v2095 = vor.u32 %v2091, %v2094
      %v2096 = vsel %vm901, %v2087, %v2095
      %v2097 = vrot.slane %v2095, 4
      %v2099 = vshrl.u32 %v1958, 16
      %v2101 = vrot.slane %v2099, 5
      %v2102 = vshll.u32 %v1958, 16
      %v2104 = vrot.slane %v2102, 6
      %v2105 = vor.u32 %v2101, %v2104
      %v2106 = vsel %vm901, %v2097, %v2105
      %v2107 = vrot.slane %v2105, 4
      %v2109 = vshrl.u32 %v1959, 16
      %v2111 = vrot.slane %v2109, 5
      %v2112 = vshll.u32 %v1959, 16
      %v2114 = vrot.slane %v2112, 6
      %v2115 = vor.u32 %v2111, %v2114
      %v2116 = vsel %vm901, %v2107, %v2115
      %v2117 = vrot.slane %v2115, 4
      %v2119 = vshrl.u32 %v1960, 16
      %v2121 = vrot.slane %v2119, 5
      %v2122 = vshll.u32 %v1960, 16
      %v2124 = vrot.slane %v2122, 6
      %v2125 = vor.u32 %v2121, %v2124
      %v2126 = vsel %vm901, %v2117, %v2125
      %v2127 = vrot.slane %v2125, 4
      %v2129 = vshrl.u32 %v1961, 16
      %v2131 = vrot.slane %v2129, 5
      %v2132 = vshll.u32 %v1961, 16
      %v2134 = vrot.slane %v2132, 6
      %v2135 = vor.u32 %v2131, %v2134
      %v2136 = vsel %vm901, %v2127, %v2135
      %v2137 = vrot.slane %v2135, 4
      %v2139 = vshrl.u32 %v1962, 16
      %v2141 = vrot.slane %v2139, 5
      %v2142 = vshll.u32 %v1962, 16
      %v2144 = vrot.slane %v2142, 6
      %v2145 = vor.u32 %v2141, %v2144
      %v2146 = vsel %vm901, %v2137, %v2145
      %v2147 = vrot.slane %v2145, 4
      %v2149 = vshrl.u32 %v1963, 16
      %v2151 = vrot.slane %v2149, 5
      %v2152 = vshll.u32 %v1963, 16
      %v2154 = vrot.slane %v2152, 6
      %v2155 = vor.u32 %v2151, %v2154
      %v2156 = vsel %vm901, %v2147, %v2155
      %v2157 = vrot.slane %v2155, 4
      %v2159 = vshrl.u32 %v1964, 16
      %v2161 = vrot.slane %v2159, 5
      %v2162 = vshll.u32 %v1964, 16
      %v2164 = vrot.slane %v2162, 6
      %v2165 = vor.u32 %v2161, %v2164
      %v2166 = vsel %vm901, %v2157, %v2165
      %v2167 = vrot.slane %v2165, 4
      %v2169 = vshrl.u32 %v1965, 16
      %v2171 = vrot.slane %v2169, 5
      %v2172 = vshll.u32 %v1965, 16
      %v2174 = vrot.slane %v2172, 6
      %v2175 = vor.u32 %v2171, %v2174
      %v2176 = vsel %vm901, %v2167, %v2175
      %v2177 = vrot.slane %v2175, 4
      %v2179 = vshrl.u32 %v1966, 16
      %v2181 = vrot.slane %v2179, 5
      %v2182 = vshll.u32 %v1966, 16
      %v2184 = vrot.slane %v2182, 6
      %v2185 = vor.u32 %v2181, %v2184
      %v2186 = vsel %vm901, %v2177, %v2185
      %v2187 = vrot.slane %v2185, 4
      %2188 = vrot.lane.b32.xlu0 %v2076, 104
      %v2189 = vpop.permute.xlu0 %2188
      %2190 = vrot.lane.b32.xlu0 %v2086, 104
      %v2191 = vpop.permute.xlu0 %2190
      %2192 = vrot.lane.b32.xlu0 %v2096, 104
      %v2193 = vpop.permute.xlu0 %2192
      %2194 = vrot.lane.b32.xlu0 %v2106, 104
      %v2195 = vpop.permute.xlu0 %2194
      %2196 = vrot.lane.b32.xlu0 %v2116, 104
      %v2197 = vpop.permute.xlu0 %2196
      %2198 = vrot.lane.b32.xlu0 %v2126, 104
      %v2199 = vpop.permute.xlu0 %2198
      %2200 = vrot.lane.b32.xlu0 %v2136, 104
      %v2201 = vpop.permute.xlu0 %2200
      %2202 = vrot.lane.b32.xlu0 %v2146, 104
      %v2203 = vpop.permute.xlu0 %2202
      %2204 = vrot.lane.b32.xlu0 %v2156, 104
      %v2205 = vpop.permute.xlu0 %2204
      %2206 = vrot.lane.b32.xlu0 %v2166, 104
      %v2207 = vpop.permute.xlu0 %2206
      %2208 = vrot.lane.b32.xlu0 %v2176, 104
      %v2209 = vpop.permute.xlu0 %2208
      %2210 = vrot.lane.b32.xlu0 %v2186, 104
      %v2211 = vpop.permute.xlu0 %2210
      %2212 = vrot.lane.b32.xlu0 %v2187, 104
      %v2213 = vpop.permute.xlu0 %2212
      %vm2227 = vcmask 913216
      %2228 = vst.msk [vmem:[#allocation2] sm:$0xf] %vm2227, %v2189
      %2229 = vst.msk [vmem:[#allocation2 + $0x8] sm:$0xf] %vm2227, %v2191
      %2230 = vst.msk [vmem:[#allocation2 + $0x10] sm:$0xf] %vm2227, %v2193
      %2231 = vst.msk [vmem:[#allocation2 + $0x18] sm:$0xf] %vm2227, %v2195
      %2232 = vst.msk [vmem:[#allocation2 + $0x20] sm:$0xf] %vm2227, %v2197
      %2233 = vst.msk [vmem:[#allocation2 + $0x28] sm:$0xf] %vm2227, %v2199
      %2234 = vst.msk [vmem:[#allocation2 + $0x30] sm:$0xf] %vm2227, %v2201
      %2235 = vst.msk [vmem:[#allocation2 + $0x38] sm:$0xf] %vm2227, %v2203
      %2236 = vst.msk [vmem:[#allocation2 + $0x40] sm:$0xf] %vm2227, %v2205
      %2237 = vst.msk [vmem:[#allocation2 + $0x48] sm:$0xf] %vm2227, %v2207
      %2238 = vst.msk [vmem:[#allocation2 + $0x50] sm:$0xf] %vm2227, %v2209
      %2239 = vst.msk [vmem:[#allocation2 + $0x58] sm:$0xf] %vm2227, %v2211
      %vm2240 = vcmask 911168
      %2241 = vst.msk [vmem:[#allocation2 + $0x60] sm:$0x3] %vm2240, %v2213
      %v2242 = vrot.slane %v1954, 6
      %v2243 = vrot.slane %v2242, 4
      %v2244 = vrot.slane %v1955, 6
      %v2245 = vsel %vm1087, %v2243, %v2244
      %v2246 = vrot.slane %v2244, 4
      %v2247 = vrot.slane %v1956, 6
      %v2248 = vsel %vm1087, %v2246, %v2247
      %v2249 = vrot.slane %v2247, 4
      %v2250 = vrot.slane %v1957, 6
      %v2251 = vsel %vm1087, %v2249, %v2250
      %v2252 = vrot.slane %v2250, 4
      %v2253 = vrot.slane %v1958, 6
      %v2254 = vsel %vm1087, %v2252, %v2253
      %v2255 = vrot.slane %v2253, 4
      %v2256 = vrot.slane %v1959, 6
      %v2257 = vsel %vm1087, %v2255, %v2256
      %v2258 = vrot.slane %v2256, 4
      %v2259 = vrot.slane %v1960, 6
      %v2260 = vsel %vm1087, %v2258, %v2259
      %v2261 = vrot.slane %v2259, 4
      %v2262 = vrot.slane %v1961, 6
      %v2263 = vsel %vm1087, %v2261, %v2262
      %v2264 = vrot.slane %v2262, 4
      %v2265 = vrot.slane %v1962, 6
      %v2266 = vsel %vm1087, %v2264, %v2265
      %v2267 = vrot.slane %v2265, 4
      %v2268 = vrot.slane %v1963, 6
      %v2269 = vsel %vm1087, %v2267, %v2268
      %v2270 = vrot.slane %v2268, 4
      %v2271 = vrot.slane %v1964, 6
      %v2272 = vsel %vm1087, %v2270, %v2271
      %v2273 = vrot.slane %v2271, 4
      %v2274 = vrot.slane %v1965, 6
      %v2275 = vsel %vm1087, %v2273, %v2274
      %v2276 = vrot.slane %v2274, 4
      %v2277 = vrot.slane %v1966, 6
      %v2278 = vsel %vm1087, %v2276, %v2277
      %v2279 = vrot.slane %v2277, 4
      %2280 = vrot.lane.b32.xlu0 %v2245, 112
      %v2281 = vpop.permute.xlu0 %2280
      %2282 = vrot.lane.b32.xlu0 %v2248, 112
      %v2283 = vpop.permute.xlu0 %2282
      %2284 = vrot.lane.b32.xlu0 %v2251, 112
      %v2285 = vpop.permute.xlu0 %2284
      %2286 = vrot.lane.b32.xlu0 %v2254, 112
      %v2287 = vpop.permute.xlu0 %2286
      %2288 = vrot.lane.b32.xlu0 %v2257, 112
      %v2289 = vpop.permute.xlu0 %2288
      %2290 = vrot.lane.b32.xlu0 %v2260, 112
      %v2291 = vpop.permute.xlu0 %2290
      %2292 = vrot.lane.b32.xlu0 %v2263, 112
      %v2293 = vpop.permute.xlu0 %2292
      %2294 = vrot.lane.b32.xlu0 %v2266, 112
      %v2295 = vpop.permute.xlu0 %2294
      %2296 = vrot.lane.b32.xlu0 %v2269, 112
      %v2297 = vpop.permute.xlu0 %2296
      %2298 = vrot.lane.b32.xlu0 %v2272, 112
      %v2299 = vpop.permute.xlu0 %2298
      %2300 = vrot.lane.b32.xlu0 %v2275, 112
      %v2301 = vpop.permute.xlu0 %2300
      %2302 = vrot.lane.b32.xlu0 %v2278, 112
      %v2303 = vpop.permute.xlu0 %2302
      %2304 = vrot.lane.b32.xlu0 %v2279, 112
      %v2305 = vpop.permute.xlu0 %2304
      %vm2319 = vcmask 978816
      %2320 = vst.msk [vmem:[#allocation2] sm:$0xf] %vm2319, %v2281
      %2321 = vst.msk [vmem:[#allocation2 + $0x8] sm:$0xf] %vm2319, %v2283
      %2322 = vst.msk [vmem:[#allocation2 + $0x10] sm:$0xf] %vm2319, %v2285
      %2323 = vst.msk [vmem:[#allocation2 + $0x18] sm:$0xf] %vm2319, %v2287
      %2324 = vst.msk [vmem:[#allocation2 + $0x20] sm:$0xf] %vm2319, %v2289
      %2325 = vst.msk [vmem:[#allocation2 + $0x28] sm:$0xf] %vm2319, %v2291
      %2326 = vst.msk [vmem:[#allocation2 + $0x30] sm:$0xf] %vm2319, %v2293
      %2327 = vst.msk [vmem:[#allocation2 + $0x38] sm:$0xf] %vm2319, %v2295
      %2328 = vst.msk [vmem:[#allocation2 + $0x40] sm:$0xf] %vm2319, %v2297
      %2329 = vst.msk [vmem:[#allocation2 + $0x48] sm:$0xf] %vm2319, %v2299
      %2330 = vst.msk [vmem:[#allocation2 + $0x50] sm:$0xf] %vm2319, %v2301
      %2331 = vst.msk [vmem:[#allocation2 + $0x58] sm:$0xf] %vm2319, %v2303
      %vm2332 = vcmask 976768
      %2333 = vst.msk [vmem:[#allocation2 + $0x60] sm:$0x3] %vm2332, %v2305
      %v2334 = vpack.c.bf16 %v1555, %v1554
      %v2335 = vpack.c.bf16 %v1556, %v1556
      %v2338 = vunpack.c.l.b16 %v2334
      %v2339 = vunpack.c.h.b16 %v2334
      %v2340 = vunpack.c.l.b16 %v2335
      %v2341 = vpack.c.b16 %v2338, %v2338
      %v2342 = vpack.c.b16 %v2339, %v2339
      %v2343 = vpack.c.b16 %v2340, %v2340
      %v2344 = vrot.slane %v1587, 6
      %v2345 = vrot.slane %v2344, 4
      %v2346 = vrot.slane %v1588, 6
      %v2347 = vsel %vm1087, %v2345, %v2346
      %v2348 = vrot.slane %v2346, 4
      %v2349 = vrot.slane %v1589, 6
      %v2350 = vsel %vm1087, %v2348, %v2349
      %v2351 = vrot.slane %v2349, 4
      %v2352 = vrot.slane %v1590, 6
      %v2353 = vsel %vm1087, %v2351, %v2352
      %v2354 = vrot.slane %v2352, 4
      %v2355 = vrot.slane %v1591, 6
      %v2356 = vsel %vm1087, %v2354, %v2355
      %v2357 = vrot.slane %v2355, 4
      %v2358 = vrot.slane %v1592, 6
      %v2359 = vsel %vm1087, %v2357, %v2358
      %v2360 = vrot.slane %v2358, 4
      %v2361 = vrot.slane %v1593, 6
      %v2362 = vsel %vm1087, %v2360, %v2361
      %v2363 = vrot.slane %v2361, 4
      %v2364 = vrot.slane %v1594, 6
      %v2365 = vsel %vm1087, %v2363, %v2364
      %v2366 = vrot.slane %v2364, 4
      %v2367 = vrot.slane %v1595, 6
      %v2368 = vsel %vm1087, %v2366, %v2367
      %v2369 = vrot.slane %v2367, 4
      %v2370 = vrot.slane %v1596, 6
      %v2371 = vsel %vm1087, %v2369, %v2370
      %v2372 = vrot.slane %v2370, 4
      %v2373 = vrot.slane %v2341, 6
      %v2374 = vsel %vm1087, %v2372, %v2373
      %v2375 = vrot.slane %v2373, 4
      %v2376 = vrot.slane %v2342, 6
      %v2377 = vsel %vm1087, %v2375, %v2376
      %v2378 = vrot.slane %v2376, 4
      %v2379 = vrot.slane %v2343, 6
      %v2380 = vsel %vm1087, %v2378, %v2379
      %v2381 = vrot.slane %v2379, 4
      %2382 = vrot.lane.b32.xlu0 %v2347, 120
      %v2383 = vpop.permute.xlu0 %2382
      %2384 = vrot.lane.b32.xlu0 %v2350, 120
      %v2385 = vpop.permute.xlu0 %2384
      %2386 = vrot.lane.b32.xlu0 %v2353, 120
      %v2387 = vpop.permute.xlu0 %2386
      %2388 = vrot.lane.b32.xlu0 %v2356, 120
      %v2389 = vpop.permute.xlu0 %2388
      %2390 = vrot.lane.b32.xlu0 %v2359, 120
      %v2391 = vpop.permute.xlu0 %2390
      %2392 = vrot.lane.b32.xlu0 %v2362, 120
      %v2393 = vpop.permute.xlu0 %2392
      %2394 = vrot.lane.b32.xlu0 %v2365, 120
      %v2395 = vpop.permute.xlu0 %2394
      %2396 = vrot.lane.b32.xlu0 %v2368, 120
      %v2397 = vpop.permute.xlu0 %2396
      %2398 = vrot.lane.b32.xlu0 %v2371, 120
      %v2399 = vpop.permute.xlu0 %2398
      %2400 = vrot.lane.b32.xlu0 %v2374, 120
      %v2401 = vpop.permute.xlu0 %2400
      %2402 = vrot.lane.b32.xlu0 %v2377, 120
      %v2403 = vpop.permute.xlu0 %2402
      %2404 = vrot.lane.b32.xlu0 %v2380, 120
      %v2405 = vpop.permute.xlu0 %2404
      %2406 = vrot.lane.b32.xlu0 %v2381, 120
      %v2407 = vpop.permute.xlu0 %2406
      %vm2421 = vcmask 1044416
      %2422 = vst.msk [vmem:[#allocation2] sm:$0xf] %vm2421, %v2383
      %2423 = vst.msk [vmem:[#allocation2 + $0x8] sm:$0xf] %vm2421, %v2385
      %2424 = vst.msk [vmem:[#allocation2 + $0x10] sm:$0xf] %vm2421, %v2387
      %2425 = vst.msk [vmem:[#allocation2 + $0x18] sm:$0xf] %vm2421, %v2389
      %2426 = vst.msk [vmem:[#allocation2 + $0x20] sm:$0xf] %vm2421, %v2391
      %2427 = vst.msk [vmem:[#allocation2 + $0x28] sm:$0xf] %vm2421, %v2393
      %2428 = vst.msk [vmem:[#allocation2 + $0x30] sm:$0xf] %vm2421, %v2395
      %2429 = vst.msk [vmem:[#allocation2 + $0x38] sm:$0xf] %vm2421, %v2397
      %2430 = vst.msk [vmem:[#allocation2 + $0x40] sm:$0xf] %vm2421, %v2399
      %2431 = vst.msk [vmem:[#allocation2 + $0x48] sm:$0xf] %vm2421, %v2401
      %2432 = vst.msk [vmem:[#allocation2 + $0x50] sm:$0xf] %vm2421, %v2403
      %2433 = vst.msk [vmem:[#allocation2 + $0x58] sm:$0xf] %vm2421, %v2405
      %vm2434 = vcmask 1042368
      %2435 = vst.msk [vmem:[#allocation2 + $0x60] sm:$0x3] %vm2434, %v2407
      %v2436 = vpack.c.bf16 %v1557, %v1556
      %v2438 = vunpack.c.l.b16 %v2436
      %v2439 = vunpack.c.h.b16 %v2436
      %v2440 = vpack.c.b16 %v2438, %v2438
      %v2441 = vpack.c.b16 %v2439, %v2439
      %v2442 = vrot.slane %v1676, 6
      %v2443 = vrot.slane %v1672, 7
      %v2444 = vor.u32 %v2442, %v2443
      %v2445 = vrot.slane %v2444, 4
      %v2446 = vrot.slane %v1686, 6
      %v2447 = vrot.slane %v1682, 7
      %v2448 = vor.u32 %v2446, %v2447
      %v2449 = vsel %vm1290, %v2445, %v2448
      %v2450 = vrot.slane %v2448, 4
      %v2451 = vrot.slane %v1696, 6
      %v2452 = vrot.slane %v1692, 7
      %v2453 = vor.u32 %v2451, %v2452
      %v2454 = vsel %vm1290, %v2450, %v2453
      %v2455 = vrot.slane %v2453, 4
      %v2456 = vrot.slane %v1706, 6
      %v2457 = vrot.slane %v1702, 7
      %v2458 = vor.u32 %v2456, %v2457
      %v2459 = vsel %vm1290, %v2455, %v2458
      %v2460 = vrot.slane %v2458, 4
      %v2461 = vrot.slane %v1716, 6
      %v2462 = vrot.slane %v1712, 7
      %v2463 = vor.u32 %v2461, %v2462
      %v2464 = vsel %vm1290, %v2460, %v2463
      %v2465 = vrot.slane %v2463, 4
      %v2466 = vrot.slane %v1726, 6
      %v2467 = vrot.slane %v1722, 7
      %v2468 = vor.u32 %v2466, %v2467
      %v2469 = vsel %vm1290, %v2465, %v2468
      %v2470 = vrot.slane %v2468, 4
      %v2471 = vrot.slane %v1736, 6
      %v2472 = vrot.slane %v1732, 7
      %v2473 = vor.u32 %v2471, %v2472
      %v2474 = vsel %vm1290, %v2470, %v2473
      %v2475 = vrot.slane %v2473, 4
      %v2476 = vrot.slane %v1746, 6
      %v2477 = vrot.slane %v1742, 7
      %v2478 = vor.u32 %v2476, %v2477
      %v2479 = vsel %vm1290, %v2475, %v2478
      %v2480 = vrot.slane %v2478, 4
      %v2481 = vrot.slane %v1756, 6
      %v2482 = vrot.slane %v1752, 7
      %v2483 = vor.u32 %v2481, %v2482
      %v2484 = vsel %vm1290, %v2480, %v2483
      %v2485 = vrot.slane %v2483, 4
      %v2486 = vrot.slane %v1766, 6
      %v2487 = vrot.slane %v1762, 7
      %v2488 = vor.u32 %v2486, %v2487
      %v2489 = vsel %vm1290, %v2485, %v2488
      %v2490 = vrot.slane %v2488, 4
      %v2492 = vshrl.u32 %v2341, 16
      %v2494 = vrot.slane %v2492, 6
      %v2495 = vshll.u32 %v2341, 16
      %v2497 = vrot.slane %v2495, 7
      %v2498 = vor.u32 %v2494, %v2497
      %v2499 = vsel %vm1290, %v2490, %v2498
      %v2500 = vrot.slane %v2498, 4
      %v2502 = vshrl.u32 %v2342, 16
      %v2504 = vrot.slane %v2502, 6
      %v2505 = vshll.u32 %v2342, 16
      %v2507 = vrot.slane %v2505, 7
      %v2508 = vor.u32 %v2504, %v2507
      %v2509 = vsel %vm1290, %v2500, %v2508
      %v2510 = vrot.slane %v2508, 4
      %v2512 = vshrl.u32 %v2440, 16
      %v2514 = vrot.slane %v2512, 6
      %v2515 = vshll.u32 %v2440, 16
      %v2517 = vrot.slane %v2515, 7
      %v2518 = vor.u32 %v2514, %v2517
      %v2519 = vsel %vm1290, %v2510, %v2518
      %v2520 = vrot.slane %v2518, 4
      %v2522 = vshll.u32 %v2441, 16
      %v2524 = vrot.slane %v2522, 7
      %v2525 = vsel %vm1290, %v2520, %v2524
      %2539 = vst.msk [vmem:[#allocation2 + $0x4] sm:$0xf] %vm471, %v2449
      %2540 = vst.msk [vmem:[#allocation2 + $0xc] sm:$0xf] %vm471, %v2454
      %2541 = vst.msk [vmem:[#allocation2 + $0x14] sm:$0xf] %vm471, %v2459
      %2542 = vst.msk [vmem:[#allocation2 + $0x1c] sm:$0xf] %vm471, %v2464
      %2543 = vst.msk [vmem:[#allocation2 + $0x24] sm:$0xf] %vm471, %v2469
      %2544 = vst.msk [vmem:[#allocation2 + $0x2c] sm:$0xf] %vm471, %v2474
      %2545 = vst.msk [vmem:[#allocation2 + $0x34] sm:$0xf] %vm471, %v2479
      %2546 = vst.msk [vmem:[#allocation2 + $0x3c] sm:$0xf] %vm471, %v2484
      %2547 = vst.msk [vmem:[#allocation2 + $0x44] sm:$0xf] %vm471, %v2489
      %2548 = vst.msk [vmem:[#allocation2 + $0x4c] sm:$0xf] %vm471, %v2499
      %2549 = vst.msk [vmem:[#allocation2 + $0x54] sm:$0xf] %vm471, %v2509
      %2550 = vst.msk [vmem:[#allocation2 + $0x5c] sm:$0xf] %vm471, %v2519
      %2551 = vst.msk [vmem:[#allocation2 + $0x64] sm:$0x3] %vm484, %v2525
      %v2552 = vrot.slane %v1587, 7
      %v2553 = vrot.slane %v2552, 4
      %v2554 = vrot.slane %v1588, 7
      %v2555 = vsel %vm1431, %v2553, %v2554
      %v2556 = vrot.slane %v2554, 4
      %v2557 = vrot.slane %v1589, 7
      %v2558 = vsel %vm1431, %v2556, %v2557
      %v2559 = vrot.slane %v2557, 4
      %v2560 = vrot.slane %v1590, 7
      %v2561 = vsel %vm1431, %v2559, %v2560
      %v2562 = vrot.slane %v2560, 4
      %v2563 = vrot.slane %v1591, 7
      %v2564 = vsel %vm1431, %v2562, %v2563
      %v2565 = vrot.slane %v2563, 4
      %v2566 = vrot.slane %v1592, 7
      %v2567 = vsel %vm1431, %v2565, %v2566
      %v2568 = vrot.slane %v2566, 4
      %v2569 = vrot.slane %v1593, 7
      %v2570 = vsel %vm1431, %v2568, %v2569
      %v2571 = vrot.slane %v2569, 4
      %v2572 = vrot.slane %v1594, 7
      %v2573 = vsel %vm1431, %v2571, %v2572
      %v2574 = vrot.slane %v2572, 4
      %v2575 = vrot.slane %v1595, 7
      %v2576 = vsel %vm1431, %v2574, %v2575
      %v2577 = vrot.slane %v2575, 4
      %v2578 = vrot.slane %v1596, 7
      %v2579 = vsel %vm1431, %v2577, %v2578
      %v2580 = vrot.slane %v2578, 4
      %v2581 = vrot.slane %v2341, 7
      %v2582 = vsel %vm1431, %v2580, %v2581
      %v2583 = vrot.slane %v2581, 4
      %v2584 = vrot.slane %v2342, 7
      %v2585 = vsel %vm1431, %v2583, %v2584
      %v2586 = vrot.slane %v2584, 4
      %v2587 = vrot.slane %v2440, 7
      %v2588 = vsel %vm1431, %v2586, %v2587
      %v2589 = vrot.slane %v2587, 4
      %v2590 = vrot.slane %v2441, 7
      %v2591 = vsel %vm1431, %v2589, %v2590
      %2592 = vrot.lane.b32.xlu0 %v2555, 8
      %v2593 = vpop.permute.xlu0 %2592
      %2594 = vrot.lane.b32.xlu0 %v2558, 8
      %v2595 = vpop.permute.xlu0 %2594
      %2596 = vrot.lane.b32.xlu0 %v2561, 8
      %v2597 = vpop.permute.xlu0 %2596
      %2598 = vrot.lane.b32.xlu0 %v2564, 8
      %v2599 = vpop.permute.xlu0 %2598
      %2600 = vrot.lane.b32.xlu0 %v2567, 8
      %v2601 = vpop.permute.xlu0 %2600
      %2602 = vrot.lane.b32.xlu0 %v2570, 8
      %v2603 = vpop.permute.xlu0 %2602
      %2604 = vrot.lane.b32.xlu0 %v2573, 8
      %v2605 = vpop.permute.xlu0 %2604
      %2606 = vrot.lane.b32.xlu0 %v2576, 8
      %v2607 = vpop.permute.xlu0 %2606
      %2608 = vrot.lane.b32.xlu0 %v2579, 8
      %v2609 = vpop.permute.xlu0 %2608
      %2610 = vrot.lane.b32.xlu0 %v2582, 8
      %v2611 = vpop.permute.xlu0 %2610
      %2612 = vrot.lane.b32.xlu0 %v2585, 8
      %v2613 = vpop.permute.xlu0 %2612
      %2614 = vrot.lane.b32.xlu0 %v2588, 8
      %v2615 = vpop.permute.xlu0 %2614
      %2616 = vrot.lane.b32.xlu0 %v2591, 8
      %v2617 = vpop.permute.xlu0 %2616
      %2631 = vst.msk [vmem:[#allocation2 + $0x4] sm:$0xf] %vm657, %v2593
      %2632 = vst.msk [vmem:[#allocation2 + $0xc] sm:$0xf] %vm657, %v2595
      %2633 = vst.msk [vmem:[#allocation2 + $0x14] sm:$0xf] %vm657, %v2597
      %2634 = vst.msk [vmem:[#allocation2 + $0x1c] sm:$0xf] %vm657, %v2599
      %2635 = vst.msk [vmem:[#allocation2 + $0x24] sm:$0xf] %vm657, %v2601
      %2636 = vst.msk [vmem:[#allocation2 + $0x2c] sm:$0xf] %vm657, %v2603
      %2637 = vst.msk [vmem:[#allocation2 + $0x34] sm:$0xf] %vm657, %v2605
      %2638 = vst.msk [vmem:[#allocation2 + $0x3c] sm:$0xf] %vm657, %v2607
      %2639 = vst.msk [vmem:[#allocation2 + $0x44] sm:$0xf] %vm657, %v2609
      %2640 = vst.msk [vmem:[#allocation2 + $0x4c] sm:$0xf] %vm657, %v2611
      %2641 = vst.msk [vmem:[#allocation2 + $0x54] sm:$0xf] %vm657, %v2613
      %2642 = vst.msk [vmem:[#allocation2 + $0x5c] sm:$0xf] %vm657, %v2615
      %2643 = vst.msk [vmem:[#allocation2 + $0x64] sm:$0x3] %vm670, %v2617
      %v2644 = vld [vmem:[%s359] sm:$0xf]
      %v2645 = vld [vmem:[%s359 + $0x4] sm:$0xf]
      %v2646 = vld [vmem:[%s359 + $0x8] sm:$0xf]
      %v2647 = vld [vmem:[%s359 + $0xc] sm:$0xf]
      %v2648 = vld [vmem:[%s359 + $0x10] sm:$0xf]
      %v2649 = vld [vmem:[%s359 + $0x14] sm:$0xf]
      %v2650 = vld [vmem:[%s359 + $0x18] sm:$0xf]
      %v2651 = vld [vmem:[%s359 + $0x1c] sm:$0xf]
      %v2652 = vld [vmem:[%s359 + $0x20] sm:$0xf]
      %v2653 = vld [vmem:[%s359 + $0x24] sm:$0xf]
      %v2654 = vld [vmem:[%s359 + $0x28] sm:$0xf]
      %v2655 = vld [vmem:[%s359 + $0x2c] sm:$0xf]
      %v2656 = vld [vmem:[%s359 + $0x30] sm:$0xf]
      %v2657 = vld [vmem:[%s359 + $0x34] sm:$0xf]
      %v2658 = vld [vmem:[%s359 + $0x38] sm:$0xf]
      %v2659 = vld [vmem:[%s359 + $0x3c] sm:$0x1]
      %v2660 = vunpack.c.l.bf16 %v2644
      %v2661 = vunpack.c.l.bf16 %v2645
      %v2662 = vunpack.c.l.bf16 %v2646
      %v2663 = vunpack.c.l.bf16 %v2647
      %v2664 = vunpack.c.l.bf16 %v2648
      %v2665 = vunpack.c.l.bf16 %v2649
      %v2666 = vunpack.c.l.bf16 %v2650
      %v2667 = vunpack.c.l.bf16 %v2651
      %v2668 = vunpack.c.l.bf16 %v2652
      %v2669 = vunpack.c.l.bf16 %v2653
      %v2670 = vunpack.c.l.bf16 %v2654
      %v2671 = vunpack.c.l.bf16 %v2655
      %v2672 = vunpack.c.l.bf16 %v2656
      %v2673 = vunpack.c.l.bf16 %v2657
      %v2674 = vunpack.c.l.bf16 %v2658
      %v2675 = vunpack.c.l.bf16 %v2659
      %v2676 = vpack.c.bf16 %v2661, %v2660
      %v2677 = vpack.c.bf16 %v2663, %v2662
      %v2678 = vpack.c.bf16 %v2665, %v2664
      %v2679 = vpack.c.bf16 %v2667, %v2666
      %v2680 = vpack.c.bf16 %v2669, %v2668
      %v2681 = vpack.c.bf16 %v2671, %v2670
      %v2682 = vpack.c.bf16 %v2672, %v2672
      %v2690 = vunpack.c.l.b16 %v2676
      %v2691 = vunpack.c.h.b16 %v2676
      %v2692 = vunpack.c.l.b16 %v2677
      %v2693 = vunpack.c.h.b16 %v2677
      %v2694 = vunpack.c.l.b16 %v2678
      %v2695 = vunpack.c.h.b16 %v2678
      %v2696 = vunpack.c.l.b16 %v2679
      %v2697 = vunpack.c.h.b16 %v2679
      %v2698 = vunpack.c.l.b16 %v2680
      %v2699 = vunpack.c.h.b16 %v2680
      %v2700 = vunpack.c.l.b16 %v2681
      %v2701 = vunpack.c.h.b16 %v2681
      %v2702 = vunpack.c.l.b16 %v2682
      %v2703 = vpack.c.b16 %v2690, %v2690
      %v2704 = vpack.c.b16 %v2691, %v2691
      %v2705 = vpack.c.b16 %v2692, %v2692
      %v2706 = vpack.c.b16 %v2693, %v2693
      %v2707 = vpack.c.b16 %v2694, %v2694
      %v2708 = vpack.c.b16 %v2695, %v2695
      %v2709 = vpack.c.b16 %v2696, %v2696
      %v2710 = vpack.c.b16 %v2697, %v2697
      %v2711 = vpack.c.b16 %v2698, %v2698
      %v2712 = vpack.c.b16 %v2699, %v2699
      %v2713 = vpack.c.b16 %v2700, %v2700
      %v2714 = vpack.c.b16 %v2701, %v2701
      %v2715 = vpack.c.b16 %v2702, %v2702
      %2716 = vrot.lane.b32.xlu0 %v2703, 16
      %v2717 = vpop.permute.xlu0 %2716
      %2718 = vrot.lane.b32.xlu0 %v2704, 16
      %v2719 = vpop.permute.xlu0 %2718
      %2720 = vrot.lane.b32.xlu0 %v2705, 16
      %v2721 = vpop.permute.xlu0 %2720
      %2722 = vrot.lane.b32.xlu0 %v2706, 16
      %v2723 = vpop.permute.xlu0 %2722
      %2724 = vrot.lane.b32.xlu0 %v2707, 16
      %v2725 = vpop.permute.xlu0 %2724
      %2726 = vrot.lane.b32.xlu0 %v2708, 16
      %v2727 = vpop.permute.xlu0 %2726
      %2728 = vrot.lane.b32.xlu0 %v2709, 16
      %v2729 = vpop.permute.xlu0 %2728
      %2730 = vrot.lane.b32.xlu0 %v2710, 16
      %v2731 = vpop.permute.xlu0 %2730
      %2732 = vrot.lane.b32.xlu0 %v2711, 16
      %v2733 = vpop.permute.xlu0 %2732
      %2734 = vrot.lane.b32.xlu0 %v2712, 16
      %v2735 = vpop.permute.xlu0 %2734
      %2736 = vrot.lane.b32.xlu0 %v2713, 16
      %v2737 = vpop.permute.xlu0 %2736
      %2738 = vrot.lane.b32.xlu0 %v2714, 16
      %v2739 = vpop.permute.xlu0 %2738
      %2740 = vrot.lane.b32.xlu0 %v2715, 16
      %v2741 = vpop.permute.xlu0 %2740
      %2755 = vst.msk [vmem:[#allocation2 + $0x4] sm:$0xf] %vm752, %v2717
      %2756 = vst.msk [vmem:[#allocation2 + $0xc] sm:$0xf] %vm752, %v2719
      %2757 = vst.msk [vmem:[#allocation2 + $0x14] sm:$0xf] %vm752, %v2721
      %2758 = vst.msk [vmem:[#allocation2 + $0x1c] sm:$0xf] %vm752, %v2723
      %2759 = vst.msk [vmem:[#allocation2 + $0x24] sm:$0xf] %vm752, %v2725
      %2760 = vst.msk [vmem:[#allocation2 + $0x2c] sm:$0xf] %vm752, %v2727
      %2761 = vst.msk [vmem:[#allocation2 + $0x34] sm:$0xf] %vm752, %v2729
      %2762 = vst.msk [vmem:[#allocation2 + $0x3c] sm:$0xf] %vm752, %v2731
      %2763 = vst.msk [vmem:[#allocation2 + $0x44] sm:$0xf] %vm752, %v2733
      %2764 = vst.msk [vmem:[#allocation2 + $0x4c] sm:$0xf] %vm752, %v2735
      %2765 = vst.msk [vmem:[#allocation2 + $0x54] sm:$0xf] %vm752, %v2737
      %2766 = vst.msk [vmem:[#allocation2 + $0x5c] sm:$0xf] %vm752, %v2739
      %2767 = vst.msk [vmem:[#allocation2 + $0x64] sm:$0x3] %vm765, %v2741
      %v2769 = vshrl.u32 %v2703, 16
      %v2771 = vrot.slane %v2769, 4
      %v2772 = vshll.u32 %v2703, 16
      %v2774 = vrot.slane %v2772, 5
      %v2775 = vor.u32 %v2771, %v2774
      %v2776 = vrot.slane %v2775, 4
      %v2778 = vshll.u32 %v2704, 16
      %v2780 = vrot.slane %v2778, 5
      %v2781 = vsel %vm488, %v2776, %v2780
      %v2782 = vshrl.u32 %v2704, 16
      %v2784 = vrot.slane %v2782, 4
      %v2785 = vor.u32 %v2784, %v2780
      %v2786 = vrot.slane %v2785, 4
      %v2788 = vshll.u32 %v2705, 16
      %v2790 = vrot.slane %v2788, 5
      %v2791 = vsel %vm488, %v2786, %v2790
      %v2792 = vshrl.u32 %v2705, 16
      %v2794 = vrot.slane %v2792, 4
      %v2795 = vor.u32 %v2794, %v2790
      %v2796 = vrot.slane %v2795, 4
      %v2798 = vshll.u32 %v2706, 16
      %v2800 = vrot.slane %v2798, 5
      %v2801 = vsel %vm488, %v2796, %v2800
      %v2802 = vshrl.u32 %v2706, 16
      %v2804 = vrot.slane %v2802, 4
      %v2805 = vor.u32 %v2804, %v2800
      %v2806 = vrot.slane %v2805, 4
      %v2808 = vshll.u32 %v2707, 16
      %v2810 = vrot.slane %v2808, 5
      %v2811 = vsel %vm488, %v2806, %v2810
      %v2812 = vshrl.u32 %v2707, 16
      %v2814 = vrot.slane %v2812, 4
      %v2815 = vor.u32 %v2814, %v2810
      %v2816 = vrot.slane %v2815, 4
      %v2818 = vshll.u32 %v2708, 16
      %v2820 = vrot.slane %v2818, 5
      %v2821 = vsel %vm488, %v2816, %v2820
      %v2822 = vshrl.u32 %v2708, 16
      %v2824 = vrot.slane %v2822, 4
      %v2825 = vor.u32 %v2824, %v2820
      %v2826 = vrot.slane %v2825, 4
      %v2828 = vshll.u32 %v2709, 16
      %v2830 = vrot.slane %v2828, 5
      %v2831 = vsel %vm488, %v2826, %v2830
      %v2832 = vshrl.u32 %v2709, 16
      %v2834 = vrot.slane %v2832, 4
      %v2835 = vor.u32 %v2834, %v2830
      %v2836 = vrot.slane %v2835, 4
      %v2838 = vshll.u32 %v2710, 16
      %v2840 = vrot.slane %v2838, 5
      %v2841 = vsel %vm488, %v2836, %v2840
      %v2842 = vshrl.u32 %v2710, 16
      %v2844 = vrot.slane %v2842, 4
      %v2845 = vor.u32 %v2844, %v2840
      %v2846 = vrot.slane %v2845, 4
      %v2848 = vshll.u32 %v2711, 16
      %v2850 = vrot.slane %v2848, 5
      %v2851 = vsel %vm488, %v2846, %v2850
      %v2852 = vshrl.u32 %v2711, 16
      %v2854 = vrot.slane %v2852, 4
      %v2855 = vor.u32 %v2854, %v2850
      %v2856 = vrot.slane %v2855, 4
      %v2858 = vshll.u32 %v2712, 16
      %v2860 = vrot.slane %v2858, 5
      %v2861 = vsel %vm488, %v2856, %v2860
      %v2862 = vshrl.u32 %v2712, 16
      %v2864 = vrot.slane %v2862, 4
      %v2865 = vor.u32 %v2864, %v2860
      %v2866 = vrot.slane %v2865, 4
      %v2868 = vshll.u32 %v2713, 16
      %v2870 = vrot.slane %v2868, 5
      %v2871 = vsel %vm488, %v2866, %v2870
      %v2872 = vshrl.u32 %v2713, 16
      %v2874 = vrot.slane %v2872, 4
      %v2875 = vor.u32 %v2874, %v2870
      %v2876 = vrot.slane %v2875, 4
      %v2878 = vshll.u32 %v2714, 16
      %v2880 = vrot.slane %v2878, 5
      %v2881 = vsel %vm488, %v2876, %v2880
      %v2882 = vshrl.u32 %v2714, 16
      %v2884 = vrot.slane %v2882, 4
      %v2885 = vor.u32 %v2884, %v2880
      %v2886 = vrot.slane %v2885, 4
      %v2888 = vshll.u32 %v2715, 16
      %v2890 = vrot.slane %v2888, 5
      %v2891 = vsel %vm488, %v2886, %v2890
      %v2892 = vshrl.u32 %v2715, 16
      %v2894 = vrot.slane %v2892, 4
      %v2895 = vor.u32 %v2894, %v2890
      %v2896 = vrot.slane %v2895, 4
      %2897 = vrot.lane.b32.xlu0 %v2781, 24
      %v2898 = vpop.permute.xlu0 %2897
      %2899 = vrot.lane.b32.xlu0 %v2791, 24
      %v2900 = vpop.permute.xlu0 %2899
      %2901 = vrot.lane.b32.xlu0 %v2801, 24
      %v2902 = vpop.permute.xlu0 %2901
      %2903 = vrot.lane.b32.xlu0 %v2811, 24
      %v2904 = vpop.permute.xlu0 %2903
      %2905 = vrot.lane.b32.xlu0 %v2821, 24
      %v2906 = vpop.permute.xlu0 %2905
      %2907 = vrot.lane.b32.xlu0 %v2831, 24
      %v2908 = vpop.permute.xlu0 %2907
      %2909 = vrot.lane.b32.xlu0 %v2841, 24
      %v2910 = vpop.permute.xlu0 %2909
      %2911 = vrot.lane.b32.xlu0 %v2851, 24
      %v2912 = vpop.permute.xlu0 %2911
      %2913 = vrot.lane.b32.xlu0 %v2861, 24
      %v2914 = vpop.permute.xlu0 %2913
      %2915 = vrot.lane.b32.xlu0 %v2871, 24
      %v2916 = vpop.permute.xlu0 %2915
      %2917 = vrot.lane.b32.xlu0 %v2881, 24
      %v2918 = vpop.permute.xlu0 %2917
      %2919 = vrot.lane.b32.xlu0 %v2891, 24
      %v2920 = vpop.permute.xlu0 %2919
      %2921 = vrot.lane.b32.xlu0 %v2896, 24
      %v2922 = vpop.permute.xlu0 %2921
      %2936 = vst.msk [vmem:[#allocation2 + $0x4] sm:$0xf] %vm884, %v2898
      %2937 = vst.msk [vmem:[#allocation2 + $0xc] sm:$0xf] %vm884, %v2900
      %2938 = vst.msk [vmem:[#allocation2 + $0x14] sm:$0xf] %vm884, %v2902
      %2939 = vst.msk [vmem:[#allocation2 + $0x1c] sm:$0xf] %vm884, %v2904
      %2940 = vst.msk [vmem:[#allocation2 + $0x24] sm:$0xf] %vm884, %v2906
      %2941 = vst.msk [vmem:[#allocation2 + $0x2c] sm:$0xf] %vm884, %v2908
      %2942 = vst.msk [vmem:[#allocation2 + $0x34] sm:$0xf] %vm884, %v2910
      %2943 = vst.msk [vmem:[#allocation2 + $0x3c] sm:$0xf] %vm884, %v2912
      %2944 = vst.msk [vmem:[#allocation2 + $0x44] sm:$0xf] %vm884, %v2914
      %2945 = vst.msk [vmem:[#allocation2 + $0x4c] sm:$0xf] %vm884, %v2916
      %2946 = vst.msk [vmem:[#allocation2 + $0x54] sm:$0xf] %vm884, %v2918
      %2947 = vst.msk [vmem:[#allocation2 + $0x5c] sm:$0xf] %vm884, %v2920
      %2948 = vst.msk [vmem:[#allocation2 + $0x64] sm:$0x3] %vm897, %v2922
      %v2949 = vrot.slane %v2703, 5
      %v2950 = vrot.slane %v2949, 4
      %v2951 = vrot.slane %v2704, 5
      %v2952 = vsel %vm674, %v2950, %v2951
      %v2953 = vrot.slane %v2951, 4
      %v2954 = vrot.slane %v2705, 5
      %v2955 = vsel %vm674, %v2953, %v2954
      %v2956 = vrot.slane %v2954, 4
      %v2957 = vrot.slane %v2706, 5
      %v2958 = vsel %vm674, %v2956, %v2957
      %v2959 = vrot.slane %v2957, 4
      %v2960 = vrot.slane %v2707, 5
      %v2961 = vsel %vm674, %v2959, %v2960
      %v2962 = vrot.slane %v2960, 4
      %v2963 = vrot.slane %v2708, 5
      %v2964 = vsel %vm674, %v2962, %v2963
      %v2965 = vrot.slane %v2963, 4
      %v2966 = vrot.slane %v2709, 5
      %v2967 = vsel %vm674, %v2965, %v2966
      %v2968 = vrot.slane %v2966, 4
      %v2969 = vrot.slane %v2710, 5
      %v2970 = vsel %vm674, %v2968, %v2969
      %v2971 = vrot.slane %v2969, 4
      %v2972 = vrot.slane %v2711, 5
      %v2973 = vsel %vm674, %v2971, %v2972
      %v2974 = vrot.slane %v2972, 4
      %v2975 = vrot.slane %v2712, 5
      %v2976 = vsel %vm674, %v2974, %v2975
      %v2977 = vrot.slane %v2975, 4
      %v2978 = vrot.slane %v2713, 5
      %v2979 = vsel %vm674, %v2977, %v2978
      %v2980 = vrot.slane %v2978, 4
      %v2981 = vrot.slane %v2714, 5
      %v2982 = vsel %vm674, %v2980, %v2981
      %v2983 = vrot.slane %v2981, 4
      %v2984 = vrot.slane %v2715, 5
      %v2985 = vsel %vm674, %v2983, %v2984
      %v2986 = vrot.slane %v2984, 4
      %2987 = vrot.lane.b32.xlu0 %v2952, 32
      %v2988 = vpop.permute.xlu0 %2987
      %2989 = vrot.lane.b32.xlu0 %v2955, 32
      %v2990 = vpop.permute.xlu0 %2989
      %2991 = vrot.lane.b32.xlu0 %v2958, 32
      %v2992 = vpop.permute.xlu0 %2991
      %2993 = vrot.lane.b32.xlu0 %v2961, 32
      %v2994 = vpop.permute.xlu0 %2993
      %2995 = vrot.lane.b32.xlu0 %v2964, 32
      %v2996 = vpop.permute.xlu0 %2995
      %2997 = vrot.lane.b32.xlu0 %v2967, 32
      %v2998 = vpop.permute.xlu0 %2997
      %2999 = vrot.lane.b32.xlu0 %v2970, 32
      %v3000 = vpop.permute.xlu0 %2999
      %3001 = vrot.lane.b32.xlu0 %v2973, 32
      %v3002 = vpop.permute.xlu0 %3001
      %3003 = vrot.lane.b32.xlu0 %v2976, 32
      %v3004 = vpop.permute.xlu0 %3003
      %3005 = vrot.lane.b32.xlu0 %v2979, 32
      %v3006 = vpop.permute.xlu0 %3005
      %3007 = vrot.lane.b32.xlu0 %v2982, 32
      %v3008 = vpop.permute.xlu0 %3007
      %3009 = vrot.lane.b32.xlu0 %v2985, 32
      %v3010 = vpop.permute.xlu0 %3009
      %3011 = vrot.lane.b32.xlu0 %v2986, 32
      %v3012 = vpop.permute.xlu0 %3011
      %3026 = vst.msk [vmem:[#allocation2 + $0x4] sm:$0xf] %vm1070, %v2988
      %3027 = vst.msk [vmem:[#allocation2 + $0xc] sm:$0xf] %vm1070, %v2990
      %3028 = vst.msk [vmem:[#allocation2 + $0x14] sm:$0xf] %vm1070, %v2992
      %3029 = vst.msk [vmem:[#allocation2 + $0x1c] sm:$0xf] %vm1070, %v2994
      %3030 = vst.msk [vmem:[#allocation2 + $0x24] sm:$0xf] %vm1070, %v2996
      %3031 = vst.msk [vmem:[#allocation2 + $0x2c] sm:$0xf] %vm1070, %v2998
      %3032 = vst.msk [vmem:[#allocation2 + $0x34] sm:$0xf] %vm1070, %v3000
      %3033 = vst.msk [vmem:[#allocation2 + $0x3c] sm:$0xf] %vm1070, %v3002
      %3034 = vst.msk [vmem:[#allocation2 + $0x44] sm:$0xf] %vm1070, %v3004
      %3035 = vst.msk [vmem:[#allocation2 + $0x4c] sm:$0xf] %vm1070, %v3006
      %3036 = vst.msk [vmem:[#allocation2 + $0x54] sm:$0xf] %vm1070, %v3008
      %3037 = vst.msk [vmem:[#allocation2 + $0x5c] sm:$0xf] %vm1070, %v3010
      %3038 = vst.msk [vmem:[#allocation2 + $0x64] sm:$0x3] %vm1083, %v3012
      %v3039 = vpack.c.bf16 %v2662, %v2661
      %v3040 = vpack.c.bf16 %v2664, %v2663
      %v3041 = vpack.c.bf16 %v2666, %v2665
      %v3042 = vpack.c.bf16 %v2668, %v2667
      %v3043 = vpack.c.bf16 %v2670, %v2669
      %v3044 = vpack.c.bf16 %v2672, %v2671
      %v3045 = vpack.c.bf16 %v2673, %v2673
      %v3053 = vunpack.c.l.b16 %v3039
      %v3054 = vunpack.c.h.b16 %v3039
      %v3055 = vunpack.c.l.b16 %v3040
      %v3056 = vunpack.c.h.b16 %v3040
      %v3057 = vunpack.c.l.b16 %v3041
      %v3058 = vunpack.c.h.b16 %v3041
      %v3059 = vunpack.c.l.b16 %v3042
      %v3060 = vunpack.c.h.b16 %v3042
      %v3061 = vunpack.c.l.b16 %v3043
      %v3062 = vunpack.c.h.b16 %v3043
      %v3063 = vunpack.c.l.b16 %v3044
      %v3064 = vunpack.c.h.b16 %v3044
      %v3065 = vunpack.c.l.b16 %v3045
      %v3066 = vpack.c.b16 %v3053, %v3053
      %v3067 = vpack.c.b16 %v3054, %v3054
      %v3068 = vpack.c.b16 %v3055, %v3055
      %v3069 = vpack.c.b16 %v3056, %v3056
      %v3070 = vpack.c.b16 %v3057, %v3057
      %v3071 = vpack.c.b16 %v3058, %v3058
      %v3072 = vpack.c.b16 %v3059, %v3059
      %v3073 = vpack.c.b16 %v3060, %v3060
      %v3074 = vpack.c.b16 %v3061, %v3061
      %v3075 = vpack.c.b16 %v3062, %v3062
      %v3076 = vpack.c.b16 %v3063, %v3063
      %v3077 = vpack.c.b16 %v3064, %v3064
      %v3078 = vpack.c.b16 %v3065, %v3065
      %v3079 = vrot.slane %v3066, 5
      %v3080 = vrot.slane %v3079, 4
      %v3081 = vrot.slane %v3067, 5
      %v3082 = vsel %vm674, %v3080, %v3081
      %v3083 = vrot.slane %v3081, 4
      %v3084 = vrot.slane %v3068, 5
      %v3085 = vsel %vm674, %v3083, %v3084
      %v3086 = vrot.slane %v3084, 4
      %v3087 = vrot.slane %v3069, 5
      %v3088 = vsel %vm674, %v3086, %v3087
      %v3089 = vrot.slane %v3087, 4
      %v3090 = vrot.slane %v3070, 5
      %v3091 = vsel %vm674, %v3089, %v3090
      %v3092 = vrot.slane %v3090, 4
      %v3093 = vrot.slane %v3071, 5
      %v3094 = vsel %vm674, %v3092, %v3093
      %v3095 = vrot.slane %v3093, 4
      %v3096 = vrot.slane %v3072, 5
      %v3097 = vsel %vm674, %v3095, %v3096
      %v3098 = vrot.slane %v3096, 4
      %v3099 = vrot.slane %v3073, 5
      %v3100 = vsel %vm674, %v3098, %v3099
      %v3101 = vrot.slane %v3099, 4
      %v3102 = vrot.slane %v3074, 5
      %v3103 = vsel %vm674, %v3101, %v3102
      %v3104 = vrot.slane %v3102, 4
      %v3105 = vrot.slane %v3075, 5
      %v3106 = vsel %vm674, %v3104, %v3105
      %v3107 = vrot.slane %v3105, 4
      %v3108 = vrot.slane %v3076, 5
      %v3109 = vsel %vm674, %v3107, %v3108
      %v3110 = vrot.slane %v3108, 4
      %v3111 = vrot.slane %v3077, 5
      %v3112 = vsel %vm674, %v3110, %v3111
      %v3113 = vrot.slane %v3111, 4
      %v3114 = vrot.slane %v3078, 5
      %v3115 = vsel %vm674, %v3113, %v3114
      %v3116 = vrot.slane %v3114, 4
      %3117 = vrot.lane.b32.xlu0 %v3082, 40
      %v3118 = vpop.permute.xlu0 %3117
      %3119 = vrot.lane.b32.xlu0 %v3085, 40
      %v3120 = vpop.permute.xlu0 %3119
      %3121 = vrot.lane.b32.xlu0 %v3088, 40
      %v3122 = vpop.permute.xlu0 %3121
      %3123 = vrot.lane.b32.xlu0 %v3091, 40
      %v3124 = vpop.permute.xlu0 %3123
      %3125 = vrot.lane.b32.xlu0 %v3094, 40
      %v3126 = vpop.permute.xlu0 %3125
      %3127 = vrot.lane.b32.xlu0 %v3097, 40
      %v3128 = vpop.permute.xlu0 %3127
      %3129 = vrot.lane.b32.xlu0 %v3100, 40
      %v3130 = vpop.permute.xlu0 %3129
      %3131 = vrot.lane.b32.xlu0 %v3103, 40
      %v3132 = vpop.permute.xlu0 %3131
      %3133 = vrot.lane.b32.xlu0 %v3106, 40
      %v3134 = vpop.permute.xlu0 %3133
      %3135 = vrot.lane.b32.xlu0 %v3109, 40
      %v3136 = vpop.permute.xlu0 %3135
      %3137 = vrot.lane.b32.xlu0 %v3112, 40
      %v3138 = vpop.permute.xlu0 %3137
      %3139 = vrot.lane.b32.xlu0 %v3115, 40
      %v3140 = vpop.permute.xlu0 %3139
      %3141 = vrot.lane.b32.xlu0 %v3116, 40
      %v3142 = vpop.permute.xlu0 %3141
      %3156 = vst.msk [vmem:[#allocation2 + $0x4] sm:$0xf] %vm1165, %v3118
      %3157 = vst.msk [vmem:[#allocation2 + $0xc] sm:$0xf] %vm1165, %v3120
      %3158 = vst.msk [vmem:[#allocation2 + $0x14] sm:$0xf] %vm1165, %v3122
      %3159 = vst.msk [vmem:[#allocation2 + $0x1c] sm:$0xf] %vm1165, %v3124
      %3160 = vst.msk [vmem:[#allocation2 + $0x24] sm:$0xf] %vm1165, %v3126
      %3161 = vst.msk [vmem:[#allocation2 + $0x2c] sm:$0xf] %vm1165, %v3128
      %3162 = vst.msk [vmem:[#allocation2 + $0x34] sm:$0xf] %vm1165, %v3130
      %3163 = vst.msk [vmem:[#allocation2 + $0x3c] sm:$0xf] %vm1165, %v3132
      %3164 = vst.msk [vmem:[#allocation2 + $0x44] sm:$0xf] %vm1165, %v3134
      %3165 = vst.msk [vmem:[#allocation2 + $0x4c] sm:$0xf] %vm1165, %v3136
      %3166 = vst.msk [vmem:[#allocation2 + $0x54] sm:$0xf] %vm1165, %v3138
      %3167 = vst.msk [vmem:[#allocation2 + $0x5c] sm:$0xf] %vm1165, %v3140
      %3168 = vst.msk [vmem:[#allocation2 + $0x64] sm:$0x3] %vm1178, %v3142
      %v3170 = vshrl.u32 %v3066, 16
      %v3172 = vrot.slane %v3170, 5
      %v3173 = vshll.u32 %v3066, 16
      %v3175 = vrot.slane %v3173, 6
      %v3176 = vor.u32 %v3172, %v3175
      %v3177 = vrot.slane %v3176, 4
      %v3179 = vshrl.u32 %v3067, 16
      %v3181 = vrot.slane %v3179, 5
      %v3182 = vshll.u32 %v3067, 16
      %v3184 = vrot.slane %v3182, 6
      %v3185 = vor.u32 %v3181, %v3184
      %v3186 = vsel %vm901, %v3177, %v3185
      %v3187 = vrot.slane %v3185, 4
      %v3189 = vshrl.u32 %v3068, 16
      %v3191 = vrot.slane %v3189, 5
      %v3192 = vshll.u32 %v3068, 16
      %v3194 = vrot.slane %v3192, 6
      %v3195 = vor.u32 %v3191, %v3194
      %v3196 = vsel %vm901, %v3187, %v3195
      %v3197 = vrot.slane %v3195, 4
      %v3199 = vshrl.u32 %v3069, 16
      %v3201 = vrot.slane %v3199, 5
      %v3202 = vshll.u32 %v3069, 16
      %v3204 = vrot.slane %v3202, 6
      %v3205 = vor.u32 %v3201, %v3204
      %v3206 = vsel %vm901, %v3197, %v3205
      %v3207 = vrot.slane %v3205, 4
      %v3209 = vshrl.u32 %v3070, 16
      %v3211 = vrot.slane %v3209, 5
      %v3212 = vshll.u32 %v3070, 16
      %v3214 = vrot.slane %v3212, 6
      %v3215 = vor.u32 %v3211, %v3214
      %v3216 = vsel %vm901, %v3207, %v3215
      %v3217 = vrot.slane %v3215, 4
      %v3219 = vshrl.u32 %v3071, 16
      %v3221 = vrot.slane %v3219, 5
      %v3222 = vshll.u32 %v3071, 16
      %v3224 = vrot.slane %v3222, 6
      %v3225 = vor.u32 %v3221, %v3224
      %v3226 = vsel %vm901, %v3217, %v3225
      %v3227 = vrot.slane %v3225, 4
      %v3229 = vshrl.u32 %v3072, 16
      %v3231 = vrot.slane %v3229, 5
      %v3232 = vshll.u32 %v3072, 16
      %v3234 = vrot.slane %v3232, 6
      %v3235 = vor.u32 %v3231, %v3234
      %v3236 = vsel %vm901, %v3227, %v3235
      %v3237 = vrot.slane %v3235, 4
      %v3239 = vshrl.u32 %v3073, 16
      %v3241 = vrot.slane %v3239, 5
      %v3242 = vshll.u32 %v3073, 16
      %v3244 = vrot.slane %v3242, 6
      %v3245 = vor.u32 %v3241, %v3244
      %v3246 = vsel %vm901, %v3237, %v3245
      %v3247 = vrot.slane %v3245, 4
      %v3249 = vshrl.u32 %v3074, 16
      %v3251 = vrot.slane %v3249, 5
      %v3252 = vshll.u32 %v3074, 16
      %v3254 = vrot.slane %v3252, 6
      %v3255 = vor.u32 %v3251, %v3254
      %v3256 = vsel %vm901, %v3247, %v3255
      %v3257 = vrot.slane %v3255, 4
      %v3259 = vshrl.u32 %v3075, 16
      %v3261 = vrot.slane %v3259, 5
      %v3262 = vshll.u32 %v3075, 16
      %v3264 = vrot.slane %v3262, 6
      %v3265 = vor.u32 %v3261, %v3264
      %v3266 = vsel %vm901, %v3257, %v3265
      %v3267 = vrot.slane %v3265, 4
      %v3269 = vshrl.u32 %v3076, 16
      %v3271 = vrot.slane %v3269, 5
      %v3272 = vshll.u32 %v3076, 16
      %v3274 = vrot.slane %v3272, 6
      %v3275 = vor.u32 %v3271, %v3274
      %v3276 = vsel %vm901, %v3267, %v3275
      %v3277 = vrot.slane %v3275, 4
      %v3279 = vshrl.u32 %v3077, 16
      %v3281 = vrot.slane %v3279, 5
      %v3282 = vshll.u32 %v3077, 16
      %v3284 = vrot.slane %v3282, 6
      %v3285 = vor.u32 %v3281, %v3284
      %v3286 = vsel %vm901, %v3277, %v3285
      %v3287 = vrot.slane %v3285, 4
      %v3289 = vshrl.u32 %v3078, 16
      %v3291 = vrot.slane %v3289, 5
      %v3292 = vshll.u32 %v3078, 16
      %v3294 = vrot.slane %v3292, 6
      %v3295 = vor.u32 %v3291, %v3294
      %v3296 = vsel %vm901, %v3287, %v3295
      %v3297 = vrot.slane %v3295, 4
      %3298 = vrot.lane.b32.xlu0 %v3186, 48
      %v3299 = vpop.permute.xlu0 %3298
      %3300 = vrot.lane.b32.xlu0 %v3196, 48
      %v3301 = vpop.permute.xlu0 %3300
      %3302 = vrot.lane.b32.xlu0 %v3206, 48
      %v3303 = vpop.permute.xlu0 %3302
      %3304 = vrot.lane.b32.xlu0 %v3216, 48
      %v3305 = vpop.permute.xlu0 %3304
      %3306 = vrot.lane.b32.xlu0 %v3226, 48
      %v3307 = vpop.permute.xlu0 %3306
      %3308 = vrot.lane.b32.xlu0 %v3236, 48
      %v3309 = vpop.permute.xlu0 %3308
      %3310 = vrot.lane.b32.xlu0 %v3246, 48
      %v3311 = vpop.permute.xlu0 %3310
      %3312 = vrot.lane.b32.xlu0 %v3256, 48
      %v3313 = vpop.permute.xlu0 %3312
      %3314 = vrot.lane.b32.xlu0 %v3266, 48
      %v3315 = vpop.permute.xlu0 %3314
      %3316 = vrot.lane.b32.xlu0 %v3276, 48
      %v3317 = vpop.permute.xlu0 %3316
      %3318 = vrot.lane.b32.xlu0 %v3286, 48
      %v3319 = vpop.permute.xlu0 %3318
      %3320 = vrot.lane.b32.xlu0 %v3296, 48
      %v3321 = vpop.permute.xlu0 %3320
      %3322 = vrot.lane.b32.xlu0 %v3297, 48
      %v3323 = vpop.permute.xlu0 %3322
      %3337 = vst.msk [vmem:[#allocation2 + $0x4] sm:$0xf] %vm1267, %v3299
      %3338 = vst.msk [vmem:[#allocation2 + $0xc] sm:$0xf] %vm1267, %v3301
      %3339 = vst.msk [vmem:[#allocation2 + $0x14] sm:$0xf] %vm1267, %v3303
      %3340 = vst.msk [vmem:[#allocation2 + $0x1c] sm:$0xf] %vm1267, %v3305
      %3341 = vst.msk [vmem:[#allocation2 + $0x24] sm:$0xf] %vm1267, %v3307
      %3342 = vst.msk [vmem:[#allocation2 + $0x2c] sm:$0xf] %vm1267, %v3309
      %3343 = vst.msk [vmem:[#allocation2 + $0x34] sm:$0xf] %vm1267, %v3311
      %3344 = vst.msk [vmem:[#allocation2 + $0x3c] sm:$0xf] %vm1267, %v3313
      %3345 = vst.msk [vmem:[#allocation2 + $0x44] sm:$0xf] %vm1267, %v3315
      %3346 = vst.msk [vmem:[#allocation2 + $0x4c] sm:$0xf] %vm1267, %v3317
      %3347 = vst.msk [vmem:[#allocation2 + $0x54] sm:$0xf] %vm1267, %v3319
      %3348 = vst.msk [vmem:[#allocation2 + $0x5c] sm:$0xf] %vm1267, %v3321
      %3349 = vst.msk [vmem:[#allocation2 + $0x64] sm:$0x3] %vm1280, %v3323
      %v3350 = vrot.slane %v3066, 6
      %v3351 = vrot.slane %v3350, 4
      %v3352 = vrot.slane %v3067, 6
      %v3353 = vsel %vm1087, %v3351, %v3352
      %v3354 = vrot.slane %v3352, 4
      %v3355 = vrot.slane %v3068, 6
      %v3356 = vsel %vm1087, %v3354, %v3355
      %v3357 = vrot.slane %v3355, 4
      %v3358 = vrot.slane %v3069, 6
      %v3359 = vsel %vm1087, %v3357, %v3358
      %v3360 = vrot.slane %v3358, 4
      %v3361 = vrot.slane %v3070, 6
      %v3362 = vsel %vm1087, %v3360, %v3361
      %v3363 = vrot.slane %v3361, 4
      %v3364 = vrot.slane %v3071, 6
      %v3365 = vsel %vm1087, %v3363, %v3364
      %v3366 = vrot.slane %v3364, 4
      %v3367 = vrot.slane %v3072, 6
      %v3368 = vsel %vm1087, %v3366, %v3367
      %v3369 = vrot.slane %v3367, 4
      %v3370 = vrot.slane %v3073, 6
      %v3371 = vsel %vm1087, %v3369, %v3370
      %v3372 = vrot.slane %v3370, 4
      %v3373 = vrot.slane %v3074, 6
      %v3374 = vsel %vm1087, %v3372, %v3373
      %v3375 = vrot.slane %v3373, 4
      %v3376 = vrot.slane %v3075, 6
      %v3377 = vsel %vm1087, %v3375, %v3376
      %v3378 = vrot.slane %v3376, 4
      %v3379 = vrot.slane %v3076, 6
      %v3380 = vsel %vm1087, %v3378, %v3379
      %v3381 = vrot.slane %v3379, 4
      %v3382 = vrot.slane %v3077, 6
      %v3383 = vsel %vm1087, %v3381, %v3382
      %v3384 = vrot.slane %v3382, 4
      %v3385 = vrot.slane %v3078, 6
      %v3386 = vsel %vm1087, %v3384, %v3385
      %v3387 = vrot.slane %v3385, 4
      %3388 = vrot.lane.b32.xlu0 %v3353, 56
      %v3389 = vpop.permute.xlu0 %3388
      %3390 = vrot.lane.b32.xlu0 %v3356, 56
      %v3391 = vpop.permute.xlu0 %3390
      %3392 = vrot.lane.b32.xlu0 %v3359, 56
      %v3393 = vpop.permute.xlu0 %3392
      %3394 = vrot.lane.b32.xlu0 %v3362, 56
      %v3395 = vpop.permute.xlu0 %3394
      %3396 = vrot.lane.b32.xlu0 %v3365, 56
      %v3397 = vpop.permute.xlu0 %3396
      %3398 = vrot.lane.b32.xlu0 %v3368, 56
      %v3399 = vpop.permute.xlu0 %3398
      %3400 = vrot.lane.b32.xlu0 %v3371, 56
      %v3401 = vpop.permute.xlu0 %3400
      %3402 = vrot.lane.b32.xlu0 %v3374, 56
      %v3403 = vpop.permute.xlu0 %3402
      %3404 = vrot.lane.b32.xlu0 %v3377, 56
      %v3405 = vpop.permute.xlu0 %3404
      %3406 = vrot.lane.b32.xlu0 %v3380, 56
      %v3407 = vpop.permute.xlu0 %3406
      %3408 = vrot.lane.b32.xlu0 %v3383, 56
      %v3409 = vpop.permute.xlu0 %3408
      %3410 = vrot.lane.b32.xlu0 %v3386, 56
      %v3411 = vpop.permute.xlu0 %3410
      %3412 = vrot.lane.b32.xlu0 %v3387, 56
      %v3413 = vpop.permute.xlu0 %3412
      %3427 = vst.msk [vmem:[#allocation2 + $0x4] sm:$0xf] %vm1414, %v3389
      %3428 = vst.msk [vmem:[#allocation2 + $0xc] sm:$0xf] %vm1414, %v3391
      %3429 = vst.msk [vmem:[#allocation2 + $0x14] sm:$0xf] %vm1414, %v3393
      %3430 = vst.msk [vmem:[#allocation2 + $0x1c] sm:$0xf] %vm1414, %v3395
      %3431 = vst.msk [vmem:[#allocation2 + $0x24] sm:$0xf] %vm1414, %v3397
      %3432 = vst.msk [vmem:[#allocation2 + $0x2c] sm:$0xf] %vm1414, %v3399
      %3433 = vst.msk [vmem:[#allocation2 + $0x34] sm:$0xf] %vm1414, %v3401
      %3434 = vst.msk [vmem:[#allocation2 + $0x3c] sm:$0xf] %vm1414, %v3403
      %3435 = vst.msk [vmem:[#allocation2 + $0x44] sm:$0xf] %vm1414, %v3405
      %3436 = vst.msk [vmem:[#allocation2 + $0x4c] sm:$0xf] %vm1414, %v3407
      %3437 = vst.msk [vmem:[#allocation2 + $0x54] sm:$0xf] %vm1414, %v3409
      %3438 = vst.msk [vmem:[#allocation2 + $0x5c] sm:$0xf] %vm1414, %v3411
      %3439 = vst.msk [vmem:[#allocation2 + $0x64] sm:$0x3] %vm1427, %v3413
      %v3440 = vpack.c.bf16 %v2673, %v2672
      %v3441 = vpack.c.bf16 %v2674, %v2674
      %v3444 = vunpack.c.l.b16 %v3440
      %v3445 = vunpack.c.h.b16 %v3440
      %v3446 = vunpack.c.l.b16 %v3441
      %v3447 = vpack.c.b16 %v3444, %v3444
      %v3448 = vpack.c.b16 %v3445, %v3445
      %v3449 = vpack.c.b16 %v3446, %v3446
      %v3450 = vrot.slane %v2705, 6
      %v3451 = vrot.slane %v3450, 4
      %v3452 = vrot.slane %v2706, 6
      %v3453 = vsel %vm1087, %v3451, %v3452
      %v3454 = vrot.slane %v3452, 4
      %v3455 = vrot.slane %v2707, 6
      %v3456 = vsel %vm1087, %v3454, %v3455
      %v3457 = vrot.slane %v3455, 4
      %v3458 = vrot.slane %v2708, 6
      %v3459 = vsel %vm1087, %v3457, %v3458
      %v3460 = vrot.slane %v3458, 4
      %v3461 = vrot.slane %v2709, 6
      %v3462 = vsel %vm1087, %v3460, %v3461
      %v3463 = vrot.slane %v3461, 4
      %v3464 = vrot.slane %v2710, 6
      %v3465 = vsel %vm1087, %v3463, %v3464
      %v3466 = vrot.slane %v3464, 4
      %v3467 = vrot.slane %v2711, 6
      %v3468 = vsel %vm1087, %v3466, %v3467
      %v3469 = vrot.slane %v3467, 4
      %v3470 = vrot.slane %v2712, 6
      %v3471 = vsel %vm1087, %v3469, %v3470
      %v3472 = vrot.slane %v3470, 4
      %v3473 = vrot.slane %v2713, 6
      %v3474 = vsel %vm1087, %v3472, %v3473
      %v3475 = vrot.slane %v3473, 4
      %v3476 = vrot.slane %v2714, 6
      %v3477 = vsel %vm1087, %v3475, %v3476
      %v3478 = vrot.slane %v3476, 4
      %v3479 = vrot.slane %v3447, 6
      %v3480 = vsel %vm1087, %v3478, %v3479
      %v3481 = vrot.slane %v3479, 4
      %v3482 = vrot.slane %v3448, 6
      %v3483 = vsel %vm1087, %v3481, %v3482
      %v3484 = vrot.slane %v3482, 4
      %v3485 = vrot.slane %v3449, 6
      %v3486 = vsel %vm1087, %v3484, %v3485
      %v3487 = vrot.slane %v3485, 4
      %3488 = vrot.lane.b32.xlu0 %v3453, 64
      %v3489 = vpop.permute.xlu0 %3488
      %3490 = vrot.lane.b32.xlu0 %v3456, 64
      %v3491 = vpop.permute.xlu0 %3490
      %3492 = vrot.lane.b32.xlu0 %v3459, 64
      %v3493 = vpop.permute.xlu0 %3492
      %3494 = vrot.lane.b32.xlu0 %v3462, 64
      %v3495 = vpop.permute.xlu0 %3494
      %3496 = vrot.lane.b32.xlu0 %v3465, 64
      %v3497 = vpop.permute.xlu0 %3496
      %3498 = vrot.lane.b32.xlu0 %v3468, 64
      %v3499 = vpop.permute.xlu0 %3498
      %3500 = vrot.lane.b32.xlu0 %v3471, 64
      %v3501 = vpop.permute.xlu0 %3500
      %3502 = vrot.lane.b32.xlu0 %v3474, 64
      %v3503 = vpop.permute.xlu0 %3502
      %3504 = vrot.lane.b32.xlu0 %v3477, 64
      %v3505 = vpop.permute.xlu0 %3504
      %3506 = vrot.lane.b32.xlu0 %v3480, 64
      %v3507 = vpop.permute.xlu0 %3506
      %3508 = vrot.lane.b32.xlu0 %v3483, 64
      %v3509 = vpop.permute.xlu0 %3508
      %3510 = vrot.lane.b32.xlu0 %v3486, 64
      %v3511 = vpop.permute.xlu0 %3510
      %3512 = vrot.lane.b32.xlu0 %v3487, 64
      %v3513 = vpop.permute.xlu0 %3512
      %3527 = vst.msk [vmem:[#allocation2 + $0x4] sm:$0xf] %vm1511, %v3489
      %3528 = vst.msk [vmem:[#allocation2 + $0xc] sm:$0xf] %vm1511, %v3491
      %3529 = vst.msk [vmem:[#allocation2 + $0x14] sm:$0xf] %vm1511, %v3493
      %3530 = vst.msk [vmem:[#allocation2 + $0x1c] sm:$0xf] %vm1511, %v3495
      %3531 = vst.msk [vmem:[#allocation2 + $0x24] sm:$0xf] %vm1511, %v3497
      %3532 = vst.msk [vmem:[#allocation2 + $0x2c] sm:$0xf] %vm1511, %v3499
      %3533 = vst.msk [vmem:[#allocation2 + $0x34] sm:$0xf] %vm1511, %v3501
      %3534 = vst.msk [vmem:[#allocation2 + $0x3c] sm:$0xf] %vm1511, %v3503
      %3535 = vst.msk [vmem:[#allocation2 + $0x44] sm:$0xf] %vm1511, %v3505
      %3536 = vst.msk [vmem:[#allocation2 + $0x4c] sm:$0xf] %vm1511, %v3507
      %3537 = vst.msk [vmem:[#allocation2 + $0x54] sm:$0xf] %vm1511, %v3509
      %3538 = vst.msk [vmem:[#allocation2 + $0x5c] sm:$0xf] %vm1511, %v3511
      %3539 = vst.msk [vmem:[#allocation2 + $0x64] sm:$0x3] %vm1524, %v3513
      %v3540 = vpack.c.bf16 %v2675, %v2674
      %v3542 = vunpack.c.l.b16 %v3540
      %v3543 = vunpack.c.h.b16 %v3540
      %v3544 = vpack.c.b16 %v3542, %v3542
      %v3545 = vpack.c.b16 %v3543, %v3543
      %v3546 = vrot.slane %v2792, 6
      %v3547 = vrot.slane %v2788, 7
      %v3548 = vor.u32 %v3546, %v3547
      %v3549 = vrot.slane %v3548, 4
      %v3550 = vrot.slane %v2802, 6
      %v3551 = vrot.slane %v2798, 7
      %v3552 = vor.u32 %v3550, %v3551
      %v3553 = vsel %vm1290, %v3549, %v3552
      %v3554 = vrot.slane %v3552, 4
      %v3555 = vrot.slane %v2812, 6
      %v3556 = vrot.slane %v2808, 7
      %v3557 = vor.u32 %v3555, %v3556
      %v3558 = vsel %vm1290, %v3554, %v3557
      %v3559 = vrot.slane %v3557, 4
      %v3560 = vrot.slane %v2822, 6
      %v3561 = vrot.slane %v2818, 7
      %v3562 = vor.u32 %v3560, %v3561
      %v3563 = vsel %vm1290, %v3559, %v3562
      %v3564 = vrot.slane %v3562, 4
      %v3565 = vrot.slane %v2832, 6
      %v3566 = vrot.slane %v2828, 7
      %v3567 = vor.u32 %v3565, %v3566
      %v3568 = vsel %vm1290, %v3564, %v3567
      %v3569 = vrot.slane %v3567, 4
      %v3570 = vrot.slane %v2842, 6
      %v3571 = vrot.slane %v2838, 7
      %v3572 = vor.u32 %v3570, %v3571
      %v3573 = vsel %vm1290, %v3569, %v3572
      %v3574 = vrot.slane %v3572, 4
      %v3575 = vrot.slane %v2852, 6
      %v3576 = vrot.slane %v2848, 7
      %v3577 = vor.u32 %v3575, %v3576
      %v3578 = vsel %vm1290, %v3574, %v3577
      %v3579 = vrot.slane %v3577, 4
      %v3580 = vrot.slane %v2862, 6
      %v3581 = vrot.slane %v2858, 7
      %v3582 = vor.u32 %v3580, %v3581
      %v3583 = vsel %vm1290, %v3579, %v3582
      %v3584 = vrot.slane %v3582, 4
      %v3585 = vrot.slane %v2872, 6
      %v3586 = vrot.slane %v2868, 7
      %v3587 = vor.u32 %v3585, %v3586
      %v3588 = vsel %vm1290, %v3584, %v3587
      %v3589 = vrot.slane %v3587, 4
      %v3590 = vrot.slane %v2882, 6
      %v3591 = vrot.slane %v2878, 7
      %v3592 = vor.u32 %v3590, %v3591
      %v3593 = vsel %vm1290, %v3589, %v3592
      %v3594 = vrot.slane %v3592, 4
      %v3596 = vshrl.u32 %v3447, 16
      %v3598 = vrot.slane %v3596, 6
      %v3599 = vshll.u32 %v3447, 16
      %v3601 = vrot.slane %v3599, 7
      %v3602 = vor.u32 %v3598, %v3601
      %v3603 = vsel %vm1290, %v3594, %v3602
      %v3604 = vrot.slane %v3602, 4
      %v3606 = vshrl.u32 %v3448, 16
      %v3608 = vrot.slane %v3606, 6
      %v3609 = vshll.u32 %v3448, 16
      %v3611 = vrot.slane %v3609, 7
      %v3612 = vor.u32 %v3608, %v3611
      %v3613 = vsel %vm1290, %v3604, %v3612
      %v3614 = vrot.slane %v3612, 4
      %v3616 = vshrl.u32 %v3544, 16
      %v3618 = vrot.slane %v3616, 6
      %v3619 = vshll.u32 %v3544, 16
      %v3621 = vrot.slane %v3619, 7
      %v3622 = vor.u32 %v3618, %v3621
      %v3623 = vsel %vm1290, %v3614, %v3622
      %v3624 = vrot.slane %v3622, 4
      %v3626 = vshll.u32 %v3545, 16
      %v3628 = vrot.slane %v3626, 7
      %v3629 = vsel %vm1290, %v3624, %v3628
      %3630 = vrot.lane.b32.xlu0 %v3553, 72
      %v3631 = vpop.permute.xlu0 %3630
      %3632 = vrot.lane.b32.xlu0 %v3558, 72
      %v3633 = vpop.permute.xlu0 %3632
      %3634 = vrot.lane.b32.xlu0 %v3563, 72
      %v3635 = vpop.permute.xlu0 %3634
      %3636 = vrot.lane.b32.xlu0 %v3568, 72
      %v3637 = vpop.permute.xlu0 %3636
      %3638 = vrot.lane.b32.xlu0 %v3573, 72
      %v3639 = vpop.permute.xlu0 %3638
      %3640 = vrot.lane.b32.xlu0 %v3578, 72
      %v3641 = vpop.permute.xlu0 %3640
      %3642 = vrot.lane.b32.xlu0 %v3583, 72
      %v3643 = vpop.permute.xlu0 %3642
      %3644 = vrot.lane.b32.xlu0 %v3588, 72
      %v3645 = vpop.permute.xlu0 %3644
      %3646 = vrot.lane.b32.xlu0 %v3593, 72
      %v3647 = vpop.permute.xlu0 %3646
      %3648 = vrot.lane.b32.xlu0 %v3603, 72
      %v3649 = vpop.permute.xlu0 %3648
      %3650 = vrot.lane.b32.xlu0 %v3613, 72
      %v3651 = vpop.permute.xlu0 %3650
      %3652 = vrot.lane.b32.xlu0 %v3623, 72
      %v3653 = vpop.permute.xlu0 %3652
      %3654 = vrot.lane.b32.xlu0 %v3629, 72
      %v3655 = vpop.permute.xlu0 %3654
      %3669 = vst.msk [vmem:[#allocation2 + $0x4] sm:$0xf] %vm1637, %v3631
      %3670 = vst.msk [vmem:[#allocation2 + $0xc] sm:$0xf] %vm1637, %v3633
      %3671 = vst.msk [vmem:[#allocation2 + $0x14] sm:$0xf] %vm1637, %v3635
      %3672 = vst.msk [vmem:[#allocation2 + $0x1c] sm:$0xf] %vm1637, %v3637
      %3673 = vst.msk [vmem:[#allocation2 + $0x24] sm:$0xf] %vm1637, %v3639
      %3674 = vst.msk [vmem:[#allocation2 + $0x2c] sm:$0xf] %vm1637, %v3641
      %3675 = vst.msk [vmem:[#allocation2 + $0x34] sm:$0xf] %vm1637, %v3643
      %3676 = vst.msk [vmem:[#allocation2 + $0x3c] sm:$0xf] %vm1637, %v3645
      %3677 = vst.msk [vmem:[#allocation2 + $0x44] sm:$0xf] %vm1637, %v3647
      %3678 = vst.msk [vmem:[#allocation2 + $0x4c] sm:$0xf] %vm1637, %v3649
      %3679 = vst.msk [vmem:[#allocation2 + $0x54] sm:$0xf] %vm1637, %v3651
      %3680 = vst.msk [vmem:[#allocation2 + $0x5c] sm:$0xf] %vm1637, %v3653
      %3681 = vst.msk [vmem:[#allocation2 + $0x64] sm:$0x3] %vm1650, %v3655
      %v3682 = vrot.slane %v2705, 7
      %v3683 = vrot.slane %v3682, 4
      %v3684 = vrot.slane %v2706, 7
      %v3685 = vsel %vm1431, %v3683, %v3684
      %v3686 = vrot.slane %v3684, 4
      %v3687 = vrot.slane %v2707, 7
      %v3688 = vsel %vm1431, %v3686, %v3687
      %v3689 = vrot.slane %v3687, 4
      %v3690 = vrot.slane %v2708, 7
      %v3691 = vsel %vm1431, %v3689, %v3690
      %v3692 = vrot.slane %v3690, 4
      %v3693 = vrot.slane %v2709, 7
      %v3694 = vsel %vm1431, %v3692, %v3693
      %v3695 = vrot.slane %v3693, 4
      %v3696 = vrot.slane %v2710, 7
      %v3697 = vsel %vm1431, %v3695, %v3696
      %v3698 = vrot.slane %v3696, 4
      %v3699 = vrot.slane %v2711, 7
      %v3700 = vsel %vm1431, %v3698, %v3699
      %v3701 = vrot.slane %v3699, 4
      %v3702 = vrot.slane %v2712, 7
      %v3703 = vsel %vm1431, %v3701, %v3702
      %v3704 = vrot.slane %v3702, 4
      %v3705 = vrot.slane %v2713, 7
      %v3706 = vsel %vm1431, %v3704, %v3705
      %v3707 = vrot.slane %v3705, 4
      %v3708 = vrot.slane %v2714, 7
      %v3709 = vsel %vm1431, %v3707, %v3708
      %v3710 = vrot.slane %v3708, 4
      %v3711 = vrot.slane %v3447, 7
      %v3712 = vsel %vm1431, %v3710, %v3711
      %v3713 = vrot.slane %v3711, 4
      %v3714 = vrot.slane %v3448, 7
      %v3715 = vsel %vm1431, %v3713, %v3714
      %v3716 = vrot.slane %v3714, 4
      %v3717 = vrot.slane %v3544, 7
      %v3718 = vsel %vm1431, %v3716, %v3717
      %v3719 = vrot.slane %v3717, 4
      %v3720 = vrot.slane %v3545, 7
      %v3721 = vsel %vm1431, %v3719, %v3720
      %3722 = vrot.lane.b32.xlu0 %v3685, 80
      %v3723 = vpop.permute.xlu0 %3722
      %3724 = vrot.lane.b32.xlu0 %v3688, 80
      %v3725 = vpop.permute.xlu0 %3724
      %3726 = vrot.lane.b32.xlu0 %v3691, 80
      %v3727 = vpop.permute.xlu0 %3726
      %3728 = vrot.lane.b32.xlu0 %v3694, 80
      %v3729 = vpop.permute.xlu0 %3728
      %3730 = vrot.lane.b32.xlu0 %v3697, 80
      %v3731 = vpop.permute.xlu0 %3730
      %3732 = vrot.lane.b32.xlu0 %v3700, 80
      %v3733 = vpop.permute.xlu0 %3732
      %3734 = vrot.lane.b32.xlu0 %v3703, 80
      %v3735 = vpop.permute.xlu0 %3734
      %3736 = vrot.lane.b32.xlu0 %v3706, 80
      %v3737 = vpop.permute.xlu0 %3736
      %3738 = vrot.lane.b32.xlu0 %v3709, 80
      %v3739 = vpop.permute.xlu0 %3738
      %3740 = vrot.lane.b32.xlu0 %v3712, 80
      %v3741 = vpop.permute.xlu0 %3740
      %3742 = vrot.lane.b32.xlu0 %v3715, 80
      %v3743 = vpop.permute.xlu0 %3742
      %3744 = vrot.lane.b32.xlu0 %v3718, 80
      %v3745 = vpop.permute.xlu0 %3744
      %3746 = vrot.lane.b32.xlu0 %v3721, 80
      %v3747 = vpop.permute.xlu0 %3746
      %3761 = vst.msk [vmem:[#allocation2 + $0x4] sm:$0xf] %vm1820, %v3723
      %3762 = vst.msk [vmem:[#allocation2 + $0xc] sm:$0xf] %vm1820, %v3725
      %3763 = vst.msk [vmem:[#allocation2 + $0x14] sm:$0xf] %vm1820, %v3727
      %3764 = vst.msk [vmem:[#allocation2 + $0x1c] sm:$0xf] %vm1820, %v3729
      %3765 = vst.msk [vmem:[#allocation2 + $0x24] sm:$0xf] %vm1820, %v3731
      %3766 = vst.msk [vmem:[#allocation2 + $0x2c] sm:$0xf] %vm1820, %v3733
      %3767 = vst.msk [vmem:[#allocation2 + $0x34] sm:$0xf] %vm1820, %v3735
      %3768 = vst.msk [vmem:[#allocation2 + $0x3c] sm:$0xf] %vm1820, %v3737
      %3769 = vst.msk [vmem:[#allocation2 + $0x44] sm:$0xf] %vm1820, %v3739
      %3770 = vst.msk [vmem:[#allocation2 + $0x4c] sm:$0xf] %vm1820, %v3741
      %3771 = vst.msk [vmem:[#allocation2 + $0x54] sm:$0xf] %vm1820, %v3743
      %3772 = vst.msk [vmem:[#allocation2 + $0x5c] sm:$0xf] %vm1820, %v3745
      %3773 = vst.msk [vmem:[#allocation2 + $0x64] sm:$0x3] %vm1833, %v3747
      %v3774 = vld [vmem:[#allocation2] sm:$0xff]
      %v3775 = vld [vmem:[#allocation2 + $0x8] sm:$0xff]
      %v3776 = vld [vmem:[#allocation2 + $0x10] sm:$0xff]
      %v3777 = vld [vmem:[#allocation2 + $0x18] sm:$0xff]
      %v3778 = vld [vmem:[#allocation2 + $0x20] sm:$0xff]
      %v3779 = vld [vmem:[#allocation2 + $0x28] sm:$0xff]
      %v3780 = vld [vmem:[#allocation2 + $0x30] sm:$0xff]
      %v3781 = vld [vmem:[#allocation2 + $0x38] sm:$0xff]
      %v3782 = vld [vmem:[#allocation2 + $0x40] sm:$0xff]
      %v3783 = vld [vmem:[#allocation2 + $0x48] sm:$0xff]
      %v3784 = vld [vmem:[#allocation2 + $0x50] sm:$0xff]
      %v3785 = vld [vmem:[#allocation2 + $0x58] sm:$0xff]
      %v3786 = vld [vmem:[#allocation2 + $0x60] sm:$0x33]
      %v3787 = vld [vmem:[%s3] sm:$0xf]
      %v3788 = vld [vmem:[%s3 + $0x4] sm:$0xf]
      %v3789 = vld [vmem:[%s3 + $0x8] sm:$0xf]
      %v3790 = vld [vmem:[%s3 + $0xc] sm:$0xf]
      %v3791 = vld [vmem:[%s3 + $0x10] sm:$0xf]
      %v3792 = vld [vmem:[%s3 + $0x14] sm:$0xf]
      %v3793 = vld [vmem:[%s3 + $0x18] sm:$0xf]
      %v3794 = vld [vmem:[%s3 + $0x1c] sm:$0xf]
      %v3795 = vld [vmem:[%s3 + $0x20] sm:$0xf]
      %v3796 = vld [vmem:[%s3 + $0x24] sm:$0xf]
      %v3797 = vld [vmem:[%s3 + $0x28] sm:$0xf]
      %v3798 = vld [vmem:[%s3 + $0x2c] sm:$0xf]
      %v3799 = vld [vmem:[%s3 + $0x30] sm:$0xf]
      %v3800 = vld [vmem:[%s3 + $0x34] sm:$0xf]
      %v3801 = vld [vmem:[%s3 + $0x38] sm:$0xf]
      %v3802 = vld [vmem:[%s3 + $0x3c] sm:$0xf]
      %v3803 = vld [vmem:[%s3 + $0x40] sm:$0xf]
      %v3804 = vld [vmem:[%s3 + $0x44] sm:$0xf]
      %v3805 = vld [vmem:[%s3 + $0x48] sm:$0xf]
      %v3806 = vld [vmem:[%s3 + $0x4c] sm:$0xf]
      %v3807 = vld [vmem:[%s3 + $0x50] sm:$0xf]
      %v3808 = vld [vmem:[%s3 + $0x54] sm:$0xf]
      %v3809 = vld [vmem:[%s3 + $0x58] sm:$0xf]
      %v3810 = vld [vmem:[%s3 + $0x5c] sm:$0xf]
      %v3811 = vld [vmem:[%s3 + $0x60] sm:$0xf]
      %v3812 = vld [vmem:[%s3 + $0x64] sm:$0xf]
      %v3813 = vld [vmem:[%s3 + $0x68] sm:$0xf]
      %v3814 = vld [vmem:[%s3 + $0x6c] sm:$0xf]
      %v3815 = vld [vmem:[%s3 + $0x70] sm:$0xf]
      %v3816 = vld [vmem:[%s3 + $0x74] sm:$0xf]
      %v3817 = vld [vmem:[%s3 + $0x78] sm:$0xf]
      %v3818 = vld [vmem:[%s3 + $0x7c] sm:$0xf]
      %v3819 = vld [vmem:[%s4] sm:$0x1]
      %v3821 = vlaneseq
      %v3822 = vshrl.u32 %v3821, 7
      %v3823 = vsub.s32 0, %v3822
      %v3824 = vrot.slane %v3819, %v3823
      %v3839 = vunpack.c.l.b16 %v3774
      %v3840 = vunpack.c.h.b16 %v3774
      %v3841 = vunpack.c.l.b16 %v3775
      %v3842 = vunpack.c.h.b16 %v3775
      %v3843 = vunpack.c.l.b16 %v3776
      %v3844 = vunpack.c.h.b16 %v3776
      %v3845 = vunpack.c.l.b16 %v3777
      %v3846 = vunpack.c.h.b16 %v3777
      %v3847 = vunpack.c.l.b16 %v3778
      %v3848 = vunpack.c.h.b16 %v3778
      %v3849 = vunpack.c.l.b16 %v3779
      %v3850 = vunpack.c.h.b16 %v3779
      %v3851 = vunpack.c.l.b16 %v3780
      %v3852 = vunpack.c.h.b16 %v3780
      %v3853 = vunpack.c.l.b16 %v3781
      %v3854 = vunpack.c.h.b16 %v3781
      %v3855 = vunpack.c.l.b16 %v3782
      %v3856 = vunpack.c.h.b16 %v3782
      %v3857 = vunpack.c.l.b16 %v3783
      %v3858 = vunpack.c.h.b16 %v3783
      %v3859 = vunpack.c.l.b16 %v3784
      %v3860 = vunpack.c.h.b16 %v3784
      %v3861 = vunpack.c.l.b16 %v3785
      %v3862 = vunpack.c.h.b16 %v3785
      %v3863 = vunpack.c.l.b16 %v3786
      %v3864 = vunpack.c.h.b16 %v3786
      %v3865 = vpack.c.b16 %v3841, %v3839
      %v3866 = vpack.c.b16 %v3842, %v3840
      %v3867 = vpack.c.b16 %v3845, %v3843
      %v3868 = vpack.c.b16 %v3846, %v3844
      %v3869 = vpack.c.b16 %v3849, %v3847
      %v3870 = vpack.c.b16 %v3850, %v3848
      %v3871 = vpack.c.b16 %v3853, %v3851
      %v3872 = vpack.c.b16 %v3854, %v3852
      %v3873 = vpack.c.b16 %v3857, %v3855
      %v3874 = vpack.c.b16 %v3858, %v3856
      %v3875 = vpack.c.b16 %v3861, %v3859
      %v3876 = vpack.c.b16 %v3862, %v3860
      %v3877 = vpack.c.b16 %v3863, %v3863
      %v3878 = vpack.c.b16 %v3864, %v3864
      %v3925 = vunpack.c.l.b16 %v3787
      %v3926 = vunpack.c.l.b16 %v3788
      %v3927 = vunpack.c.l.b16 %v3789
      %v3928 = vunpack.c.l.b16 %v3790
      %v3929 = vunpack.c.l.b16 %v3791
      %v3930 = vunpack.c.l.b16 %v3792
      %v3931 = vunpack.c.l.b16 %v3793
      %v3932 = vunpack.c.l.b16 %v3794
      %v3933 = vunpack.c.l.b16 %v3795
      %v3934 = vunpack.c.l.b16 %v3796
      %v3935 = vunpack.c.l.b16 %v3797
      %v3936 = vunpack.c.l.b16 %v3798
      %v3937 = vunpack.c.l.b16 %v3799
      %v3938 = vunpack.c.l.b16 %v3800
      %v3939 = vunpack.c.l.b16 %v3801
      %v3940 = vunpack.c.l.b16 %v3802
      %v3941 = vunpack.c.l.b16 %v3803
      %v3942 = vunpack.c.l.b16 %v3804
      %v3943 = vunpack.c.l.b16 %v3805
      %v3944 = vunpack.c.l.b16 %v3806
      %v3945 = vunpack.c.l.b16 %v3807
      %v3946 = vunpack.c.l.b16 %v3808
      %v3947 = vunpack.c.l.b16 %v3809
      %v3948 = vunpack.c.l.b16 %v3810
      %v3949 = vunpack.c.l.b16 %v3811
      %v3950 = vunpack.c.l.b16 %v3812
      %v3951 = vunpack.c.l.b16 %v3813
      %v3952 = vunpack.c.l.b16 %v3814
      %v3953 = vunpack.c.l.b16 %v3815
      %v3954 = vunpack.c.l.b16 %v3816
      %v3955 = vunpack.c.l.b16 %v3817
      %v3956 = vunpack.c.l.b16 %v3818
      %v3957 = vpack.c.b16 %v3926, %v3925
      %v3958 = vpack.c.b16 %v3928, %v3927
      %v3959 = vpack.c.b16 %v3930, %v3929
      %v3960 = vpack.c.b16 %v3932, %v3931
      %v3961 = vpack.c.b16 %v3934, %v3933
      %v3962 = vpack.c.b16 %v3936, %v3935
      %v3963 = vpack.c.b16 %v3938, %v3937
      %v3964 = vpack.c.b16 %v3940, %v3939
      %v3965 = vpack.c.b16 %v3942, %v3941
      %v3966 = vpack.c.b16 %v3944, %v3943
      %v3967 = vpack.c.b16 %v3946, %v3945
      %v3968 = vpack.c.b16 %v3948, %v3947
      %v3969 = vpack.c.b16 %v3950, %v3949
      %v3970 = vpack.c.b16 %v3952, %v3951
      %v3971 = vpack.c.b16 %v3954, %v3953
      %v3972 = vpack.c.b16 %v3956, %v3955
      %3989 = vmatprep.subr.bf16.mxu0 0
      %3990 = vmatpush1.bf16.msra.mxu0 %v3957
      %3991 = vmatprep.subr.bf16.mxu0 0
      %3992 = vmatpush1.bf16.msra.mxu0 %v3958
      %3993 = vmatprep.subr.bf16.mxu0 0
      %3994 = vmatpush1.bf16.msra.mxu0 %v3959
      %3995 = vmatprep.subr.bf16.mxu0 0
      %3996 = vmatpush1.bf16.msra.mxu0 %v3960
      %3997 = vmatprep.subr.bf16.mxu0 0
      %3998 = vmatpush1.bf16.msra.mxu0 %v3961
      %3999 = vmatprep.subr.bf16.mxu0 0
      %4000 = vmatpush1.bf16.msra.mxu0 %v3962
      %4001 = vmatprep.subr.bf16.mxu0 0
      %4002 = vmatpush1.bf16.msra.mxu0 %v3963
      %4003 = vmatprep.subr.bf16.mxu0 0
      %4004 = vmatpush1.bf16.msra.mxu0 %v3964
      %4005 = vmatprep.subr.bf16.mxu0 0
      %4006 = vmatpush1.bf16.msra.mxu0 %v3965
      %4007 = vmatprep.subr.bf16.mxu0 0
      %4008 = vmatpush1.bf16.msra.mxu0 %v3966
      %4009 = vmatprep.subr.bf16.mxu0 0
      %4010 = vmatpush1.bf16.msra.mxu0 %v3967
      %4011 = vmatprep.subr.bf16.mxu0 0
      %4012 = vmatpush1.bf16.msra.mxu0 %v3968
      %4013 = vmatprep.subr.bf16.mxu0 0
      %4014 = vmatpush1.bf16.msra.mxu0 %v3969
      %4015 = vmatprep.subr.bf16.mxu0 0
      %4016 = vmatpush1.bf16.msra.mxu0 %v3970
      %4017 = vmatprep.subr.bf16.mxu0 0
      %4018 = vmatpush1.bf16.msra.mxu0 %v3971
      %4019 = vmatprep.subr.bf16.mxu0 0
      %4020 = vmatpush1.bf16.msra.mxu0 %v3972
      %4021 = vmatprep.mubr.bf16.mxu0 %v3866
      %4022 = vmatmul.mubr.bf16.gmra.mrb[0].mxu0 %v3865
      %v4023 = vpop.f32.mrb[0].mxu0
      %v4024 = vadd.f32 %v3824, %v4023
      %v4025 = vpop.f32.mrb[0].mxu0
      %v4026 = vpop.f32.mrb[0].mxu0
      %v4027 = vadd.f32 %v3824, %v4026
      %v4028 = vpop.f32.mrb[0].mxu0
      %4029 = vmatprep.mubr.bf16.mxu0 %v3868
      %4030 = vmatmul.mubr.bf16.gmra.mrb[0].mxu0 %v3867
      %v4031 = vpop.f32.mrb[0].mxu0
      %v4032 = vadd.f32 %v3824, %v4031
      %v4033 = vpop.f32.mrb[0].mxu0
      %v4034 = vpop.f32.mrb[0].mxu0
      %v4035 = vadd.f32 %v3824, %v4034
      %v4036 = vpop.f32.mrb[0].mxu0
      %4037 = vmatprep.mubr.bf16.mxu0 %v3870
      %4038 = vmatmul.mubr.bf16.gmra.mrb[0].mxu0 %v3869
      %v4039 = vpop.f32.mrb[0].mxu0
      %v4040 = vadd.f32 %v3824, %v4039
      %v4041 = vpop.f32.mrb[0].mxu0
      %v4042 = vpop.f32.mrb[0].mxu0
      %v4043 = vadd.f32 %v3824, %v4042
      %v4044 = vpop.f32.mrb[0].mxu0
      %4045 = vmatprep.mubr.bf16.mxu0 %v3872
      %4046 = vmatmul.mubr.bf16.gmra.mrb[0].mxu0 %v3871
      %v4047 = vpop.f32.mrb[0].mxu0
      %v4048 = vadd.f32 %v3824, %v4047
      %v4049 = vpop.f32.mrb[0].mxu0
      %v4050 = vpop.f32.mrb[0].mxu0
      %v4051 = vadd.f32 %v3824, %v4050
      %v4052 = vpop.f32.mrb[0].mxu0
      %4053 = vmatprep.mubr.bf16.mxu0 %v3874
      %4054 = vmatmul.mubr.bf16.gmra.mrb[0].mxu0 %v3873
      %v4055 = vpop.f32.mrb[0].mxu0
      %v4056 = vadd.f32 %v3824, %v4055
      %v4057 = vpop.f32.mrb[0].mxu0
      %v4058 = vpop.f32.mrb[0].mxu0
      %v4059 = vadd.f32 %v3824, %v4058
      %v4060 = vpop.f32.mrb[0].mxu0
      %4061 = vmatprep.mubr.bf16.mxu0 %v3876
      %4062 = vmatmul.mubr.bf16.gmra.mrb[0].mxu0 %v3875
      %v4063 = vpop.f32.mrb[0].mxu0
      %v4064 = vadd.f32 %v3824, %v4063
      %v4065 = vpop.f32.mrb[0].mxu0
      %v4066 = vpop.f32.mrb[0].mxu0
      %v4067 = vadd.f32 %v3824, %v4066
      %v4068 = vpop.f32.mrb[0].mxu0
      %4069 = vmatprep.mubr.bf16.mxu0 %v3878
      %4070 = vmatmul.mubr.bf16.gmra.mrb[0].mxu0 %v3877
      %v4071 = vpop.f32.mrb[0].mxu0
      %v4072 = vadd.f32 %v3824, %v4071
      %v4073 = vpop.f32.mrb[0].mxu0
      %v4074 = vpop.f32.mrb[0].mxu0
      %v4075 = vpop.f32.mrb[0].mxu0
      %4076 = vdwg.mxu0
      %v4077 = vmax.f32 %v4024, 0.0
      %v4078 = vmax.f32 %v4027, 0.0
      %v4079 = vmax.f32 %v4032, 0.0
      %v4080 = vmax.f32 %v4035, 0.0
      %v4081 = vmax.f32 %v4040, 0.0
      %v4082 = vmax.f32 %v4043, 0.0
      %v4083 = vmax.f32 %v4048, 0.0
      %v4084 = vmax.f32 %v4051, 0.0
      %v4085 = vmax.f32 %v4056, 0.0
      %v4086 = vmax.f32 %v4059, 0.0
      %v4087 = vmax.f32 %v4064, 0.0
      %v4088 = vmax.f32 %v4067, 0.0
      %v4089 = vmax.f32 %v4072, 0.0
      %v4090 = vld [vmem:[%s5] sm:$0xff]
      %v4091 = vld [vmem:[%s5 + $0x8] sm:$0xff]
      %v4092 = vld [vmem:[%s5 + $0x10] sm:$0xff]
      %v4093 = vld [vmem:[%s5 + $0x18] sm:$0xff]
      %v4094 = vld [vmem:[%s5 + $0x20] sm:$0xff]
      %v4095 = vld [vmem:[%s5 + $0x28] sm:$0xff]
      %v4096 = vld [vmem:[%s5 + $0x30] sm:$0xff]
      %v4097 = vld [vmem:[%s5 + $0x38] sm:$0xff]
      %v4098 = vld [vmem:[%s5 + $0x40] sm:$0xff]
      %v4099 = vld [vmem:[%s5 + $0x48] sm:$0xff]
      %v4100 = vld [vmem:[%s5 + $0x50] sm:$0xff]
      %v4101 = vld [vmem:[%s5 + $0x58] sm:$0xff]
      %v4102 = vld [vmem:[%s5 + $0x60] sm:$0xf]
      %4104 = vset.pattern.permute.xlu0 0
      %4105 = vperm.xlu0 %4104, %v4090
      %v4106 = vpop.permute.xlu0 %4105
      %4109 = vset.pattern.permute.xlu0 0
      %4110 = vperm.xlu0 %4109, %v4091
      %v4111 = vpop.permute.xlu0 %4110
      %4114 = vset.pattern.permute.xlu0 0
      %4115 = vperm.xlu0 %4114, %v4092
      %v4116 = vpop.permute.xlu0 %4115
      %4119 = vset.pattern.permute.xlu0 0
      %4120 = vperm.xlu0 %4119, %v4093
      %v4121 = vpop.permute.xlu0 %4120
      %4124 = vset.pattern.permute.xlu0 0
      %4125 = vperm.xlu0 %4124, %v4094
      %v4126 = vpop.permute.xlu0 %4125
      %4129 = vset.pattern.permute.xlu0 0
      %4130 = vperm.xlu0 %4129, %v4095
      %v4131 = vpop.permute.xlu0 %4130
      %4134 = vset.pattern.permute.xlu0 0
      %4135 = vperm.xlu0 %4134, %v4096
      %v4136 = vpop.permute.xlu0 %4135
      %4139 = vset.pattern.permute.xlu0 0
      %4140 = vperm.xlu0 %4139, %v4097
      %v4141 = vpop.permute.xlu0 %4140
      %4144 = vset.pattern.permute.xlu0 0
      %4145 = vperm.xlu0 %4144, %v4098
      %v4146 = vpop.permute.xlu0 %4145
      %4149 = vset.pattern.permute.xlu0 0
      %4150 = vperm.xlu0 %4149, %v4099
      %v4151 = vpop.permute.xlu0 %4150
      %4154 = vset.pattern.permute.xlu0 0
      %4155 = vperm.xlu0 %4154, %v4100
      %v4156 = vpop.permute.xlu0 %4155
      %4159 = vset.pattern.permute.xlu0 0
      %4160 = vperm.xlu0 %4159, %v4101
      %v4161 = vpop.permute.xlu0 %4160
      %4164 = vset.pattern.permute.xlu0 0
      %4165 = vperm.xlu0 %4164, %v4102
      %v4166 = vpop.permute.xlu0 %4165
      %v4168 = vmul.f32 %v4077, %v4106
      %v4169 = vmul.f32 %v4078, %v4111
      %v4170 = vmul.f32 %v4079, %v4116
      %v4171 = vmul.f32 %v4080, %v4121
      %v4172 = vmul.f32 %v4081, %v4126
      %v4173 = vmul.f32 %v4082, %v4131
      %v4174 = vmul.f32 %v4083, %v4136
      %v4175 = vmul.f32 %v4084, %v4141
      %v4176 = vmul.f32 %v4085, %v4146
      %v4177 = vmul.f32 %v4086, %v4151
      %v4178 = vmul.f32 %v4087, %v4156
      %v4179 = vmul.f32 %v4088, %v4161
      %v4180 = vmul.f32 %v4089, %v4166
      %v4181 = vpack.c.bf16 %v4169, %v4168
      %v4182 = vpack.c.bf16 %v4171, %v4170
      %v4183 = vpack.c.bf16 %v4173, %v4172
      %v4184 = vpack.c.bf16 %v4175, %v4174
      %v4185 = vpack.c.bf16 %v4177, %v4176
      %v4186 = vpack.c.bf16 %v4179, %v4178
      %v4187 = vpack.c.bf16 %v4180, %v4180
      %v4195 = vunpack.c.l.b16 %v4181
      %v4196 = vunpack.c.h.b16 %v4181
      %v4197 = vunpack.c.l.b16 %v4182
      %v4198 = vunpack.c.h.b16 %v4182
      %v4199 = vunpack.c.l.b16 %v4183
      %v4200 = vunpack.c.h.b16 %v4183
      %v4201 = vunpack.c.l.b16 %v4184
      %v4202 = vunpack.c.h.b16 %v4184
      %v4203 = vunpack.c.l.b16 %v4185
      %v4204 = vunpack.c.h.b16 %v4185
      %v4205 = vunpack.c.l.b16 %v4186
      %v4206 = vunpack.c.h.b16 %v4186
      %v4207 = vunpack.c.l.b16 %v4187
      %v4208 = vpack.c.b16 %v4195, %v4195
      %v4209 = vpack.c.b16 %v4196, %v4196
      %v4210 = vpack.c.b16 %v4197, %v4197
      %v4211 = vpack.c.b16 %v4198, %v4198
      %v4212 = vpack.c.b16 %v4199, %v4199
      %v4213 = vpack.c.b16 %v4200, %v4200
      %v4214 = vpack.c.b16 %v4201, %v4201
      %v4215 = vpack.c.b16 %v4202, %v4202
      %v4216 = vpack.c.b16 %v4203, %v4203
      %v4217 = vpack.c.b16 %v4204, %v4204
      %v4218 = vpack.c.b16 %v4205, %v4205
      %v4219 = vpack.c.b16 %v4206, %v4206
      %v4220 = vpack.c.b16 %v4207, %v4207
      %4234 = vst [vmem:[%s369] sm:$0xf] %v4208
      %4235 = vst [vmem:[%s369 + $0x4] sm:$0xf] %v4209
      %4236 = vst [vmem:[%s369 + $0x8] sm:$0xf] %v4210
      %4237 = vst [vmem:[%s369 + $0xc] sm:$0xf] %v4211
      %4238 = vst [vmem:[%s369 + $0x10] sm:$0xf] %v4212
      %4239 = vst [vmem:[%s369 + $0x14] sm:$0xf] %v4213
      %4240 = vst [vmem:[%s369 + $0x18] sm:$0xf] %v4214
      %4241 = vst [vmem:[%s369 + $0x1c] sm:$0xf] %v4215
      %4242 = vst [vmem:[%s369 + $0x20] sm:$0xf] %v4216
      %4243 = vst [vmem:[%s369 + $0x24] sm:$0xf] %v4217
      %4244 = vst [vmem:[%s369 + $0x28] sm:$0xf] %v4218
      %4245 = vst [vmem:[%s369 + $0x2c] sm:$0xf] %v4219
      %4246 = vst [vmem:[%s369 + $0x30] sm:$0x3] %v4220
      %p4247 = scmp.lt.s32.totalorder %s21, 1
      %s4248 = scalar_select %p4247, %s21, 1
      %p4249 = scmp.lt.s32.totalorder %s22, 7
      %s4250 = scalar_select %p4249, %s22, 7
      %s4251 = smul.addr %s4250, 13
      %s4252 = smul.addr %s4248, 104
      %s4253 = sadd.s32 %s4251, %s4252
      %s4254 = smul.addr %s4253, 4
      %s4255 = scalar_lea.vmem %s6, %s4254
      // Predicated region
      $region45: #{basic_block_forward.2} parent=43 // pred_check
        %p4256 = pneg %p200
      $region46: #{basic_block_forward.2} parent=43 // pred_check_branch
        %4258 = sbr.rel (%p4256) target = $region48
      $region47: #{basic_block_forward.2} parent=43 // pred_region
        _
      $region48: #{basic_block_forward.2} parent=43 // pred_fallthru
        _
    $region44: #{basic_block_forward.2} parent=5 // pred_fallthru
      _
    %p4259 = scmp.le.s32.totalorder 2, %s12
    // Predicated region
    $region49: #{basic_block_forward.2} parent=5 // pred_check
      %p4260 = pneg %p4259
    $region50: #{basic_block_forward.2} parent=5 // pred_check_branch
      %4262 = sbr.rel (%p4260) target = $region52
    $region51: #{basic_block_forward.2} parent=5 // pred_region
      %s4263 = ssub.s32 %s12, 2
      // Predicated region
      $region53: #{basic_block_forward.2} parent=51 // pred_check
        %p4264 = pneg %p206
      $region54: #{basic_block_forward.2} parent=51 // pred_check_branch
        %4266 = sbr.rel (%p4264) target = $region56
      $region55: #{basic_block_forward.2} parent=51 // pred_region
        %p4267 = scmp.lt.s32.totalorder %s23, 1
        %s4268 = scalar_select %p4267, %s23, 1
        %p4269 = scmp.lt.s32.totalorder %s24, 7
        %s4270 = scalar_select %p4269, %s24, 7
        %s4271 = smul.addr %s4270, 13
        %s4272 = smul.addr %s4268, 104
        %s4273 = sadd.s32 %s4271, %s4272
        %s4274 = smul.addr %s4273, 4
        %s4275 = scalar_lea.vmem %s6, %s4274
      $region56: #{basic_block_forward.2} parent=51 // pred_fallthru
        _
    $region52: #{basic_block_forward.2} parent=5 // pred_fallthru
      _
  $region6: #{basic_block_forward.2} parent=0 // loop_footer
    %s16 = sadd.s32 1, %s12
  $region7: #{basic_block_forward.2} parent=0 // loop_footer_branch
    %11 = sbr.rel target = $region3
  $region8: #{basic_block_forward.2} parent=0 // loop_exit
    _

// kernel: basic_block_forward.3
$region0: #{basic_block_forward.3}
  #allocation0 [shape = 'u32[]', space=smem, size = 0x4, offset = 0x4, fixed_abs, tag = 'smem constant byte address 0x4 - core index']
  #allocation1 [shape = 'u32[144,128]{1,0:T(1,128)}', space=vmem, size = 0x12000, scoped, tag = 'internal scratch']
  #allocation2 [shape = 'bf16[100,256]{1,0:T(8,128)(2,1)}', space=vmem, size = 0xd000, scoped, tag = 'scratch operand']
  %s0 = inlined_call_operand.vmem [shape: bf16[2,10,122,8], index: 0, kind: input, shape index: {}, may-alias: {0,1,2}]
  %s1 = inlined_call_operand.vmem [shape: bf16[2,10,122,8], index: 1, kind: input, shape index: {}, may-alias: {0,1,2}]
  %s2 = inlined_call_operand.vmem [shape: bf16[2,10,122,8], index: 2, kind: input, shape index: {}, may-alias: {0,1,2}]
  %s3 = inlined_call_operand.vmem [shape: bf16[256,128], index: 3, kind: input, shape index: {}]
  %s4 = inlined_call_operand.vmem [shape: f32[1,128], index: 4, kind: input, shape index: {}]
  %s5 = inlined_call_operand.vmem [shape: bf16[2,8,100,128], index: 5, kind: input, shape index: {}]
  %s6 = inlined_call_operand.vmem [shape: bf16[2,8,100,128], index: 6, kind: output, shape index: {}]
  %s7 = sld [smem:[#allocation0]]
  $region57: #{basic_block_forward.3} parent=0
    _
  %s9 = ssub.s32 1, %s7
  %s10 = scalar_select 0, %s9, %s7
  loop: start=0, step=1, limit=18
  $region2: #{basic_block_forward.3} parent=0 // loop_pre_header
    _
  $region3: #{basic_block_forward.3} parent=0 // loop_header
    %s12 = sphi 0, %s16
    %p13 = scmp.ge.s32.totalorder %s12, 18
    %s19 = sphi 0, %s31
    %s20 = sphi 0, %s27
    %s21 = sphi 0, %s19
    %s22 = sphi 0, %s20
    %s23 = sphi 0, %s21
    %s24 = sphi 0, %s22
    %s36 = sphi 0, %s38
    %s39 = sphi 0, %s36
    %s40 = sphi 0, %s39
    %s56 = sphi 0, %s40
    %s66 = sphi 0, %s68
    %s69 = sphi 0, %s66
    %s70 = sphi 0, %s69
    %s86 = sphi 0, %s70
    %s96 = sphi 0, %s98
    %s99 = sphi 0, %s96
    %s100 = sphi 0, %s99
    %s116 = sphi 0, %s100
    %s120 = sphi 0, %s120
    %s122 = sphi 0, %s120
    %s123 = sphi 0, %s122
    %s137 = sphi 0, %s123
    %s141 = sphi 0, %s141
    %s143 = sphi 0, %s141
    %s144 = sphi 0, %s143
    %s158 = sphi 0, %s144
    %s166 = sphi 0, %s168
    %s169 = sphi 0, %s166
    %s170 = sphi 0, %s169
    %s186 = sphi 0, %s170
    %s194 = sphi 0, %s196
    %s197 = sphi 0, %s194
    %s198 = sphi 0, %s197
    %s214 = sphi 0, %s198
  $region4: #{basic_block_forward.3} parent=0 // loop_header_branch
    %15 = sbr.rel (%p13) target = $region8
  $region5: #{basic_block_forward.3} parent=0 // loop_body
    %s17 = ssub.s32 %s12, 1
    %s18 = ssub.s32 %s12, 2
    %s25 = sadd.s32 1, %s20
    %p26 = scmp.ge.s32.totalorder %s25, 8
    %s27 = scalar_select %p26, 0, %s25
    %s28 = sadd.s32 1, %s19
    %s29 = scalar_select %p26, %s28, %s19
    %p30 = scmp.ge.s32.totalorder %s29, 2
    %s31 = scalar_select %p30, 0, %s29
    %s32 = ssub.s32 %s19, %s31
    %s33 = ssub.s32 %s20, %s27
    %s34 = sor.u32 %s32, %s33
    %p35 = scmp.eq.s32.totalorder %s34, 0
    %s37 = sadd.s32 %s36, 1
    %s38 = scalar_select %p35, %s36, %s37
    %p41 = pneg %p35
    %p42 = scmp.eq.s32.totalorder %s12, 15
    %p43 = por %p41, %p42
    %p44 = scmp.ne.s32.totalorder %s36, %s39
    %p45 = scmp.eq.s32.totalorder %s12, 0
    %p46 = por %p44, %p45
    %p47 = scmp.ne.s32.totalorder %s36, %s39
    %p48 = scmp.eq.s32.totalorder %s17, 15
    %p49 = por %p47, %p48
    %p50 = scmp.ne.s32.totalorder %s39, %s40
    %p51 = scmp.eq.s32.totalorder %s17, 0
    %p52 = por %p50, %p51
    %p53 = scmp.ne.s32.totalorder %s39, %s40
    %p54 = scmp.eq.s32.totalorder %s18, 15
    %p55 = por %p53, %p54
    %p57 = scmp.ne.s32.totalorder %s40, %s56
    %p58 = scmp.eq.s32.totalorder %s18, 0
    %p59 = por %p57, %p58
    %s60 = sadd.s32 %s20, 1
    %s61 = sadd.s32 %s27, 1
    %s62 = ssub.s32 %s19, %s31
    %s63 = ssub.s32 %s60, %s61
    %s64 = sor.u32 %s62, %s63
    %p65 = scmp.eq.s32.totalorder %s64, 0
    %s67 = sadd.s32 %s66, 1
    %s68 = scalar_select %p65, %s66, %s67
    %p71 = pneg %p65
    %p72 = scmp.eq.s32.totalorder %s12, 15
    %p73 = por %p71, %p72
    %p74 = scmp.ne.s32.totalorder %s66, %s69
    %p75 = scmp.eq.s32.totalorder %s12, 0
    %p76 = por %p74, %p75
    %p77 = scmp.ne.s32.totalorder %s66, %s69
    %p78 = scmp.eq.s32.totalorder %s17, 15
    %p79 = por %p77, %p78
    %p80 = scmp.ne.s32.totalorder %s69, %s70
    %p81 = scmp.eq.s32.totalorder %s17, 0
    %p82 = por %p80, %p81
    %p83 = scmp.ne.s32.totalorder %s69, %s70
    %p84 = scmp.eq.s32.totalorder %s18, 15
    %p85 = por %p83, %p84
    %p87 = scmp.ne.s32.totalorder %s70, %s86
    %p88 = scmp.eq.s32.totalorder %s18, 0
    %p89 = por %p87, %p88
    %s90 = sadd.s32 %s20, 2
    %s91 = sadd.s32 %s27, 2
    %s92 = ssub.s32 %s19, %s31
    %s93 = ssub.s32 %s90, %s91
    %s94 = sor.u32 %s92, %s93
    %p95 = scmp.eq.s32.totalorder %s94, 0
    %s97 = sadd.s32 %s96, 1
    %s98 = scalar_select %p95, %s96, %s97
    %p101 = pneg %p95
    %p102 = scmp.eq.s32.totalorder %s12, 15
    %p103 = por %p101, %p102
    %p104 = scmp.ne.s32.totalorder %s96, %s99
    %p105 = scmp.eq.s32.totalorder %s12, 0
    %p106 = por %p104, %p105
    %p107 = scmp.ne.s32.totalorder %s96, %s99
    %p108 = scmp.eq.s32.totalorder %s17, 15
    %p109 = por %p107, %p108
    %p110 = scmp.ne.s32.totalorder %s99, %s100
    %p111 = scmp.eq.s32.totalorder %s17, 0
    %p112 = por %p110, %p111
    %p113 = scmp.ne.s32.totalorder %s99, %s100
    %p114 = scmp.eq.s32.totalorder %s18, 15
    %p115 = por %p113, %p114
    %p117 = scmp.ne.s32.totalorder %s100, %s116
    %p118 = scmp.eq.s32.totalorder %s18, 0
    %p119 = por %p117, %p118
    %s121 = sadd.s32 %s120, 1
    %p124 = scmp.eq.s32.totalorder %s12, 15
    %p125 = scmp.ne.s32.totalorder %s120, %s122
    %p126 = scmp.eq.s32.totalorder %s12, 0
    %p127 = por %p125, %p126
    %p128 = scmp.ne.s32.totalorder %s120, %s122
    %p129 = scmp.eq.s32.totalorder %s17, 15
    %p130 = por %p128, %p129
    %p131 = scmp.ne.s32.totalorder %s122, %s123
    %p132 = scmp.eq.s32.totalorder %s17, 0
    %p133 = por %p131, %p132
    %p134 = scmp.ne.s32.totalorder %s122, %s123
    %p135 = scmp.eq.s32.totalorder %s18, 15
    %p136 = por %p134, %p135
    %p138 = scmp.ne.s32.totalorder %s123, %s137
    %p139 = scmp.eq.s32.totalorder %s18, 0
    %p140 = por %p138, %p139
    %s142 = sadd.s32 %s141, 1
    %p145 = scmp.eq.s32.totalorder %s12, 15
    %p146 = scmp.ne.s32.totalorder %s141, %s143
    %p147 = scmp.eq.s32.totalorder %s12, 0
    %p148 = por %p146, %p147
    %p149 = scmp.ne.s32.totalorder %s141, %s143
    %p150 = scmp.eq.s32.totalorder %s17, 15
    %p151 = por %p149, %p150
    %p152 = scmp.ne.s32.totalorder %s143, %s144
    %p153 = scmp.eq.s32.totalorder %s17, 0
    %p154 = por %p152, %p153
    %p155 = scmp.ne.s32.totalorder %s143, %s144
    %p156 = scmp.eq.s32.totalorder %s18, 15
    %p157 = por %p155, %p156
    %p159 = scmp.ne.s32.totalorder %s144, %s158
    %p160 = scmp.eq.s32.totalorder %s18, 0
    %p161 = por %p159, %p160
    %s162 = ssub.s32 %s19, %s31
    %s163 = ssub.s32 %s20, %s27
    %s164 = sor.u32 %s162, %s163
    %p165 = scmp.eq.s32.totalorder %s164, 0
    %s167 = sadd.s32 %s166, 1
    %s168 = scalar_select %p165, %s166, %s167
    %p171 = pneg %p165
    %p172 = scmp.eq.s32.totalorder %s12, 15
    %p173 = por %p171, %p172
    %p174 = scmp.ne.s32.totalorder %s166, %s169
    %p175 = scmp.eq.s32.totalorder %s12, 0
    %p176 = por %p174, %p175
    %p177 = scmp.ne.s32.totalorder %s166, %s169
    %p178 = scmp.eq.s32.totalorder %s17, 15
    %p179 = por %p177, %p178
    %p180 = scmp.ne.s32.totalorder %s169, %s170
    %p181 = scmp.eq.s32.totalorder %s17, 0
    %p182 = por %p180, %p181
    %p183 = scmp.ne.s32.totalorder %s169, %s170
    %p184 = scmp.eq.s32.totalorder %s18, 15
    %p185 = por %p183, %p184
    %p187 = scmp.ne.s32.totalorder %s170, %s186
    %p188 = scmp.eq.s32.totalorder %s18, 0
    %p189 = por %p187, %p188
    %s190 = ssub.s32 %s19, %s31
    %s191 = ssub.s32 %s20, %s27
    %s192 = sor.u32 %s190, %s191
    %p193 = scmp.eq.s32.totalorder %s192, 0
    %s195 = sadd.s32 %s194, 1
    %s196 = scalar_select %p193, %s194, %s195
    %p199 = pneg %p193
    %p200 = scmp.eq.s32.totalorder %s12, 15
    %p201 = por %p199, %p200
    %p202 = scmp.ne.s32.totalorder %s194, %s197
    %p203 = scmp.eq.s32.totalorder %s12, 0
    %p204 = por %p202, %p203
    %p205 = scmp.ne.s32.totalorder %s194, %s197
    %p206 = scmp.eq.s32.totalorder %s17, 15
    %p207 = por %p205, %p206
    %p208 = scmp.ne.s32.totalorder %s197, %s198
    %p209 = scmp.eq.s32.totalorder %s17, 0
    %p210 = por %p208, %p209
    %p211 = scmp.ne.s32.totalorder %s197, %s198
    %p212 = scmp.eq.s32.totalorder %s18, 15
    %p213 = por %p211, %p212
    %p215 = scmp.ne.s32.totalorder %s198, %s214
    %p216 = scmp.eq.s32.totalorder %s18, 0
    %p217 = por %p215, %p216
    %p218 = scmp.le.s32.totalorder 1, %s12
    %p219 = scmp.lt.s32.totalorder %s12, 17
    %p220 = pnand %p218, %p219
    %p221 = pneg %p220
    // Predicated region
    $region9: #{basic_block_forward.3} parent=5 // pred_check
      _
    $region10: #{basic_block_forward.3} parent=5 // pred_check_branch
      %223 = sbr.rel (%p220) target = $region12
    $region11: #{basic_block_forward.3} parent=5 // pred_region
      %s224 = ssub.s32 %s12, 1
      // Predicated region
      $region13: #{basic_block_forward.3} parent=11 // pred_check
        %p225 = pneg %p133
      $region14: #{basic_block_forward.3} parent=11 // pred_check_branch
        %227 = sbr.rel (%p225) target = $region16
      $region15: #{basic_block_forward.3} parent=11 // pred_region
        _
      $region16: #{basic_block_forward.3} parent=11 // pred_fallthru
        _
      // Predicated region
      $region17: #{basic_block_forward.3} parent=11 // pred_check
        %p228 = pneg %p154
      $region18: #{basic_block_forward.3} parent=11 // pred_check_branch
        %230 = sbr.rel (%p228) target = $region20
      $region19: #{basic_block_forward.3} parent=11 // pred_region
        _
      $region20: #{basic_block_forward.3} parent=11 // pred_fallthru
        _
    $region12: #{basic_block_forward.3} parent=5 // pred_fallthru
      _
    %p231 = scmp.lt.s32.totalorder %s12, 16
    // Predicated region
    $region21: #{basic_block_forward.3} parent=5 // pred_check
      %p232 = pneg %p231
    $region22: #{basic_block_forward.3} parent=5 // pred_check_branch
      %234 = sbr.rel (%p232) target = $region24
    $region23: #{basic_block_forward.3} parent=5 // pred_region
      // Predicated region
      $region25: #{basic_block_forward.3} parent=23 // pred_check
        %p235 = pneg %p46
      $region26: #{basic_block_forward.3} parent=23 // pred_check_branch
        %237 = sbr.rel (%p235) target = $region28
      $region27: #{basic_block_forward.3} parent=23 // pred_region
        %p238 = scmp.lt.s32.totalorder %s19, 1
        %s239 = scalar_select %p238, %s19, 1
        %p240 = scmp.lt.s32.totalorder %s20, 9
        %s241 = scalar_select %p240, %s20, 9
        %s242 = smul.addr %s241, 16
        %s243 = smul.addr %s239, 160
        %s244 = sadd.s32 %s242, %s243
        %s245 = smul.addr %s244, 4
        %s246 = scalar_lea.vmem %s0, %s245
      $region28: #{basic_block_forward.3} parent=23 // pred_fallthru
        _
      // Predicated region
      $region29: #{basic_block_forward.3} parent=23 // pred_check
        %p247 = pneg %p76
      $region30: #{basic_block_forward.3} parent=23 // pred_check_branch
        %249 = sbr.rel (%p247) target = $region32
      $region31: #{basic_block_forward.3} parent=23 // pred_region
        %s250 = sadd.s32 %s20, 1
        %p251 = scmp.lt.s32.totalorder %s19, 1
        %s252 = scalar_select %p251, %s19, 1
        %p253 = scmp.lt.s32.totalorder %s250, 9
        %s254 = scalar_select %p253, %s250, 9
        %s255 = smul.addr %s254, 16
        %s256 = smul.addr %s252, 160
        %s257 = sadd.s32 %s255, %s256
        %s258 = smul.addr %s257, 4
        %s259 = scalar_lea.vmem %s1, %s258
        %s260 = sadd.s32 %s20, 1
      $region32: #{basic_block_forward.3} parent=23 // pred_fallthru
        _
      // Predicated region
      $region33: #{basic_block_forward.3} parent=23 // pred_check
        %p261 = pneg %p106
      $region34: #{basic_block_forward.3} parent=23 // pred_check_branch
        %263 = sbr.rel (%p261) target = $region36
      $region35: #{basic_block_forward.3} parent=23 // pred_region
        %s264 = sadd.s32 %s20, 2
        %p265 = scmp.lt.s32.totalorder %s19, 1
        %s266 = scalar_select %p265, %s19, 1
        %p267 = scmp.lt.s32.totalorder %s264, 9
        %s268 = scalar_select %p267, %s264, 9
        %s269 = smul.addr %s268, 16
        %s270 = smul.addr %s266, 160
        %s271 = sadd.s32 %s269, %s270
        %s272 = smul.addr %s271, 4
        %s273 = scalar_lea.vmem %s2, %s272
        %s274 = sadd.s32 %s20, 2
      $region36: #{basic_block_forward.3} parent=23 // pred_fallthru
        _
      // Predicated region
      $region37: #{basic_block_forward.3} parent=23 // pred_check
        %p275 = pneg %p176
      $region38: #{basic_block_forward.3} parent=23 // pred_check_branch
        %277 = sbr.rel (%p275) target = $region40
      $region39: #{basic_block_forward.3} parent=23 // pred_region
        %p278 = scmp.lt.s32.totalorder %s19, 1
        %s279 = scalar_select %p278, %s19, 1
        %p280 = scmp.lt.s32.totalorder %s20, 7
        %s281 = scalar_select %p280, %s20, 7
        %s282 = smul.addr %s281, 13
        %s283 = smul.addr %s279, 104
        %s284 = sadd.s32 %s282, %s283
        %s285 = smul.addr %s284, 4
        %s286 = scalar_lea.vmem %s5, %s285
      $region40: #{basic_block_forward.3} parent=23 // pred_fallthru
        _
    $region24: #{basic_block_forward.3} parent=5 // pred_fallthru
      _
    %p287 = scmp.le.s32.totalorder 1, %s12
    %p288 = scmp.lt.s32.totalorder %s12, 17
    %p289 = pnand %p287, %p288
    %p290 = pneg %p289
    // Predicated region
    $region41: #{basic_block_forward.3} parent=5 // pred_check
      _
    $region42: #{basic_block_forward.3} parent=5 // pred_check_branch
      %292 = sbr.rel (%p289) target = $region44
    $region43: #{basic_block_forward.3} parent=5 // pred_region
      %s293 = ssub.s32 %s12, 1
      %p294 = scmp.lt.s32.totalorder %s21, 1
      %s295 = scalar_select %p294, %s21, 1
      %p296 = scmp.lt.s32.totalorder %s22, 9
      %s297 = scalar_select %p296, %s22, 9
      %s298 = smul.addr %s297, 16
      %s299 = smul.addr %s295, 160
      %s300 = sadd.s32 %s298, %s299
      %s301 = smul.addr %s300, 4
      %s302 = scalar_lea.vmem %s0, %s301
      %p303 = pneg %p52
      %p304 = pneg %p49
      %s305 = sadd.s32 %s22, 1
      %p306 = scmp.lt.s32.totalorder %s21, 1
      %s307 = scalar_select %p306, %s21, 1
      %p308 = scmp.lt.s32.totalorder %s305, 9
      %s309 = scalar_select %p308, %s305, 9
      %s310 = smul.addr %s309, 16
      %s311 = smul.addr %s307, 160
      %s312 = sadd.s32 %s310, %s311
      %s313 = smul.addr %s312, 4
      %s314 = scalar_lea.vmem %s1, %s313
      %p315 = pneg %p82
      %p316 = pneg %p79
      %s317 = sadd.s32 %s22, 2
      %p318 = scmp.lt.s32.totalorder %s21, 1
      %s319 = scalar_select %p318, %s21, 1
      %p320 = scmp.lt.s32.totalorder %s317, 9
      %s321 = scalar_select %p320, %s317, 9
      %s322 = smul.addr %s321, 16
      %s323 = smul.addr %s319, 160
      %s324 = sadd.s32 %s322, %s323
      %s325 = smul.addr %s324, 4
      %s326 = scalar_lea.vmem %s2, %s325
      %p327 = pneg %p112
      %p328 = pneg %p109
      %p329 = pneg %p133
      %p330 = pneg %p130
      %p331 = pneg %p154
      %p332 = pneg %p151
      %p333 = scmp.lt.s32.totalorder %s21, 1
      %s334 = scalar_select %p333, %s21, 1
      %p335 = scmp.lt.s32.totalorder %s22, 7
      %s336 = scalar_select %p335, %s22, 7
      %s337 = smul.addr %s336, 13
      %s338 = smul.addr %s334, 104
      %s339 = sadd.s32 %s337, %s338
      %s340 = smul.addr %s339, 4
      %s341 = scalar_lea.vmem %s5, %s340
      %p342 = pneg %p182
      %p343 = pneg %p179
      %p344 = pneg %p210
      %p345 = pneg %p207
      %p346 = scmp.lt.s32.totalorder %s21, 1
      %s347 = scalar_select %p346, %s21, 1
      %p348 = scmp.lt.s32.totalorder %s22, 7
      %s349 = scalar_select %p348, %s22, 7
      %s350 = smul.addr %s349, 13
      %s351 = smul.addr %s347, 104
      %s352 = sadd.s32 %s350, %s351
      %s353 = smul.addr %s352, 4
      %s354 = scalar_lea.vmem %s6, %s353
      %p355 = scmp.lt.s32.totalorder %s21, 1
      %s356 = scalar_select %p355, %s21, 1
      %p357 = scmp.lt.s32.totalorder %s22, 9
      %s358 = scalar_select %p357, %s22, 9
      %s359 = smul.addr %s358, 16
      %s360 = smul.addr %s356, 160
      %s361 = sadd.s32 %s359, %s360
      %s362 = smul.addr %s361, 4
      %s363 = scalar_lea.vmem %s0, %s362
      %s364 = sadd.s32 %s22, 1
      %p365 = scmp.lt.s32.totalorder %s21, 1
      %s366 = scalar_select %p365, %s21, 1
      %p367 = scmp.lt.s32.totalorder %s364, 9
      %s368 = scalar_select %p367, %s364, 9
      %s369 = smul.addr %s368, 16
      %s370 = smul.addr %s366, 160
      %s371 = sadd.s32 %s369, %s370
      %s372 = smul.addr %s371, 4
      %s373 = scalar_lea.vmem %s1, %s372
      %s374 = sadd.s32 %s22, 1
      %s375 = sadd.s32 %s22, 2
      %p376 = scmp.lt.s32.totalorder %s21, 1
      %s377 = scalar_select %p376, %s21, 1
      %p378 = scmp.lt.s32.totalorder %s375, 9
      %s379 = scalar_select %p378, %s375, 9
      %s380 = smul.addr %s379, 16
      %s381 = smul.addr %s377, 160
      %s382 = sadd.s32 %s380, %s381
      %s383 = smul.addr %s382, 4
      %s384 = scalar_lea.vmem %s2, %s383
      %s385 = sadd.s32 %s22, 2
      %p386 = scmp.lt.s32.totalorder %s21, 1
      %s387 = scalar_select %p386, %s21, 1
      %p388 = scmp.lt.s32.totalorder %s22, 7
      %s389 = scalar_select %p388, %s22, 7
      %s390 = smul.addr %s389, 13
      %s391 = smul.addr %s387, 104
      %s392 = sadd.s32 %s390, %s391
      %s393 = smul.addr %s392, 4
      %s394 = scalar_lea.vmem %s5, %s393
      %p395 = scmp.lt.s32.totalorder %s21, 1
      %s396 = scalar_select %p395, %s21, 1
      %p397 = scmp.lt.s32.totalorder %s22, 7
      %s398 = scalar_select %p397, %s22, 7
      %s399 = smul.addr %s398, 13
      %s400 = smul.addr %s396, 104
      %s401 = sadd.s32 %s399, %s400
      %s402 = smul.addr %s401, 4
      %s403 = scalar_lea.vmem %s6, %s402
      %vm405 = vcmask 1044160
      %406 = vst.msk [vmem:[#allocation2 + $0x4] sm:$0xf] %vm405, 0
      %407 = vst.msk [vmem:[#allocation2 + $0xc] sm:$0xf] %vm405, 0
      %408 = vst.msk [vmem:[#allocation2 + $0x14] sm:$0xf] %vm405, 0
      %409 = vst.msk [vmem:[#allocation2 + $0x1c] sm:$0xf] %vm405, 0
      %410 = vst.msk [vmem:[#allocation2 + $0x24] sm:$0xf] %vm405, 0
      %411 = vst.msk [vmem:[#allocation2 + $0x2c] sm:$0xf] %vm405, 0
      %412 = vst.msk [vmem:[#allocation2 + $0x34] sm:$0xf] %vm405, 0
      %413 = vst.msk [vmem:[#allocation2 + $0x3c] sm:$0xf] %vm405, 0
      %414 = vst.msk [vmem:[#allocation2 + $0x44] sm:$0xf] %vm405, 0
      %415 = vst.msk [vmem:[#allocation2 + $0x4c] sm:$0xf] %vm405, 0
      %416 = vst.msk [vmem:[#allocation2 + $0x54] sm:$0xf] %vm405, 0
      %417 = vst.msk [vmem:[#allocation2 + $0x5c] sm:$0xf] %vm405, 0
      %vm418 = vcmask 1042112
      %419 = vst.msk [vmem:[#allocation2 + $0x64] sm:$0x3] %vm418, 0
      %v420 = vld [vmem:[%s363] sm:$0xf]
      %v421 = vld [vmem:[%s363 + $0x4] sm:$0xf]
      %v422 = vld [vmem:[%s363 + $0x8] sm:$0xf]
      %v423 = vld [vmem:[%s363 + $0xc] sm:$0xf]
      %v424 = vld [vmem:[%s363 + $0x10] sm:$0xf]
      %v425 = vld [vmem:[%s363 + $0x14] sm:$0xf]
      %v426 = vld [vmem:[%s363 + $0x18] sm:$0xf]
      %v427 = vld [vmem:[%s363 + $0x1c] sm:$0xf]
      %v428 = vld [vmem:[%s363 + $0x20] sm:$0xf]
      %v429 = vld [vmem:[%s363 + $0x24] sm:$0xf]
      %v430 = vld [vmem:[%s363 + $0x28] sm:$0xf]
      %v431 = vld [vmem:[%s363 + $0x2c] sm:$0xf]
      %v432 = vld [vmem:[%s363 + $0x30] sm:$0xf]
      %v433 = vld [vmem:[%s363 + $0x34] sm:$0xf]
      %v434 = vld [vmem:[%s363 + $0x38] sm:$0xf]
      %v435 = vld [vmem:[%s363 + $0x3c] sm:$0x1]
      %v436 = vunpack.c.l.bf16 %v420
      %v437 = vunpack.c.l.bf16 %v421
      %v438 = vunpack.c.l.bf16 %v422
      %v439 = vunpack.c.l.bf16 %v423
      %v440 = vunpack.c.l.bf16 %v424
      %v441 = vunpack.c.l.bf16 %v425
      %v442 = vunpack.c.l.bf16 %v426
      %v443 = vunpack.c.l.bf16 %v427
      %v444 = vunpack.c.l.bf16 %v428
      %v445 = vunpack.c.l.bf16 %v429
      %v446 = vunpack.c.l.bf16 %v430
      %v447 = vunpack.c.l.bf16 %v431
      %v448 = vunpack.c.l.bf16 %v432
      %v449 = vunpack.c.l.bf16 %v433
      %v450 = vunpack.c.l.bf16 %v434
      %v451 = vunpack.c.l.bf16 %v435
      %v452 = vpack.c.bf16 %v437, %v436
      %v453 = vpack.c.bf16 %v439, %v438
      %v454 = vpack.c.bf16 %v441, %v440
      %v455 = vpack.c.bf16 %v443, %v442
      %v456 = vpack.c.bf16 %v445, %v444
      %v457 = vpack.c.bf16 %v447, %v446
      %v458 = vpack.c.bf16 %v448, %v448
      %v466 = vunpack.c.l.b16 %v452
      %v467 = vunpack.c.h.b16 %v452
      %v468 = vunpack.c.l.b16 %v453
      %v469 = vunpack.c.h.b16 %v453
      %v470 = vunpack.c.l.b16 %v454
      %v471 = vunpack.c.h.b16 %v454
      %v472 = vunpack.c.l.b16 %v455
      %v473 = vunpack.c.h.b16 %v455
      %v474 = vunpack.c.l.b16 %v456
      %v475 = vunpack.c.h.b16 %v456
      %v476 = vunpack.c.l.b16 %v457
      %v477 = vunpack.c.h.b16 %v457
      %v478 = vunpack.c.l.b16 %v458
      %v479 = vpack.c.b16 %v466, %v466
      %v480 = vpack.c.b16 %v467, %v467
      %v481 = vpack.c.b16 %v468, %v468
      %v482 = vpack.c.b16 %v469, %v469
      %v483 = vpack.c.b16 %v470, %v470
      %v484 = vpack.c.b16 %v471, %v471
      %v485 = vpack.c.b16 %v472, %v472
      %v486 = vpack.c.b16 %v473, %v473
      %v487 = vpack.c.b16 %v474, %v474
      %v488 = vpack.c.b16 %v475, %v475
      %v489 = vpack.c.b16 %v476, %v476
      %v490 = vpack.c.b16 %v477, %v477
      %v491 = vpack.c.b16 %v478, %v478
      %vm505 = vcmask 60416
      %506 = vst.msk [vmem:[#allocation2] sm:$0xf] %vm505, %v479
      %507 = vst.msk [vmem:[#allocation2 + $0x8] sm:$0xf] %vm505, %v480
      %508 = vst.msk [vmem:[#allocation2 + $0x10] sm:$0xf] %vm505, %v481
      %509 = vst.msk [vmem:[#allocation2 + $0x18] sm:$0xf] %vm505, %v482
      %510 = vst.msk [vmem:[#allocation2 + $0x20] sm:$0xf] %vm505, %v483
      %511 = vst.msk [vmem:[#allocation2 + $0x28] sm:$0xf] %vm505, %v484
      %512 = vst.msk [vmem:[#allocation2 + $0x30] sm:$0xf] %vm505, %v485
      %513 = vst.msk [vmem:[#allocation2 + $0x38] sm:$0xf] %vm505, %v486
      %514 = vst.msk [vmem:[#allocation2 + $0x40] sm:$0xf] %vm505, %v487
      %515 = vst.msk [vmem:[#allocation2 + $0x48] sm:$0xf] %vm505, %v488
      %516 = vst.msk [vmem:[#allocation2 + $0x50] sm:$0xf] %vm505, %v489
      %517 = vst.msk [vmem:[#allocation2 + $0x58] sm:$0xf] %vm505, %v490
      %vm518 = vcmask 58368
      %519 = vst.msk [vmem:[#allocation2 + $0x60] sm:$0x3] %vm518, %v491
      %vm520 = vsmask.f32 3328
      %vm521 = vsmask.f32 7440
      %vm522 = vmor %vm520, %vm521
      %v524 = vshrl.u32 %v479, 16
      %v526 = vrot.slane %v524, 4
      %v527 = vshll.u32 %v479, 16
      %v529 = vrot.slane %v527, 5
      %v530 = vor.u32 %v526, %v529
      %v531 = vrot.slane %v530, 4
      %v533 = vshll.u32 %v480, 16
      %v535 = vrot.slane %v533, 5
      %v536 = vsel %vm522, %v531, %v535
      %v537 = vshrl.u32 %v480, 16
      %v539 = vrot.slane %v537, 4
      %v540 = vor.u32 %v539, %v535
      %v541 = vrot.slane %v540, 4
      %v543 = vshll.u32 %v481, 16
      %v545 = vrot.slane %v543, 5
      %v546 = vsel %vm522, %v541, %v545
      %v547 = vshrl.u32 %v481, 16
      %v549 = vrot.slane %v547, 4
      %v550 = vor.u32 %v549, %v545
      %v551 = vrot.slane %v550, 4
      %v553 = vshll.u32 %v482, 16
      %v555 = vrot.slane %v553, 5
      %v556 = vsel %vm522, %v551, %v555
      %v557 = vshrl.u32 %v482, 16
      %v559 = vrot.slane %v557, 4
      %v560 = vor.u32 %v559, %v555
      %v561 = vrot.slane %v560, 4
      %v563 = vshll.u32 %v483, 16
      %v565 = vrot.slane %v563, 5
      %v566 = vsel %vm522, %v561, %v565
      %v567 = vshrl.u32 %v483, 16
      %v569 = vrot.slane %v567, 4
      %v570 = vor.u32 %v569, %v565
      %v571 = vrot.slane %v570, 4
      %v573 = vshll.u32 %v484, 16
      %v575 = vrot.slane %v573, 5
      %v576 = vsel %vm522, %v571, %v575
      %v577 = vshrl.u32 %v484, 16
      %v579 = vrot.slane %v577, 4
      %v580 = vor.u32 %v579, %v575
      %v581 = vrot.slane %v580, 4
      %v583 = vshll.u32 %v485, 16
      %v585 = vrot.slane %v583, 5
      %v586 = vsel %vm522, %v581, %v585
      %v587 = vshrl.u32 %v485, 16
      %v589 = vrot.slane %v587, 4
      %v590 = vor.u32 %v589, %v585
      %v591 = vrot.slane %v590, 4
      %v593 = vshll.u32 %v486, 16
      %v595 = vrot.slane %v593, 5
      %v596 = vsel %vm522, %v591, %v595
      %v597 = vshrl.u32 %v486, 16
      %v599 = vrot.slane %v597, 4
      %v600 = vor.u32 %v599, %v595
      %v601 = vrot.slane %v600, 4
      %v603 = vshll.u32 %v487, 16
      %v605 = vrot.slane %v603, 5
      %v606 = vsel %vm522, %v601, %v605
      %v607 = vshrl.u32 %v487, 16
      %v609 = vrot.slane %v607, 4
      %v610 = vor.u32 %v609, %v605
      %v611 = vrot.slane %v610, 4
      %v613 = vshll.u32 %v488, 16
      %v615 = vrot.slane %v613, 5
      %v616 = vsel %vm522, %v611, %v615
      %v617 = vshrl.u32 %v488, 16
      %v619 = vrot.slane %v617, 4
      %v620 = vor.u32 %v619, %v615
      %v621 = vrot.slane %v620, 4
      %v623 = vshll.u32 %v489, 16
      %v625 = vrot.slane %v623, 5
      %v626 = vsel %vm522, %v621, %v625
      %v627 = vshrl.u32 %v489, 16
      %v629 = vrot.slane %v627, 4
      %v630 = vor.u32 %v629, %v625
      %v631 = vrot.slane %v630, 4
      %v633 = vshll.u32 %v490, 16
      %v635 = vrot.slane %v633, 5
      %v636 = vsel %vm522, %v631, %v635
      %v637 = vshrl.u32 %v490, 16
      %v639 = vrot.slane %v637, 4
      %v640 = vor.u32 %v639, %v635
      %v641 = vrot.slane %v640, 4
      %v643 = vshll.u32 %v491, 16
      %v645 = vrot.slane %v643, 5
      %v646 = vsel %vm522, %v641, %v645
      %v647 = vshrl.u32 %v491, 16
      %v649 = vrot.slane %v647, 4
      %v650 = vor.u32 %v649, %v645
      %v651 = vrot.slane %v650, 4
      %652 = vrot.lane.b32.xlu0 %v536, 8
      %v653 = vpop.permute.xlu0 %652
      %654 = vrot.lane.b32.xlu0 %v546, 8
      %v655 = vpop.permute.xlu0 %654
      %656 = vrot.lane.b32.xlu0 %v556, 8
      %v657 = vpop.permute.xlu0 %656
      %658 = vrot.lane.b32.xlu0 %v566, 8
      %v659 = vpop.permute.xlu0 %658
      %660 = vrot.lane.b32.xlu0 %v576, 8
      %v661 = vpop.permute.xlu0 %660
      %662 = vrot.lane.b32.xlu0 %v586, 8
      %v663 = vpop.permute.xlu0 %662
      %664 = vrot.lane.b32.xlu0 %v596, 8
      %v665 = vpop.permute.xlu0 %664
      %666 = vrot.lane.b32.xlu0 %v606, 8
      %v667 = vpop.permute.xlu0 %666
      %668 = vrot.lane.b32.xlu0 %v616, 8
      %v669 = vpop.permute.xlu0 %668
      %670 = vrot.lane.b32.xlu0 %v626, 8
      %v671 = vpop.permute.xlu0 %670
      %672 = vrot.lane.b32.xlu0 %v636, 8
      %v673 = vpop.permute.xlu0 %672
      %674 = vrot.lane.b32.xlu0 %v646, 8
      %v675 = vpop.permute.xlu0 %674
      %676 = vrot.lane.b32.xlu0 %v651, 8
      %v677 = vpop.permute.xlu0 %676
      %vm691 = vcmask 126016
      %692 = vst.msk [vmem:[#allocation2] sm:$0xf] %vm691, %v653
      %693 = vst.msk [vmem:[#allocation2 + $0x8] sm:$0xf] %vm691, %v655
      %694 = vst.msk [vmem:[#allocation2 + $0x10] sm:$0xf] %vm691, %v657
      %695 = vst.msk [vmem:[#allocation2 + $0x18] sm:$0xf] %vm691, %v659
      %696 = vst.msk [vmem:[#allocation2 + $0x20] sm:$0xf] %vm691, %v661
      %697 = vst.msk [vmem:[#allocation2 + $0x28] sm:$0xf] %vm691, %v663
      %698 = vst.msk [vmem:[#allocation2 + $0x30] sm:$0xf] %vm691, %v665
      %699 = vst.msk [vmem:[#allocation2 + $0x38] sm:$0xf] %vm691, %v667
      %700 = vst.msk [vmem:[#allocation2 + $0x40] sm:$0xf] %vm691, %v669
      %701 = vst.msk [vmem:[#allocation2 + $0x48] sm:$0xf] %vm691, %v671
      %702 = vst.msk [vmem:[#allocation2 + $0x50] sm:$0xf] %vm691, %v673
      %703 = vst.msk [vmem:[#allocation2 + $0x58] sm:$0xf] %vm691, %v675
      %vm704 = vcmask 123968
      %705 = vst.msk [vmem:[#allocation2 + $0x60] sm:$0x3] %vm704, %v677
      %vm706 = vcmask 1042432
      %vm707 = vcmask 1046532
      %vm708 = vmor %vm706, %vm707
      %v709 = vrot.slane %v479, 5
      %v710 = vrot.slane %v709, 4
      %v711 = vrot.slane %v480, 5
      %v712 = vsel %vm708, %v710, %v711
      %v713 = vrot.slane %v711, 4
      %v714 = vrot.slane %v481, 5
      %v715 = vsel %vm708, %v713, %v714
      %v716 = vrot.slane %v714, 4
      %v717 = vrot.slane %v482, 5
      %v718 = vsel %vm708, %v716, %v717
      %v719 = vrot.slane %v717, 4
      %v720 = vrot.slane %v483, 5
      %v721 = vsel %vm708, %v719, %v720
      %v722 = vrot.slane %v720, 4
      %v723 = vrot.slane %v484, 5
      %v724 = vsel %vm708, %v722, %v723
      %v725 = vrot.slane %v723, 4
      %v726 = vrot.slane %v485, 5
      %v727 = vsel %vm708, %v725, %v726
      %v728 = vrot.slane %v726, 4
      %v729 = vrot.slane %v486, 5
      %v730 = vsel %vm708, %v728, %v729
      %v731 = vrot.slane %v729, 4
      %v732 = vrot.slane %v487, 5
      %v733 = vsel %vm708, %v731, %v732
      %v734 = vrot.slane %v732, 4
      %v735 = vrot.slane %v488, 5
      %v736 = vsel %vm708, %v734, %v735
      %v737 = vrot.slane %v735, 4
      %v738 = vrot.slane %v489, 5
      %v739 = vsel %vm708, %v737, %v738
      %v740 = vrot.slane %v738, 4
      %v741 = vrot.slane %v490, 5
      %v742 = vsel %vm708, %v740, %v741
      %v743 = vrot.slane %v741, 4
      %v744 = vrot.slane %v491, 5
      %v745 = vsel %vm708, %v743, %v744
      %v746 = vrot.slane %v744, 4
      %747 = vrot.lane.b32.xlu0 %v712, 16
      %v748 = vpop.permute.xlu0 %747
      %749 = vrot.lane.b32.xlu0 %v715, 16
      %v750 = vpop.permute.xlu0 %749
      %751 = vrot.lane.b32.xlu0 %v718, 16
      %v752 = vpop.permute.xlu0 %751
      %753 = vrot.lane.b32.xlu0 %v721, 16
      %v754 = vpop.permute.xlu0 %753
      %755 = vrot.lane.b32.xlu0 %v724, 16
      %v756 = vpop.permute.xlu0 %755
      %757 = vrot.lane.b32.xlu0 %v727, 16
      %v758 = vpop.permute.xlu0 %757
      %759 = vrot.lane.b32.xlu0 %v730, 16
      %v760 = vpop.permute.xlu0 %759
      %761 = vrot.lane.b32.xlu0 %v733, 16
      %v762 = vpop.permute.xlu0 %761
      %763 = vrot.lane.b32.xlu0 %v736, 16
      %v764 = vpop.permute.xlu0 %763
      %765 = vrot.lane.b32.xlu0 %v739, 16
      %v766 = vpop.permute.xlu0 %765
      %767 = vrot.lane.b32.xlu0 %v742, 16
      %v768 = vpop.permute.xlu0 %767
      %769 = vrot.lane.b32.xlu0 %v745, 16
      %v770 = vpop.permute.xlu0 %769
      %771 = vrot.lane.b32.xlu0 %v746, 16
      %v772 = vpop.permute.xlu0 %771
      %vm786 = vcmask 191616
      %787 = vst.msk [vmem:[#allocation2] sm:$0xf] %vm786, %v748
      %788 = vst.msk [vmem:[#allocation2 + $0x8] sm:$0xf] %vm786, %v750
      %789 = vst.msk [vmem:[#allocation2 + $0x10] sm:$0xf] %vm786, %v752
      %790 = vst.msk [vmem:[#allocation2 + $0x18] sm:$0xf] %vm786, %v754
      %791 = vst.msk [vmem:[#allocation2 + $0x20] sm:$0xf] %vm786, %v756
      %792 = vst.msk [vmem:[#allocation2 + $0x28] sm:$0xf] %vm786, %v758
      %793 = vst.msk [vmem:[#allocation2 + $0x30] sm:$0xf] %vm786, %v760
      %794 = vst.msk [vmem:[#allocation2 + $0x38] sm:$0xf] %vm786, %v762
      %795 = vst.msk [vmem:[#allocation2 + $0x40] sm:$0xf] %vm786, %v764
      %796 = vst.msk [vmem:[#allocation2 + $0x48] sm:$0xf] %vm786, %v766
      %797 = vst.msk [vmem:[#allocation2 + $0x50] sm:$0xf] %vm786, %v768
      %798 = vst.msk [vmem:[#allocation2 + $0x58] sm:$0xf] %vm786, %v770
      %vm799 = vcmask 189568
      %800 = vst.msk [vmem:[#allocation2 + $0x60] sm:$0x3] %vm799, %v772
      %v801 = vpack.c.bf16 %v438, %v437
      %v802 = vpack.c.bf16 %v440, %v439
      %v803 = vpack.c.bf16 %v442, %v441
      %v804 = vpack.c.bf16 %v444, %v443
      %v805 = vpack.c.bf16 %v446, %v445
      %v806 = vpack.c.bf16 %v448, %v447
      %v807 = vpack.c.bf16 %v449, %v449
      %v815 = vunpack.c.l.b16 %v801
      %v816 = vunpack.c.h.b16 %v801
      %v817 = vunpack.c.l.b16 %v802
      %v818 = vunpack.c.h.b16 %v802
      %v819 = vunpack.c.l.b16 %v803
      %v820 = vunpack.c.h.b16 %v803
      %v821 = vunpack.c.l.b16 %v804
      %v822 = vunpack.c.h.b16 %v804
      %v823 = vunpack.c.l.b16 %v805
      %v824 = vunpack.c.h.b16 %v805
      %v825 = vunpack.c.l.b16 %v806
      %v826 = vunpack.c.h.b16 %v806
      %v827 = vunpack.c.l.b16 %v807
      %v828 = vpack.c.b16 %v815, %v815
      %v829 = vpack.c.b16 %v816, %v816
      %v830 = vpack.c.b16 %v817, %v817
      %v831 = vpack.c.b16 %v818, %v818
      %v832 = vpack.c.b16 %v819, %v819
      %v833 = vpack.c.b16 %v820, %v820
      %v834 = vpack.c.b16 %v821, %v821
      %v835 = vpack.c.b16 %v822, %v822
      %v836 = vpack.c.b16 %v823, %v823
      %v837 = vpack.c.b16 %v824, %v824
      %v838 = vpack.c.b16 %v825, %v825
      %v839 = vpack.c.b16 %v826, %v826
      %v840 = vpack.c.b16 %v827, %v827
      %v841 = vrot.slane %v828, 5
      %v842 = vrot.slane %v841, 4
      %v843 = vrot.slane %v829, 5
      %v844 = vsel %vm708, %v842, %v843
      %v845 = vrot.slane %v843, 4
      %v846 = vrot.slane %v830, 5
      %v847 = vsel %vm708, %v845, %v846
      %v848 = vrot.slane %v846, 4
      %v849 = vrot.slane %v831, 5
      %v850 = vsel %vm708, %v848, %v849
      %v851 = vrot.slane %v849, 4
      %v852 = vrot.slane %v832, 5
      %v853 = vsel %vm708, %v851, %v852
      %v854 = vrot.slane %v852, 4
      %v855 = vrot.slane %v833, 5
      %v856 = vsel %vm708, %v854, %v855
      %v857 = vrot.slane %v855, 4
      %v858 = vrot.slane %v834, 5
      %v859 = vsel %vm708, %v857, %v858
      %v860 = vrot.slane %v858, 4
      %v861 = vrot.slane %v835, 5
      %v862 = vsel %vm708, %v860, %v861
      %v863 = vrot.slane %v861, 4
      %v864 = vrot.slane %v836, 5
      %v865 = vsel %vm708, %v863, %v864
      %v866 = vrot.slane %v864, 4
      %v867 = vrot.slane %v837, 5
      %v868 = vsel %vm708, %v866, %v867
      %v869 = vrot.slane %v867, 4
      %v870 = vrot.slane %v838, 5
      %v871 = vsel %vm708, %v869, %v870
      %v872 = vrot.slane %v870, 4
      %v873 = vrot.slane %v839, 5
      %v874 = vsel %vm708, %v872, %v873
      %v875 = vrot.slane %v873, 4
      %v876 = vrot.slane %v840, 5
      %v877 = vsel %vm708, %v875, %v876
      %v878 = vrot.slane %v876, 4
      %879 = vrot.lane.b32.xlu0 %v844, 24
      %v880 = vpop.permute.xlu0 %879
      %881 = vrot.lane.b32.xlu0 %v847, 24
      %v882 = vpop.permute.xlu0 %881
      %883 = vrot.lane.b32.xlu0 %v850, 24
      %v884 = vpop.permute.xlu0 %883
      %885 = vrot.lane.b32.xlu0 %v853, 24
      %v886 = vpop.permute.xlu0 %885
      %887 = vrot.lane.b32.xlu0 %v856, 24
      %v888 = vpop.permute.xlu0 %887
      %889 = vrot.lane.b32.xlu0 %v859, 24
      %v890 = vpop.permute.xlu0 %889
      %891 = vrot.lane.b32.xlu0 %v862, 24
      %v892 = vpop.permute.xlu0 %891
      %893 = vrot.lane.b32.xlu0 %v865, 24
      %v894 = vpop.permute.xlu0 %893
      %895 = vrot.lane.b32.xlu0 %v868, 24
      %v896 = vpop.permute.xlu0 %895
      %897 = vrot.lane.b32.xlu0 %v871, 24
      %v898 = vpop.permute.xlu0 %897
      %899 = vrot.lane.b32.xlu0 %v874, 24
      %v900 = vpop.permute.xlu0 %899
      %901 = vrot.lane.b32.xlu0 %v877, 24
      %v902 = vpop.permute.xlu0 %901
      %903 = vrot.lane.b32.xlu0 %v878, 24
      %v904 = vpop.permute.xlu0 %903
      %vm918 = vcmask 257216
      %919 = vst.msk [vmem:[#allocation2] sm:$0xf] %vm918, %v880
      %920 = vst.msk [vmem:[#allocation2 + $0x8] sm:$0xf] %vm918, %v882
      %921 = vst.msk [vmem:[#allocation2 + $0x10] sm:$0xf] %vm918, %v884
      %922 = vst.msk [vmem:[#allocation2 + $0x18] sm:$0xf] %vm918, %v886
      %923 = vst.msk [vmem:[#allocation2 + $0x20] sm:$0xf] %vm918, %v888
      %924 = vst.msk [vmem:[#allocation2 + $0x28] sm:$0xf] %vm918, %v890
      %925 = vst.msk [vmem:[#allocation2 + $0x30] sm:$0xf] %vm918, %v892
      %926 = vst.msk [vmem:[#allocation2 + $0x38] sm:$0xf] %vm918, %v894
      %927 = vst.msk [vmem:[#allocation2 + $0x40] sm:$0xf] %vm918, %v896
      %928 = vst.msk [vmem:[#allocation2 + $0x48] sm:$0xf] %vm918, %v898
      %929 = vst.msk [vmem:[#allocation2 + $0x50] sm:$0xf] %vm918, %v900
      %930 = vst.msk [vmem:[#allocation2 + $0x58] sm:$0xf] %vm918, %v902
      %vm931 = vcmask 255168
      %932 = vst.msk [vmem:[#allocation2 + $0x60] sm:$0x3] %vm931, %v904
      %vm933 = vsmask.f32 2304
      %vm934 = vsmask.f32 6416
      %vm935 = vmor %vm933, %vm934
      %v937 = vshrl.u32 %v828, 16
      %v939 = vrot.slane %v937, 5
      %v940 = vshll.u32 %v828, 16
      %v942 = vrot.slane %v940, 6
      %v943 = vor.u32 %v939, %v942
      %v944 = vrot.slane %v943, 4
      %v946 = vshrl.u32 %v829, 16
      %v948 = vrot.slane %v946, 5
      %v949 = vshll.u32 %v829, 16
      %v951 = vrot.slane %v949, 6
      %v952 = vor.u32 %v948, %v951
      %v953 = vsel %vm935, %v944, %v952
      %v954 = vrot.slane %v952, 4
      %v956 = vshrl.u32 %v830, 16
      %v958 = vrot.slane %v956, 5
      %v959 = vshll.u32 %v830, 16
      %v961 = vrot.slane %v959, 6
      %v962 = vor.u32 %v958, %v961
      %v963 = vsel %vm935, %v954, %v962
      %v964 = vrot.slane %v962, 4
      %v966 = vshrl.u32 %v831, 16
      %v968 = vrot.slane %v966, 5
      %v969 = vshll.u32 %v831, 16
      %v971 = vrot.slane %v969, 6
      %v972 = vor.u32 %v968, %v971
      %v973 = vsel %vm935, %v964, %v972
      %v974 = vrot.slane %v972, 4
      %v976 = vshrl.u32 %v832, 16
      %v978 = vrot.slane %v976, 5
      %v979 = vshll.u32 %v832, 16
      %v981 = vrot.slane %v979, 6
      %v982 = vor.u32 %v978, %v981
      %v983 = vsel %vm935, %v974, %v982
      %v984 = vrot.slane %v982, 4
      %v986 = vshrl.u32 %v833, 16
      %v988 = vrot.slane %v986, 5
      %v989 = vshll.u32 %v833, 16
      %v991 = vrot.slane %v989, 6
      %v992 = vor.u32 %v988, %v991
      %v993 = vsel %vm935, %v984, %v992
      %v994 = vrot.slane %v992, 4
      %v996 = vshrl.u32 %v834, 16
      %v998 = vrot.slane %v996, 5
      %v999 = vshll.u32 %v834, 16
      %v1001 = vrot.slane %v999, 6
      %v1002 = vor.u32 %v998, %v1001
      %v1003 = vsel %vm935, %v994, %v1002
      %v1004 = vrot.slane %v1002, 4
      %v1006 = vshrl.u32 %v835, 16
      %v1008 = vrot.slane %v1006, 5
      %v1009 = vshll.u32 %v835, 16
      %v1011 = vrot.slane %v1009, 6
      %v1012 = vor.u32 %v1008, %v1011
      %v1013 = vsel %vm935, %v1004, %v1012
      %v1014 = vrot.slane %v1012, 4
      %v1016 = vshrl.u32 %v836, 16
      %v1018 = vrot.slane %v1016, 5
      %v1019 = vshll.u32 %v836, 16
      %v1021 = vrot.slane %v1019, 6
      %v1022 = vor.u32 %v1018, %v1021
      %v1023 = vsel %vm935, %v1014, %v1022
      %v1024 = vrot.slane %v1022, 4
      %v1026 = vshrl.u32 %v837, 16
      %v1028 = vrot.slane %v1026, 5
      %v1029 = vshll.u32 %v837, 16
      %v1031 = vrot.slane %v1029, 6
      %v1032 = vor.u32 %v1028, %v1031
      %v1033 = vsel %vm935, %v1024, %v1032
      %v1034 = vrot.slane %v1032, 4
      %v1036 = vshrl.u32 %v838, 16
      %v1038 = vrot.slane %v1036, 5
      %v1039 = vshll.u32 %v838, 16
      %v1041 = vrot.slane %v1039, 6
      %v1042 = vor.u32 %v1038, %v1041
      %v1043 = vsel %vm935, %v1034, %v1042
      %v1044 = vrot.slane %v1042, 4
      %v1046 = vshrl.u32 %v839, 16
      %v1048 = vrot.slane %v1046, 5
      %v1049 = vshll.u32 %v839, 16
      %v1051 = vrot.slane %v1049, 6
      %v1052 = vor.u32 %v1048, %v1051
      %v1053 = vsel %vm935, %v1044, %v1052
      %v1054 = vrot.slane %v1052, 4
      %v1056 = vshrl.u32 %v840, 16
      %v1058 = vrot.slane %v1056, 5
      %v1059 = vshll.u32 %v840, 16
      %v1061 = vrot.slane %v1059, 6
      %v1062 = vor.u32 %v1058, %v1061
      %v1063 = vsel %vm935, %v1054, %v1062
      %v1064 = vrot.slane %v1062, 4
      %1065 = vrot.lane.b32.xlu0 %v953, 32
      %v1066 = vpop.permute.xlu0 %1065
      %1067 = vrot.lane.b32.xlu0 %v963, 32
      %v1068 = vpop.permute.xlu0 %1067
      %1069 = vrot.lane.b32.xlu0 %v973, 32
      %v1070 = vpop.permute.xlu0 %1069
      %1071 = vrot.lane.b32.xlu0 %v983, 32
      %v1072 = vpop.permute.xlu0 %1071
      %1073 = vrot.lane.b32.xlu0 %v993, 32
      %v1074 = vpop.permute.xlu0 %1073
      %1075 = vrot.lane.b32.xlu0 %v1003, 32
      %v1076 = vpop.permute.xlu0 %1075
      %1077 = vrot.lane.b32.xlu0 %v1013, 32
      %v1078 = vpop.permute.xlu0 %1077
      %1079 = vrot.lane.b32.xlu0 %v1023, 32
      %v1080 = vpop.permute.xlu0 %1079
      %1081 = vrot.lane.b32.xlu0 %v1033, 32
      %v1082 = vpop.permute.xlu0 %1081
      %1083 = vrot.lane.b32.xlu0 %v1043, 32
      %v1084 = vpop.permute.xlu0 %1083
      %1085 = vrot.lane.b32.xlu0 %v1053, 32
      %v1086 = vpop.permute.xlu0 %1085
      %1087 = vrot.lane.b32.xlu0 %v1063, 32
      %v1088 = vpop.permute.xlu0 %1087
      %1089 = vrot.lane.b32.xlu0 %v1064, 32
      %v1090 = vpop.permute.xlu0 %1089
      %vm1104 = vcmask 322816
      %1105 = vst.msk [vmem:[#allocation2] sm:$0xf] %vm1104, %v1066
      %1106 = vst.msk [vmem:[#allocation2 + $0x8] sm:$0xf] %vm1104, %v1068
      %1107 = vst.msk [vmem:[#allocation2 + $0x10] sm:$0xf] %vm1104, %v1070
      %1108 = vst.msk [vmem:[#allocation2 + $0x18] sm:$0xf] %vm1104, %v1072
      %1109 = vst.msk [vmem:[#allocation2 + $0x20] sm:$0xf] %vm1104, %v1074
      %1110 = vst.msk [vmem:[#allocation2 + $0x28] sm:$0xf] %vm1104, %v1076
      %1111 = vst.msk [vmem:[#allocation2 + $0x30] sm:$0xf] %vm1104, %v1078
      %1112 = vst.msk [vmem:[#allocation2 + $0x38] sm:$0xf] %vm1104, %v1080
      %1113 = vst.msk [vmem:[#allocation2 + $0x40] sm:$0xf] %vm1104, %v1082
      %1114 = vst.msk [vmem:[#allocation2 + $0x48] sm:$0xf] %vm1104, %v1084
      %1115 = vst.msk [vmem:[#allocation2 + $0x50] sm:$0xf] %vm1104, %v1086
      %1116 = vst.msk [vmem:[#allocation2 + $0x58] sm:$0xf] %vm1104, %v1088
      %vm1117 = vcmask 320768
      %1118 = vst.msk [vmem:[#allocation2 + $0x60] sm:$0x3] %vm1117, %v1090
      %vm1119 = vcmask 1041408
      %vm1120 = vcmask 1045508
      %vm1121 = vmor %vm1119, %vm1120
      %v1122 = vrot.slane %v828, 6
      %v1123 = vrot.slane %v1122, 4
      %v1124 = vrot.slane %v829, 6
      %v1125 = vsel %vm1121, %v1123, %v1124
      %v1126 = vrot.slane %v1124, 4
      %v1127 = vrot.slane %v830, 6
      %v1128 = vsel %vm1121, %v1126, %v1127
      %v1129 = vrot.slane %v1127, 4
      %v1130 = vrot.slane %v831, 6
      %v1131 = vsel %vm1121, %v1129, %v1130
      %v1132 = vrot.slane %v1130, 4
      %v1133 = vrot.slane %v832, 6
      %v1134 = vsel %vm1121, %v1132, %v1133
      %v1135 = vrot.slane %v1133, 4
      %v1136 = vrot.slane %v833, 6
      %v1137 = vsel %vm1121, %v1135, %v1136
      %v1138 = vrot.slane %v1136, 4
      %v1139 = vrot.slane %v834, 6
      %v1140 = vsel %vm1121, %v1138, %v1139
      %v1141 = vrot.slane %v1139, 4
      %v1142 = vrot.slane %v835, 6
      %v1143 = vsel %vm1121, %v1141, %v1142
      %v1144 = vrot.slane %v1142, 4
      %v1145 = vrot.slane %v836, 6
      %v1146 = vsel %vm1121, %v1144, %v1145
      %v1147 = vrot.slane %v1145, 4
      %v1148 = vrot.slane %v837, 6
      %v1149 = vsel %vm1121, %v1147, %v1148
      %v1150 = vrot.slane %v1148, 4
      %v1151 = vrot.slane %v838, 6
      %v1152 = vsel %vm1121, %v1150, %v1151
      %v1153 = vrot.slane %v1151, 4
      %v1154 = vrot.slane %v839, 6
      %v1155 = vsel %vm1121, %v1153, %v1154
      %v1156 = vrot.slane %v1154, 4
      %v1157 = vrot.slane %v840, 6
      %v1158 = vsel %vm1121, %v1156, %v1157
      %v1159 = vrot.slane %v1157, 4
      %1160 = vrot.lane.b32.xlu0 %v1125, 40
      %v1161 = vpop.permute.xlu0 %1160
      %1162 = vrot.lane.b32.xlu0 %v1128, 40
      %v1163 = vpop.permute.xlu0 %1162
      %1164 = vrot.lane.b32.xlu0 %v1131, 40
      %v1165 = vpop.permute.xlu0 %1164
      %1166 = vrot.lane.b32.xlu0 %v1134, 40
      %v1167 = vpop.permute.xlu0 %1166
      %1168 = vrot.lane.b32.xlu0 %v1137, 40
      %v1169 = vpop.permute.xlu0 %1168
      %1170 = vrot.lane.b32.xlu0 %v1140, 40
      %v1171 = vpop.permute.xlu0 %1170
      %1172 = vrot.lane.b32.xlu0 %v1143, 40
      %v1173 = vpop.permute.xlu0 %1172
      %1174 = vrot.lane.b32.xlu0 %v1146, 40
      %v1175 = vpop.permute.xlu0 %1174
      %1176 = vrot.lane.b32.xlu0 %v1149, 40
      %v1177 = vpop.permute.xlu0 %1176
      %1178 = vrot.lane.b32.xlu0 %v1152, 40
      %v1179 = vpop.permute.xlu0 %1178
      %1180 = vrot.lane.b32.xlu0 %v1155, 40
      %v1181 = vpop.permute.xlu0 %1180
      %1182 = vrot.lane.b32.xlu0 %v1158, 40
      %v1183 = vpop.permute.xlu0 %1182
      %1184 = vrot.lane.b32.xlu0 %v1159, 40
      %v1185 = vpop.permute.xlu0 %1184
      %vm1199 = vcmask 388416
      %1200 = vst.msk [vmem:[#allocation2] sm:$0xf] %vm1199, %v1161
      %1201 = vst.msk [vmem:[#allocation2 + $0x8] sm:$0xf] %vm1199, %v1163
      %1202 = vst.msk [vmem:[#allocation2 + $0x10] sm:$0xf] %vm1199, %v1165
      %1203 = vst.msk [vmem:[#allocation2 + $0x18] sm:$0xf] %vm1199, %v1167
      %1204 = vst.msk [vmem:[#allocation2 + $0x20] sm:$0xf] %vm1199, %v1169
      %1205 = vst.msk [vmem:[#allocation2 + $0x28] sm:$0xf] %vm1199, %v1171
      %1206 = vst.msk [vmem:[#allocation2 + $0x30] sm:$0xf] %vm1199, %v1173
      %1207 = vst.msk [vmem:[#allocation2 + $0x38] sm:$0xf] %vm1199, %v1175
      %1208 = vst.msk [vmem:[#allocation2 + $0x40] sm:$0xf] %vm1199, %v1177
      %1209 = vst.msk [vmem:[#allocation2 + $0x48] sm:$0xf] %vm1199, %v1179
      %1210 = vst.msk [vmem:[#allocation2 + $0x50] sm:$0xf] %vm1199, %v1181
      %1211 = vst.msk [vmem:[#allocation2 + $0x58] sm:$0xf] %vm1199, %v1183
      %vm1212 = vcmask 386368
      %1213 = vst.msk [vmem:[#allocation2 + $0x60] sm:$0x3] %vm1212, %v1185
      %v1214 = vpack.c.bf16 %v449, %v448
      %v1215 = vpack.c.bf16 %v450, %v450
      %v1218 = vunpack.c.l.b16 %v1214
      %v1219 = vunpack.c.h.b16 %v1214
      %v1220 = vunpack.c.l.b16 %v1215
      %v1221 = vpack.c.b16 %v1218, %v1218
      %v1222 = vpack.c.b16 %v1219, %v1219
      %v1223 = vpack.c.b16 %v1220, %v1220
      %v1224 = vrot.slane %v481, 6
      %v1225 = vrot.slane %v1224, 4
      %v1226 = vrot.slane %v482, 6
      %v1227 = vsel %vm1121, %v1225, %v1226
      %v1228 = vrot.slane %v1226, 4
      %v1229 = vrot.slane %v483, 6
      %v1230 = vsel %vm1121, %v1228, %v1229
      %v1231 = vrot.slane %v1229, 4
      %v1232 = vrot.slane %v484, 6
      %v1233 = vsel %vm1121, %v1231, %v1232
      %v1234 = vrot.slane %v1232, 4
      %v1235 = vrot.slane %v485, 6
      %v1236 = vsel %vm1121, %v1234, %v1235
      %v1237 = vrot.slane %v1235, 4
      %v1238 = vrot.slane %v486, 6
      %v1239 = vsel %vm1121, %v1237, %v1238
      %v1240 = vrot.slane %v1238, 4
      %v1241 = vrot.slane %v487, 6
      %v1242 = vsel %vm1121, %v1240, %v1241
      %v1243 = vrot.slane %v1241, 4
      %v1244 = vrot.slane %v488, 6
      %v1245 = vsel %vm1121, %v1243, %v1244
      %v1246 = vrot.slane %v1244, 4
      %v1247 = vrot.slane %v489, 6
      %v1248 = vsel %vm1121, %v1246, %v1247
      %v1249 = vrot.slane %v1247, 4
      %v1250 = vrot.slane %v490, 6
      %v1251 = vsel %vm1121, %v1249, %v1250
      %v1252 = vrot.slane %v1250, 4
      %v1253 = vrot.slane %v1221, 6
      %v1254 = vsel %vm1121, %v1252, %v1253
      %v1255 = vrot.slane %v1253, 4
      %v1256 = vrot.slane %v1222, 6
      %v1257 = vsel %vm1121, %v1255, %v1256
      %v1258 = vrot.slane %v1256, 4
      %v1259 = vrot.slane %v1223, 6
      %v1260 = vsel %vm1121, %v1258, %v1259
      %v1261 = vrot.slane %v1259, 4
      %1262 = vrot.lane.b32.xlu0 %v1227, 48
      %v1263 = vpop.permute.xlu0 %1262
      %1264 = vrot.lane.b32.xlu0 %v1230, 48
      %v1265 = vpop.permute.xlu0 %1264
      %1266 = vrot.lane.b32.xlu0 %v1233, 48
      %v1267 = vpop.permute.xlu0 %1266
      %1268 = vrot.lane.b32.xlu0 %v1236, 48
      %v1269 = vpop.permute.xlu0 %1268
      %1270 = vrot.lane.b32.xlu0 %v1239, 48
      %v1271 = vpop.permute.xlu0 %1270
      %1272 = vrot.lane.b32.xlu0 %v1242, 48
      %v1273 = vpop.permute.xlu0 %1272
      %1274 = vrot.lane.b32.xlu0 %v1245, 48
      %v1275 = vpop.permute.xlu0 %1274
      %1276 = vrot.lane.b32.xlu0 %v1248, 48
      %v1277 = vpop.permute.xlu0 %1276
      %1278 = vrot.lane.b32.xlu0 %v1251, 48
      %v1279 = vpop.permute.xlu0 %1278
      %1280 = vrot.lane.b32.xlu0 %v1254, 48
      %v1281 = vpop.permute.xlu0 %1280
      %1282 = vrot.lane.b32.xlu0 %v1257, 48
      %v1283 = vpop.permute.xlu0 %1282
      %1284 = vrot.lane.b32.xlu0 %v1260, 48
      %v1285 = vpop.permute.xlu0 %1284
      %1286 = vrot.lane.b32.xlu0 %v1261, 48
      %v1287 = vpop.permute.xlu0 %1286
      %vm1301 = vcmask 454016
      %1302 = vst.msk [vmem:[#allocation2] sm:$0xf] %vm1301, %v1263
      %1303 = vst.msk [vmem:[#allocation2 + $0x8] sm:$0xf] %vm1301, %v1265
      %1304 = vst.msk [vmem:[#allocation2 + $0x10] sm:$0xf] %vm1301, %v1267
      %1305 = vst.msk [vmem:[#allocation2 + $0x18] sm:$0xf] %vm1301, %v1269
      %1306 = vst.msk [vmem:[#allocation2 + $0x20] sm:$0xf] %vm1301, %v1271
      %1307 = vst.msk [vmem:[#allocation2 + $0x28] sm:$0xf] %vm1301, %v1273
      %1308 = vst.msk [vmem:[#allocation2 + $0x30] sm:$0xf] %vm1301, %v1275
      %1309 = vst.msk [vmem:[#allocation2 + $0x38] sm:$0xf] %vm1301, %v1277
      %1310 = vst.msk [vmem:[#allocation2 + $0x40] sm:$0xf] %vm1301, %v1279
      %1311 = vst.msk [vmem:[#allocation2 + $0x48] sm:$0xf] %vm1301, %v1281
      %1312 = vst.msk [vmem:[#allocation2 + $0x50] sm:$0xf] %vm1301, %v1283
      %1313 = vst.msk [vmem:[#allocation2 + $0x58] sm:$0xf] %vm1301, %v1285
      %vm1314 = vcmask 451968
      %1315 = vst.msk [vmem:[#allocation2 + $0x60] sm:$0x3] %vm1314, %v1287
      %v1316 = vpack.c.bf16 %v451, %v450
      %v1318 = vunpack.c.l.b16 %v1316
      %v1319 = vunpack.c.h.b16 %v1316
      %v1320 = vpack.c.b16 %v1318, %v1318
      %v1321 = vpack.c.b16 %v1319, %v1319
      %vm1322 = vsmask.f32 1280
      %vm1323 = vsmask.f32 5392
      %vm1324 = vmor %vm1322, %vm1323
      %v1325 = vrot.slane %v547, 6
      %v1326 = vrot.slane %v543, 7
      %v1327 = vor.u32 %v1325, %v1326
      %v1328 = vrot.slane %v1327, 4
      %v1329 = vrot.slane %v557, 6
      %v1330 = vrot.slane %v553, 7
      %v1331 = vor.u32 %v1329, %v1330
      %v1332 = vsel %vm1324, %v1328, %v1331
      %v1333 = vrot.slane %v1331, 4
      %v1334 = vrot.slane %v567, 6
      %v1335 = vrot.slane %v563, 7
      %v1336 = vor.u32 %v1334, %v1335
      %v1337 = vsel %vm1324, %v1333, %v1336
      %v1338 = vrot.slane %v1336, 4
      %v1339 = vrot.slane %v577, 6
      %v1340 = vrot.slane %v573, 7
      %v1341 = vor.u32 %v1339, %v1340
      %v1342 = vsel %vm1324, %v1338, %v1341
      %v1343 = vrot.slane %v1341, 4
      %v1344 = vrot.slane %v587, 6
      %v1345 = vrot.slane %v583, 7
      %v1346 = vor.u32 %v1344, %v1345
      %v1347 = vsel %vm1324, %v1343, %v1346
      %v1348 = vrot.slane %v1346, 4
      %v1349 = vrot.slane %v597, 6
      %v1350 = vrot.slane %v593, 7
      %v1351 = vor.u32 %v1349, %v1350
      %v1352 = vsel %vm1324, %v1348, %v1351
      %v1353 = vrot.slane %v1351, 4
      %v1354 = vrot.slane %v607, 6
      %v1355 = vrot.slane %v603, 7
      %v1356 = vor.u32 %v1354, %v1355
      %v1357 = vsel %vm1324, %v1353, %v1356
      %v1358 = vrot.slane %v1356, 4
      %v1359 = vrot.slane %v617, 6
      %v1360 = vrot.slane %v613, 7
      %v1361 = vor.u32 %v1359, %v1360
      %v1362 = vsel %vm1324, %v1358, %v1361
      %v1363 = vrot.slane %v1361, 4
      %v1364 = vrot.slane %v627, 6
      %v1365 = vrot.slane %v623, 7
      %v1366 = vor.u32 %v1364, %v1365
      %v1367 = vsel %vm1324, %v1363, %v1366
      %v1368 = vrot.slane %v1366, 4
      %v1369 = vrot.slane %v637, 6
      %v1370 = vrot.slane %v633, 7
      %v1371 = vor.u32 %v1369, %v1370
      %v1372 = vsel %vm1324, %v1368, %v1371
      %v1373 = vrot.slane %v1371, 4
      %v1375 = vshrl.u32 %v1221, 16
      %v1377 = vrot.slane %v1375, 6
      %v1378 = vshll.u32 %v1221, 16
      %v1380 = vrot.slane %v1378, 7
      %v1381 = vor.u32 %v1377, %v1380
      %v1382 = vsel %vm1324, %v1373, %v1381
      %v1383 = vrot.slane %v1381, 4
      %v1385 = vshrl.u32 %v1222, 16
      %v1387 = vrot.slane %v1385, 6
      %v1388 = vshll.u32 %v1222, 16
      %v1390 = vrot.slane %v1388, 7
      %v1391 = vor.u32 %v1387, %v1390
      %v1392 = vsel %vm1324, %v1383, %v1391
      %v1393 = vrot.slane %v1391, 4
      %v1395 = vshrl.u32 %v1320, 16
      %v1397 = vrot.slane %v1395, 6
      %v1398 = vshll.u32 %v1320, 16
      %v1400 = vrot.slane %v1398, 7
      %v1401 = vor.u32 %v1397, %v1400
      %v1402 = vsel %vm1324, %v1393, %v1401
      %v1403 = vrot.slane %v1401, 4
      %v1405 = vshll.u32 %v1321, 16
      %v1407 = vrot.slane %v1405, 7
      %v1408 = vsel %vm1324, %v1403, %v1407
      %1409 = vrot.lane.b32.xlu0 %v1332, 56
      %v1410 = vpop.permute.xlu0 %1409
      %1411 = vrot.lane.b32.xlu0 %v1337, 56
      %v1412 = vpop.permute.xlu0 %1411
      %1413 = vrot.lane.b32.xlu0 %v1342, 56
      %v1414 = vpop.permute.xlu0 %1413
      %1415 = vrot.lane.b32.xlu0 %v1347, 56
      %v1416 = vpop.permute.xlu0 %1415
      %1417 = vrot.lane.b32.xlu0 %v1352, 56
      %v1418 = vpop.permute.xlu0 %1417
      %1419 = vrot.lane.b32.xlu0 %v1357, 56
      %v1420 = vpop.permute.xlu0 %1419
      %1421 = vrot.lane.b32.xlu0 %v1362, 56
      %v1422 = vpop.permute.xlu0 %1421
      %1423 = vrot.lane.b32.xlu0 %v1367, 56
      %v1424 = vpop.permute.xlu0 %1423
      %1425 = vrot.lane.b32.xlu0 %v1372, 56
      %v1426 = vpop.permute.xlu0 %1425
      %1427 = vrot.lane.b32.xlu0 %v1382, 56
      %v1428 = vpop.permute.xlu0 %1427
      %1429 = vrot.lane.b32.xlu0 %v1392, 56
      %v1430 = vpop.permute.xlu0 %1429
      %1431 = vrot.lane.b32.xlu0 %v1402, 56
      %v1432 = vpop.permute.xlu0 %1431
      %1433 = vrot.lane.b32.xlu0 %v1408, 56
      %v1434 = vpop.permute.xlu0 %1433
      %vm1448 = vcmask 519616
      %1449 = vst.msk [vmem:[#allocation2] sm:$0xf] %vm1448, %v1410
      %1450 = vst.msk [vmem:[#allocation2 + $0x8] sm:$0xf] %vm1448, %v1412
      %1451 = vst.msk [vmem:[#allocation2 + $0x10] sm:$0xf] %vm1448, %v1414
      %1452 = vst.msk [vmem:[#allocation2 + $0x18] sm:$0xf] %vm1448, %v1416
      %1453 = vst.msk [vmem:[#allocation2 + $0x20] sm:$0xf] %vm1448, %v1418
      %1454 = vst.msk [vmem:[#allocation2 + $0x28] sm:$0xf] %vm1448, %v1420
      %1455 = vst.msk [vmem:[#allocation2 + $0x30] sm:$0xf] %vm1448, %v1422
      %1456 = vst.msk [vmem:[#allocation2 + $0x38] sm:$0xf] %vm1448, %v1424
      %1457 = vst.msk [vmem:[#allocation2 + $0x40] sm:$0xf] %vm1448, %v1426
      %1458 = vst.msk [vmem:[#allocation2 + $0x48] sm:$0xf] %vm1448, %v1428
      %1459 = vst.msk [vmem:[#allocation2 + $0x50] sm:$0xf] %vm1448, %v1430
      %1460 = vst.msk [vmem:[#allocation2 + $0x58] sm:$0xf] %vm1448, %v1432
      %vm1461 = vcmask 517568
      %1462 = vst.msk [vmem:[#allocation2 + $0x60] sm:$0x3] %vm1461, %v1434
      %vm1463 = vcmask 1040384
      %vm1464 = vcmask 1044484
      %vm1465 = vmor %vm1463, %vm1464
      %v1466 = vrot.slane %v481, 7
      %v1467 = vrot.slane %v1466, 4
      %v1468 = vrot.slane %v482, 7
      %v1469 = vsel %vm1465, %v1467, %v1468
      %v1470 = vrot.slane %v1468, 4
      %v1471 = vrot.slane %v483, 7
      %v1472 = vsel %vm1465, %v1470, %v1471
      %v1473 = vrot.slane %v1471, 4
      %v1474 = vrot.slane %v484, 7
      %v1475 = vsel %vm1465, %v1473, %v1474
      %v1476 = vrot.slane %v1474, 4
      %v1477 = vrot.slane %v485, 7
      %v1478 = vsel %vm1465, %v1476, %v1477
      %v1479 = vrot.slane %v1477, 4
      %v1480 = vrot.slane %v486, 7
      %v1481 = vsel %vm1465, %v1479, %v1480
      %v1482 = vrot.slane %v1480, 4
      %v1483 = vrot.slane %v487, 7
      %v1484 = vsel %vm1465, %v1482, %v1483
      %v1485 = vrot.slane %v1483, 4
      %v1486 = vrot.slane %v488, 7
      %v1487 = vsel %vm1465, %v1485, %v1486
      %v1488 = vrot.slane %v1486, 4
      %v1489 = vrot.slane %v489, 7
      %v1490 = vsel %vm1465, %v1488, %v1489
      %v1491 = vrot.slane %v1489, 4
      %v1492 = vrot.slane %v490, 7
      %v1493 = vsel %vm1465, %v1491, %v1492
      %v1494 = vrot.slane %v1492, 4
      %v1495 = vrot.slane %v1221, 7
      %v1496 = vsel %vm1465, %v1494, %v1495
      %v1497 = vrot.slane %v1495, 4
      %v1498 = vrot.slane %v1222, 7
      %v1499 = vsel %vm1465, %v1497, %v1498
      %v1500 = vrot.slane %v1498, 4
      %v1501 = vrot.slane %v1320, 7
      %v1502 = vsel %vm1465, %v1500, %v1501
      %v1503 = vrot.slane %v1501, 4
      %v1504 = vrot.slane %v1321, 7
      %v1505 = vsel %vm1465, %v1503, %v1504
      %1506 = vrot.lane.b32.xlu0 %v1469, 64
      %v1507 = vpop.permute.xlu0 %1506
      %1508 = vrot.lane.b32.xlu0 %v1472, 64
      %v1509 = vpop.permute.xlu0 %1508
      %1510 = vrot.lane.b32.xlu0 %v1475, 64
      %v1511 = vpop.permute.xlu0 %1510
      %1512 = vrot.lane.b32.xlu0 %v1478, 64
      %v1513 = vpop.permute.xlu0 %1512
      %1514 = vrot.lane.b32.xlu0 %v1481, 64
      %v1515 = vpop.permute.xlu0 %1514
      %1516 = vrot.lane.b32.xlu0 %v1484, 64
      %v1517 = vpop.permute.xlu0 %1516
      %1518 = vrot.lane.b32.xlu0 %v1487, 64
      %v1519 = vpop.permute.xlu0 %1518
      %1520 = vrot.lane.b32.xlu0 %v1490, 64
      %v1521 = vpop.permute.xlu0 %1520
      %1522 = vrot.lane.b32.xlu0 %v1493, 64
      %v1523 = vpop.permute.xlu0 %1522
      %1524 = vrot.lane.b32.xlu0 %v1496, 64
      %v1525 = vpop.permute.xlu0 %1524
      %1526 = vrot.lane.b32.xlu0 %v1499, 64
      %v1527 = vpop.permute.xlu0 %1526
      %1528 = vrot.lane.b32.xlu0 %v1502, 64
      %v1529 = vpop.permute.xlu0 %1528
      %1530 = vrot.lane.b32.xlu0 %v1505, 64
      %v1531 = vpop.permute.xlu0 %1530
      %vm1545 = vcmask 585216
      %1546 = vst.msk [vmem:[#allocation2] sm:$0xf] %vm1545, %v1507
      %1547 = vst.msk [vmem:[#allocation2 + $0x8] sm:$0xf] %vm1545, %v1509
      %1548 = vst.msk [vmem:[#allocation2 + $0x10] sm:$0xf] %vm1545, %v1511
      %1549 = vst.msk [vmem:[#allocation2 + $0x18] sm:$0xf] %vm1545, %v1513
      %1550 = vst.msk [vmem:[#allocation2 + $0x20] sm:$0xf] %vm1545, %v1515
      %1551 = vst.msk [vmem:[#allocation2 + $0x28] sm:$0xf] %vm1545, %v1517
      %1552 = vst.msk [vmem:[#allocation2 + $0x30] sm:$0xf] %vm1545, %v1519
      %1553 = vst.msk [vmem:[#allocation2 + $0x38] sm:$0xf] %vm1545, %v1521
      %1554 = vst.msk [vmem:[#allocation2 + $0x40] sm:$0xf] %vm1545, %v1523
      %1555 = vst.msk [vmem:[#allocation2 + $0x48] sm:$0xf] %vm1545, %v1525
      %1556 = vst.msk [vmem:[#allocation2 + $0x50] sm:$0xf] %vm1545, %v1527
      %1557 = vst.msk [vmem:[#allocation2 + $0x58] sm:$0xf] %vm1545, %v1529
      %vm1558 = vcmask 583168
      %1559 = vst.msk [vmem:[#allocation2 + $0x60] sm:$0x3] %vm1558, %v1531
      %v1560 = vld [vmem:[%s373] sm:$0xf]
      %v1561 = vld [vmem:[%s373 + $0x4] sm:$0xf]
      %v1562 = vld [vmem:[%s373 + $0x8] sm:$0xf]
      %v1563 = vld [vmem:[%s373 + $0xc] sm:$0xf]
      %v1564 = vld [vmem:[%s373 + $0x10] sm:$0xf]
      %v1565 = vld [vmem:[%s373 + $0x14] sm:$0xf]
      %v1566 = vld [vmem:[%s373 + $0x18] sm:$0xf]
      %v1567 = vld [vmem:[%s373 + $0x1c] sm:$0xf]
      %v1568 = vld [vmem:[%s373 + $0x20] sm:$0xf]
      %v1569 = vld [vmem:[%s373 + $0x24] sm:$0xf]
      %v1570 = vld [vmem:[%s373 + $0x28] sm:$0xf]
      %v1571 = vld [vmem:[%s373 + $0x2c] sm:$0xf]
      %v1572 = vld [vmem:[%s373 + $0x30] sm:$0xf]
      %v1573 = vld [vmem:[%s373 + $0x34] sm:$0xf]
      %v1574 = vld [vmem:[%s373 + $0x38] sm:$0xf]
      %v1575 = vld [vmem:[%s373 + $0x3c] sm:$0x1]
      %v1576 = vunpack.c.l.bf16 %v1560
      %v1577 = vunpack.c.l.bf16 %v1561
      %v1578 = vunpack.c.l.bf16 %v1562
      %v1579 = vunpack.c.l.bf16 %v1563
      %v1580 = vunpack.c.l.bf16 %v1564
      %v1581 = vunpack.c.l.bf16 %v1565
      %v1582 = vunpack.c.l.bf16 %v1566
      %v1583 = vunpack.c.l.bf16 %v1567
      %v1584 = vunpack.c.l.bf16 %v1568
      %v1585 = vunpack.c.l.bf16 %v1569
      %v1586 = vunpack.c.l.bf16 %v1570
      %v1587 = vunpack.c.l.bf16 %v1571
      %v1588 = vunpack.c.l.bf16 %v1572
      %v1589 = vunpack.c.l.bf16 %v1573
      %v1590 = vunpack.c.l.bf16 %v1574
      %v1591 = vunpack.c.l.bf16 %v1575
      %v1592 = vpack.c.bf16 %v1577, %v1576
      %v1593 = vpack.c.bf16 %v1579, %v1578
      %v1594 = vpack.c.bf16 %v1581, %v1580
      %v1595 = vpack.c.bf16 %v1583, %v1582
      %v1596 = vpack.c.bf16 %v1585, %v1584
      %v1597 = vpack.c.bf16 %v1587, %v1586
      %v1598 = vpack.c.bf16 %v1588, %v1588
      %v1606 = vunpack.c.l.b16 %v1592
      %v1607 = vunpack.c.h.b16 %v1592
      %v1608 = vunpack.c.l.b16 %v1593
      %v1609 = vunpack.c.h.b16 %v1593
      %v1610 = vunpack.c.l.b16 %v1594
      %v1611 = vunpack.c.h.b16 %v1594
      %v1612 = vunpack.c.l.b16 %v1595
      %v1613 = vunpack.c.h.b16 %v1595
      %v1614 = vunpack.c.l.b16 %v1596
      %v1615 = vunpack.c.h.b16 %v1596
      %v1616 = vunpack.c.l.b16 %v1597
      %v1617 = vunpack.c.h.b16 %v1597
      %v1618 = vunpack.c.l.b16 %v1598
      %v1619 = vpack.c.b16 %v1606, %v1606
      %v1620 = vpack.c.b16 %v1607, %v1607
      %v1621 = vpack.c.b16 %v1608, %v1608
      %v1622 = vpack.c.b16 %v1609, %v1609
      %v1623 = vpack.c.b16 %v1610, %v1610
      %v1624 = vpack.c.b16 %v1611, %v1611
      %v1625 = vpack.c.b16 %v1612, %v1612
      %v1626 = vpack.c.b16 %v1613, %v1613
      %v1627 = vpack.c.b16 %v1614, %v1614
      %v1628 = vpack.c.b16 %v1615, %v1615
      %v1629 = vpack.c.b16 %v1616, %v1616
      %v1630 = vpack.c.b16 %v1617, %v1617
      %v1631 = vpack.c.b16 %v1618, %v1618
      %1632 = vrot.lane.b32.xlu0 %v1619, 72
      %v1633 = vpop.permute.xlu0 %1632
      %1634 = vrot.lane.b32.xlu0 %v1620, 72
      %v1635 = vpop.permute.xlu0 %1634
      %1636 = vrot.lane.b32.xlu0 %v1621, 72
      %v1637 = vpop.permute.xlu0 %1636
      %1638 = vrot.lane.b32.xlu0 %v1622, 72
      %v1639 = vpop.permute.xlu0 %1638
      %1640 = vrot.lane.b32.xlu0 %v1623, 72
      %v1641 = vpop.permute.xlu0 %1640
      %1642 = vrot.lane.b32.xlu0 %v1624, 72
      %v1643 = vpop.permute.xlu0 %1642
      %1644 = vrot.lane.b32.xlu0 %v1625, 72
      %v1645 = vpop.permute.xlu0 %1644
      %1646 = vrot.lane.b32.xlu0 %v1626, 72
      %v1647 = vpop.permute.xlu0 %1646
      %1648 = vrot.lane.b32.xlu0 %v1627, 72
      %v1649 = vpop.permute.xlu0 %1648
      %1650 = vrot.lane.b32.xlu0 %v1628, 72
      %v1651 = vpop.permute.xlu0 %1650
      %1652 = vrot.lane.b32.xlu0 %v1629, 72
      %v1653 = vpop.permute.xlu0 %1652
      %1654 = vrot.lane.b32.xlu0 %v1630, 72
      %v1655 = vpop.permute.xlu0 %1654
      %1656 = vrot.lane.b32.xlu0 %v1631, 72
      %v1657 = vpop.permute.xlu0 %1656
      %vm1671 = vcmask 650816
      %1672 = vst.msk [vmem:[#allocation2] sm:$0xf] %vm1671, %v1633
      %1673 = vst.msk [vmem:[#allocation2 + $0x8] sm:$0xf] %vm1671, %v1635
      %1674 = vst.msk [vmem:[#allocation2 + $0x10] sm:$0xf] %vm1671, %v1637
      %1675 = vst.msk [vmem:[#allocation2 + $0x18] sm:$0xf] %vm1671, %v1639
      %1676 = vst.msk [vmem:[#allocation2 + $0x20] sm:$0xf] %vm1671, %v1641
      %1677 = vst.msk [vmem:[#allocation2 + $0x28] sm:$0xf] %vm1671, %v1643
      %1678 = vst.msk [vmem:[#allocation2 + $0x30] sm:$0xf] %vm1671, %v1645
      %1679 = vst.msk [vmem:[#allocation2 + $0x38] sm:$0xf] %vm1671, %v1647
      %1680 = vst.msk [vmem:[#allocation2 + $0x40] sm:$0xf] %vm1671, %v1649
      %1681 = vst.msk [vmem:[#allocation2 + $0x48] sm:$0xf] %vm1671, %v1651
      %1682 = vst.msk [vmem:[#allocation2 + $0x50] sm:$0xf] %vm1671, %v1653
      %1683 = vst.msk [vmem:[#allocation2 + $0x58] sm:$0xf] %vm1671, %v1655
      %vm1684 = vcmask 648768
      %1685 = vst.msk [vmem:[#allocation2 + $0x60] sm:$0x3] %vm1684, %v1657
      %v1687 = vshrl.u32 %v1619, 16
      %v1689 = vrot.slane %v1687, 4
      %v1690 = vshll.u32 %v1619, 16
      %v1692 = vrot.slane %v1690, 5
      %v1693 = vor.u32 %v1689, %v1692
      %v1694 = vrot.slane %v1693, 4
      %v1696 = vshll.u32 %v1620, 16
      %v1698 = vrot.slane %v1696, 5
      %v1699 = vsel %vm522, %v1694, %v1698
      %v1700 = vshrl.u32 %v1620, 16
      %v1702 = vrot.slane %v1700, 4
      %v1703 = vor.u32 %v1702, %v1698
      %v1704 = vrot.slane %v1703, 4
      %v1706 = vshll.u32 %v1621, 16
      %v1708 = vrot.slane %v1706, 5
      %v1709 = vsel %vm522, %v1704, %v1708
      %v1710 = vshrl.u32 %v1621, 16
      %v1712 = vrot.slane %v1710, 4
      %v1713 = vor.u32 %v1712, %v1708
      %v1714 = vrot.slane %v1713, 4
      %v1716 = vshll.u32 %v1622, 16
      %v1718 = vrot.slane %v1716, 5
      %v1719 = vsel %vm522, %v1714, %v1718
      %v1720 = vshrl.u32 %v1622, 16
      %v1722 = vrot.slane %v1720, 4
      %v1723 = vor.u32 %v1722, %v1718
      %v1724 = vrot.slane %v1723, 4
      %v1726 = vshll.u32 %v1623, 16
      %v1728 = vrot.slane %v1726, 5
      %v1729 = vsel %vm522, %v1724, %v1728
      %v1730 = vshrl.u32 %v1623, 16
      %v1732 = vrot.slane %v1730, 4
      %v1733 = vor.u32 %v1732, %v1728
      %v1734 = vrot.slane %v1733, 4
      %v1736 = vshll.u32 %v1624, 16
      %v1738 = vrot.slane %v1736, 5
      %v1739 = vsel %vm522, %v1734, %v1738
      %v1740 = vshrl.u32 %v1624, 16
      %v1742 = vrot.slane %v1740, 4
      %v1743 = vor.u32 %v1742, %v1738
      %v1744 = vrot.slane %v1743, 4
      %v1746 = vshll.u32 %v1625, 16
      %v1748 = vrot.slane %v1746, 5
      %v1749 = vsel %vm522, %v1744, %v1748
      %v1750 = vshrl.u32 %v1625, 16
      %v1752 = vrot.slane %v1750, 4
      %v1753 = vor.u32 %v1752, %v1748
      %v1754 = vrot.slane %v1753, 4
      %v1756 = vshll.u32 %v1626, 16
      %v1758 = vrot.slane %v1756, 5
      %v1759 = vsel %vm522, %v1754, %v1758
      %v1760 = vshrl.u32 %v1626, 16
      %v1762 = vrot.slane %v1760, 4
      %v1763 = vor.u32 %v1762, %v1758
      %v1764 = vrot.slane %v1763, 4
      %v1766 = vshll.u32 %v1627, 16
      %v1768 = vrot.slane %v1766, 5
      %v1769 = vsel %vm522, %v1764, %v1768
      %v1770 = vshrl.u32 %v1627, 16
      %v1772 = vrot.slane %v1770, 4
      %v1773 = vor.u32 %v1772, %v1768
      %v1774 = vrot.slane %v1773, 4
      %v1776 = vshll.u32 %v1628, 16
      %v1778 = vrot.slane %v1776, 5
      %v1779 = vsel %vm522, %v1774, %v1778
      %v1780 = vshrl.u32 %v1628, 16
      %v1782 = vrot.slane %v1780, 4
      %v1783 = vor.u32 %v1782, %v1778
      %v1784 = vrot.slane %v1783, 4
      %v1786 = vshll.u32 %v1629, 16
      %v1788 = vrot.slane %v1786, 5
      %v1789 = vsel %vm522, %v1784, %v1788
      %v1790 = vshrl.u32 %v1629, 16
      %v1792 = vrot.slane %v1790, 4
      %v1793 = vor.u32 %v1792, %v1788
      %v1794 = vrot.slane %v1793, 4
      %v1796 = vshll.u32 %v1630, 16
      %v1798 = vrot.slane %v1796, 5
      %v1799 = vsel %vm522, %v1794, %v1798
      %v1800 = vshrl.u32 %v1630, 16
      %v1802 = vrot.slane %v1800, 4
      %v1803 = vor.u32 %v1802, %v1798
      %v1804 = vrot.slane %v1803, 4
      %v1806 = vshll.u32 %v1631, 16
      %v1808 = vrot.slane %v1806, 5
      %v1809 = vsel %vm522, %v1804, %v1808
      %v1810 = vshrl.u32 %v1631, 16
      %v1812 = vrot.slane %v1810, 4
      %v1813 = vor.u32 %v1812, %v1808
      %v1814 = vrot.slane %v1813, 4
      %1815 = vrot.lane.b32.xlu0 %v1699, 80
      %v1816 = vpop.permute.xlu0 %1815
      %1817 = vrot.lane.b32.xlu0 %v1709, 80
      %v1818 = vpop.permute.xlu0 %1817
      %1819 = vrot.lane.b32.xlu0 %v1719, 80
      %v1820 = vpop.permute.xlu0 %1819
      %1821 = vrot.lane.b32.xlu0 %v1729, 80
      %v1822 = vpop.permute.xlu0 %1821
      %1823 = vrot.lane.b32.xlu0 %v1739, 80
      %v1824 = vpop.permute.xlu0 %1823
      %1825 = vrot.lane.b32.xlu0 %v1749, 80
      %v1826 = vpop.permute.xlu0 %1825
      %1827 = vrot.lane.b32.xlu0 %v1759, 80
      %v1828 = vpop.permute.xlu0 %1827
      %1829 = vrot.lane.b32.xlu0 %v1769, 80
      %v1830 = vpop.permute.xlu0 %1829
      %1831 = vrot.lane.b32.xlu0 %v1779, 80
      %v1832 = vpop.permute.xlu0 %1831
      %1833 = vrot.lane.b32.xlu0 %v1789, 80
      %v1834 = vpop.permute.xlu0 %1833
      %1835 = vrot.lane.b32.xlu0 %v1799, 80
      %v1836 = vpop.permute.xlu0 %1835
      %1837 = vrot.lane.b32.xlu0 %v1809, 80
      %v1838 = vpop.permute.xlu0 %1837
      %1839 = vrot.lane.b32.xlu0 %v1814, 80
      %v1840 = vpop.permute.xlu0 %1839
      %vm1854 = vcmask 716416
      %1855 = vst.msk [vmem:[#allocation2] sm:$0xf] %vm1854, %v1816
      %1856 = vst.msk [vmem:[#allocation2 + $0x8] sm:$0xf] %vm1854, %v1818
      %1857 = vst.msk [vmem:[#allocation2 + $0x10] sm:$0xf] %vm1854, %v1820
      %1858 = vst.msk [vmem:[#allocation2 + $0x18] sm:$0xf] %vm1854, %v1822
      %1859 = vst.msk [vmem:[#allocation2 + $0x20] sm:$0xf] %vm1854, %v1824
      %1860 = vst.msk [vmem:[#allocation2 + $0x28] sm:$0xf] %vm1854, %v1826
      %1861 = vst.msk [vmem:[#allocation2 + $0x30] sm:$0xf] %vm1854, %v1828
      %1862 = vst.msk [vmem:[#allocation2 + $0x38] sm:$0xf] %vm1854, %v1830
      %1863 = vst.msk [vmem:[#allocation2 + $0x40] sm:$0xf] %vm1854, %v1832
      %1864 = vst.msk [vmem:[#allocation2 + $0x48] sm:$0xf] %vm1854, %v1834
      %1865 = vst.msk [vmem:[#allocation2 + $0x50] sm:$0xf] %vm1854, %v1836
      %1866 = vst.msk [vmem:[#allocation2 + $0x58] sm:$0xf] %vm1854, %v1838
      %vm1867 = vcmask 714368
      %1868 = vst.msk [vmem:[#allocation2 + $0x60] sm:$0x3] %vm1867, %v1840
      %v1869 = vrot.slane %v1619, 5
      %v1870 = vrot.slane %v1869, 4
      %v1871 = vrot.slane %v1620, 5
      %v1872 = vsel %vm708, %v1870, %v1871
      %v1873 = vrot.slane %v1871, 4
      %v1874 = vrot.slane %v1621, 5
      %v1875 = vsel %vm708, %v1873, %v1874
      %v1876 = vrot.slane %v1874, 4
      %v1877 = vrot.slane %v1622, 5
      %v1878 = vsel %vm708, %v1876, %v1877
      %v1879 = vrot.slane %v1877, 4
      %v1880 = vrot.slane %v1623, 5
      %v1881 = vsel %vm708, %v1879, %v1880
      %v1882 = vrot.slane %v1880, 4
      %v1883 = vrot.slane %v1624, 5
      %v1884 = vsel %vm708, %v1882, %v1883
      %v1885 = vrot.slane %v1883, 4
      %v1886 = vrot.slane %v1625, 5
      %v1887 = vsel %vm708, %v1885, %v1886
      %v1888 = vrot.slane %v1886, 4
      %v1889 = vrot.slane %v1626, 5
      %v1890 = vsel %vm708, %v1888, %v1889
      %v1891 = vrot.slane %v1889, 4
      %v1892 = vrot.slane %v1627, 5
      %v1893 = vsel %vm708, %v1891, %v1892
      %v1894 = vrot.slane %v1892, 4
      %v1895 = vrot.slane %v1628, 5
      %v1896 = vsel %vm708, %v1894, %v1895
      %v1897 = vrot.slane %v1895, 4
      %v1898 = vrot.slane %v1629, 5
      %v1899 = vsel %vm708, %v1897, %v1898
      %v1900 = vrot.slane %v1898, 4
      %v1901 = vrot.slane %v1630, 5
      %v1902 = vsel %vm708, %v1900, %v1901
      %v1903 = vrot.slane %v1901, 4
      %v1904 = vrot.slane %v1631, 5
      %v1905 = vsel %vm708, %v1903, %v1904
      %v1906 = vrot.slane %v1904, 4
      %1907 = vrot.lane.b32.xlu0 %v1872, 88
      %v1908 = vpop.permute.xlu0 %1907
      %1909 = vrot.lane.b32.xlu0 %v1875, 88
      %v1910 = vpop.permute.xlu0 %1909
      %1911 = vrot.lane.b32.xlu0 %v1878, 88
      %v1912 = vpop.permute.xlu0 %1911
      %1913 = vrot.lane.b32.xlu0 %v1881, 88
      %v1914 = vpop.permute.xlu0 %1913
      %1915 = vrot.lane.b32.xlu0 %v1884, 88
      %v1916 = vpop.permute.xlu0 %1915
      %1917 = vrot.lane.b32.xlu0 %v1887, 88
      %v1918 = vpop.permute.xlu0 %1917
      %1919 = vrot.lane.b32.xlu0 %v1890, 88
      %v1920 = vpop.permute.xlu0 %1919
      %1921 = vrot.lane.b32.xlu0 %v1893, 88
      %v1922 = vpop.permute.xlu0 %1921
      %1923 = vrot.lane.b32.xlu0 %v1896, 88
      %v1924 = vpop.permute.xlu0 %1923
      %1925 = vrot.lane.b32.xlu0 %v1899, 88
      %v1926 = vpop.permute.xlu0 %1925
      %1927 = vrot.lane.b32.xlu0 %v1902, 88
      %v1928 = vpop.permute.xlu0 %1927
      %1929 = vrot.lane.b32.xlu0 %v1905, 88
      %v1930 = vpop.permute.xlu0 %1929
      %1931 = vrot.lane.b32.xlu0 %v1906, 88
      %v1932 = vpop.permute.xlu0 %1931
      %vm1946 = vcmask 782016
      %1947 = vst.msk [vmem:[#allocation2] sm:$0xf] %vm1946, %v1908
      %1948 = vst.msk [vmem:[#allocation2 + $0x8] sm:$0xf] %vm1946, %v1910
      %1949 = vst.msk [vmem:[#allocation2 + $0x10] sm:$0xf] %vm1946, %v1912
      %1950 = vst.msk [vmem:[#allocation2 + $0x18] sm:$0xf] %vm1946, %v1914
      %1951 = vst.msk [vmem:[#allocation2 + $0x20] sm:$0xf] %vm1946, %v1916
      %1952 = vst.msk [vmem:[#allocation2 + $0x28] sm:$0xf] %vm1946, %v1918
      %1953 = vst.msk [vmem:[#allocation2 + $0x30] sm:$0xf] %vm1946, %v1920
      %1954 = vst.msk [vmem:[#allocation2 + $0x38] sm:$0xf] %vm1946, %v1922
      %1955 = vst.msk [vmem:[#allocation2 + $0x40] sm:$0xf] %vm1946, %v1924
      %1956 = vst.msk [vmem:[#allocation2 + $0x48] sm:$0xf] %vm1946, %v1926
      %1957 = vst.msk [vmem:[#allocation2 + $0x50] sm:$0xf] %vm1946, %v1928
      %1958 = vst.msk [vmem:[#allocation2 + $0x58] sm:$0xf] %vm1946, %v1930
      %vm1959 = vcmask 779968
      %1960 = vst.msk [vmem:[#allocation2 + $0x60] sm:$0x3] %vm1959, %v1932
      %v1961 = vpack.c.bf16 %v1578, %v1577
      %v1962 = vpack.c.bf16 %v1580, %v1579
      %v1963 = vpack.c.bf16 %v1582, %v1581
      %v1964 = vpack.c.bf16 %v1584, %v1583
      %v1965 = vpack.c.bf16 %v1586, %v1585
      %v1966 = vpack.c.bf16 %v1588, %v1587
      %v1967 = vpack.c.bf16 %v1589, %v1589
      %v1975 = vunpack.c.l.b16 %v1961
      %v1976 = vunpack.c.h.b16 %v1961
      %v1977 = vunpack.c.l.b16 %v1962
      %v1978 = vunpack.c.h.b16 %v1962
      %v1979 = vunpack.c.l.b16 %v1963
      %v1980 = vunpack.c.h.b16 %v1963
      %v1981 = vunpack.c.l.b16 %v1964
      %v1982 = vunpack.c.h.b16 %v1964
      %v1983 = vunpack.c.l.b16 %v1965
      %v1984 = vunpack.c.h.b16 %v1965
      %v1985 = vunpack.c.l.b16 %v1966
      %v1986 = vunpack.c.h.b16 %v1966
      %v1987 = vunpack.c.l.b16 %v1967
      %v1988 = vpack.c.b16 %v1975, %v1975
      %v1989 = vpack.c.b16 %v1976, %v1976
      %v1990 = vpack.c.b16 %v1977, %v1977
      %v1991 = vpack.c.b16 %v1978, %v1978
      %v1992 = vpack.c.b16 %v1979, %v1979
      %v1993 = vpack.c.b16 %v1980, %v1980
      %v1994 = vpack.c.b16 %v1981, %v1981
      %v1995 = vpack.c.b16 %v1982, %v1982
      %v1996 = vpack.c.b16 %v1983, %v1983
      %v1997 = vpack.c.b16 %v1984, %v1984
      %v1998 = vpack.c.b16 %v1985, %v1985
      %v1999 = vpack.c.b16 %v1986, %v1986
      %v2000 = vpack.c.b16 %v1987, %v1987
      %v2001 = vrot.slane %v1988, 5
      %v2002 = vrot.slane %v2001, 4
      %v2003 = vrot.slane %v1989, 5
      %v2004 = vsel %vm708, %v2002, %v2003
      %v2005 = vrot.slane %v2003, 4
      %v2006 = vrot.slane %v1990, 5
      %v2007 = vsel %vm708, %v2005, %v2006
      %v2008 = vrot.slane %v2006, 4
      %v2009 = vrot.slane %v1991, 5
      %v2010 = vsel %vm708, %v2008, %v2009
      %v2011 = vrot.slane %v2009, 4
      %v2012 = vrot.slane %v1992, 5
      %v2013 = vsel %vm708, %v2011, %v2012
      %v2014 = vrot.slane %v2012, 4
      %v2015 = vrot.slane %v1993, 5
      %v2016 = vsel %vm708, %v2014, %v2015
      %v2017 = vrot.slane %v2015, 4
      %v2018 = vrot.slane %v1994, 5
      %v2019 = vsel %vm708, %v2017, %v2018
      %v2020 = vrot.slane %v2018, 4
      %v2021 = vrot.slane %v1995, 5
      %v2022 = vsel %vm708, %v2020, %v2021
      %v2023 = vrot.slane %v2021, 4
      %v2024 = vrot.slane %v1996, 5
      %v2025 = vsel %vm708, %v2023, %v2024
      %v2026 = vrot.slane %v2024, 4
      %v2027 = vrot.slane %v1997, 5
      %v2028 = vsel %vm708, %v2026, %v2027
      %v2029 = vrot.slane %v2027, 4
      %v2030 = vrot.slane %v1998, 5
      %v2031 = vsel %vm708, %v2029, %v2030
      %v2032 = vrot.slane %v2030, 4
      %v2033 = vrot.slane %v1999, 5
      %v2034 = vsel %vm708, %v2032, %v2033
      %v2035 = vrot.slane %v2033, 4
      %v2036 = vrot.slane %v2000, 5
      %v2037 = vsel %vm708, %v2035, %v2036
      %v2038 = vrot.slane %v2036, 4
      %2039 = vrot.lane.b32.xlu0 %v2004, 96
      %v2040 = vpop.permute.xlu0 %2039
      %2041 = vrot.lane.b32.xlu0 %v2007, 96
      %v2042 = vpop.permute.xlu0 %2041
      %2043 = vrot.lane.b32.xlu0 %v2010, 96
      %v2044 = vpop.permute.xlu0 %2043
      %2045 = vrot.lane.b32.xlu0 %v2013, 96
      %v2046 = vpop.permute.xlu0 %2045
      %2047 = vrot.lane.b32.xlu0 %v2016, 96
      %v2048 = vpop.permute.xlu0 %2047
      %2049 = vrot.lane.b32.xlu0 %v2019, 96
      %v2050 = vpop.permute.xlu0 %2049
      %2051 = vrot.lane.b32.xlu0 %v2022, 96
      %v2052 = vpop.permute.xlu0 %2051
      %2053 = vrot.lane.b32.xlu0 %v2025, 96
      %v2054 = vpop.permute.xlu0 %2053
      %2055 = vrot.lane.b32.xlu0 %v2028, 96
      %v2056 = vpop.permute.xlu0 %2055
      %2057 = vrot.lane.b32.xlu0 %v2031, 96
      %v2058 = vpop.permute.xlu0 %2057
      %2059 = vrot.lane.b32.xlu0 %v2034, 96
      %v2060 = vpop.permute.xlu0 %2059
      %2061 = vrot.lane.b32.xlu0 %v2037, 96
      %v2062 = vpop.permute.xlu0 %2061
      %2063 = vrot.lane.b32.xlu0 %v2038, 96
      %v2064 = vpop.permute.xlu0 %2063
      %vm2078 = vcmask 847616
      %2079 = vst.msk [vmem:[#allocation2] sm:$0xf] %vm2078, %v2040
      %2080 = vst.msk [vmem:[#allocation2 + $0x8] sm:$0xf] %vm2078, %v2042
      %2081 = vst.msk [vmem:[#allocation2 + $0x10] sm:$0xf] %vm2078, %v2044
      %2082 = vst.msk [vmem:[#allocation2 + $0x18] sm:$0xf] %vm2078, %v2046
      %2083 = vst.msk [vmem:[#allocation2 + $0x20] sm:$0xf] %vm2078, %v2048
      %2084 = vst.msk [vmem:[#allocation2 + $0x28] sm:$0xf] %vm2078, %v2050
      %2085 = vst.msk [vmem:[#allocation2 + $0x30] sm:$0xf] %vm2078, %v2052
      %2086 = vst.msk [vmem:[#allocation2 + $0x38] sm:$0xf] %vm2078, %v2054
      %2087 = vst.msk [vmem:[#allocation2 + $0x40] sm:$0xf] %vm2078, %v2056
      %2088 = vst.msk [vmem:[#allocation2 + $0x48] sm:$0xf] %vm2078, %v2058
      %2089 = vst.msk [vmem:[#allocation2 + $0x50] sm:$0xf] %vm2078, %v2060
      %2090 = vst.msk [vmem:[#allocation2 + $0x58] sm:$0xf] %vm2078, %v2062
      %vm2091 = vcmask 845568
      %2092 = vst.msk [vmem:[#allocation2 + $0x60] sm:$0x3] %vm2091, %v2064
      %v2094 = vshrl.u32 %v1988, 16
      %v2096 = vrot.slane %v2094, 5
      %v2097 = vshll.u32 %v1988, 16
      %v2099 = vrot.slane %v2097, 6
      %v2100 = vor.u32 %v2096, %v2099
      %v2101 = vrot.slane %v2100, 4
      %v2103 = vshrl.u32 %v1989, 16
      %v2105 = vrot.slane %v2103, 5
      %v2106 = vshll.u32 %v1989, 16
      %v2108 = vrot.slane %v2106, 6
      %v2109 = vor.u32 %v2105, %v2108
      %v2110 = vsel %vm935, %v2101, %v2109
      %v2111 = vrot.slane %v2109, 4
      %v2113 = vshrl.u32 %v1990, 16
      %v2115 = vrot.slane %v2113, 5
      %v2116 = vshll.u32 %v1990, 16
      %v2118 = vrot.slane %v2116, 6
      %v2119 = vor.u32 %v2115, %v2118
      %v2120 = vsel %vm935, %v2111, %v2119
      %v2121 = vrot.slane %v2119, 4
      %v2123 = vshrl.u32 %v1991, 16
      %v2125 = vrot.slane %v2123, 5
      %v2126 = vshll.u32 %v1991, 16
      %v2128 = vrot.slane %v2126, 6
      %v2129 = vor.u32 %v2125, %v2128
      %v2130 = vsel %vm935, %v2121, %v2129
      %v2131 = vrot.slane %v2129, 4
      %v2133 = vshrl.u32 %v1992, 16
      %v2135 = vrot.slane %v2133, 5
      %v2136 = vshll.u32 %v1992, 16
      %v2138 = vrot.slane %v2136, 6
      %v2139 = vor.u32 %v2135, %v2138
      %v2140 = vsel %vm935, %v2131, %v2139
      %v2141 = vrot.slane %v2139, 4
      %v2143 = vshrl.u32 %v1993, 16
      %v2145 = vrot.slane %v2143, 5
      %v2146 = vshll.u32 %v1993, 16
      %v2148 = vrot.slane %v2146, 6
      %v2149 = vor.u32 %v2145, %v2148
      %v2150 = vsel %vm935, %v2141, %v2149
      %v2151 = vrot.slane %v2149, 4
      %v2153 = vshrl.u32 %v1994, 16
      %v2155 = vrot.slane %v2153, 5
      %v2156 = vshll.u32 %v1994, 16
      %v2158 = vrot.slane %v2156, 6
      %v2159 = vor.u32 %v2155, %v2158
      %v2160 = vsel %vm935, %v2151, %v2159
      %v2161 = vrot.slane %v2159, 4
      %v2163 = vshrl.u32 %v1995, 16
      %v2165 = vrot.slane %v2163, 5
      %v2166 = vshll.u32 %v1995, 16
      %v2168 = vrot.slane %v2166, 6
      %v2169 = vor.u32 %v2165, %v2168
      %v2170 = vsel %vm935, %v2161, %v2169
      %v2171 = vrot.slane %v2169, 4
      %v2173 = vshrl.u32 %v1996, 16
      %v2175 = vrot.slane %v2173, 5
      %v2176 = vshll.u32 %v1996, 16
      %v2178 = vrot.slane %v2176, 6
      %v2179 = vor.u32 %v2175, %v2178
      %v2180 = vsel %vm935, %v2171, %v2179
      %v2181 = vrot.slane %v2179, 4
      %v2183 = vshrl.u32 %v1997, 16
      %v2185 = vrot.slane %v2183, 5
      %v2186 = vshll.u32 %v1997, 16
      %v2188 = vrot.slane %v2186, 6
      %v2189 = vor.u32 %v2185, %v2188
      %v2190 = vsel %vm935, %v2181, %v2189
      %v2191 = vrot.slane %v2189, 4
      %v2193 = vshrl.u32 %v1998, 16
      %v2195 = vrot.slane %v2193, 5
      %v2196 = vshll.u32 %v1998, 16
      %v2198 = vrot.slane %v2196, 6
      %v2199 = vor.u32 %v2195, %v2198
      %v2200 = vsel %vm935, %v2191, %v2199
      %v2201 = vrot.slane %v2199, 4
      %v2203 = vshrl.u32 %v1999, 16
      %v2205 = vrot.slane %v2203, 5
      %v2206 = vshll.u32 %v1999, 16
      %v2208 = vrot.slane %v2206, 6
      %v2209 = vor.u32 %v2205, %v2208
      %v2210 = vsel %vm935, %v2201, %v2209
      %v2211 = vrot.slane %v2209, 4
      %v2213 = vshrl.u32 %v2000, 16
      %v2215 = vrot.slane %v2213, 5
      %v2216 = vshll.u32 %v2000, 16
      %v2218 = vrot.slane %v2216, 6
      %v2219 = vor.u32 %v2215, %v2218
      %v2220 = vsel %vm935, %v2211, %v2219
      %v2221 = vrot.slane %v2219, 4
      %2222 = vrot.lane.b32.xlu0 %v2110, 104
      %v2223 = vpop.permute.xlu0 %2222
      %2224 = vrot.lane.b32.xlu0 %v2120, 104
      %v2225 = vpop.permute.xlu0 %2224
      %2226 = vrot.lane.b32.xlu0 %v2130, 104
      %v2227 = vpop.permute.xlu0 %2226
      %2228 = vrot.lane.b32.xlu0 %v2140, 104
      %v2229 = vpop.permute.xlu0 %2228
      %2230 = vrot.lane.b32.xlu0 %v2150, 104
      %v2231 = vpop.permute.xlu0 %2230
      %2232 = vrot.lane.b32.xlu0 %v2160, 104
      %v2233 = vpop.permute.xlu0 %2232
      %2234 = vrot.lane.b32.xlu0 %v2170, 104
      %v2235 = vpop.permute.xlu0 %2234
      %2236 = vrot.lane.b32.xlu0 %v2180, 104
      %v2237 = vpop.permute.xlu0 %2236
      %2238 = vrot.lane.b32.xlu0 %v2190, 104
      %v2239 = vpop.permute.xlu0 %2238
      %2240 = vrot.lane.b32.xlu0 %v2200, 104
      %v2241 = vpop.permute.xlu0 %2240
      %2242 = vrot.lane.b32.xlu0 %v2210, 104
      %v2243 = vpop.permute.xlu0 %2242
      %2244 = vrot.lane.b32.xlu0 %v2220, 104
      %v2245 = vpop.permute.xlu0 %2244
      %2246 = vrot.lane.b32.xlu0 %v2221, 104
      %v2247 = vpop.permute.xlu0 %2246
      %vm2261 = vcmask 913216
      %2262 = vst.msk [vmem:[#allocation2] sm:$0xf] %vm2261, %v2223
      %2263 = vst.msk [vmem:[#allocation2 + $0x8] sm:$0xf] %vm2261, %v2225
      %2264 = vst.msk [vmem:[#allocation2 + $0x10] sm:$0xf] %vm2261, %v2227
      %2265 = vst.msk [vmem:[#allocation2 + $0x18] sm:$0xf] %vm2261, %v2229
      %2266 = vst.msk [vmem:[#allocation2 + $0x20] sm:$0xf] %vm2261, %v2231
      %2267 = vst.msk [vmem:[#allocation2 + $0x28] sm:$0xf] %vm2261, %v2233
      %2268 = vst.msk [vmem:[#allocation2 + $0x30] sm:$0xf] %vm2261, %v2235
      %2269 = vst.msk [vmem:[#allocation2 + $0x38] sm:$0xf] %vm2261, %v2237
      %2270 = vst.msk [vmem:[#allocation2 + $0x40] sm:$0xf] %vm2261, %v2239
      %2271 = vst.msk [vmem:[#allocation2 + $0x48] sm:$0xf] %vm2261, %v2241
      %2272 = vst.msk [vmem:[#allocation2 + $0x50] sm:$0xf] %vm2261, %v2243
      %2273 = vst.msk [vmem:[#allocation2 + $0x58] sm:$0xf] %vm2261, %v2245
      %vm2274 = vcmask 911168
      %2275 = vst.msk [vmem:[#allocation2 + $0x60] sm:$0x3] %vm2274, %v2247
      %v2276 = vrot.slane %v1988, 6
      %v2277 = vrot.slane %v2276, 4
      %v2278 = vrot.slane %v1989, 6
      %v2279 = vsel %vm1121, %v2277, %v2278
      %v2280 = vrot.slane %v2278, 4
      %v2281 = vrot.slane %v1990, 6
      %v2282 = vsel %vm1121, %v2280, %v2281
      %v2283 = vrot.slane %v2281, 4
      %v2284 = vrot.slane %v1991, 6
      %v2285 = vsel %vm1121, %v2283, %v2284
      %v2286 = vrot.slane %v2284, 4
      %v2287 = vrot.slane %v1992, 6
      %v2288 = vsel %vm1121, %v2286, %v2287
      %v2289 = vrot.slane %v2287, 4
      %v2290 = vrot.slane %v1993, 6
      %v2291 = vsel %vm1121, %v2289, %v2290
      %v2292 = vrot.slane %v2290, 4
      %v2293 = vrot.slane %v1994, 6
      %v2294 = vsel %vm1121, %v2292, %v2293
      %v2295 = vrot.slane %v2293, 4
      %v2296 = vrot.slane %v1995, 6
      %v2297 = vsel %vm1121, %v2295, %v2296
      %v2298 = vrot.slane %v2296, 4
      %v2299 = vrot.slane %v1996, 6
      %v2300 = vsel %vm1121, %v2298, %v2299
      %v2301 = vrot.slane %v2299, 4
      %v2302 = vrot.slane %v1997, 6
      %v2303 = vsel %vm1121, %v2301, %v2302
      %v2304 = vrot.slane %v2302, 4
      %v2305 = vrot.slane %v1998, 6
      %v2306 = vsel %vm1121, %v2304, %v2305
      %v2307 = vrot.slane %v2305, 4
      %v2308 = vrot.slane %v1999, 6
      %v2309 = vsel %vm1121, %v2307, %v2308
      %v2310 = vrot.slane %v2308, 4
      %v2311 = vrot.slane %v2000, 6
      %v2312 = vsel %vm1121, %v2310, %v2311
      %v2313 = vrot.slane %v2311, 4
      %2314 = vrot.lane.b32.xlu0 %v2279, 112
      %v2315 = vpop.permute.xlu0 %2314
      %2316 = vrot.lane.b32.xlu0 %v2282, 112
      %v2317 = vpop.permute.xlu0 %2316
      %2318 = vrot.lane.b32.xlu0 %v2285, 112
      %v2319 = vpop.permute.xlu0 %2318
      %2320 = vrot.lane.b32.xlu0 %v2288, 112
      %v2321 = vpop.permute.xlu0 %2320
      %2322 = vrot.lane.b32.xlu0 %v2291, 112
      %v2323 = vpop.permute.xlu0 %2322
      %2324 = vrot.lane.b32.xlu0 %v2294, 112
      %v2325 = vpop.permute.xlu0 %2324
      %2326 = vrot.lane.b32.xlu0 %v2297, 112
      %v2327 = vpop.permute.xlu0 %2326
      %2328 = vrot.lane.b32.xlu0 %v2300, 112
      %v2329 = vpop.permute.xlu0 %2328
      %2330 = vrot.lane.b32.xlu0 %v2303, 112
      %v2331 = vpop.permute.xlu0 %2330
      %2332 = vrot.lane.b32.xlu0 %v2306, 112
      %v2333 = vpop.permute.xlu0 %2332
      %2334 = vrot.lane.b32.xlu0 %v2309, 112
      %v2335 = vpop.permute.xlu0 %2334
      %2336 = vrot.lane.b32.xlu0 %v2312, 112
      %v2337 = vpop.permute.xlu0 %2336
      %2338 = vrot.lane.b32.xlu0 %v2313, 112
      %v2339 = vpop.permute.xlu0 %2338
      %vm2353 = vcmask 978816
      %2354 = vst.msk [vmem:[#allocation2] sm:$0xf] %vm2353, %v2315
      %2355 = vst.msk [vmem:[#allocation2 + $0x8] sm:$0xf] %vm2353, %v2317
      %2356 = vst.msk [vmem:[#allocation2 + $0x10] sm:$0xf] %vm2353, %v2319
      %2357 = vst.msk [vmem:[#allocation2 + $0x18] sm:$0xf] %vm2353, %v2321
      %2358 = vst.msk [vmem:[#allocation2 + $0x20] sm:$0xf] %vm2353, %v2323
      %2359 = vst.msk [vmem:[#allocation2 + $0x28] sm:$0xf] %vm2353, %v2325
      %2360 = vst.msk [vmem:[#allocation2 + $0x30] sm:$0xf] %vm2353, %v2327
      %2361 = vst.msk [vmem:[#allocation2 + $0x38] sm:$0xf] %vm2353, %v2329
      %2362 = vst.msk [vmem:[#allocation2 + $0x40] sm:$0xf] %vm2353, %v2331
      %2363 = vst.msk [vmem:[#allocation2 + $0x48] sm:$0xf] %vm2353, %v2333
      %2364 = vst.msk [vmem:[#allocation2 + $0x50] sm:$0xf] %vm2353, %v2335
      %2365 = vst.msk [vmem:[#allocation2 + $0x58] sm:$0xf] %vm2353, %v2337
      %vm2366 = vcmask 976768
      %2367 = vst.msk [vmem:[#allocation2 + $0x60] sm:$0x3] %vm2366, %v2339
      %v2368 = vpack.c.bf16 %v1589, %v1588
      %v2369 = vpack.c.bf16 %v1590, %v1590
      %v2372 = vunpack.c.l.b16 %v2368
      %v2373 = vunpack.c.h.b16 %v2368
      %v2374 = vunpack.c.l.b16 %v2369
      %v2375 = vpack.c.b16 %v2372, %v2372
      %v2376 = vpack.c.b16 %v2373, %v2373
      %v2377 = vpack.c.b16 %v2374, %v2374
      %v2378 = vrot.slane %v1621, 6
      %v2379 = vrot.slane %v2378, 4
      %v2380 = vrot.slane %v1622, 6
      %v2381 = vsel %vm1121, %v2379, %v2380
      %v2382 = vrot.slane %v2380, 4
      %v2383 = vrot.slane %v1623, 6
      %v2384 = vsel %vm1121, %v2382, %v2383
      %v2385 = vrot.slane %v2383, 4
      %v2386 = vrot.slane %v1624, 6
      %v2387 = vsel %vm1121, %v2385, %v2386
      %v2388 = vrot.slane %v2386, 4
      %v2389 = vrot.slane %v1625, 6
      %v2390 = vsel %vm1121, %v2388, %v2389
      %v2391 = vrot.slane %v2389, 4
      %v2392 = vrot.slane %v1626, 6
      %v2393 = vsel %vm1121, %v2391, %v2392
      %v2394 = vrot.slane %v2392, 4
      %v2395 = vrot.slane %v1627, 6
      %v2396 = vsel %vm1121, %v2394, %v2395
      %v2397 = vrot.slane %v2395, 4
      %v2398 = vrot.slane %v1628, 6
      %v2399 = vsel %vm1121, %v2397, %v2398
      %v2400 = vrot.slane %v2398, 4
      %v2401 = vrot.slane %v1629, 6
      %v2402 = vsel %vm1121, %v2400, %v2401
      %v2403 = vrot.slane %v2401, 4
      %v2404 = vrot.slane %v1630, 6
      %v2405 = vsel %vm1121, %v2403, %v2404
      %v2406 = vrot.slane %v2404, 4
      %v2407 = vrot.slane %v2375, 6
      %v2408 = vsel %vm1121, %v2406, %v2407
      %v2409 = vrot.slane %v2407, 4
      %v2410 = vrot.slane %v2376, 6
      %v2411 = vsel %vm1121, %v2409, %v2410
      %v2412 = vrot.slane %v2410, 4
      %v2413 = vrot.slane %v2377, 6
      %v2414 = vsel %vm1121, %v2412, %v2413
      %v2415 = vrot.slane %v2413, 4
      %2416 = vrot.lane.b32.xlu0 %v2381, 120
      %v2417 = vpop.permute.xlu0 %2416
      %2418 = vrot.lane.b32.xlu0 %v2384, 120
      %v2419 = vpop.permute.xlu0 %2418
      %2420 = vrot.lane.b32.xlu0 %v2387, 120
      %v2421 = vpop.permute.xlu0 %2420
      %2422 = vrot.lane.b32.xlu0 %v2390, 120
      %v2423 = vpop.permute.xlu0 %2422
      %2424 = vrot.lane.b32.xlu0 %v2393, 120
      %v2425 = vpop.permute.xlu0 %2424
      %2426 = vrot.lane.b32.xlu0 %v2396, 120
      %v2427 = vpop.permute.xlu0 %2426
      %2428 = vrot.lane.b32.xlu0 %v2399, 120
      %v2429 = vpop.permute.xlu0 %2428
      %2430 = vrot.lane.b32.xlu0 %v2402, 120
      %v2431 = vpop.permute.xlu0 %2430
      %2432 = vrot.lane.b32.xlu0 %v2405, 120
      %v2433 = vpop.permute.xlu0 %2432
      %2434 = vrot.lane.b32.xlu0 %v2408, 120
      %v2435 = vpop.permute.xlu0 %2434
      %2436 = vrot.lane.b32.xlu0 %v2411, 120
      %v2437 = vpop.permute.xlu0 %2436
      %2438 = vrot.lane.b32.xlu0 %v2414, 120
      %v2439 = vpop.permute.xlu0 %2438
      %2440 = vrot.lane.b32.xlu0 %v2415, 120
      %v2441 = vpop.permute.xlu0 %2440
      %vm2455 = vcmask 1044416
      %2456 = vst.msk [vmem:[#allocation2] sm:$0xf] %vm2455, %v2417
      %2457 = vst.msk [vmem:[#allocation2 + $0x8] sm:$0xf] %vm2455, %v2419
      %2458 = vst.msk [vmem:[#allocation2 + $0x10] sm:$0xf] %vm2455, %v2421
      %2459 = vst.msk [vmem:[#allocation2 + $0x18] sm:$0xf] %vm2455, %v2423
      %2460 = vst.msk [vmem:[#allocation2 + $0x20] sm:$0xf] %vm2455, %v2425
      %2461 = vst.msk [vmem:[#allocation2 + $0x28] sm:$0xf] %vm2455, %v2427
      %2462 = vst.msk [vmem:[#allocation2 + $0x30] sm:$0xf] %vm2455, %v2429
      %2463 = vst.msk [vmem:[#allocation2 + $0x38] sm:$0xf] %vm2455, %v2431
      %2464 = vst.msk [vmem:[#allocation2 + $0x40] sm:$0xf] %vm2455, %v2433
      %2465 = vst.msk [vmem:[#allocation2 + $0x48] sm:$0xf] %vm2455, %v2435
      %2466 = vst.msk [vmem:[#allocation2 + $0x50] sm:$0xf] %vm2455, %v2437
      %2467 = vst.msk [vmem:[#allocation2 + $0x58] sm:$0xf] %vm2455, %v2439
      %vm2468 = vcmask 1042368
      %2469 = vst.msk [vmem:[#allocation2 + $0x60] sm:$0x3] %vm2468, %v2441
      %v2470 = vpack.c.bf16 %v1591, %v1590
      %v2472 = vunpack.c.l.b16 %v2470
      %v2473 = vunpack.c.h.b16 %v2470
      %v2474 = vpack.c.b16 %v2472, %v2472
      %v2475 = vpack.c.b16 %v2473, %v2473
      %v2476 = vrot.slane %v1710, 6
      %v2477 = vrot.slane %v1706, 7
      %v2478 = vor.u32 %v2476, %v2477
      %v2479 = vrot.slane %v2478, 4
      %v2480 = vrot.slane %v1720, 6
      %v2481 = vrot.slane %v1716, 7
      %v2482 = vor.u32 %v2480, %v2481
      %v2483 = vsel %vm1324, %v2479, %v2482
      %v2484 = vrot.slane %v2482, 4
      %v2485 = vrot.slane %v1730, 6
      %v2486 = vrot.slane %v1726, 7
      %v2487 = vor.u32 %v2485, %v2486
      %v2488 = vsel %vm1324, %v2484, %v2487
      %v2489 = vrot.slane %v2487, 4
      %v2490 = vrot.slane %v1740, 6
      %v2491 = vrot.slane %v1736, 7
      %v2492 = vor.u32 %v2490, %v2491
      %v2493 = vsel %vm1324, %v2489, %v2492
      %v2494 = vrot.slane %v2492, 4
      %v2495 = vrot.slane %v1750, 6
      %v2496 = vrot.slane %v1746, 7
      %v2497 = vor.u32 %v2495, %v2496
      %v2498 = vsel %vm1324, %v2494, %v2497
      %v2499 = vrot.slane %v2497, 4
      %v2500 = vrot.slane %v1760, 6
      %v2501 = vrot.slane %v1756, 7
      %v2502 = vor.u32 %v2500, %v2501
      %v2503 = vsel %vm1324, %v2499, %v2502
      %v2504 = vrot.slane %v2502, 4
      %v2505 = vrot.slane %v1770, 6
      %v2506 = vrot.slane %v1766, 7
      %v2507 = vor.u32 %v2505, %v2506
      %v2508 = vsel %vm1324, %v2504, %v2507
      %v2509 = vrot.slane %v2507, 4
      %v2510 = vrot.slane %v1780, 6
      %v2511 = vrot.slane %v1776, 7
      %v2512 = vor.u32 %v2510, %v2511
      %v2513 = vsel %vm1324, %v2509, %v2512
      %v2514 = vrot.slane %v2512, 4
      %v2515 = vrot.slane %v1790, 6
      %v2516 = vrot.slane %v1786, 7
      %v2517 = vor.u32 %v2515, %v2516
      %v2518 = vsel %vm1324, %v2514, %v2517
      %v2519 = vrot.slane %v2517, 4
      %v2520 = vrot.slane %v1800, 6
      %v2521 = vrot.slane %v1796, 7
      %v2522 = vor.u32 %v2520, %v2521
      %v2523 = vsel %vm1324, %v2519, %v2522
      %v2524 = vrot.slane %v2522, 4
      %v2526 = vshrl.u32 %v2375, 16
      %v2528 = vrot.slane %v2526, 6
      %v2529 = vshll.u32 %v2375, 16
      %v2531 = vrot.slane %v2529, 7
      %v2532 = vor.u32 %v2528, %v2531
      %v2533 = vsel %vm1324, %v2524, %v2532
      %v2534 = vrot.slane %v2532, 4
      %v2536 = vshrl.u32 %v2376, 16
      %v2538 = vrot.slane %v2536, 6
      %v2539 = vshll.u32 %v2376, 16
      %v2541 = vrot.slane %v2539, 7
      %v2542 = vor.u32 %v2538, %v2541
      %v2543 = vsel %vm1324, %v2534, %v2542
      %v2544 = vrot.slane %v2542, 4
      %v2546 = vshrl.u32 %v2474, 16
      %v2548 = vrot.slane %v2546, 6
      %v2549 = vshll.u32 %v2474, 16
      %v2551 = vrot.slane %v2549, 7
      %v2552 = vor.u32 %v2548, %v2551
      %v2553 = vsel %vm1324, %v2544, %v2552
      %v2554 = vrot.slane %v2552, 4
      %v2556 = vshll.u32 %v2475, 16
      %v2558 = vrot.slane %v2556, 7
      %v2559 = vsel %vm1324, %v2554, %v2558
      %2573 = vst.msk [vmem:[#allocation2 + $0x4] sm:$0xf] %vm505, %v2483
      %2574 = vst.msk [vmem:[#allocation2 + $0xc] sm:$0xf] %vm505, %v2488
      %2575 = vst.msk [vmem:[#allocation2 + $0x14] sm:$0xf] %vm505, %v2493
      %2576 = vst.msk [vmem:[#allocation2 + $0x1c] sm:$0xf] %vm505, %v2498
      %2577 = vst.msk [vmem:[#allocation2 + $0x24] sm:$0xf] %vm505, %v2503
      %2578 = vst.msk [vmem:[#allocation2 + $0x2c] sm:$0xf] %vm505, %v2508
      %2579 = vst.msk [vmem:[#allocation2 + $0x34] sm:$0xf] %vm505, %v2513
      %2580 = vst.msk [vmem:[#allocation2 + $0x3c] sm:$0xf] %vm505, %v2518
      %2581 = vst.msk [vmem:[#allocation2 + $0x44] sm:$0xf] %vm505, %v2523
      %2582 = vst.msk [vmem:[#allocation2 + $0x4c] sm:$0xf] %vm505, %v2533
      %2583 = vst.msk [vmem:[#allocation2 + $0x54] sm:$0xf] %vm505, %v2543
      %2584 = vst.msk [vmem:[#allocation2 + $0x5c] sm:$0xf] %vm505, %v2553
      %2585 = vst.msk [vmem:[#allocation2 + $0x64] sm:$0x3] %vm518, %v2559
      %v2586 = vrot.slane %v1621, 7
      %v2587 = vrot.slane %v2586, 4
      %v2588 = vrot.slane %v1622, 7
      %v2589 = vsel %vm1465, %v2587, %v2588
      %v2590 = vrot.slane %v2588, 4
      %v2591 = vrot.slane %v1623, 7
      %v2592 = vsel %vm1465, %v2590, %v2591
      %v2593 = vrot.slane %v2591, 4
      %v2594 = vrot.slane %v1624, 7
      %v2595 = vsel %vm1465, %v2593, %v2594
      %v2596 = vrot.slane %v2594, 4
      %v2597 = vrot.slane %v1625, 7
      %v2598 = vsel %vm1465, %v2596, %v2597
      %v2599 = vrot.slane %v2597, 4
      %v2600 = vrot.slane %v1626, 7
      %v2601 = vsel %vm1465, %v2599, %v2600
      %v2602 = vrot.slane %v2600, 4
      %v2603 = vrot.slane %v1627, 7
      %v2604 = vsel %vm1465, %v2602, %v2603
      %v2605 = vrot.slane %v2603, 4
      %v2606 = vrot.slane %v1628, 7
      %v2607 = vsel %vm1465, %v2605, %v2606
      %v2608 = vrot.slane %v2606, 4
      %v2609 = vrot.slane %v1629, 7
      %v2610 = vsel %vm1465, %v2608, %v2609
      %v2611 = vrot.slane %v2609, 4
      %v2612 = vrot.slane %v1630, 7
      %v2613 = vsel %vm1465, %v2611, %v2612
      %v2614 = vrot.slane %v2612, 4
      %v2615 = vrot.slane %v2375, 7
      %v2616 = vsel %vm1465, %v2614, %v2615
      %v2617 = vrot.slane %v2615, 4
      %v2618 = vrot.slane %v2376, 7
      %v2619 = vsel %vm1465, %v2617, %v2618
      %v2620 = vrot.slane %v2618, 4
      %v2621 = vrot.slane %v2474, 7
      %v2622 = vsel %vm1465, %v2620, %v2621
      %v2623 = vrot.slane %v2621, 4
      %v2624 = vrot.slane %v2475, 7
      %v2625 = vsel %vm1465, %v2623, %v2624
      %2626 = vrot.lane.b32.xlu0 %v2589, 8
      %v2627 = vpop.permute.xlu0 %2626
      %2628 = vrot.lane.b32.xlu0 %v2592, 8
      %v2629 = vpop.permute.xlu0 %2628
      %2630 = vrot.lane.b32.xlu0 %v2595, 8
      %v2631 = vpop.permute.xlu0 %2630
      %2632 = vrot.lane.b32.xlu0 %v2598, 8
      %v2633 = vpop.permute.xlu0 %2632
      %2634 = vrot.lane.b32.xlu0 %v2601, 8
      %v2635 = vpop.permute.xlu0 %2634
      %2636 = vrot.lane.b32.xlu0 %v2604, 8
      %v2637 = vpop.permute.xlu0 %2636
      %2638 = vrot.lane.b32.xlu0 %v2607, 8
      %v2639 = vpop.permute.xlu0 %2638
      %2640 = vrot.lane.b32.xlu0 %v2610, 8
      %v2641 = vpop.permute.xlu0 %2640
      %2642 = vrot.lane.b32.xlu0 %v2613, 8
      %v2643 = vpop.permute.xlu0 %2642
      %2644 = vrot.lane.b32.xlu0 %v2616, 8
      %v2645 = vpop.permute.xlu0 %2644
      %2646 = vrot.lane.b32.xlu0 %v2619, 8
      %v2647 = vpop.permute.xlu0 %2646
      %2648 = vrot.lane.b32.xlu0 %v2622, 8
      %v2649 = vpop.permute.xlu0 %2648
      %2650 = vrot.lane.b32.xlu0 %v2625, 8
      %v2651 = vpop.permute.xlu0 %2650
      %2665 = vst.msk [vmem:[#allocation2 + $0x4] sm:$0xf] %vm691, %v2627
      %2666 = vst.msk [vmem:[#allocation2 + $0xc] sm:$0xf] %vm691, %v2629
      %2667 = vst.msk [vmem:[#allocation2 + $0x14] sm:$0xf] %vm691, %v2631
      %2668 = vst.msk [vmem:[#allocation2 + $0x1c] sm:$0xf] %vm691, %v2633
      %2669 = vst.msk [vmem:[#allocation2 + $0x24] sm:$0xf] %vm691, %v2635
      %2670 = vst.msk [vmem:[#allocation2 + $0x2c] sm:$0xf] %vm691, %v2637
      %2671 = vst.msk [vmem:[#allocation2 + $0x34] sm:$0xf] %vm691, %v2639
      %2672 = vst.msk [vmem:[#allocation2 + $0x3c] sm:$0xf] %vm691, %v2641
      %2673 = vst.msk [vmem:[#allocation2 + $0x44] sm:$0xf] %vm691, %v2643
      %2674 = vst.msk [vmem:[#allocation2 + $0x4c] sm:$0xf] %vm691, %v2645
      %2675 = vst.msk [vmem:[#allocation2 + $0x54] sm:$0xf] %vm691, %v2647
      %2676 = vst.msk [vmem:[#allocation2 + $0x5c] sm:$0xf] %vm691, %v2649
      %2677 = vst.msk [vmem:[#allocation2 + $0x64] sm:$0x3] %vm704, %v2651
      %v2678 = vld [vmem:[%s384] sm:$0xf]
      %v2679 = vld [vmem:[%s384 + $0x4] sm:$0xf]
      %v2680 = vld [vmem:[%s384 + $0x8] sm:$0xf]
      %v2681 = vld [vmem:[%s384 + $0xc] sm:$0xf]
      %v2682 = vld [vmem:[%s384 + $0x10] sm:$0xf]
      %v2683 = vld [vmem:[%s384 + $0x14] sm:$0xf]
      %v2684 = vld [vmem:[%s384 + $0x18] sm:$0xf]
      %v2685 = vld [vmem:[%s384 + $0x1c] sm:$0xf]
      %v2686 = vld [vmem:[%s384 + $0x20] sm:$0xf]
      %v2687 = vld [vmem:[%s384 + $0x24] sm:$0xf]
      %v2688 = vld [vmem:[%s384 + $0x28] sm:$0xf]
      %v2689 = vld [vmem:[%s384 + $0x2c] sm:$0xf]
      %v2690 = vld [vmem:[%s384 + $0x30] sm:$0xf]
      %v2691 = vld [vmem:[%s384 + $0x34] sm:$0xf]
      %v2692 = vld [vmem:[%s384 + $0x38] sm:$0xf]
      %v2693 = vld [vmem:[%s384 + $0x3c] sm:$0x1]
      %v2694 = vunpack.c.l.bf16 %v2678
      %v2695 = vunpack.c.l.bf16 %v2679
      %v2696 = vunpack.c.l.bf16 %v2680
      %v2697 = vunpack.c.l.bf16 %v2681
      %v2698 = vunpack.c.l.bf16 %v2682
      %v2699 = vunpack.c.l.bf16 %v2683
      %v2700 = vunpack.c.l.bf16 %v2684
      %v2701 = vunpack.c.l.bf16 %v2685
      %v2702 = vunpack.c.l.bf16 %v2686
      %v2703 = vunpack.c.l.bf16 %v2687
      %v2704 = vunpack.c.l.bf16 %v2688
      %v2705 = vunpack.c.l.bf16 %v2689
      %v2706 = vunpack.c.l.bf16 %v2690
      %v2707 = vunpack.c.l.bf16 %v2691
      %v2708 = vunpack.c.l.bf16 %v2692
      %v2709 = vunpack.c.l.bf16 %v2693
      %v2710 = vpack.c.bf16 %v2695, %v2694
      %v2711 = vpack.c.bf16 %v2697, %v2696
      %v2712 = vpack.c.bf16 %v2699, %v2698
      %v2713 = vpack.c.bf16 %v2701, %v2700
      %v2714 = vpack.c.bf16 %v2703, %v2702
      %v2715 = vpack.c.bf16 %v2705, %v2704
      %v2716 = vpack.c.bf16 %v2706, %v2706
      %v2724 = vunpack.c.l.b16 %v2710
      %v2725 = vunpack.c.h.b16 %v2710
      %v2726 = vunpack.c.l.b16 %v2711
      %v2727 = vunpack.c.h.b16 %v2711
      %v2728 = vunpack.c.l.b16 %v2712
      %v2729 = vunpack.c.h.b16 %v2712
      %v2730 = vunpack.c.l.b16 %v2713
      %v2731 = vunpack.c.h.b16 %v2713
      %v2732 = vunpack.c.l.b16 %v2714
      %v2733 = vunpack.c.h.b16 %v2714
      %v2734 = vunpack.c.l.b16 %v2715
      %v2735 = vunpack.c.h.b16 %v2715
      %v2736 = vunpack.c.l.b16 %v2716
      %v2737 = vpack.c.b16 %v2724, %v2724
      %v2738 = vpack.c.b16 %v2725, %v2725
      %v2739 = vpack.c.b16 %v2726, %v2726
      %v2740 = vpack.c.b16 %v2727, %v2727
      %v2741 = vpack.c.b16 %v2728, %v2728
      %v2742 = vpack.c.b16 %v2729, %v2729
      %v2743 = vpack.c.b16 %v2730, %v2730
      %v2744 = vpack.c.b16 %v2731, %v2731
      %v2745 = vpack.c.b16 %v2732, %v2732
      %v2746 = vpack.c.b16 %v2733, %v2733
      %v2747 = vpack.c.b16 %v2734, %v2734
      %v2748 = vpack.c.b16 %v2735, %v2735
      %v2749 = vpack.c.b16 %v2736, %v2736
      %2750 = vrot.lane.b32.xlu0 %v2737, 16
      %v2751 = vpop.permute.xlu0 %2750
      %2752 = vrot.lane.b32.xlu0 %v2738, 16
      %v2753 = vpop.permute.xlu0 %2752
      %2754 = vrot.lane.b32.xlu0 %v2739, 16
      %v2755 = vpop.permute.xlu0 %2754
      %2756 = vrot.lane.b32.xlu0 %v2740, 16
      %v2757 = vpop.permute.xlu0 %2756
      %2758 = vrot.lane.b32.xlu0 %v2741, 16
      %v2759 = vpop.permute.xlu0 %2758
      %2760 = vrot.lane.b32.xlu0 %v2742, 16
      %v2761 = vpop.permute.xlu0 %2760
      %2762 = vrot.lane.b32.xlu0 %v2743, 16
      %v2763 = vpop.permute.xlu0 %2762
      %2764 = vrot.lane.b32.xlu0 %v2744, 16
      %v2765 = vpop.permute.xlu0 %2764
      %2766 = vrot.lane.b32.xlu0 %v2745, 16
      %v2767 = vpop.permute.xlu0 %2766
      %2768 = vrot.lane.b32.xlu0 %v2746, 16
      %v2769 = vpop.permute.xlu0 %2768
      %2770 = vrot.lane.b32.xlu0 %v2747, 16
      %v2771 = vpop.permute.xlu0 %2770
      %2772 = vrot.lane.b32.xlu0 %v2748, 16
      %v2773 = vpop.permute.xlu0 %2772
      %2774 = vrot.lane.b32.xlu0 %v2749, 16
      %v2775 = vpop.permute.xlu0 %2774
      %2789 = vst.msk [vmem:[#allocation2 + $0x4] sm:$0xf] %vm786, %v2751
      %2790 = vst.msk [vmem:[#allocation2 + $0xc] sm:$0xf] %vm786, %v2753
      %2791 = vst.msk [vmem:[#allocation2 + $0x14] sm:$0xf] %vm786, %v2755
      %2792 = vst.msk [vmem:[#allocation2 + $0x1c] sm:$0xf] %vm786, %v2757
      %2793 = vst.msk [vmem:[#allocation2 + $0x24] sm:$0xf] %vm786, %v2759
      %2794 = vst.msk [vmem:[#allocation2 + $0x2c] sm:$0xf] %vm786, %v2761
      %2795 = vst.msk [vmem:[#allocation2 + $0x34] sm:$0xf] %vm786, %v2763
      %2796 = vst.msk [vmem:[#allocation2 + $0x3c] sm:$0xf] %vm786, %v2765
      %2797 = vst.msk [vmem:[#allocation2 + $0x44] sm:$0xf] %vm786, %v2767
      %2798 = vst.msk [vmem:[#allocation2 + $0x4c] sm:$0xf] %vm786, %v2769
      %2799 = vst.msk [vmem:[#allocation2 + $0x54] sm:$0xf] %vm786, %v2771
      %2800 = vst.msk [vmem:[#allocation2 + $0x5c] sm:$0xf] %vm786, %v2773
      %2801 = vst.msk [vmem:[#allocation2 + $0x64] sm:$0x3] %vm799, %v2775
      %v2803 = vshrl.u32 %v2737, 16
      %v2805 = vrot.slane %v2803, 4
      %v2806 = vshll.u32 %v2737, 16
      %v2808 = vrot.slane %v2806, 5
      %v2809 = vor.u32 %v2805, %v2808
      %v2810 = vrot.slane %v2809, 4
      %v2812 = vshll.u32 %v2738, 16
      %v2814 = vrot.slane %v2812, 5
      %v2815 = vsel %vm522, %v2810, %v2814
      %v2816 = vshrl.u32 %v2738, 16
      %v2818 = vrot.slane %v2816, 4
      %v2819 = vor.u32 %v2818, %v2814
      %v2820 = vrot.slane %v2819, 4
      %v2822 = vshll.u32 %v2739, 16
      %v2824 = vrot.slane %v2822, 5
      %v2825 = vsel %vm522, %v2820, %v2824
      %v2826 = vshrl.u32 %v2739, 16
      %v2828 = vrot.slane %v2826, 4
      %v2829 = vor.u32 %v2828, %v2824
      %v2830 = vrot.slane %v2829, 4
      %v2832 = vshll.u32 %v2740, 16
      %v2834 = vrot.slane %v2832, 5
      %v2835 = vsel %vm522, %v2830, %v2834
      %v2836 = vshrl.u32 %v2740, 16
      %v2838 = vrot.slane %v2836, 4
      %v2839 = vor.u32 %v2838, %v2834
      %v2840 = vrot.slane %v2839, 4
      %v2842 = vshll.u32 %v2741, 16
      %v2844 = vrot.slane %v2842, 5
      %v2845 = vsel %vm522, %v2840, %v2844
      %v2846 = vshrl.u32 %v2741, 16
      %v2848 = vrot.slane %v2846, 4
      %v2849 = vor.u32 %v2848, %v2844
      %v2850 = vrot.slane %v2849, 4
      %v2852 = vshll.u32 %v2742, 16
      %v2854 = vrot.slane %v2852, 5
      %v2855 = vsel %vm522, %v2850, %v2854
      %v2856 = vshrl.u32 %v2742, 16
      %v2858 = vrot.slane %v2856, 4
      %v2859 = vor.u32 %v2858, %v2854
      %v2860 = vrot.slane %v2859, 4
      %v2862 = vshll.u32 %v2743, 16
      %v2864 = vrot.slane %v2862, 5
      %v2865 = vsel %vm522, %v2860, %v2864
      %v2866 = vshrl.u32 %v2743, 16
      %v2868 = vrot.slane %v2866, 4
      %v2869 = vor.u32 %v2868, %v2864
      %v2870 = vrot.slane %v2869, 4
      %v2872 = vshll.u32 %v2744, 16
      %v2874 = vrot.slane %v2872, 5
      %v2875 = vsel %vm522, %v2870, %v2874
      %v2876 = vshrl.u32 %v2744, 16
      %v2878 = vrot.slane %v2876, 4
      %v2879 = vor.u32 %v2878, %v2874
      %v2880 = vrot.slane %v2879, 4
      %v2882 = vshll.u32 %v2745, 16
      %v2884 = vrot.slane %v2882, 5
      %v2885 = vsel %vm522, %v2880, %v2884
      %v2886 = vshrl.u32 %v2745, 16
      %v2888 = vrot.slane %v2886, 4
      %v2889 = vor.u32 %v2888, %v2884
      %v2890 = vrot.slane %v2889, 4
      %v2892 = vshll.u32 %v2746, 16
      %v2894 = vrot.slane %v2892, 5
      %v2895 = vsel %vm522, %v2890, %v2894
      %v2896 = vshrl.u32 %v2746, 16
      %v2898 = vrot.slane %v2896, 4
      %v2899 = vor.u32 %v2898, %v2894
      %v2900 = vrot.slane %v2899, 4
      %v2902 = vshll.u32 %v2747, 16
      %v2904 = vrot.slane %v2902, 5
      %v2905 = vsel %vm522, %v2900, %v2904
      %v2906 = vshrl.u32 %v2747, 16
      %v2908 = vrot.slane %v2906, 4
      %v2909 = vor.u32 %v2908, %v2904
      %v2910 = vrot.slane %v2909, 4
      %v2912 = vshll.u32 %v2748, 16
      %v2914 = vrot.slane %v2912, 5
      %v2915 = vsel %vm522, %v2910, %v2914
      %v2916 = vshrl.u32 %v2748, 16
      %v2918 = vrot.slane %v2916, 4
      %v2919 = vor.u32 %v2918, %v2914
      %v2920 = vrot.slane %v2919, 4
      %v2922 = vshll.u32 %v2749, 16
      %v2924 = vrot.slane %v2922, 5
      %v2925 = vsel %vm522, %v2920, %v2924
      %v2926 = vshrl.u32 %v2749, 16
      %v2928 = vrot.slane %v2926, 4
      %v2929 = vor.u32 %v2928, %v2924
      %v2930 = vrot.slane %v2929, 4
      %2931 = vrot.lane.b32.xlu0 %v2815, 24
      %v2932 = vpop.permute.xlu0 %2931
      %2933 = vrot.lane.b32.xlu0 %v2825, 24
      %v2934 = vpop.permute.xlu0 %2933
      %2935 = vrot.lane.b32.xlu0 %v2835, 24
      %v2936 = vpop.permute.xlu0 %2935
      %2937 = vrot.lane.b32.xlu0 %v2845, 24
      %v2938 = vpop.permute.xlu0 %2937
      %2939 = vrot.lane.b32.xlu0 %v2855, 24
      %v2940 = vpop.permute.xlu0 %2939
      %2941 = vrot.lane.b32.xlu0 %v2865, 24
      %v2942 = vpop.permute.xlu0 %2941
      %2943 = vrot.lane.b32.xlu0 %v2875, 24
      %v2944 = vpop.permute.xlu0 %2943
      %2945 = vrot.lane.b32.xlu0 %v2885, 24
      %v2946 = vpop.permute.xlu0 %2945
      %2947 = vrot.lane.b32.xlu0 %v2895, 24
      %v2948 = vpop.permute.xlu0 %2947
      %2949 = vrot.lane.b32.xlu0 %v2905, 24
      %v2950 = vpop.permute.xlu0 %2949
      %2951 = vrot.lane.b32.xlu0 %v2915, 24
      %v2952 = vpop.permute.xlu0 %2951
      %2953 = vrot.lane.b32.xlu0 %v2925, 24
      %v2954 = vpop.permute.xlu0 %2953
      %2955 = vrot.lane.b32.xlu0 %v2930, 24
      %v2956 = vpop.permute.xlu0 %2955
      %2970 = vst.msk [vmem:[#allocation2 + $0x4] sm:$0xf] %vm918, %v2932
      %2971 = vst.msk [vmem:[#allocation2 + $0xc] sm:$0xf] %vm918, %v2934
      %2972 = vst.msk [vmem:[#allocation2 + $0x14] sm:$0xf] %vm918, %v2936
      %2973 = vst.msk [vmem:[#allocation2 + $0x1c] sm:$0xf] %vm918, %v2938
      %2974 = vst.msk [vmem:[#allocation2 + $0x24] sm:$0xf] %vm918, %v2940
      %2975 = vst.msk [vmem:[#allocation2 + $0x2c] sm:$0xf] %vm918, %v2942
      %2976 = vst.msk [vmem:[#allocation2 + $0x34] sm:$0xf] %vm918, %v2944
      %2977 = vst.msk [vmem:[#allocation2 + $0x3c] sm:$0xf] %vm918, %v2946
      %2978 = vst.msk [vmem:[#allocation2 + $0x44] sm:$0xf] %vm918, %v2948
      %2979 = vst.msk [vmem:[#allocation2 + $0x4c] sm:$0xf] %vm918, %v2950
      %2980 = vst.msk [vmem:[#allocation2 + $0x54] sm:$0xf] %vm918, %v2952
      %2981 = vst.msk [vmem:[#allocation2 + $0x5c] sm:$0xf] %vm918, %v2954
      %2982 = vst.msk [vmem:[#allocation2 + $0x64] sm:$0x3] %vm931, %v2956
      %v2983 = vrot.slane %v2737, 5
      %v2984 = vrot.slane %v2983, 4
      %v2985 = vrot.slane %v2738, 5
      %v2986 = vsel %vm708, %v2984, %v2985
      %v2987 = vrot.slane %v2985, 4
      %v2988 = vrot.slane %v2739, 5
      %v2989 = vsel %vm708, %v2987, %v2988
      %v2990 = vrot.slane %v2988, 4
      %v2991 = vrot.slane %v2740, 5
      %v2992 = vsel %vm708, %v2990, %v2991
      %v2993 = vrot.slane %v2991, 4
      %v2994 = vrot.slane %v2741, 5
      %v2995 = vsel %vm708, %v2993, %v2994
      %v2996 = vrot.slane %v2994, 4
      %v2997 = vrot.slane %v2742, 5
      %v2998 = vsel %vm708, %v2996, %v2997
      %v2999 = vrot.slane %v2997, 4
      %v3000 = vrot.slane %v2743, 5
      %v3001 = vsel %vm708, %v2999, %v3000
      %v3002 = vrot.slane %v3000, 4
      %v3003 = vrot.slane %v2744, 5
      %v3004 = vsel %vm708, %v3002, %v3003
      %v3005 = vrot.slane %v3003, 4
      %v3006 = vrot.slane %v2745, 5
      %v3007 = vsel %vm708, %v3005, %v3006
      %v3008 = vrot.slane %v3006, 4
      %v3009 = vrot.slane %v2746, 5
      %v3010 = vsel %vm708, %v3008, %v3009
      %v3011 = vrot.slane %v3009, 4
      %v3012 = vrot.slane %v2747, 5
      %v3013 = vsel %vm708, %v3011, %v3012
      %v3014 = vrot.slane %v3012, 4
      %v3015 = vrot.slane %v2748, 5
      %v3016 = vsel %vm708, %v3014, %v3015
      %v3017 = vrot.slane %v3015, 4
      %v3018 = vrot.slane %v2749, 5
      %v3019 = vsel %vm708, %v3017, %v3018
      %v3020 = vrot.slane %v3018, 4
      %3021 = vrot.lane.b32.xlu0 %v2986, 32
      %v3022 = vpop.permute.xlu0 %3021
      %3023 = vrot.lane.b32.xlu0 %v2989, 32
      %v3024 = vpop.permute.xlu0 %3023
      %3025 = vrot.lane.b32.xlu0 %v2992, 32
      %v3026 = vpop.permute.xlu0 %3025
      %3027 = vrot.lane.b32.xlu0 %v2995, 32
      %v3028 = vpop.permute.xlu0 %3027
      %3029 = vrot.lane.b32.xlu0 %v2998, 32
      %v3030 = vpop.permute.xlu0 %3029
      %3031 = vrot.lane.b32.xlu0 %v3001, 32
      %v3032 = vpop.permute.xlu0 %3031
      %3033 = vrot.lane.b32.xlu0 %v3004, 32
      %v3034 = vpop.permute.xlu0 %3033
      %3035 = vrot.lane.b32.xlu0 %v3007, 32
      %v3036 = vpop.permute.xlu0 %3035
      %3037 = vrot.lane.b32.xlu0 %v3010, 32
      %v3038 = vpop.permute.xlu0 %3037
      %3039 = vrot.lane.b32.xlu0 %v3013, 32
      %v3040 = vpop.permute.xlu0 %3039
      %3041 = vrot.lane.b32.xlu0 %v3016, 32
      %v3042 = vpop.permute.xlu0 %3041
      %3043 = vrot.lane.b32.xlu0 %v3019, 32
      %v3044 = vpop.permute.xlu0 %3043
      %3045 = vrot.lane.b32.xlu0 %v3020, 32
      %v3046 = vpop.permute.xlu0 %3045
      %3060 = vst.msk [vmem:[#allocation2 + $0x4] sm:$0xf] %vm1104, %v3022
      %3061 = vst.msk [vmem:[#allocation2 + $0xc] sm:$0xf] %vm1104, %v3024
      %3062 = vst.msk [vmem:[#allocation2 + $0x14] sm:$0xf] %vm1104, %v3026
      %3063 = vst.msk [vmem:[#allocation2 + $0x1c] sm:$0xf] %vm1104, %v3028
      %3064 = vst.msk [vmem:[#allocation2 + $0x24] sm:$0xf] %vm1104, %v3030
      %3065 = vst.msk [vmem:[#allocation2 + $0x2c] sm:$0xf] %vm1104, %v3032
      %3066 = vst.msk [vmem:[#allocation2 + $0x34] sm:$0xf] %vm1104, %v3034
      %3067 = vst.msk [vmem:[#allocation2 + $0x3c] sm:$0xf] %vm1104, %v3036
      %3068 = vst.msk [vmem:[#allocation2 + $0x44] sm:$0xf] %vm1104, %v3038
      %3069 = vst.msk [vmem:[#allocation2 + $0x4c] sm:$0xf] %vm1104, %v3040
      %3070 = vst.msk [vmem:[#allocation2 + $0x54] sm:$0xf] %vm1104, %v3042
      %3071 = vst.msk [vmem:[#allocation2 + $0x5c] sm:$0xf] %vm1104, %v3044
      %3072 = vst.msk [vmem:[#allocation2 + $0x64] sm:$0x3] %vm1117, %v3046
      %v3073 = vpack.c.bf16 %v2696, %v2695
      %v3074 = vpack.c.bf16 %v2698, %v2697
      %v3075 = vpack.c.bf16 %v2700, %v2699
      %v3076 = vpack.c.bf16 %v2702, %v2701
      %v3077 = vpack.c.bf16 %v2704, %v2703
      %v3078 = vpack.c.bf16 %v2706, %v2705
      %v3079 = vpack.c.bf16 %v2707, %v2707
      %v3087 = vunpack.c.l.b16 %v3073
      %v3088 = vunpack.c.h.b16 %v3073
      %v3089 = vunpack.c.l.b16 %v3074
      %v3090 = vunpack.c.h.b16 %v3074
      %v3091 = vunpack.c.l.b16 %v3075
      %v3092 = vunpack.c.h.b16 %v3075
      %v3093 = vunpack.c.l.b16 %v3076
      %v3094 = vunpack.c.h.b16 %v3076
      %v3095 = vunpack.c.l.b16 %v3077
      %v3096 = vunpack.c.h.b16 %v3077
      %v3097 = vunpack.c.l.b16 %v3078
      %v3098 = vunpack.c.h.b16 %v3078
      %v3099 = vunpack.c.l.b16 %v3079
      %v3100 = vpack.c.b16 %v3087, %v3087
      %v3101 = vpack.c.b16 %v3088, %v3088
      %v3102 = vpack.c.b16 %v3089, %v3089
      %v3103 = vpack.c.b16 %v3090, %v3090
      %v3104 = vpack.c.b16 %v3091, %v3091
      %v3105 = vpack.c.b16 %v3092, %v3092
      %v3106 = vpack.c.b16 %v3093, %v3093
      %v3107 = vpack.c.b16 %v3094, %v3094
      %v3108 = vpack.c.b16 %v3095, %v3095
      %v3109 = vpack.c.b16 %v3096, %v3096
      %v3110 = vpack.c.b16 %v3097, %v3097
      %v3111 = vpack.c.b16 %v3098, %v3098
      %v3112 = vpack.c.b16 %v3099, %v3099
      %v3113 = vrot.slane %v3100, 5
      %v3114 = vrot.slane %v3113, 4
      %v3115 = vrot.slane %v3101, 5
      %v3116 = vsel %vm708, %v3114, %v3115
      %v3117 = vrot.slane %v3115, 4
      %v3118 = vrot.slane %v3102, 5
      %v3119 = vsel %vm708, %v3117, %v3118
      %v3120 = vrot.slane %v3118, 4
      %v3121 = vrot.slane %v3103, 5
      %v3122 = vsel %vm708, %v3120, %v3121
      %v3123 = vrot.slane %v3121, 4
      %v3124 = vrot.slane %v3104, 5
      %v3125 = vsel %vm708, %v3123, %v3124
      %v3126 = vrot.slane %v3124, 4
      %v3127 = vrot.slane %v3105, 5
      %v3128 = vsel %vm708, %v3126, %v3127
      %v3129 = vrot.slane %v3127, 4
      %v3130 = vrot.slane %v3106, 5
      %v3131 = vsel %vm708, %v3129, %v3130
      %v3132 = vrot.slane %v3130, 4
      %v3133 = vrot.slane %v3107, 5
      %v3134 = vsel %vm708, %v3132, %v3133
      %v3135 = vrot.slane %v3133, 4
      %v3136 = vrot.slane %v3108, 5
      %v3137 = vsel %vm708, %v3135, %v3136
      %v3138 = vrot.slane %v3136, 4
      %v3139 = vrot.slane %v3109, 5
      %v3140 = vsel %vm708, %v3138, %v3139
      %v3141 = vrot.slane %v3139, 4
      %v3142 = vrot.slane %v3110, 5
      %v3143 = vsel %vm708, %v3141, %v3142
      %v3144 = vrot.slane %v3142, 4
      %v3145 = vrot.slane %v3111, 5
      %v3146 = vsel %vm708, %v3144, %v3145
      %v3147 = vrot.slane %v3145, 4
      %v3148 = vrot.slane %v3112, 5
      %v3149 = vsel %vm708, %v3147, %v3148
      %v3150 = vrot.slane %v3148, 4
      %3151 = vrot.lane.b32.xlu0 %v3116, 40
      %v3152 = vpop.permute.xlu0 %3151
      %3153 = vrot.lane.b32.xlu0 %v3119, 40
      %v3154 = vpop.permute.xlu0 %3153
      %3155 = vrot.lane.b32.xlu0 %v3122, 40
      %v3156 = vpop.permute.xlu0 %3155
      %3157 = vrot.lane.b32.xlu0 %v3125, 40
      %v3158 = vpop.permute.xlu0 %3157
      %3159 = vrot.lane.b32.xlu0 %v3128, 40
      %v3160 = vpop.permute.xlu0 %3159
      %3161 = vrot.lane.b32.xlu0 %v3131, 40
      %v3162 = vpop.permute.xlu0 %3161
      %3163 = vrot.lane.b32.xlu0 %v3134, 40
      %v3164 = vpop.permute.xlu0 %3163
      %3165 = vrot.lane.b32.xlu0 %v3137, 40
      %v3166 = vpop.permute.xlu0 %3165
      %3167 = vrot.lane.b32.xlu0 %v3140, 40
      %v3168 = vpop.permute.xlu0 %3167
      %3169 = vrot.lane.b32.xlu0 %v3143, 40
      %v3170 = vpop.permute.xlu0 %3169
      %3171 = vrot.lane.b32.xlu0 %v3146, 40
      %v3172 = vpop.permute.xlu0 %3171
      %3173 = vrot.lane.b32.xlu0 %v3149, 40
      %v3174 = vpop.permute.xlu0 %3173
      %3175 = vrot.lane.b32.xlu0 %v3150, 40
      %v3176 = vpop.permute.xlu0 %3175
      %3190 = vst.msk [vmem:[#allocation2 + $0x4] sm:$0xf] %vm1199, %v3152
      %3191 = vst.msk [vmem:[#allocation2 + $0xc] sm:$0xf] %vm1199, %v3154
      %3192 = vst.msk [vmem:[#allocation2 + $0x14] sm:$0xf] %vm1199, %v3156
      %3193 = vst.msk [vmem:[#allocation2 + $0x1c] sm:$0xf] %vm1199, %v3158
      %3194 = vst.msk [vmem:[#allocation2 + $0x24] sm:$0xf] %vm1199, %v3160
      %3195 = vst.msk [vmem:[#allocation2 + $0x2c] sm:$0xf] %vm1199, %v3162
      %3196 = vst.msk [vmem:[#allocation2 + $0x34] sm:$0xf] %vm1199, %v3164
      %3197 = vst.msk [vmem:[#allocation2 + $0x3c] sm:$0xf] %vm1199, %v3166
      %3198 = vst.msk [vmem:[#allocation2 + $0x44] sm:$0xf] %vm1199, %v3168
      %3199 = vst.msk [vmem:[#allocation2 + $0x4c] sm:$0xf] %vm1199, %v3170
      %3200 = vst.msk [vmem:[#allocation2 + $0x54] sm:$0xf] %vm1199, %v3172
      %3201 = vst.msk [vmem:[#allocation2 + $0x5c] sm:$0xf] %vm1199, %v3174
      %3202 = vst.msk [vmem:[#allocation2 + $0x64] sm:$0x3] %vm1212, %v3176
      %v3204 = vshrl.u32 %v3100, 16
      %v3206 = vrot.slane %v3204, 5
      %v3207 = vshll.u32 %v3100, 16
      %v3209 = vrot.slane %v3207, 6
      %v3210 = vor.u32 %v3206, %v3209
      %v3211 = vrot.slane %v3210, 4
      %v3213 = vshrl.u32 %v3101, 16
      %v3215 = vrot.slane %v3213, 5
      %v3216 = vshll.u32 %v3101, 16
      %v3218 = vrot.slane %v3216, 6
      %v3219 = vor.u32 %v3215, %v3218
      %v3220 = vsel %vm935, %v3211, %v3219
      %v3221 = vrot.slane %v3219, 4
      %v3223 = vshrl.u32 %v3102, 16
      %v3225 = vrot.slane %v3223, 5
      %v3226 = vshll.u32 %v3102, 16
      %v3228 = vrot.slane %v3226, 6
      %v3229 = vor.u32 %v3225, %v3228
      %v3230 = vsel %vm935, %v3221, %v3229
      %v3231 = vrot.slane %v3229, 4
      %v3233 = vshrl.u32 %v3103, 16
      %v3235 = vrot.slane %v3233, 5
      %v3236 = vshll.u32 %v3103, 16
      %v3238 = vrot.slane %v3236, 6
      %v3239 = vor.u32 %v3235, %v3238
      %v3240 = vsel %vm935, %v3231, %v3239
      %v3241 = vrot.slane %v3239, 4
      %v3243 = vshrl.u32 %v3104, 16
      %v3245 = vrot.slane %v3243, 5
      %v3246 = vshll.u32 %v3104, 16
      %v3248 = vrot.slane %v3246, 6
      %v3249 = vor.u32 %v3245, %v3248
      %v3250 = vsel %vm935, %v3241, %v3249
      %v3251 = vrot.slane %v3249, 4
      %v3253 = vshrl.u32 %v3105, 16
      %v3255 = vrot.slane %v3253, 5
      %v3256 = vshll.u32 %v3105, 16
      %v3258 = vrot.slane %v3256, 6
      %v3259 = vor.u32 %v3255, %v3258
      %v3260 = vsel %vm935, %v3251, %v3259
      %v3261 = vrot.slane %v3259, 4
      %v3263 = vshrl.u32 %v3106, 16
      %v3265 = vrot.slane %v3263, 5
      %v3266 = vshll.u32 %v3106, 16
      %v3268 = vrot.slane %v3266, 6
      %v3269 = vor.u32 %v3265, %v3268
      %v3270 = vsel %vm935, %v3261, %v3269
      %v3271 = vrot.slane %v3269, 4
      %v3273 = vshrl.u32 %v3107, 16
      %v3275 = vrot.slane %v3273, 5
      %v3276 = vshll.u32 %v3107, 16
      %v3278 = vrot.slane %v3276, 6
      %v3279 = vor.u32 %v3275, %v3278
      %v3280 = vsel %vm935, %v3271, %v3279
      %v3281 = vrot.slane %v3279, 4
      %v3283 = vshrl.u32 %v3108, 16
      %v3285 = vrot.slane %v3283, 5
      %v3286 = vshll.u32 %v3108, 16
      %v3288 = vrot.slane %v3286, 6
      %v3289 = vor.u32 %v3285, %v3288
      %v3290 = vsel %vm935, %v3281, %v3289
      %v3291 = vrot.slane %v3289, 4
      %v3293 = vshrl.u32 %v3109, 16
      %v3295 = vrot.slane %v3293, 5
      %v3296 = vshll.u32 %v3109, 16
      %v3298 = vrot.slane %v3296, 6
      %v3299 = vor.u32 %v3295, %v3298
      %v3300 = vsel %vm935, %v3291, %v3299
      %v3301 = vrot.slane %v3299, 4
      %v3303 = vshrl.u32 %v3110, 16
      %v3305 = vrot.slane %v3303, 5
      %v3306 = vshll.u32 %v3110, 16
      %v3308 = vrot.slane %v3306, 6
      %v3309 = vor.u32 %v3305, %v3308
      %v3310 = vsel %vm935, %v3301, %v3309
      %v3311 = vrot.slane %v3309, 4
      %v3313 = vshrl.u32 %v3111, 16
      %v3315 = vrot.slane %v3313, 5
      %v3316 = vshll.u32 %v3111, 16
      %v3318 = vrot.slane %v3316, 6
      %v3319 = vor.u32 %v3315, %v3318
      %v3320 = vsel %vm935, %v3311, %v3319
      %v3321 = vrot.slane %v3319, 4
      %v3323 = vshrl.u32 %v3112, 16
      %v3325 = vrot.slane %v3323, 5
      %v3326 = vshll.u32 %v3112, 16
      %v3328 = vrot.slane %v3326, 6
      %v3329 = vor.u32 %v3325, %v3328
      %v3330 = vsel %vm935, %v3321, %v3329
      %v3331 = vrot.slane %v3329, 4
      %3332 = vrot.lane.b32.xlu0 %v3220, 48
      %v3333 = vpop.permute.xlu0 %3332
      %3334 = vrot.lane.b32.xlu0 %v3230, 48
      %v3335 = vpop.permute.xlu0 %3334
      %3336 = vrot.lane.b32.xlu0 %v3240, 48
      %v3337 = vpop.permute.xlu0 %3336
      %3338 = vrot.lane.b32.xlu0 %v3250, 48
      %v3339 = vpop.permute.xlu0 %3338
      %3340 = vrot.lane.b32.xlu0 %v3260, 48
      %v3341 = vpop.permute.xlu0 %3340
      %3342 = vrot.lane.b32.xlu0 %v3270, 48
      %v3343 = vpop.permute.xlu0 %3342
      %3344 = vrot.lane.b32.xlu0 %v3280, 48
      %v3345 = vpop.permute.xlu0 %3344
      %3346 = vrot.lane.b32.xlu0 %v3290, 48
      %v3347 = vpop.permute.xlu0 %3346
      %3348 = vrot.lane.b32.xlu0 %v3300, 48
      %v3349 = vpop.permute.xlu0 %3348
      %3350 = vrot.lane.b32.xlu0 %v3310, 48
      %v3351 = vpop.permute.xlu0 %3350
      %3352 = vrot.lane.b32.xlu0 %v3320, 48
      %v3353 = vpop.permute.xlu0 %3352
      %3354 = vrot.lane.b32.xlu0 %v3330, 48
      %v3355 = vpop.permute.xlu0 %3354
      %3356 = vrot.lane.b32.xlu0 %v3331, 48
      %v3357 = vpop.permute.xlu0 %3356
      %3371 = vst.msk [vmem:[#allocation2 + $0x4] sm:$0xf] %vm1301, %v3333
      %3372 = vst.msk [vmem:[#allocation2 + $0xc] sm:$0xf] %vm1301, %v3335
      %3373 = vst.msk [vmem:[#allocation2 + $0x14] sm:$0xf] %vm1301, %v3337
      %3374 = vst.msk [vmem:[#allocation2 + $0x1c] sm:$0xf] %vm1301, %v3339
      %3375 = vst.msk [vmem:[#allocation2 + $0x24] sm:$0xf] %vm1301, %v3341
      %3376 = vst.msk [vmem:[#allocation2 + $0x2c] sm:$0xf] %vm1301, %v3343
      %3377 = vst.msk [vmem:[#allocation2 + $0x34] sm:$0xf] %vm1301, %v3345
      %3378 = vst.msk [vmem:[#allocation2 + $0x3c] sm:$0xf] %vm1301, %v3347
      %3379 = vst.msk [vmem:[#allocation2 + $0x44] sm:$0xf] %vm1301, %v3349
      %3380 = vst.msk [vmem:[#allocation2 + $0x4c] sm:$0xf] %vm1301, %v3351
      %3381 = vst.msk [vmem:[#allocation2 + $0x54] sm:$0xf] %vm1301, %v3353
      %3382 = vst.msk [vmem:[#allocation2 + $0x5c] sm:$0xf] %vm1301, %v3355
      %3383 = vst.msk [vmem:[#allocation2 + $0x64] sm:$0x3] %vm1314, %v3357
      %v3384 = vrot.slane %v3100, 6
      %v3385 = vrot.slane %v3384, 4
      %v3386 = vrot.slane %v3101, 6
      %v3387 = vsel %vm1121, %v3385, %v3386
      %v3388 = vrot.slane %v3386, 4
      %v3389 = vrot.slane %v3102, 6
      %v3390 = vsel %vm1121, %v3388, %v3389
      %v3391 = vrot.slane %v3389, 4
      %v3392 = vrot.slane %v3103, 6
      %v3393 = vsel %vm1121, %v3391, %v3392
      %v3394 = vrot.slane %v3392, 4
      %v3395 = vrot.slane %v3104, 6
      %v3396 = vsel %vm1121, %v3394, %v3395
      %v3397 = vrot.slane %v3395, 4
      %v3398 = vrot.slane %v3105, 6
      %v3399 = vsel %vm1121, %v3397, %v3398
      %v3400 = vrot.slane %v3398, 4
      %v3401 = vrot.slane %v3106, 6
      %v3402 = vsel %vm1121, %v3400, %v3401
      %v3403 = vrot.slane %v3401, 4
      %v3404 = vrot.slane %v3107, 6
      %v3405 = vsel %vm1121, %v3403, %v3404
      %v3406 = vrot.slane %v3404, 4
      %v3407 = vrot.slane %v3108, 6
      %v3408 = vsel %vm1121, %v3406, %v3407
      %v3409 = vrot.slane %v3407, 4
      %v3410 = vrot.slane %v3109, 6
      %v3411 = vsel %vm1121, %v3409, %v3410
      %v3412 = vrot.slane %v3410, 4
      %v3413 = vrot.slane %v3110, 6
      %v3414 = vsel %vm1121, %v3412, %v3413
      %v3415 = vrot.slane %v3413, 4
      %v3416 = vrot.slane %v3111, 6
      %v3417 = vsel %vm1121, %v3415, %v3416
      %v3418 = vrot.slane %v3416, 4
      %v3419 = vrot.slane %v3112, 6
      %v3420 = vsel %vm1121, %v3418, %v3419
      %v3421 = vrot.slane %v3419, 4
      %3422 = vrot.lane.b32.xlu0 %v3387, 56
      %v3423 = vpop.permute.xlu0 %3422
      %3424 = vrot.lane.b32.xlu0 %v3390, 56
      %v3425 = vpop.permute.xlu0 %3424
      %3426 = vrot.lane.b32.xlu0 %v3393, 56
      %v3427 = vpop.permute.xlu0 %3426
      %3428 = vrot.lane.b32.xlu0 %v3396, 56
      %v3429 = vpop.permute.xlu0 %3428
      %3430 = vrot.lane.b32.xlu0 %v3399, 56
      %v3431 = vpop.permute.xlu0 %3430
      %3432 = vrot.lane.b32.xlu0 %v3402, 56
      %v3433 = vpop.permute.xlu0 %3432
      %3434 = vrot.lane.b32.xlu0 %v3405, 56
      %v3435 = vpop.permute.xlu0 %3434
      %3436 = vrot.lane.b32.xlu0 %v3408, 56
      %v3437 = vpop.permute.xlu0 %3436
      %3438 = vrot.lane.b32.xlu0 %v3411, 56
      %v3439 = vpop.permute.xlu0 %3438
      %3440 = vrot.lane.b32.xlu0 %v3414, 56
      %v3441 = vpop.permute.xlu0 %3440
      %3442 = vrot.lane.b32.xlu0 %v3417, 56
      %v3443 = vpop.permute.xlu0 %3442
      %3444 = vrot.lane.b32.xlu0 %v3420, 56
      %v3445 = vpop.permute.xlu0 %3444
      %3446 = vrot.lane.b32.xlu0 %v3421, 56
      %v3447 = vpop.permute.xlu0 %3446
      %3461 = vst.msk [vmem:[#allocation2 + $0x4] sm:$0xf] %vm1448, %v3423
      %3462 = vst.msk [vmem:[#allocation2 + $0xc] sm:$0xf] %vm1448, %v3425
      %3463 = vst.msk [vmem:[#allocation2 + $0x14] sm:$0xf] %vm1448, %v3427
      %3464 = vst.msk [vmem:[#allocation2 + $0x1c] sm:$0xf] %vm1448, %v3429
      %3465 = vst.msk [vmem:[#allocation2 + $0x24] sm:$0xf] %vm1448, %v3431
      %3466 = vst.msk [vmem:[#allocation2 + $0x2c] sm:$0xf] %vm1448, %v3433
      %3467 = vst.msk [vmem:[#allocation2 + $0x34] sm:$0xf] %vm1448, %v3435
      %3468 = vst.msk [vmem:[#allocation2 + $0x3c] sm:$0xf] %vm1448, %v3437
      %3469 = vst.msk [vmem:[#allocation2 + $0x44] sm:$0xf] %vm1448, %v3439
      %3470 = vst.msk [vmem:[#allocation2 + $0x4c] sm:$0xf] %vm1448, %v3441
      %3471 = vst.msk [vmem:[#allocation2 + $0x54] sm:$0xf] %vm1448, %v3443
      %3472 = vst.msk [vmem:[#allocation2 + $0x5c] sm:$0xf] %vm1448, %v3445
      %3473 = vst.msk [vmem:[#allocation2 + $0x64] sm:$0x3] %vm1461, %v3447
      %v3474 = vpack.c.bf16 %v2707, %v2706
      %v3475 = vpack.c.bf16 %v2708, %v2708
      %v3478 = vunpack.c.l.b16 %v3474
      %v3479 = vunpack.c.h.b16 %v3474
      %v3480 = vunpack.c.l.b16 %v3475
      %v3481 = vpack.c.b16 %v3478, %v3478
      %v3482 = vpack.c.b16 %v3479, %v3479
      %v3483 = vpack.c.b16 %v3480, %v3480
      %v3484 = vrot.slane %v2739, 6
      %v3485 = vrot.slane %v3484, 4
      %v3486 = vrot.slane %v2740, 6
      %v3487 = vsel %vm1121, %v3485, %v3486
      %v3488 = vrot.slane %v3486, 4
      %v3489 = vrot.slane %v2741, 6
      %v3490 = vsel %vm1121, %v3488, %v3489
      %v3491 = vrot.slane %v3489, 4
      %v3492 = vrot.slane %v2742, 6
      %v3493 = vsel %vm1121, %v3491, %v3492
      %v3494 = vrot.slane %v3492, 4
      %v3495 = vrot.slane %v2743, 6
      %v3496 = vsel %vm1121, %v3494, %v3495
      %v3497 = vrot.slane %v3495, 4
      %v3498 = vrot.slane %v2744, 6
      %v3499 = vsel %vm1121, %v3497, %v3498
      %v3500 = vrot.slane %v3498, 4
      %v3501 = vrot.slane %v2745, 6
      %v3502 = vsel %vm1121, %v3500, %v3501
      %v3503 = vrot.slane %v3501, 4
      %v3504 = vrot.slane %v2746, 6
      %v3505 = vsel %vm1121, %v3503, %v3504
      %v3506 = vrot.slane %v3504, 4
      %v3507 = vrot.slane %v2747, 6
      %v3508 = vsel %vm1121, %v3506, %v3507
      %v3509 = vrot.slane %v3507, 4
      %v3510 = vrot.slane %v2748, 6
      %v3511 = vsel %vm1121, %v3509, %v3510
      %v3512 = vrot.slane %v3510, 4
      %v3513 = vrot.slane %v3481, 6
      %v3514 = vsel %vm1121, %v3512, %v3513
      %v3515 = vrot.slane %v3513, 4
      %v3516 = vrot.slane %v3482, 6
      %v3517 = vsel %vm1121, %v3515, %v3516
      %v3518 = vrot.slane %v3516, 4
      %v3519 = vrot.slane %v3483, 6
      %v3520 = vsel %vm1121, %v3518, %v3519
      %v3521 = vrot.slane %v3519, 4
      %3522 = vrot.lane.b32.xlu0 %v3487, 64
      %v3523 = vpop.permute.xlu0 %3522
      %3524 = vrot.lane.b32.xlu0 %v3490, 64
      %v3525 = vpop.permute.xlu0 %3524
      %3526 = vrot.lane.b32.xlu0 %v3493, 64
      %v3527 = vpop.permute.xlu0 %3526
      %3528 = vrot.lane.b32.xlu0 %v3496, 64
      %v3529 = vpop.permute.xlu0 %3528
      %3530 = vrot.lane.b32.xlu0 %v3499, 64
      %v3531 = vpop.permute.xlu0 %3530
      %3532 = vrot.lane.b32.xlu0 %v3502, 64
      %v3533 = vpop.permute.xlu0 %3532
      %3534 = vrot.lane.b32.xlu0 %v3505, 64
      %v3535 = vpop.permute.xlu0 %3534
      %3536 = vrot.lane.b32.xlu0 %v3508, 64
      %v3537 = vpop.permute.xlu0 %3536
      %3538 = vrot.lane.b32.xlu0 %v3511, 64
      %v3539 = vpop.permute.xlu0 %3538
      %3540 = vrot.lane.b32.xlu0 %v3514, 64
      %v3541 = vpop.permute.xlu0 %3540
      %3542 = vrot.lane.b32.xlu0 %v3517, 64
      %v3543 = vpop.permute.xlu0 %3542
      %3544 = vrot.lane.b32.xlu0 %v3520, 64
      %v3545 = vpop.permute.xlu0 %3544
      %3546 = vrot.lane.b32.xlu0 %v3521, 64
      %v3547 = vpop.permute.xlu0 %3546
      %3561 = vst.msk [vmem:[#allocation2 + $0x4] sm:$0xf] %vm1545, %v3523
      %3562 = vst.msk [vmem:[#allocation2 + $0xc] sm:$0xf] %vm1545, %v3525
      %3563 = vst.msk [vmem:[#allocation2 + $0x14] sm:$0xf] %vm1545, %v3527
      %3564 = vst.msk [vmem:[#allocation2 + $0x1c] sm:$0xf] %vm1545, %v3529
      %3565 = vst.msk [vmem:[#allocation2 + $0x24] sm:$0xf] %vm1545, %v3531
      %3566 = vst.msk [vmem:[#allocation2 + $0x2c] sm:$0xf] %vm1545, %v3533
      %3567 = vst.msk [vmem:[#allocation2 + $0x34] sm:$0xf] %vm1545, %v3535
      %3568 = vst.msk [vmem:[#allocation2 + $0x3c] sm:$0xf] %vm1545, %v3537
      %3569 = vst.msk [vmem:[#allocation2 + $0x44] sm:$0xf] %vm1545, %v3539
      %3570 = vst.msk [vmem:[#allocation2 + $0x4c] sm:$0xf] %vm1545, %v3541
      %3571 = vst.msk [vmem:[#allocation2 + $0x54] sm:$0xf] %vm1545, %v3543
      %3572 = vst.msk [vmem:[#allocation2 + $0x5c] sm:$0xf] %vm1545, %v3545
      %3573 = vst.msk [vmem:[#allocation2 + $0x64] sm:$0x3] %vm1558, %v3547
      %v3574 = vpack.c.bf16 %v2709, %v2708
      %v3576 = vunpack.c.l.b16 %v3574
      %v3577 = vunpack.c.h.b16 %v3574
      %v3578 = vpack.c.b16 %v3576, %v3576
      %v3579 = vpack.c.b16 %v3577, %v3577
      %v3580 = vrot.slane %v2826, 6
      %v3581 = vrot.slane %v2822, 7
      %v3582 = vor.u32 %v3580, %v3581
      %v3583 = vrot.slane %v3582, 4
      %v3584 = vrot.slane %v2836, 6
      %v3585 = vrot.slane %v2832, 7
      %v3586 = vor.u32 %v3584, %v3585
      %v3587 = vsel %vm1324, %v3583, %v3586
      %v3588 = vrot.slane %v3586, 4
      %v3589 = vrot.slane %v2846, 6
      %v3590 = vrot.slane %v2842, 7
      %v3591 = vor.u32 %v3589, %v3590
      %v3592 = vsel %vm1324, %v3588, %v3591
      %v3593 = vrot.slane %v3591, 4
      %v3594 = vrot.slane %v2856, 6
      %v3595 = vrot.slane %v2852, 7
      %v3596 = vor.u32 %v3594, %v3595
      %v3597 = vsel %vm1324, %v3593, %v3596
      %v3598 = vrot.slane %v3596, 4
      %v3599 = vrot.slane %v2866, 6
      %v3600 = vrot.slane %v2862, 7
      %v3601 = vor.u32 %v3599, %v3600
      %v3602 = vsel %vm1324, %v3598, %v3601
      %v3603 = vrot.slane %v3601, 4
      %v3604 = vrot.slane %v2876, 6
      %v3605 = vrot.slane %v2872, 7
      %v3606 = vor.u32 %v3604, %v3605
      %v3607 = vsel %vm1324, %v3603, %v3606
      %v3608 = vrot.slane %v3606, 4
      %v3609 = vrot.slane %v2886, 6
      %v3610 = vrot.slane %v2882, 7
      %v3611 = vor.u32 %v3609, %v3610
      %v3612 = vsel %vm1324, %v3608, %v3611
      %v3613 = vrot.slane %v3611, 4
      %v3614 = vrot.slane %v2896, 6
      %v3615 = vrot.slane %v2892, 7
      %v3616 = vor.u32 %v3614, %v3615
      %v3617 = vsel %vm1324, %v3613, %v3616
      %v3618 = vrot.slane %v3616, 4
      %v3619 = vrot.slane %v2906, 6
      %v3620 = vrot.slane %v2902, 7
      %v3621 = vor.u32 %v3619, %v3620
      %v3622 = vsel %vm1324, %v3618, %v3621
      %v3623 = vrot.slane %v3621, 4
      %v3624 = vrot.slane %v2916, 6
      %v3625 = vrot.slane %v2912, 7
      %v3626 = vor.u32 %v3624, %v3625
      %v3627 = vsel %vm1324, %v3623, %v3626
      %v3628 = vrot.slane %v3626, 4
      %v3630 = vshrl.u32 %v3481, 16
      %v3632 = vrot.slane %v3630, 6
      %v3633 = vshll.u32 %v3481, 16
      %v3635 = vrot.slane %v3633, 7
      %v3636 = vor.u32 %v3632, %v3635
      %v3637 = vsel %vm1324, %v3628, %v3636
      %v3638 = vrot.slane %v3636, 4
      %v3640 = vshrl.u32 %v3482, 16
      %v3642 = vrot.slane %v3640, 6
      %v3643 = vshll.u32 %v3482, 16
      %v3645 = vrot.slane %v3643, 7
      %v3646 = vor.u32 %v3642, %v3645
      %v3647 = vsel %vm1324, %v3638, %v3646
      %v3648 = vrot.slane %v3646, 4
      %v3650 = vshrl.u32 %v3578, 16
      %v3652 = vrot.slane %v3650, 6
      %v3653 = vshll.u32 %v3578, 16
      %v3655 = vrot.slane %v3653, 7
      %v3656 = vor.u32 %v3652, %v3655
      %v3657 = vsel %vm1324, %v3648, %v3656
      %v3658 = vrot.slane %v3656, 4
      %v3660 = vshll.u32 %v3579, 16
      %v3662 = vrot.slane %v3660, 7
      %v3663 = vsel %vm1324, %v3658, %v3662
      %3664 = vrot.lane.b32.xlu0 %v3587, 72
      %v3665 = vpop.permute.xlu0 %3664
      %3666 = vrot.lane.b32.xlu0 %v3592, 72
      %v3667 = vpop.permute.xlu0 %3666
      %3668 = vrot.lane.b32.xlu0 %v3597, 72
      %v3669 = vpop.permute.xlu0 %3668
      %3670 = vrot.lane.b32.xlu0 %v3602, 72
      %v3671 = vpop.permute.xlu0 %3670
      %3672 = vrot.lane.b32.xlu0 %v3607, 72
      %v3673 = vpop.permute.xlu0 %3672
      %3674 = vrot.lane.b32.xlu0 %v3612, 72
      %v3675 = vpop.permute.xlu0 %3674
      %3676 = vrot.lane.b32.xlu0 %v3617, 72
      %v3677 = vpop.permute.xlu0 %3676
      %3678 = vrot.lane.b32.xlu0 %v3622, 72
      %v3679 = vpop.permute.xlu0 %3678
      %3680 = vrot.lane.b32.xlu0 %v3627, 72
      %v3681 = vpop.permute.xlu0 %3680
      %3682 = vrot.lane.b32.xlu0 %v3637, 72
      %v3683 = vpop.permute.xlu0 %3682
      %3684 = vrot.lane.b32.xlu0 %v3647, 72
      %v3685 = vpop.permute.xlu0 %3684
      %3686 = vrot.lane.b32.xlu0 %v3657, 72
      %v3687 = vpop.permute.xlu0 %3686
      %3688 = vrot.lane.b32.xlu0 %v3663, 72
      %v3689 = vpop.permute.xlu0 %3688
      %3703 = vst.msk [vmem:[#allocation2 + $0x4] sm:$0xf] %vm1671, %v3665
      %3704 = vst.msk [vmem:[#allocation2 + $0xc] sm:$0xf] %vm1671, %v3667
      %3705 = vst.msk [vmem:[#allocation2 + $0x14] sm:$0xf] %vm1671, %v3669
      %3706 = vst.msk [vmem:[#allocation2 + $0x1c] sm:$0xf] %vm1671, %v3671
      %3707 = vst.msk [vmem:[#allocation2 + $0x24] sm:$0xf] %vm1671, %v3673
      %3708 = vst.msk [vmem:[#allocation2 + $0x2c] sm:$0xf] %vm1671, %v3675
      %3709 = vst.msk [vmem:[#allocation2 + $0x34] sm:$0xf] %vm1671, %v3677
      %3710 = vst.msk [vmem:[#allocation2 + $0x3c] sm:$0xf] %vm1671, %v3679
      %3711 = vst.msk [vmem:[#allocation2 + $0x44] sm:$0xf] %vm1671, %v3681
      %3712 = vst.msk [vmem:[#allocation2 + $0x4c] sm:$0xf] %vm1671, %v3683
      %3713 = vst.msk [vmem:[#allocation2 + $0x54] sm:$0xf] %vm1671, %v3685
      %3714 = vst.msk [vmem:[#allocation2 + $0x5c] sm:$0xf] %vm1671, %v3687
      %3715 = vst.msk [vmem:[#allocation2 + $0x64] sm:$0x3] %vm1684, %v3689
      %v3716 = vrot.slane %v2739, 7
      %v3717 = vrot.slane %v3716, 4
      %v3718 = vrot.slane %v2740, 7
      %v3719 = vsel %vm1465, %v3717, %v3718
      %v3720 = vrot.slane %v3718, 4
      %v3721 = vrot.slane %v2741, 7
      %v3722 = vsel %vm1465, %v3720, %v3721
      %v3723 = vrot.slane %v3721, 4
      %v3724 = vrot.slane %v2742, 7
      %v3725 = vsel %vm1465, %v3723, %v3724
      %v3726 = vrot.slane %v3724, 4
      %v3727 = vrot.slane %v2743, 7
      %v3728 = vsel %vm1465, %v3726, %v3727
      %v3729 = vrot.slane %v3727, 4
      %v3730 = vrot.slane %v2744, 7
      %v3731 = vsel %vm1465, %v3729, %v3730
      %v3732 = vrot.slane %v3730, 4
      %v3733 = vrot.slane %v2745, 7
      %v3734 = vsel %vm1465, %v3732, %v3733
      %v3735 = vrot.slane %v3733, 4
      %v3736 = vrot.slane %v2746, 7
      %v3737 = vsel %vm1465, %v3735, %v3736
      %v3738 = vrot.slane %v3736, 4
      %v3739 = vrot.slane %v2747, 7
      %v3740 = vsel %vm1465, %v3738, %v3739
      %v3741 = vrot.slane %v3739, 4
      %v3742 = vrot.slane %v2748, 7
      %v3743 = vsel %vm1465, %v3741, %v3742
      %v3744 = vrot.slane %v3742, 4
      %v3745 = vrot.slane %v3481, 7
      %v3746 = vsel %vm1465, %v3744, %v3745
      %v3747 = vrot.slane %v3745, 4
      %v3748 = vrot.slane %v3482, 7
      %v3749 = vsel %vm1465, %v3747, %v3748
      %v3750 = vrot.slane %v3748, 4
      %v3751 = vrot.slane %v3578, 7
      %v3752 = vsel %vm1465, %v3750, %v3751
      %v3753 = vrot.slane %v3751, 4
      %v3754 = vrot.slane %v3579, 7
      %v3755 = vsel %vm1465, %v3753, %v3754
      %3756 = vrot.lane.b32.xlu0 %v3719, 80
      %v3757 = vpop.permute.xlu0 %3756
      %3758 = vrot.lane.b32.xlu0 %v3722, 80
      %v3759 = vpop.permute.xlu0 %3758
      %3760 = vrot.lane.b32.xlu0 %v3725, 80
      %v3761 = vpop.permute.xlu0 %3760
      %3762 = vrot.lane.b32.xlu0 %v3728, 80
      %v3763 = vpop.permute.xlu0 %3762
      %3764 = vrot.lane.b32.xlu0 %v3731, 80
      %v3765 = vpop.permute.xlu0 %3764
      %3766 = vrot.lane.b32.xlu0 %v3734, 80
      %v3767 = vpop.permute.xlu0 %3766
      %3768 = vrot.lane.b32.xlu0 %v3737, 80
      %v3769 = vpop.permute.xlu0 %3768
      %3770 = vrot.lane.b32.xlu0 %v3740, 80
      %v3771 = vpop.permute.xlu0 %3770
      %3772 = vrot.lane.b32.xlu0 %v3743, 80
      %v3773 = vpop.permute.xlu0 %3772
      %3774 = vrot.lane.b32.xlu0 %v3746, 80
      %v3775 = vpop.permute.xlu0 %3774
      %3776 = vrot.lane.b32.xlu0 %v3749, 80
      %v3777 = vpop.permute.xlu0 %3776
      %3778 = vrot.lane.b32.xlu0 %v3752, 80
      %v3779 = vpop.permute.xlu0 %3778
      %3780 = vrot.lane.b32.xlu0 %v3755, 80
      %v3781 = vpop.permute.xlu0 %3780
      %3795 = vst.msk [vmem:[#allocation2 + $0x4] sm:$0xf] %vm1854, %v3757
      %3796 = vst.msk [vmem:[#allocation2 + $0xc] sm:$0xf] %vm1854, %v3759
      %3797 = vst.msk [vmem:[#allocation2 + $0x14] sm:$0xf] %vm1854, %v3761
      %3798 = vst.msk [vmem:[#allocation2 + $0x1c] sm:$0xf] %vm1854, %v3763
      %3799 = vst.msk [vmem:[#allocation2 + $0x24] sm:$0xf] %vm1854, %v3765
      %3800 = vst.msk [vmem:[#allocation2 + $0x2c] sm:$0xf] %vm1854, %v3767
      %3801 = vst.msk [vmem:[#allocation2 + $0x34] sm:$0xf] %vm1854, %v3769
      %3802 = vst.msk [vmem:[#allocation2 + $0x3c] sm:$0xf] %vm1854, %v3771
      %3803 = vst.msk [vmem:[#allocation2 + $0x44] sm:$0xf] %vm1854, %v3773
      %3804 = vst.msk [vmem:[#allocation2 + $0x4c] sm:$0xf] %vm1854, %v3775
      %3805 = vst.msk [vmem:[#allocation2 + $0x54] sm:$0xf] %vm1854, %v3777
      %3806 = vst.msk [vmem:[#allocation2 + $0x5c] sm:$0xf] %vm1854, %v3779
      %3807 = vst.msk [vmem:[#allocation2 + $0x64] sm:$0x3] %vm1867, %v3781
      %v3808 = vld [vmem:[#allocation2] sm:$0xff]
      %v3809 = vld [vmem:[#allocation2 + $0x8] sm:$0xff]
      %v3810 = vld [vmem:[#allocation2 + $0x10] sm:$0xff]
      %v3811 = vld [vmem:[#allocation2 + $0x18] sm:$0xff]
      %v3812 = vld [vmem:[#allocation2 + $0x20] sm:$0xff]
      %v3813 = vld [vmem:[#allocation2 + $0x28] sm:$0xff]
      %v3814 = vld [vmem:[#allocation2 + $0x30] sm:$0xff]
      %v3815 = vld [vmem:[#allocation2 + $0x38] sm:$0xff]
      %v3816 = vld [vmem:[#allocation2 + $0x40] sm:$0xff]
      %v3817 = vld [vmem:[#allocation2 + $0x48] sm:$0xff]
      %v3818 = vld [vmem:[#allocation2 + $0x50] sm:$0xff]
      %v3819 = vld [vmem:[#allocation2 + $0x58] sm:$0xff]
      %v3820 = vld [vmem:[#allocation2 + $0x60] sm:$0x33]
      %v3821 = vld [vmem:[%s3] sm:$0xf]
      %v3822 = vld [vmem:[%s3 + $0x4] sm:$0xf]
      %v3823 = vld [vmem:[%s3 + $0x8] sm:$0xf]
      %v3824 = vld [vmem:[%s3 + $0xc] sm:$0xf]
      %v3825 = vld [vmem:[%s3 + $0x10] sm:$0xf]
      %v3826 = vld [vmem:[%s3 + $0x14] sm:$0xf]
      %v3827 = vld [vmem:[%s3 + $0x18] sm:$0xf]
      %v3828 = vld [vmem:[%s3 + $0x1c] sm:$0xf]
      %v3829 = vld [vmem:[%s3 + $0x20] sm:$0xf]
      %v3830 = vld [vmem:[%s3 + $0x24] sm:$0xf]
      %v3831 = vld [vmem:[%s3 + $0x28] sm:$0xf]
      %v3832 = vld [vmem:[%s3 + $0x2c] sm:$0xf]
      %v3833 = vld [vmem:[%s3 + $0x30] sm:$0xf]
      %v3834 = vld [vmem:[%s3 + $0x34] sm:$0xf]
      %v3835 = vld [vmem:[%s3 + $0x38] sm:$0xf]
      %v3836 = vld [vmem:[%s3 + $0x3c] sm:$0xf]
      %v3837 = vld [vmem:[%s3 + $0x40] sm:$0xf]
      %v3838 = vld [vmem:[%s3 + $0x44] sm:$0xf]
      %v3839 = vld [vmem:[%s3 + $0x48] sm:$0xf]
      %v3840 = vld [vmem:[%s3 + $0x4c] sm:$0xf]
      %v3841 = vld [vmem:[%s3 + $0x50] sm:$0xf]
      %v3842 = vld [vmem:[%s3 + $0x54] sm:$0xf]
      %v3843 = vld [vmem:[%s3 + $0x58] sm:$0xf]
      %v3844 = vld [vmem:[%s3 + $0x5c] sm:$0xf]
      %v3845 = vld [vmem:[%s3 + $0x60] sm:$0xf]
      %v3846 = vld [vmem:[%s3 + $0x64] sm:$0xf]
      %v3847 = vld [vmem:[%s3 + $0x68] sm:$0xf]
      %v3848 = vld [vmem:[%s3 + $0x6c] sm:$0xf]
      %v3849 = vld [vmem:[%s3 + $0x70] sm:$0xf]
      %v3850 = vld [vmem:[%s3 + $0x74] sm:$0xf]
      %v3851 = vld [vmem:[%s3 + $0x78] sm:$0xf]
      %v3852 = vld [vmem:[%s3 + $0x7c] sm:$0xf]
      %v3853 = vld [vmem:[%s4] sm:$0x1]
      %v3855 = vlaneseq
      %v3856 = vshrl.u32 %v3855, 7
      %v3857 = vsub.s32 0, %v3856
      %v3858 = vrot.slane %v3853, %v3857
      %v3873 = vunpack.c.l.b16 %v3808
      %v3874 = vunpack.c.h.b16 %v3808
      %v3875 = vunpack.c.l.b16 %v3809
      %v3876 = vunpack.c.h.b16 %v3809
      %v3877 = vunpack.c.l.b16 %v3810
      %v3878 = vunpack.c.h.b16 %v3810
      %v3879 = vunpack.c.l.b16 %v3811
      %v3880 = vunpack.c.h.b16 %v3811
      %v3881 = vunpack.c.l.b16 %v3812
      %v3882 = vunpack.c.h.b16 %v3812
      %v3883 = vunpack.c.l.b16 %v3813
      %v3884 = vunpack.c.h.b16 %v3813
      %v3885 = vunpack.c.l.b16 %v3814
      %v3886 = vunpack.c.h.b16 %v3814
      %v3887 = vunpack.c.l.b16 %v3815
      %v3888 = vunpack.c.h.b16 %v3815
      %v3889 = vunpack.c.l.b16 %v3816
      %v3890 = vunpack.c.h.b16 %v3816
      %v3891 = vunpack.c.l.b16 %v3817
      %v3892 = vunpack.c.h.b16 %v3817
      %v3893 = vunpack.c.l.b16 %v3818
      %v3894 = vunpack.c.h.b16 %v3818
      %v3895 = vunpack.c.l.b16 %v3819
      %v3896 = vunpack.c.h.b16 %v3819
      %v3897 = vunpack.c.l.b16 %v3820
      %v3898 = vunpack.c.h.b16 %v3820
      %v3899 = vpack.c.b16 %v3875, %v3873
      %v3900 = vpack.c.b16 %v3876, %v3874
      %v3901 = vpack.c.b16 %v3879, %v3877
      %v3902 = vpack.c.b16 %v3880, %v3878
      %v3903 = vpack.c.b16 %v3883, %v3881
      %v3904 = vpack.c.b16 %v3884, %v3882
      %v3905 = vpack.c.b16 %v3887, %v3885
      %v3906 = vpack.c.b16 %v3888, %v3886
      %v3907 = vpack.c.b16 %v3891, %v3889
      %v3908 = vpack.c.b16 %v3892, %v3890
      %v3909 = vpack.c.b16 %v3895, %v3893
      %v3910 = vpack.c.b16 %v3896, %v3894
      %v3911 = vpack.c.b16 %v3897, %v3897
      %v3912 = vpack.c.b16 %v3898, %v3898
      %v3959 = vunpack.c.l.b16 %v3821
      %v3960 = vunpack.c.l.b16 %v3822
      %v3961 = vunpack.c.l.b16 %v3823
      %v3962 = vunpack.c.l.b16 %v3824
      %v3963 = vunpack.c.l.b16 %v3825
      %v3964 = vunpack.c.l.b16 %v3826
      %v3965 = vunpack.c.l.b16 %v3827
      %v3966 = vunpack.c.l.b16 %v3828
      %v3967 = vunpack.c.l.b16 %v3829
      %v3968 = vunpack.c.l.b16 %v3830
      %v3969 = vunpack.c.l.b16 %v3831
      %v3970 = vunpack.c.l.b16 %v3832
      %v3971 = vunpack.c.l.b16 %v3833
      %v3972 = vunpack.c.l.b16 %v3834
      %v3973 = vunpack.c.l.b16 %v3835
      %v3974 = vunpack.c.l.b16 %v3836
      %v3975 = vunpack.c.l.b16 %v3837
      %v3976 = vunpack.c.l.b16 %v3838
      %v3977 = vunpack.c.l.b16 %v3839
      %v3978 = vunpack.c.l.b16 %v3840
      %v3979 = vunpack.c.l.b16 %v3841
      %v3980 = vunpack.c.l.b16 %v3842
      %v3981 = vunpack.c.l.b16 %v3843
      %v3982 = vunpack.c.l.b16 %v3844
      %v3983 = vunpack.c.l.b16 %v3845
      %v3984 = vunpack.c.l.b16 %v3846
      %v3985 = vunpack.c.l.b16 %v3847
      %v3986 = vunpack.c.l.b16 %v3848
      %v3987 = vunpack.c.l.b16 %v3849
      %v3988 = vunpack.c.l.b16 %v3850
      %v3989 = vunpack.c.l.b16 %v3851
      %v3990 = vunpack.c.l.b16 %v3852
      %v3991 = vpack.c.b16 %v3960, %v3959
      %v3992 = vpack.c.b16 %v3962, %v3961
      %v3993 = vpack.c.b16 %v3964, %v3963
      %v3994 = vpack.c.b16 %v3966, %v3965
      %v3995 = vpack.c.b16 %v3968, %v3967
      %v3996 = vpack.c.b16 %v3970, %v3969
      %v3997 = vpack.c.b16 %v3972, %v3971
      %v3998 = vpack.c.b16 %v3974, %v3973
      %v3999 = vpack.c.b16 %v3976, %v3975
      %v4000 = vpack.c.b16 %v3978, %v3977
      %v4001 = vpack.c.b16 %v3980, %v3979
      %v4002 = vpack.c.b16 %v3982, %v3981
      %v4003 = vpack.c.b16 %v3984, %v3983
      %v4004 = vpack.c.b16 %v3986, %v3985
      %v4005 = vpack.c.b16 %v3988, %v3987
      %v4006 = vpack.c.b16 %v3990, %v3989
      %4023 = vmatprep.subr.bf16.mxu0 0
      %4024 = vmatpush1.bf16.msra.mxu0 %v3991
      %4025 = vmatprep.subr.bf16.mxu0 0
      %4026 = vmatpush1.bf16.msra.mxu0 %v3992
      %4027 = vmatprep.subr.bf16.mxu0 0
      %4028 = vmatpush1.bf16.msra.mxu0 %v3993
      %4029 = vmatprep.subr.bf16.mxu0 0
      %4030 = vmatpush1.bf16.msra.mxu0 %v3994
      %4031 = vmatprep.subr.bf16.mxu0 0
      %4032 = vmatpush1.bf16.msra.mxu0 %v3995
      %4033 = vmatprep.subr.bf16.mxu0 0
      %4034 = vmatpush1.bf16.msra.mxu0 %v3996
      %4035 = vmatprep.subr.bf16.mxu0 0
      %4036 = vmatpush1.bf16.msra.mxu0 %v3997
      %4037 = vmatprep.subr.bf16.mxu0 0
      %4038 = vmatpush1.bf16.msra.mxu0 %v3998
      %4039 = vmatprep.subr.bf16.mxu0 0
      %4040 = vmatpush1.bf16.msra.mxu0 %v3999
      %4041 = vmatprep.subr.bf16.mxu0 0
      %4042 = vmatpush1.bf16.msra.mxu0 %v4000
      %4043 = vmatprep.subr.bf16.mxu0 0
      %4044 = vmatpush1.bf16.msra.mxu0 %v4001
      %4045 = vmatprep.subr.bf16.mxu0 0
      %4046 = vmatpush1.bf16.msra.mxu0 %v4002
      %4047 = vmatprep.subr.bf16.mxu0 0
      %4048 = vmatpush1.bf16.msra.mxu0 %v4003
      %4049 = vmatprep.subr.bf16.mxu0 0
      %4050 = vmatpush1.bf16.msra.mxu0 %v4004
      %4051 = vmatprep.subr.bf16.mxu0 0
      %4052 = vmatpush1.bf16.msra.mxu0 %v4005
      %4053 = vmatprep.subr.bf16.mxu0 0
      %4054 = vmatpush1.bf16.msra.mxu0 %v4006
      %4055 = vmatprep.mubr.bf16.mxu0 %v3900
      %4056 = vmatmul.mubr.bf16.gmra.mrb[0].mxu0 %v3899
      %v4057 = vpop.f32.mrb[0].mxu0
      %v4058 = vadd.f32 %v3858, %v4057
      %v4059 = vpop.f32.mrb[0].mxu0
      %v4060 = vpop.f32.mrb[0].mxu0
      %v4061 = vadd.f32 %v3858, %v4060
      %v4062 = vpop.f32.mrb[0].mxu0
      %4063 = vmatprep.mubr.bf16.mxu0 %v3902
      %4064 = vmatmul.mubr.bf16.gmra.mrb[0].mxu0 %v3901
      %v4065 = vpop.f32.mrb[0].mxu0
      %v4066 = vadd.f32 %v3858, %v4065
      %v4067 = vpop.f32.mrb[0].mxu0
      %v4068 = vpop.f32.mrb[0].mxu0
      %v4069 = vadd.f32 %v3858, %v4068
      %v4070 = vpop.f32.mrb[0].mxu0
      %4071 = vmatprep.mubr.bf16.mxu0 %v3904
      %4072 = vmatmul.mubr.bf16.gmra.mrb[0].mxu0 %v3903
      %v4073 = vpop.f32.mrb[0].mxu0
      %v4074 = vadd.f32 %v3858, %v4073
      %v4075 = vpop.f32.mrb[0].mxu0
      %v4076 = vpop.f32.mrb[0].mxu0
      %v4077 = vadd.f32 %v3858, %v4076
      %v4078 = vpop.f32.mrb[0].mxu0
      %4079 = vmatprep.mubr.bf16.mxu0 %v3906
      %4080 = vmatmul.mubr.bf16.gmra.mrb[0].mxu0 %v3905
      %v4081 = vpop.f32.mrb[0].mxu0
      %v4082 = vadd.f32 %v3858, %v4081
      %v4083 = vpop.f32.mrb[0].mxu0
      %v4084 = vpop.f32.mrb[0].mxu0
      %v4085 = vadd.f32 %v3858, %v4084
      %v4086 = vpop.f32.mrb[0].mxu0
      %4087 = vmatprep.mubr.bf16.mxu0 %v3908
      %4088 = vmatmul.mubr.bf16.gmra.mrb[0].mxu0 %v3907
      %v4089 = vpop.f32.mrb[0].mxu0
      %v4090 = vadd.f32 %v3858, %v4089
      %v4091 = vpop.f32.mrb[0].mxu0
      %v4092 = vpop.f32.mrb[0].mxu0
      %v4093 = vadd.f32 %v3858, %v4092
      %v4094 = vpop.f32.mrb[0].mxu0
      %4095 = vmatprep.mubr.bf16.mxu0 %v3910
      %4096 = vmatmul.mubr.bf16.gmra.mrb[0].mxu0 %v3909
      %v4097 = vpop.f32.mrb[0].mxu0
      %v4098 = vadd.f32 %v3858, %v4097
      %v4099 = vpop.f32.mrb[0].mxu0
      %v4100 = vpop.f32.mrb[0].mxu0
      %v4101 = vadd.f32 %v3858, %v4100
      %v4102 = vpop.f32.mrb[0].mxu0
      %4103 = vmatprep.mubr.bf16.mxu0 %v3912
      %4104 = vmatmul.mubr.bf16.gmra.mrb[0].mxu0 %v3911
      %v4105 = vpop.f32.mrb[0].mxu0
      %v4106 = vadd.f32 %v3858, %v4105
      %v4107 = vpop.f32.mrb[0].mxu0
      %v4108 = vpop.f32.mrb[0].mxu0
      %v4109 = vpop.f32.mrb[0].mxu0
      %4110 = vdwg.mxu0
      %v4111 = vld [vmem:[%s394] sm:$0xf]
      %v4112 = vld [vmem:[%s394 + $0x4] sm:$0xf]
      %v4113 = vld [vmem:[%s394 + $0x8] sm:$0xf]
      %v4114 = vld [vmem:[%s394 + $0xc] sm:$0xf]
      %v4115 = vld [vmem:[%s394 + $0x10] sm:$0xf]
      %v4116 = vld [vmem:[%s394 + $0x14] sm:$0xf]
      %v4117 = vld [vmem:[%s394 + $0x18] sm:$0xf]
      %v4118 = vld [vmem:[%s394 + $0x1c] sm:$0xf]
      %v4119 = vld [vmem:[%s394 + $0x20] sm:$0xf]
      %v4120 = vld [vmem:[%s394 + $0x24] sm:$0xf]
      %v4121 = vld [vmem:[%s394 + $0x28] sm:$0xf]
      %v4122 = vld [vmem:[%s394 + $0x2c] sm:$0xf]
      %v4123 = vld [vmem:[%s394 + $0x30] sm:$0x3]
      %v4124 = vunpack.c.l.bf16 %v4111
      %v4125 = vunpack.c.l.bf16 %v4112
      %v4126 = vunpack.c.l.bf16 %v4113
      %v4127 = vunpack.c.l.bf16 %v4114
      %v4128 = vunpack.c.l.bf16 %v4115
      %v4129 = vunpack.c.l.bf16 %v4116
      %v4130 = vunpack.c.l.bf16 %v4117
      %v4131 = vunpack.c.l.bf16 %v4118
      %v4132 = vunpack.c.l.bf16 %v4119
      %v4133 = vunpack.c.l.bf16 %v4120
      %v4134 = vunpack.c.l.bf16 %v4121
      %v4135 = vunpack.c.l.bf16 %v4122
      %v4136 = vunpack.c.l.bf16 %v4123
      %v4137 = vadd.f32 %v4058, %v4124
      %v4138 = vadd.f32 %v4061, %v4125
      %v4139 = vadd.f32 %v4066, %v4126
      %v4140 = vadd.f32 %v4069, %v4127
      %v4141 = vadd.f32 %v4074, %v4128
      %v4142 = vadd.f32 %v4077, %v4129
      %v4143 = vadd.f32 %v4082, %v4130
      %v4144 = vadd.f32 %v4085, %v4131
      %v4145 = vadd.f32 %v4090, %v4132
      %v4146 = vadd.f32 %v4093, %v4133
      %v4147 = vadd.f32 %v4098, %v4134
      %v4148 = vadd.f32 %v4101, %v4135
      %v4149 = vadd.f32 %v4106, %v4136
      %v4150 = vmax.f32 %v4137, 0.0
      %v4151 = vmax.f32 %v4138, 0.0
      %v4152 = vmax.f32 %v4139, 0.0
      %v4153 = vmax.f32 %v4140, 0.0
      %v4154 = vmax.f32 %v4141, 0.0
      %v4155 = vmax.f32 %v4142, 0.0
      %v4156 = vmax.f32 %v4143, 0.0
      %v4157 = vmax.f32 %v4144, 0.0
      %v4158 = vmax.f32 %v4145, 0.0
      %v4159 = vmax.f32 %v4146, 0.0
      %v4160 = vmax.f32 %v4147, 0.0
      %v4161 = vmax.f32 %v4148, 0.0
      %v4162 = vmax.f32 %v4149, 0.0
      %v4163 = vpack.c.bf16 %v4151, %v4150
      %v4164 = vpack.c.bf16 %v4153, %v4152
      %v4165 = vpack.c.bf16 %v4155, %v4154
      %v4166 = vpack.c.bf16 %v4157, %v4156
      %v4167 = vpack.c.bf16 %v4159, %v4158
      %v4168 = vpack.c.bf16 %v4161, %v4160
      %v4169 = vpack.c.bf16 %v4162, %v4162
      %v4177 = vunpack.c.l.b16 %v4163
      %v4178 = vunpack.c.h.b16 %v4163
      %v4179 = vunpack.c.l.b16 %v4164
      %v4180 = vunpack.c.h.b16 %v4164
      %v4181 = vunpack.c.l.b16 %v4165
      %v4182 = vunpack.c.h.b16 %v4165
      %v4183 = vunpack.c.l.b16 %v4166
      %v4184 = vunpack.c.h.b16 %v4166
      %v4185 = vunpack.c.l.b16 %v4167
      %v4186 = vunpack.c.h.b16 %v4167
      %v4187 = vunpack.c.l.b16 %v4168
      %v4188 = vunpack.c.h.b16 %v4168
      %v4189 = vunpack.c.l.b16 %v4169
      %v4190 = vpack.c.b16 %v4177, %v4177
      %v4191 = vpack.c.b16 %v4178, %v4178
      %v4192 = vpack.c.b16 %v4179, %v4179
      %v4193 = vpack.c.b16 %v4180, %v4180
      %v4194 = vpack.c.b16 %v4181, %v4181
      %v4195 = vpack.c.b16 %v4182, %v4182
      %v4196 = vpack.c.b16 %v4183, %v4183
      %v4197 = vpack.c.b16 %v4184, %v4184
      %v4198 = vpack.c.b16 %v4185, %v4185
      %v4199 = vpack.c.b16 %v4186, %v4186
      %v4200 = vpack.c.b16 %v4187, %v4187
      %v4201 = vpack.c.b16 %v4188, %v4188
      %v4202 = vpack.c.b16 %v4189, %v4189
      %4216 = vst [vmem:[%s403] sm:$0xf] %v4190
      %4217 = vst [vmem:[%s403 + $0x4] sm:$0xf] %v4191
      %4218 = vst [vmem:[%s403 + $0x8] sm:$0xf] %v4192
      %4219 = vst [vmem:[%s403 + $0xc] sm:$0xf] %v4193
      %4220 = vst [vmem:[%s403 + $0x10] sm:$0xf] %v4194
      %4221 = vst [vmem:[%s403 + $0x14] sm:$0xf] %v4195
      %4222 = vst [vmem:[%s403 + $0x18] sm:$0xf] %v4196
      %4223 = vst [vmem:[%s403 + $0x1c] sm:$0xf] %v4197
      %4224 = vst [vmem:[%s403 + $0x20] sm:$0xf] %v4198
      %4225 = vst [vmem:[%s403 + $0x24] sm:$0xf] %v4199
      %4226 = vst [vmem:[%s403 + $0x28] sm:$0xf] %v4200
      %4227 = vst [vmem:[%s403 + $0x2c] sm:$0xf] %v4201
      %4228 = vst [vmem:[%s403 + $0x30] sm:$0x3] %v4202
      %p4229 = scmp.lt.s32.totalorder %s21, 1
      %s4230 = scalar_select %p4229, %s21, 1
      %p4231 = scmp.lt.s32.totalorder %s22, 7
      %s4232 = scalar_select %p4231, %s22, 7
      %s4233 = smul.addr %s4232, 13
      %s4234 = smul.addr %s4230, 104
      %s4235 = sadd.s32 %s4233, %s4234
      %s4236 = smul.addr %s4235, 4
      %s4237 = scalar_lea.vmem %s6, %s4236
      // Predicated region
      $region45: #{basic_block_forward.3} parent=43 // pred_check
        %p4238 = pneg %p207
      $region46: #{basic_block_forward.3} parent=43 // pred_check_branch
        %4240 = sbr.rel (%p4238) target = $region48
      $region47: #{basic_block_forward.3} parent=43 // pred_region
        _
      $region48: #{basic_block_forward.3} parent=43 // pred_fallthru
        _
    $region44: #{basic_block_forward.3} parent=5 // pred_fallthru
      _
    %p4241 = scmp.le.s32.totalorder 2, %s12
    // Predicated region
    $region49: #{basic_block_forward.3} parent=5 // pred_check
      %p4242 = pneg %p4241
    $region50: #{basic_block_forward.3} parent=5 // pred_check_branch
      %4244 = sbr.rel (%p4242) target = $region52
    $region51: #{basic_block_forward.3} parent=5 // pred_region
      %s4245 = ssub.s32 %s12, 2
      // Predicated region
      $region53: #{basic_block_forward.3} parent=51 // pred_check
        %p4246 = pneg %p213
      $region54: #{basic_block_forward.3} parent=51 // pred_check_branch
        %4248 = sbr.rel (%p4246) target = $region56
      $region55: #{basic_block_forward.3} parent=51 // pred_region
        %p4249 = scmp.lt.s32.totalorder %s23, 1
        %s4250 = scalar_select %p4249, %s23, 1
        %p4251 = scmp.lt.s32.totalorder %s24, 7
        %s4252 = scalar_select %p4251, %s24, 7
        %s4253 = smul.addr %s4252, 13
        %s4254 = smul.addr %s4250, 104
        %s4255 = sadd.s32 %s4253, %s4254
        %s4256 = smul.addr %s4255, 4
        %s4257 = scalar_lea.vmem %s6, %s4256
      $region56: #{basic_block_forward.3} parent=51 // pred_fallthru
        _
    $region52: #{basic_block_forward.3} parent=5 // pred_fallthru
      _
  $region6: #{basic_block_forward.3} parent=0 // loop_footer
    %s16 = sadd.s32 1, %s12
  $region7: #{basic_block_forward.3} parent=0 // loop_footer_branch
    %11 = sbr.rel target = $region3
  $region8: #{basic_block_forward.3} parent=0 // loop_exit
    _

</llo_original>
